<compile_context>
chip_gen: v6e
topology: v6e:2x2x1
jax: 0.10.0
libtpu: 0.0.40
codegen_flags: <defaults>
</compile_context>

<pallas_src>
import functools
import math
import numpy as np
import jax
import jax.numpy as jnp
from jax.experimental import pallas as pl
from jax.experimental.pallas import tpu as pltpu

# ---------------- model hyper-parameters (small, deterministic) ----------------
D_MODEL = 32
NUM_HEADS = 4
HEAD_DIM = D_MODEL // NUM_HEADS
D_FF = 64
NUM_LAYERS = 2
LN_EPS = 1e-5


# ---------------------------------------------------------------------------
# get_reference_points : exact port of the PyTorch staticmethod (plain JAX glue)
# ---------------------------------------------------------------------------
def get_reference_points(spatial_shapes, num_query, batch_size):
    num_query = int(num_query)
    base_H, base_W = spatial_shapes[1]
    reference_points_list = []
    for (H_, W_) in spatial_shapes:
        lin_h = jnp.linspace(0.5, H_ - 0.5, H_, dtype=jnp.float32)
        lin_w = jnp.linspace(0.5, W_ - 0.5, W_, dtype=jnp.float32)
        ref_y, ref_x = jnp.meshgrid(lin_h, lin_w, indexing="ij")
        if H_ // base_H == 2:
            ref_y = ref_y[0::2, 0::2]
            ref_x = ref_x[0::2, 0::2]
        elif H_ / base_H == 1 / 2:
            tmp_y = jnp.zeros((H_ * 2, W_ * 2), jnp.float32)
            tmp_y = tmp_y.at[0::2, 0::2].set(ref_y).at[1::2, 1::2].set(ref_y)
            tmp_x = jnp.zeros((H_ * 2, W_ * 2), jnp.float32)
            tmp_x = tmp_x.at[0::2, 0::2].set(ref_x).at[1::2, 1::2].set(ref_x)
            ref_y, ref_x = tmp_y, tmp_x
        shape_H = jnp.zeros((batch_size, 1), jnp.float32) + H_
        shape_W = jnp.zeros((batch_size, 1), jnp.float32) + W_
        ref_y = ref_y.reshape(-1)[None] / shape_H          # (B, num_query)
        ref_x = ref_x.reshape(-1)[None] / shape_W          # (B, num_query)
        x1 = jnp.zeros((W_,), jnp.float32)
        x2 = lin_h / H_
        x2 = jnp.broadcast_to(x2[None, None, :], (batch_size, num_query, H_))
        y1 = lin_w / W_
        y1 = jnp.broadcast_to(y1[None, None, :], (batch_size, num_query, W_))
        y2 = jnp.zeros((H_,), jnp.float32)
        ref_1 = ref_x[:, :, None] + x1[None, None, :]       # (B, num_query, W_)
        ref_11 = jnp.stack((ref_1, y1), -1)                  # (B, num_query, W_, 2)
        ref_2 = ref_y[:, :, None] + y2[None, None, :]        # (B, num_query, H_)
        ref_22 = jnp.stack((x2, ref_2), -1)                  # (B, num_query, H_, 2)
        ref = jnp.concatenate((ref_11, ref_22), 2)           # (B, num_query, W_+H_, 2)
        reference_points_list.append(ref)
    return jnp.concatenate(reference_points_list, 2)


# ---------------------------------------------------------------------------
# Pallas kernel : the FULL encoder stack (num_layers fused) for one batch element
#   per layer: self-attn (q = k = src + pos, v = src) + add&LN + FFN + add&LN
# ---------------------------------------------------------------------------
def encoder_stack_kernel(src_ref, pos_ref,
                         wqk_ref, bqk_ref, wv_ref, bv_ref,
                         wo_ref, bo_ref, w1_ref, b1_ref, w2_ref, b2_ref,
                         g1_ref, be1_ref, g2_ref, be2_ref,
                         out_ref, attn_scr, *, num_layers, seq_len):
    s_pad = src_ref.shape[0]            # padded token count (multiple of 128)
    x = src_ref[...]                    # (S_pad, D) f32
    p = pos_ref[...]                    # (S_pad, D) f32

    # masks for the artificial sequence padding (computed once, reused every layer)
    col_ids = jax.lax.broadcasted_iota(jnp.int32, (1, s_pad), 1)
    key_bias = jnp.where(col_ids < seq_len, 0.0, -1e30).astype(jnp.float32)   # (1, S_pad)
    row_ids = jax.lax.broadcasted_iota(jnp.int32, (s_pad, 1), 0)
    row_mask = (row_ids < seq_len).astype(jnp.float32)                        # (S_pad, 1)

    scale = 1.0 / math.sqrt(HEAD_DIM)

    # _get_clones deep-copies one layer -> identical weights; loop layers on-chip.
    for _ in range(num_layers):
        qk_in = x + p
        # packed q|k projection (one (S,32)@(32,64) dot) + separate v projection
        qk = jnp.dot(qk_in.astype(jnp.bfloat16), wqk_ref[...],
                     preferred_element_type=jnp.float32) + bqk_ref[...]
        v = jnp.dot(x.astype(jnp.bfloat16), wv_ref[...],
                    preferred_element_type=jnp.float32) + bv_ref[...]
        q_bf = qk[:, :D_MODEL].astype(jnp.bfloat16)
        k_bf = qk[:, D_MODEL:].astype(jnp.bfloat16)
        v_bf = v.astype(jnp.bfloat16)

        # per-head attention; each head writes straight into the VMEM scratch slice
        for h in range(NUM_HEADS):
            lo = h * HEAD_DIM
            qh = q_bf[:, lo:lo + HEAD_DIM]
            kh = k_bf[:, lo:lo + HEAD_DIM]
            vh = v_bf[:, lo:lo + HEAD_DIM]
            s = jax.lax.dot_general(qh, kh, (((1,), (1,)), ((), ())),
                                    preferred_element_type=jnp.float32)  # (S_pad, S_pad)
            s = s * scale + key_bias
            s = s - jnp.max(s, axis=-1, keepdims=True)
            e = jnp.exp(s)
            a = e * pl.reciprocal(jnp.sum(e, axis=-1, keepdims=True), approx=True)
            attn_scr[:, lo:lo + HEAD_DIM] = jnp.dot(
                a.astype(jnp.bfloat16), vh, preferred_element_type=jnp.float32)

        attn = jnp.dot(attn_scr[...].astype(jnp.bfloat16), wo_ref[...],
                       preferred_element_type=jnp.float32) + bo_ref[...]

        # residual + LayerNorm 1 (f32)
        y = x + attn
        mu = jnp.mean(y, axis=-1, keepdims=True)
        var = jnp.mean((y - mu) ** 2, axis=-1, keepdims=True)
        y = (y - mu) * jax.lax.rsqrt(var + LN_EPS) * g1_ref[...] + be1_ref[...]

        # FFN
        h1 = jnp.maximum(
            jnp.dot(y.astype(jnp.bfloat16), w1_ref[...],
                    preferred_element_type=jnp.float32) + b1_ref[...], 0.0)
        ff = jnp.dot(h1.astype(jnp.bfloat16), w2_ref[...],
                     preferred_element_type=jnp.float32) + b2_ref[...]

        # residual + LayerNorm 2 (f32)
        z = y + ff
        mu2 = jnp.mean(z, axis=-1, keepdims=True)
        var2 = jnp.mean((z - mu2) ** 2, axis=-1, keepdims=True)
        z = (z - mu2) * jax.lax.rsqrt(var2 + LN_EPS) * g2_ref[...] + be2_ref[...]

        # keep padded rows exactly zero so they never pollute the next fused layer
        x = z * row_mask

    out_ref[...] = x


def encoder_layers_forward(src, pos, reference_points, spatial_shapes,
                           level_start_index, padding_mask, params, num_layers):
    # reference_points / spatial_shapes / level_start_index / padding_mask accepted to
    # mirror the PyTorch layer signature; unused by the representative layer (see TODO).
    del reference_points, spatial_shapes, level_start_index, padding_mask
    B, S, D = src.shape
    if pos is None:
        pos = jnp.zeros_like(src)

    # pad token axis to a multiple of 128 -> lane-dense (S,S) scores, clean sublane tiling
    s_pad = ((S + 127) // 128) * 128
    pad = s_pad - S
    src_p = jnp.pad(src, ((0, 0), (0, pad), (0, 0)))
    pos_p = jnp.pad(pos, ((0, 0), (0, pad), (0, 0)))

    # pack wq|wk into one (D, 2D) matmul weight; cast all matmul weights to bf16 once
    wqk = jnp.concatenate([params["wq"], params["wk"]], axis=1).astype(jnp.bfloat16)
    bqk = jnp.concatenate([params["bq"], params["bk"]], axis=1)
    weights = [
        wqk, bqk,
        params["wv"].astype(jnp.bfloat16), params["bv"],
        params["wo"].astype(jnp.bfloat16), params["bo"],
        params["w1"].astype(jnp.bfloat16), params["b1"],
        params["w2"].astype(jnp.bfloat16), params["b2"],
        params["g1"], params["be1"], params["g2"], params["be2"],
    ]

    token_spec = pl.BlockSpec((None, s_pad, D), lambda b: (b, 0, 0))
    weight_specs = [pl.BlockSpec(w.shape, lambda b: (0, 0)) for w in weights]

    kernel = functools.partial(encoder_stack_kernel,
                               num_layers=num_layers, seq_len=S)

    out = pl.pallas_call(
        kernel,
        grid=(B,),
        in_specs=[token_spec, token_spec] + weight_specs,
        out_specs=pl.BlockSpec((None, s_pad, D), lambda b: (b, 0, 0)),
        out_shape=jax.ShapeDtypeStruct((B, s_pad, D), jnp.float32),
        scratch_shapes=[pltpu.VMEM((s_pad, D), jnp.float32)],
        compiler_params=pltpu.CompilerParams(dimension_semantics=("parallel",)),
    )(src_p, pos_p, *weights)

    return out[:, :S, :]


# ---------------------------------------------------------------------------
# CorssTransformerEncoder.forward
# ---------------------------------------------------------------------------
def cross_transformer_encoder_forward(src, spatial_shapes, level_start_index,
                                      params, num_layers, num_query, batch_size,
                                      pos=None, padding_mask=None):
    reference_points = get_reference_points(spatial_shapes, num_query, batch_size)
    # All layers fused into a single pallas_call (identical weights via _get_clones).
    output = encoder_layers_forward(src, pos, reference_points, spatial_shapes,
                                    level_start_index, padding_mask, params, num_layers)
    return output, reference_points


# ---------------------------------------------------------------------------
# deterministic parameter init (shapes follow a standard encoder layer)
# ---------------------------------------------------------------------------
def init_params(key, d_model, d_ff):
    ks = jax.random.split(key, 6)

    def lin(k, fan_in, fan_out):
        bound = 1.0 / np.sqrt(fan_in)
        return jax.random.uniform(k, (fan_in, fan_out), jnp.float32, -bound, bound)

    return {
        "wq": lin(ks[0], d_model, d_model), "bq": jnp.zeros((1, d_model), jnp.float32),
        "wk": lin(ks[1], d_model, d_model), "bk": jnp.zeros((1, d_model), jnp.float32),
        "wv": lin(ks[2], d_model, d_model), "bv": jnp.zeros((1, d_model), jnp.float32),
        "wo": lin(ks[3], d_model, d_model), "bo": jnp.zeros((1, d_model), jnp.float32),
        "w1": lin(ks[4], d_model, d_ff),    "b1": jnp.zeros((1, d_ff), jnp.float32),
        "w2": lin(ks[5], d_ff, d_model),    "b2": jnp.zeros((1, d_model), jnp.float32),
        "g1": jnp.ones((1, d_model), jnp.float32), "be1": jnp.zeros((1, d_model), jnp.float32),
        "g2": jnp.ones((1, d_model), jnp.float32), "be2": jnp.zeros((1, d_model), jnp.float32),
    }


if __name__ == "__main__":
    batch_size = 2
    # three pyramid levels; spatial_shapes[1] is the base level (as in the PyTorch code)
    spatial_shapes = [(8, 8), (4, 4), (2, 2)]
    base_H, base_W = spatial_shapes[1]
    num_query = base_H * base_W                      # 16 (must equal base H*W for the stacks)
    S = sum(h * w for h, w in spatial_shapes)        # 84 flattened tokens

    key = jax.random.PRNGKey(0)
    k_src, k_pos, k_par = jax.random.split(key, 3)
    src = jax.random.normal(k_src, (batch_size, S, D_MODEL), jnp.float32)
    pos = jax.random.normal(k_pos, (batch_size, S, D_MODEL), jnp.float32)
    level_start_index = jnp.array(
        np.cumsum([0] + [h * w for h, w in spatial_shapes[:-1]]), jnp.int32)

    params = init_params(k_par, D_MODEL, D_FF)

    out, ref_pts = cross_transformer_encoder_forward(
        src, spatial_shapes, level_start_index, params,
        num_layers=NUM_LAYERS, num_query=num_query, batch_size=batch_size,
        pos=pos, padding_mask=None)

    jax.block_until_ready(out)
    jax.block_until_ready(ref_pts)
    assert out.shape == (batch_size, S, D_MODEL)
    assert ref_pts.shape == (batch_size, num_query,
                             sum(h + w for h, w in spatial_shapes), 2)
    assert bool(jnp.all(jnp.isfinite(out)))
    print("KERNEL_OK")
</pallas_src>

<mosaic_0001>
module attributes {stable_mosaic.version = 11 : i64} {
  func.func @encoder_stack_kernel(%arg0: i32, %arg1: memref<1x128x32xf32, #tpu.memory_space<vmem>>, %arg2: memref<1x128x32xf32, #tpu.memory_space<vmem>>, %arg3: memref<32x64xbf16, #tpu.memory_space<vmem>>, %arg4: memref<1x64xf32, #tpu.memory_space<vmem>>, %arg5: memref<32x32xbf16, #tpu.memory_space<vmem>>, %arg6: memref<1x32xf32, #tpu.memory_space<vmem>>, %arg7: memref<32x32xbf16, #tpu.memory_space<vmem>>, %arg8: memref<1x32xf32, #tpu.memory_space<vmem>>, %arg9: memref<32x64xbf16, #tpu.memory_space<vmem>>, %arg10: memref<1x64xf32, #tpu.memory_space<vmem>>, %arg11: memref<64x32xbf16, #tpu.memory_space<vmem>>, %arg12: memref<1x32xf32, #tpu.memory_space<vmem>>, %arg13: memref<1x32xf32, #tpu.memory_space<vmem>>, %arg14: memref<1x32xf32, #tpu.memory_space<vmem>>, %arg15: memref<1x32xf32, #tpu.memory_space<vmem>>, %arg16: memref<1x32xf32, #tpu.memory_space<vmem>>, %arg17: memref<1x128x32xf32, #tpu.memory_space<vmem>>, %arg18: memref<128x32xf32, #tpu.memory_space<vmem>>) attributes {dimension_semantics = [#tpu.dimension_semantics<parallel>], iteration_bounds = array<i64: 2>, scalar_prefetch = 0 : i64, scratch_operands = 1 : i64, tpu.core_type = #tpu.core_type<tc>, window_params = [{transform_indices = @transform_0, window_bounds = array<i64: 1, 128, 32>}, {transform_indices = @transform_1, window_bounds = array<i64: 1, 128, 32>}, {pipeline_mode = #tpu.pipeline_mode<synchronous>, transform_indices = @transform_2, window_bounds = array<i64: 32, 64>}, {pipeline_mode = #tpu.pipeline_mode<synchronous>, transform_indices = @transform_3, window_bounds = array<i64: 1, 64>}, {pipeline_mode = #tpu.pipeline_mode<synchronous>, transform_indices = @transform_4, window_bounds = array<i64: 32, 32>}, {pipeline_mode = #tpu.pipeline_mode<synchronous>, transform_indices = @transform_5, window_bounds = array<i64: 1, 32>}, {pipeline_mode = #tpu.pipeline_mode<synchronous>, transform_indices = @transform_6, window_bounds = array<i64: 32, 32>}, {pipeline_mode = #tpu.pipeline_mode<synchronous>, transform_indices = @transform_7, window_bounds = array<i64: 1, 32>}, {pipeline_mode = #tpu.pipeline_mode<synchronous>, transform_indices = @transform_8, window_bounds = array<i64: 32, 64>}, {pipeline_mode = #tpu.pipeline_mode<synchronous>, transform_indices = @transform_9, window_bounds = array<i64: 1, 64>}, {pipeline_mode = #tpu.pipeline_mode<synchronous>, transform_indices = @transform_10, window_bounds = array<i64: 64, 32>}, {pipeline_mode = #tpu.pipeline_mode<synchronous>, transform_indices = @transform_11, window_bounds = array<i64: 1, 32>}, {pipeline_mode = #tpu.pipeline_mode<synchronous>, transform_indices = @transform_12, window_bounds = array<i64: 1, 32>}, {pipeline_mode = #tpu.pipeline_mode<synchronous>, transform_indices = @transform_13, window_bounds = array<i64: 1, 32>}, {pipeline_mode = #tpu.pipeline_mode<synchronous>, transform_indices = @transform_14, window_bounds = array<i64: 1, 32>}, {pipeline_mode = #tpu.pipeline_mode<synchronous>, transform_indices = @transform_15, window_bounds = array<i64: 1, 32>}, {transform_indices = @transform_16, window_bounds = array<i64: 1, 128, 32>}]} {
    %c0 = arith.constant 0 : index
    %c0_0 = arith.constant 0 : index
    %c0_1 = arith.constant 0 : index
    %0 = vector.load %arg1[%c0, %c0_0, %c0_1] : memref<1x128x32xf32, #tpu.memory_space<vmem>>, vector<1x128x32xf32>
    %1 = vector.shape_cast %0 : vector<1x128x32xf32> to vector<128x32xf32>
    %c0_2 = arith.constant 0 : index
    %c0_3 = arith.constant 0 : index
    %c0_4 = arith.constant 0 : index
    %2 = vector.load %arg2[%c0_2, %c0_3, %c0_4] : memref<1x128x32xf32, #tpu.memory_space<vmem>>, vector<1x128x32xf32>
    %3 = vector.shape_cast %2 : vector<1x128x32xf32> to vector<128x32xf32>
    %4 = tpu.iota {dimensions = array<i32: 1>} : vector<1x128xi32>
    %c84_i32 = arith.constant 84 : i32
    %5 = vector.broadcast %c84_i32 : i32 to vector<1x128xi32>
    %6 = arith.cmpi slt, %4, %5 : vector<1x128xi32>
    %cst = arith.constant 0.000000e+00 : f32
    %cst_5 = arith.constant -1.000000e+30 : f32
    %7 = vector.broadcast %cst : f32 to vector<1x128xf32>
    %8 = vector.broadcast %cst_5 : f32 to vector<1x128xf32>
    %9 = arith.select %6, %7, %8 : vector<1x128xi1>, vector<1x128xf32>
    %10 = tpu.iota {dimensions = array<i32: 0>} : vector<128x1xi32>
    %c84_i32_6 = arith.constant 84 : i32
    %11 = vector.broadcast %c84_i32_6 : i32 to vector<128x1xi32>
    %12 = arith.cmpi slt, %10, %11 : vector<128x1xi32>
    %13 = arith.extui %12 : vector<128x1xi1> to vector<128x1xi32>
    %14 = arith.sitofp %13 : vector<128x1xi32> to vector<128x1xf32>
    %15 = arith.addf %1, %3 : vector<128x32xf32>
    %16 = arith.truncf %15 : vector<128x32xf32> to vector<128x32xbf16>
    %c0_7 = arith.constant 0 : index
    %c0_8 = arith.constant 0 : index
    %17 = vector.load %arg3[%c0_7, %c0_8] : memref<32x64xbf16, #tpu.memory_space<vmem>>, vector<32x64xbf16>
    %cst_9 = arith.constant dense<0.000000e+00> : vector<128x64xf32>
    %18 = tpu.matmul %16, %17, %cst_9 {dimension_numbers = #tpu.dot_dimension_numbers<[1], [0], [0], [1], [0, 0, 1, 1], [], []>} : vector<128x32xbf16>, vector<32x64xbf16>, vector<128x64xf32> -> vector<128x64xf32>
    %c0_10 = arith.constant 0 : index
    %c0_11 = arith.constant 0 : index
    %19 = vector.load %arg4[%c0_10, %c0_11] : memref<1x64xf32, #tpu.memory_space<vmem>>, vector<1x64xf32>
    %20 = vector.broadcast %19 : vector<1x64xf32> to vector<128x64xf32>
    %21 = arith.addf %18, %20 : vector<128x64xf32>
    %22 = arith.truncf %1 : vector<128x32xf32> to vector<128x32xbf16>
    %c0_12 = arith.constant 0 : index
    %c0_13 = arith.constant 0 : index
    %23 = vector.load %arg5[%c0_12, %c0_13] : memref<32x32xbf16, #tpu.memory_space<vmem>>, vector<32x32xbf16>
    %cst_14 = arith.constant dense<0.000000e+00> : vector<128x32xf32>
    %24 = tpu.matmul %22, %23, %cst_14 {dimension_numbers = #tpu.dot_dimension_numbers<[1], [0], [0], [1], [0, 0, 1, 1], [], []>} : vector<128x32xbf16>, vector<32x32xbf16>, vector<128x32xf32> -> vector<128x32xf32>
    %c0_15 = arith.constant 0 : index
    %c0_16 = arith.constant 0 : index
    %25 = vector.load %arg6[%c0_15, %c0_16] : memref<1x32xf32, #tpu.memory_space<vmem>>, vector<1x32xf32>
    %26 = vector.broadcast %25 : vector<1x32xf32> to vector<128x32xf32>
    %27 = arith.addf %24, %26 : vector<128x32xf32>
    %28 = vector.extract_strided_slice %21 {offsets = [0, 0], sizes = [128, 32], strides = [1, 1]} : vector<128x64xf32> to vector<128x32xf32>
    %29 = arith.truncf %28 : vector<128x32xf32> to vector<128x32xbf16>
    %30 = vector.extract_strided_slice %21 {offsets = [0, 32], sizes = [128, 32], strides = [1, 1]} : vector<128x64xf32> to vector<128x32xf32>
    %31 = arith.truncf %30 : vector<128x32xf32> to vector<128x32xbf16>
    %32 = arith.truncf %27 : vector<128x32xf32> to vector<128x32xbf16>
    %33 = vector.extract_strided_slice %29 {offsets = [0, 0], sizes = [128, 8], strides = [1, 1]} : vector<128x32xbf16> to vector<128x8xbf16>
    %34 = vector.extract_strided_slice %31 {offsets = [0, 0], sizes = [128, 8], strides = [1, 1]} : vector<128x32xbf16> to vector<128x8xbf16>
    %35 = vector.extract_strided_slice %32 {offsets = [0, 0], sizes = [128, 8], strides = [1, 1]} : vector<128x32xbf16> to vector<128x8xbf16>
    %cst_17 = arith.constant dense<0.000000e+00> : vector<128x128xf32>
    %36 = tpu.matmul %33, %34, %cst_17 {dimension_numbers = #tpu.dot_dimension_numbers<[1], [1], [0], [0], [0, 0, 1, 0], [], []>} : vector<128x8xbf16>, vector<128x8xbf16>, vector<128x128xf32> -> vector<128x128xf32>
    %cst_18 = arith.constant 0.353553385 : f32
    %37 = vector.broadcast %cst_18 : f32 to vector<128x128xf32>
    %38 = arith.mulf %36, %37 : vector<128x128xf32>
    %39 = vector.broadcast %9 : vector<1x128xf32> to vector<128x128xf32>
    %40 = arith.addf %38, %39 : vector<128x128xf32>
    %cst_19 = arith.constant dense<0xFF800000> : vector<128xf32>
    %41 = vector.multi_reduction <maximumf>, %40, %cst_19 [1] : vector<128x128xf32> to vector<128xf32>
    %42 = vector.shape_cast %41 : vector<128xf32> to vector<128x1xf32>
    %43 = vector.broadcast %42 : vector<128x1xf32> to vector<128x128xf32>
    %44 = arith.subf %40, %43 : vector<128x128xf32>
    %45 = math.exp %44 : vector<128x128xf32>
    %cst_20 = arith.constant dense<0.000000e+00> : vector<128xf32>
    %46 = vector.multi_reduction <add>, %45, %cst_20 [1] : vector<128x128xf32> to vector<128xf32>
    %47 = vector.shape_cast %46 : vector<128xf32> to vector<128x1xf32>
    %48 = tpu.reciprocal %47 {approx = true} : vector<128x1xf32> -> vector<128x1xf32>
    %49 = vector.broadcast %48 : vector<128x1xf32> to vector<128x128xf32>
    %50 = arith.mulf %45, %49 : vector<128x128xf32>
    %51 = arith.truncf %50 : vector<128x128xf32> to vector<128x128xbf16>
    %cst_21 = arith.constant dense<0.000000e+00> : vector<128x8xf32>
    %52 = tpu.matmul %51, %35, %cst_21 {dimension_numbers = #tpu.dot_dimension_numbers<[1], [0], [0], [1], [0, 0, 1, 1], [], []>} : vector<128x128xbf16>, vector<128x8xbf16>, vector<128x8xf32> -> vector<128x8xf32>
    %c0_22 = arith.constant 0 : index
    %c0_23 = arith.constant 0 : index
    %53 = vector.load %arg18[%c0_22, %c0_23] : memref<128x32xf32, #tpu.memory_space<vmem>>, vector<128x8xf32>
    tpu.vector_store %arg18[%c0_22, %c0_23], %52 {strides = array<i32>} : memref<128x32xf32, #tpu.memory_space<vmem>>, vector<128x8xf32>,
    %54 = vector.extract_strided_slice %29 {offsets = [0, 8], sizes = [128, 8], strides = [1, 1]} : vector<128x32xbf16> to vector<128x8xbf16>
    %55 = vector.extract_strided_slice %31 {offsets = [0, 8], sizes = [128, 8], strides = [1, 1]} : vector<128x32xbf16> to vector<128x8xbf16>
    %56 = vector.extract_strided_slice %32 {offsets = [0, 8], sizes = [128, 8], strides = [1, 1]} : vector<128x32xbf16> to vector<128x8xbf16>
    %cst_24 = arith.constant dense<0.000000e+00> : vector<128x128xf32>
    %57 = tpu.matmul %54, %55, %cst_24 {dimension_numbers = #tpu.dot_dimension_numbers<[1], [1], [0], [0], [0, 0, 1, 0], [], []>} : vector<128x8xbf16>, vector<128x8xbf16>, vector<128x128xf32> -> vector<128x128xf32>
    %cst_25 = arith.constant 0.353553385 : f32
    %58 = vector.broadcast %cst_25 : f32 to vector<128x128xf32>
    %59 = arith.mulf %57, %58 : vector<128x128xf32>
    %60 = vector.broadcast %9 : vector<1x128xf32> to vector<128x128xf32>
    %61 = arith.addf %59, %60 : vector<128x128xf32>
    %cst_26 = arith.constant dense<0xFF800000> : vector<128xf32>
    %62 = vector.multi_reduction <maximumf>, %61, %cst_26 [1] : vector<128x128xf32> to vector<128xf32>
    %63 = vector.shape_cast %62 : vector<128xf32> to vector<128x1xf32>
    %64 = vector.broadcast %63 : vector<128x1xf32> to vector<128x128xf32>
    %65 = arith.subf %61, %64 : vector<128x128xf32>
    %66 = math.exp %65 : vector<128x128xf32>
    %cst_27 = arith.constant dense<0.000000e+00> : vector<128xf32>
    %67 = vector.multi_reduction <add>, %66, %cst_27 [1] : vector<128x128xf32> to vector<128xf32>
    %68 = vector.shape_cast %67 : vector<128xf32> to vector<128x1xf32>
    %69 = tpu.reciprocal %68 {approx = true} : vector<128x1xf32> -> vector<128x1xf32>
    %70 = vector.broadcast %69 : vector<128x1xf32> to vector<128x128xf32>
    %71 = arith.mulf %66, %70 : vector<128x128xf32>
    %72 = arith.truncf %71 : vector<128x128xf32> to vector<128x128xbf16>
    %cst_28 = arith.constant dense<0.000000e+00> : vector<128x8xf32>
    %73 = tpu.matmul %72, %56, %cst_28 {dimension_numbers = #tpu.dot_dimension_numbers<[1], [0], [0], [1], [0, 0, 1, 1], [], []>} : vector<128x128xbf16>, vector<128x8xbf16>, vector<128x8xf32> -> vector<128x8xf32>
    %c0_29 = arith.constant 0 : index
    %c8 = arith.constant 8 : index
    %74 = vector.load %arg18[%c0_29, %c8] : memref<128x32xf32, #tpu.memory_space<vmem>>, vector<128x8xf32>
    tpu.vector_store %arg18[%c0_29, %c8], %73 {strides = array<i32>} : memref<128x32xf32, #tpu.memory_space<vmem>>, vector<128x8xf32>,
    %75 = vector.extract_strided_slice %29 {offsets = [0, 16], sizes = [128, 8], strides = [1, 1]} : vector<128x32xbf16> to vector<128x8xbf16>
    %76 = vector.extract_strided_slice %31 {offsets = [0, 16], sizes = [128, 8], strides = [1, 1]} : vector<128x32xbf16> to vector<128x8xbf16>
    %77 = vector.extract_strided_slice %32 {offsets = [0, 16], sizes = [128, 8], strides = [1, 1]} : vector<128x32xbf16> to vector<128x8xbf16>
    %cst_30 = arith.constant dense<0.000000e+00> : vector<128x128xf32>
    %78 = tpu.matmul %75, %76, %cst_30 {dimension_numbers = #tpu.dot_dimension_numbers<[1], [1], [0], [0], [0, 0, 1, 0], [], []>} : vector<128x8xbf16>, vector<128x8xbf16>, vector<128x128xf32> -> vector<128x128xf32>
    %cst_31 = arith.constant 0.353553385 : f32
    %79 = vector.broadcast %cst_31 : f32 to vector<128x128xf32>
    %80 = arith.mulf %78, %79 : vector<128x128xf32>
    %81 = vector.broadcast %9 : vector<1x128xf32> to vector<128x128xf32>
    %82 = arith.addf %80, %81 : vector<128x128xf32>
    %cst_32 = arith.constant dense<0xFF800000> : vector<128xf32>
    %83 = vector.multi_reduction <maximumf>, %82, %cst_32 [1] : vector<128x128xf32> to vector<128xf32>
    %84 = vector.shape_cast %83 : vector<128xf32> to vector<128x1xf32>
    %85 = vector.broadcast %84 : vector<128x1xf32> to vector<128x128xf32>
    %86 = arith.subf %82, %85 : vector<128x128xf32>
    %87 = math.exp %86 : vector<128x128xf32>
    %cst_33 = arith.constant dense<0.000000e+00> : vector<128xf32>
    %88 = vector.multi_reduction <add>, %87, %cst_33 [1] : vector<128x128xf32> to vector<128xf32>
    %89 = vector.shape_cast %88 : vector<128xf32> to vector<128x1xf32>
    %90 = tpu.reciprocal %89 {approx = true} : vector<128x1xf32> -> vector<128x1xf32>
    %91 = vector.broadcast %90 : vector<128x1xf32> to vector<128x128xf32>
    %92 = arith.mulf %87, %91 : vector<128x128xf32>
    %93 = arith.truncf %92 : vector<128x128xf32> to vector<128x128xbf16>
    %cst_34 = arith.constant dense<0.000000e+00> : vector<128x8xf32>
    %94 = tpu.matmul %93, %77, %cst_34 {dimension_numbers = #tpu.dot_dimension_numbers<[1], [0], [0], [1], [0, 0, 1, 1], [], []>} : vector<128x128xbf16>, vector<128x8xbf16>, vector<128x8xf32> -> vector<128x8xf32>
    %c0_35 = arith.constant 0 : index
    %c16 = arith.constant 16 : index
    %95 = vector.load %arg18[%c0_35, %c16] : memref<128x32xf32, #tpu.memory_space<vmem>>, vector<128x8xf32>
    tpu.vector_store %arg18[%c0_35, %c16], %94 {strides = array<i32>} : memref<128x32xf32, #tpu.memory_space<vmem>>, vector<128x8xf32>,
    %96 = vector.extract_strided_slice %29 {offsets = [0, 24], sizes = [128, 8], strides = [1, 1]} : vector<128x32xbf16> to vector<128x8xbf16>
    %97 = vector.extract_strided_slice %31 {offsets = [0, 24], sizes = [128, 8], strides = [1, 1]} : vector<128x32xbf16> to vector<128x8xbf16>
    %98 = vector.extract_strided_slice %32 {offsets = [0, 24], sizes = [128, 8], strides = [1, 1]} : vector<128x32xbf16> to vector<128x8xbf16>
    %cst_36 = arith.constant dense<0.000000e+00> : vector<128x128xf32>
    %99 = tpu.matmul %96, %97, %cst_36 {dimension_numbers = #tpu.dot_dimension_numbers<[1], [1], [0], [0], [0, 0, 1, 0], [], []>} : vector<128x8xbf16>, vector<128x8xbf16>, vector<128x128xf32> -> vector<128x128xf32>
    %cst_37 = arith.constant 0.353553385 : f32
    %100 = vector.broadcast %cst_37 : f32 to vector<128x128xf32>
    %101 = arith.mulf %99, %100 : vector<128x128xf32>
    %102 = vector.broadcast %9 : vector<1x128xf32> to vector<128x128xf32>
    %103 = arith.addf %101, %102 : vector<128x128xf32>
    %cst_38 = arith.constant dense<0xFF800000> : vector<128xf32>
    %104 = vector.multi_reduction <maximumf>, %103, %cst_38 [1] : vector<128x128xf32> to vector<128xf32>
    %105 = vector.shape_cast %104 : vector<128xf32> to vector<128x1xf32>
    %106 = vector.broadcast %105 : vector<128x1xf32> to vector<128x128xf32>
    %107 = arith.subf %103, %106 : vector<128x128xf32>
    %108 = math.exp %107 : vector<128x128xf32>
    %cst_39 = arith.constant dense<0.000000e+00> : vector<128xf32>
    %109 = vector.multi_reduction <add>, %108, %cst_39 [1] : vector<128x128xf32> to vector<128xf32>
    %110 = vector.shape_cast %109 : vector<128xf32> to vector<128x1xf32>
    %111 = tpu.reciprocal %110 {approx = true} : vector<128x1xf32> -> vector<128x1xf32>
    %112 = vector.broadcast %111 : vector<128x1xf32> to vector<128x128xf32>
    %113 = arith.mulf %108, %112 : vector<128x128xf32>
    %114 = arith.truncf %113 : vector<128x128xf32> to vector<128x128xbf16>
    %cst_40 = arith.constant dense<0.000000e+00> : vector<128x8xf32>
    %115 = tpu.matmul %114, %98, %cst_40 {dimension_numbers = #tpu.dot_dimension_numbers<[1], [0], [0], [1], [0, 0, 1, 1], [], []>} : vector<128x128xbf16>, vector<128x8xbf16>, vector<128x8xf32> -> vector<128x8xf32>
    %c0_41 = arith.constant 0 : index
    %c24 = arith.constant 24 : index
    %116 = vector.load %arg18[%c0_41, %c24] : memref<128x32xf32, #tpu.memory_space<vmem>>, vector<128x8xf32>
    tpu.vector_store %arg18[%c0_41, %c24], %115 {strides = array<i32>} : memref<128x32xf32, #tpu.memory_space<vmem>>, vector<128x8xf32>,
    %c0_42 = arith.constant 0 : index
    %c0_43 = arith.constant 0 : index
    %117 = vector.load %arg18[%c0_42, %c0_43] : memref<128x32xf32, #tpu.memory_space<vmem>>, vector<128x32xf32>
    %118 = arith.truncf %117 : vector<128x32xf32> to vector<128x32xbf16>
    %c0_44 = arith.constant 0 : index
    %c0_45 = arith.constant 0 : index
    %119 = vector.load %arg7[%c0_44, %c0_45] : memref<32x32xbf16, #tpu.memory_space<vmem>>, vector<32x32xbf16>
    %cst_46 = arith.constant dense<0.000000e+00> : vector<128x32xf32>
    %120 = tpu.matmul %118, %119, %cst_46 {dimension_numbers = #tpu.dot_dimension_numbers<[1], [0], [0], [1], [0, 0, 1, 1], [], []>} : vector<128x32xbf16>, vector<32x32xbf16>, vector<128x32xf32> -> vector<128x32xf32>
    %c0_47 = arith.constant 0 : index
    %c0_48 = arith.constant 0 : index
    %121 = vector.load %arg8[%c0_47, %c0_48] : memref<1x32xf32, #tpu.memory_space<vmem>>, vector<1x32xf32>
    %122 = vector.broadcast %121 : vector<1x32xf32> to vector<128x32xf32>
    %123 = arith.addf %120, %122 : vector<128x32xf32>
    %124 = arith.addf %1, %123 : vector<128x32xf32>
    %cst_49 = arith.constant dense<0.000000e+00> : vector<128xf32>
    %125 = vector.multi_reduction <add>, %124, %cst_49 [1] : vector<128x32xf32> to vector<128xf32>
    %126 = vector.shape_cast %125 : vector<128xf32> to vector<128x1xf32>
    %cst_50 = arith.constant 3.200000e+01 : f32
    %127 = vector.broadcast %cst_50 : f32 to vector<128x1xf32>
    %128 = arith.divf %126, %127 : vector<128x1xf32>
    %129 = vector.broadcast %128 : vector<128x1xf32> to vector<128x32xf32>
    %130 = arith.subf %124, %129 : vector<128x32xf32>
    %131 = arith.mulf %130, %130 : vector<128x32xf32>
    %cst_51 = arith.constant dense<0.000000e+00> : vector<128xf32>
    %132 = vector.multi_reduction <add>, %131, %cst_51 [1] : vector<128x32xf32> to vector<128xf32>
    %133 = vector.shape_cast %132 : vector<128xf32> to vector<128x1xf32>
    %cst_52 = arith.constant 3.200000e+01 : f32
    %134 = vector.broadcast %cst_52 : f32 to vector<128x1xf32>
    %135 = arith.divf %133, %134 : vector<128x1xf32>
    %136 = vector.broadcast %128 : vector<128x1xf32> to vector<128x32xf32>
    %137 = arith.subf %124, %136 : vector<128x32xf32>
    %cst_53 = arith.constant 9.99999974E-6 : f32
    %138 = vector.broadcast %cst_53 : f32 to vector<128x1xf32>
    %139 = arith.addf %135, %138 : vector<128x1xf32>
    %140 = math.rsqrt %139 : vector<128x1xf32>
    %141 = vector.broadcast %140 : vector<128x1xf32> to vector<128x32xf32>
    %142 = arith.mulf %137, %141 : vector<128x32xf32>
    %c0_54 = arith.constant 0 : index
    %c0_55 = arith.constant 0 : index
    %143 = vector.load %arg13[%c0_54, %c0_55] : memref<1x32xf32, #tpu.memory_space<vmem>>, vector<1x32xf32>
    %144 = vector.broadcast %143 : vector<1x32xf32> to vector<128x32xf32>
    %145 = arith.mulf %142, %144 : vector<128x32xf32>
    %c0_56 = arith.constant 0 : index
    %c0_57 = arith.constant 0 : index
    %146 = vector.load %arg14[%c0_56, %c0_57] : memref<1x32xf32, #tpu.memory_space<vmem>>, vector<1x32xf32>
    %147 = vector.broadcast %146 : vector<1x32xf32> to vector<128x32xf32>
    %148 = arith.addf %145, %147 : vector<128x32xf32>
    %149 = arith.truncf %148 : vector<128x32xf32> to vector<128x32xbf16>
    %c0_58 = arith.constant 0 : index
    %c0_59 = arith.constant 0 : index
    %150 = vector.load %arg9[%c0_58, %c0_59] : memref<32x64xbf16, #tpu.memory_space<vmem>>, vector<32x64xbf16>
    %cst_60 = arith.constant dense<0.000000e+00> : vector<128x64xf32>
    %151 = tpu.matmul %149, %150, %cst_60 {dimension_numbers = #tpu.dot_dimension_numbers<[1], [0], [0], [1], [0, 0, 1, 1], [], []>} : vector<128x32xbf16>, vector<32x64xbf16>, vector<128x64xf32> -> vector<128x64xf32>
    %c0_61 = arith.constant 0 : index
    %c0_62 = arith.constant 0 : index
    %152 = vector.load %arg10[%c0_61, %c0_62] : memref<1x64xf32, #tpu.memory_space<vmem>>, vector<1x64xf32>
    %153 = vector.broadcast %152 : vector<1x64xf32> to vector<128x64xf32>
    %154 = arith.addf %151, %153 : vector<128x64xf32>
    %cst_63 = arith.constant 0.000000e+00 : f32
    %155 = vector.broadcast %cst_63 : f32 to vector<128x64xf32>
    %156 = arith.maximumf %154, %155 : vector<128x64xf32>
    %157 = arith.truncf %156 : vector<128x64xf32> to vector<128x64xbf16>
    %c0_64 = arith.constant 0 : index
    %c0_65 = arith.constant 0 : index
    %158 = vector.load %arg11[%c0_64, %c0_65] : memref<64x32xbf16, #tpu.memory_space<vmem>>, vector<64x32xbf16>
    %cst_66 = arith.constant dense<0.000000e+00> : vector<128x32xf32>
    %159 = tpu.matmul %157, %158, %cst_66 {dimension_numbers = #tpu.dot_dimension_numbers<[1], [0], [0], [1], [0, 0, 1, 1], [], []>} : vector<128x64xbf16>, vector<64x32xbf16>, vector<128x32xf32> -> vector<128x32xf32>
    %c0_67 = arith.constant 0 : index
    %c0_68 = arith.constant 0 : index
    %160 = vector.load %arg12[%c0_67, %c0_68] : memref<1x32xf32, #tpu.memory_space<vmem>>, vector<1x32xf32>
    %161 = vector.broadcast %160 : vector<1x32xf32> to vector<128x32xf32>
    %162 = arith.addf %159, %161 : vector<128x32xf32>
    %163 = arith.addf %148, %162 : vector<128x32xf32>
    %cst_69 = arith.constant dense<0.000000e+00> : vector<128xf32>
    %164 = vector.multi_reduction <add>, %163, %cst_69 [1] : vector<128x32xf32> to vector<128xf32>
    %165 = vector.shape_cast %164 : vector<128xf32> to vector<128x1xf32>
    %cst_70 = arith.constant 3.200000e+01 : f32
    %166 = vector.broadcast %cst_70 : f32 to vector<128x1xf32>
    %167 = arith.divf %165, %166 : vector<128x1xf32>
    %168 = vector.broadcast %167 : vector<128x1xf32> to vector<128x32xf32>
    %169 = arith.subf %163, %168 : vector<128x32xf32>
    %170 = arith.mulf %169, %169 : vector<128x32xf32>
    %cst_71 = arith.constant dense<0.000000e+00> : vector<128xf32>
    %171 = vector.multi_reduction <add>, %170, %cst_71 [1] : vector<128x32xf32> to vector<128xf32>
    %172 = vector.shape_cast %171 : vector<128xf32> to vector<128x1xf32>
    %cst_72 = arith.constant 3.200000e+01 : f32
    %173 = vector.broadcast %cst_72 : f32 to vector<128x1xf32>
    %174 = arith.divf %172, %173 : vector<128x1xf32>
    %175 = vector.broadcast %167 : vector<128x1xf32> to vector<128x32xf32>
    %176 = arith.subf %163, %175 : vector<128x32xf32>
    %cst_73 = arith.constant 9.99999974E-6 : f32
    %177 = vector.broadcast %cst_73 : f32 to vector<128x1xf32>
    %178 = arith.addf %174, %177 : vector<128x1xf32>
    %179 = math.rsqrt %178 : vector<128x1xf32>
    %180 = vector.broadcast %179 : vector<128x1xf32> to vector<128x32xf32>
    %181 = arith.mulf %176, %180 : vector<128x32xf32>
    %c0_74 = arith.constant 0 : index
    %c0_75 = arith.constant 0 : index
    %182 = vector.load %arg15[%c0_74, %c0_75] : memref<1x32xf32, #tpu.memory_space<vmem>>, vector<1x32xf32>
    %183 = vector.broadcast %182 : vector<1x32xf32> to vector<128x32xf32>
    %184 = arith.mulf %181, %183 : vector<128x32xf32>
    %c0_76 = arith.constant 0 : index
    %c0_77 = arith.constant 0 : index
    %185 = vector.load %arg16[%c0_76, %c0_77] : memref<1x32xf32, #tpu.memory_space<vmem>>, vector<1x32xf32>
    %186 = vector.broadcast %185 : vector<1x32xf32> to vector<128x32xf32>
    %187 = arith.addf %184, %186 : vector<128x32xf32>
    %188 = vector.broadcast %14 : vector<128x1xf32> to vector<128x32xf32>
    %189 = arith.mulf %187, %188 : vector<128x32xf32>
    %190 = arith.addf %189, %3 : vector<128x32xf32>
    %191 = arith.truncf %190 : vector<128x32xf32> to vector<128x32xbf16>
    %c0_78 = arith.constant 0 : index
    %c0_79 = arith.constant 0 : index
    %192 = vector.load %arg3[%c0_78, %c0_79] : memref<32x64xbf16, #tpu.memory_space<vmem>>, vector<32x64xbf16>
    %cst_80 = arith.constant dense<0.000000e+00> : vector<128x64xf32>
    %193 = tpu.matmul %191, %192, %cst_80 {dimension_numbers = #tpu.dot_dimension_numbers<[1], [0], [0], [1], [0, 0, 1, 1], [], []>} : vector<128x32xbf16>, vector<32x64xbf16>, vector<128x64xf32> -> vector<128x64xf32>
    %c0_81 = arith.constant 0 : index
    %c0_82 = arith.constant 0 : index
    %194 = vector.load %arg4[%c0_81, %c0_82] : memref<1x64xf32, #tpu.memory_space<vmem>>, vector<1x64xf32>
    %195 = vector.broadcast %194 : vector<1x64xf32> to vector<128x64xf32>
    %196 = arith.addf %193, %195 : vector<128x64xf32>
    %197 = arith.truncf %189 : vector<128x32xf32> to vector<128x32xbf16>
    %c0_83 = arith.constant 0 : index
    %c0_84 = arith.constant 0 : index
    %198 = vector.load %arg5[%c0_83, %c0_84] : memref<32x32xbf16, #tpu.memory_space<vmem>>, vector<32x32xbf16>
    %cst_85 = arith.constant dense<0.000000e+00> : vector<128x32xf32>
    %199 = tpu.matmul %197, %198, %cst_85 {dimension_numbers = #tpu.dot_dimension_numbers<[1], [0], [0], [1], [0, 0, 1, 1], [], []>} : vector<128x32xbf16>, vector<32x32xbf16>, vector<128x32xf32> -> vector<128x32xf32>
    %c0_86 = arith.constant 0 : index
    %c0_87 = arith.constant 0 : index
    %200 = vector.load %arg6[%c0_86, %c0_87] : memref<1x32xf32, #tpu.memory_space<vmem>>, vector<1x32xf32>
    %201 = vector.broadcast %200 : vector<1x32xf32> to vector<128x32xf32>
    %202 = arith.addf %199, %201 : vector<128x32xf32>
    %203 = vector.extract_strided_slice %196 {offsets = [0, 0], sizes = [128, 32], strides = [1, 1]} : vector<128x64xf32> to vector<128x32xf32>
    %204 = arith.truncf %203 : vector<128x32xf32> to vector<128x32xbf16>
    %205 = vector.extract_strided_slice %196 {offsets = [0, 32], sizes = [128, 32], strides = [1, 1]} : vector<128x64xf32> to vector<128x32xf32>
    %206 = arith.truncf %205 : vector<128x32xf32> to vector<128x32xbf16>
    %207 = arith.truncf %202 : vector<128x32xf32> to vector<128x32xbf16>
    %208 = vector.extract_strided_slice %204 {offsets = [0, 0], sizes = [128, 8], strides = [1, 1]} : vector<128x32xbf16> to vector<128x8xbf16>
    %209 = vector.extract_strided_slice %206 {offsets = [0, 0], sizes = [128, 8], strides = [1, 1]} : vector<128x32xbf16> to vector<128x8xbf16>
    %210 = vector.extract_strided_slice %207 {offsets = [0, 0], sizes = [128, 8], strides = [1, 1]} : vector<128x32xbf16> to vector<128x8xbf16>
    %cst_88 = arith.constant dense<0.000000e+00> : vector<128x128xf32>
    %211 = tpu.matmul %208, %209, %cst_88 {dimension_numbers = #tpu.dot_dimension_numbers<[1], [1], [0], [0], [0, 0, 1, 0], [], []>} : vector<128x8xbf16>, vector<128x8xbf16>, vector<128x128xf32> -> vector<128x128xf32>
    %cst_89 = arith.constant 0.353553385 : f32
    %212 = vector.broadcast %cst_89 : f32 to vector<128x128xf32>
    %213 = arith.mulf %211, %212 : vector<128x128xf32>
    %214 = vector.broadcast %9 : vector<1x128xf32> to vector<128x128xf32>
    %215 = arith.addf %213, %214 : vector<128x128xf32>
    %cst_90 = arith.constant dense<0xFF800000> : vector<128xf32>
    %216 = vector.multi_reduction <maximumf>, %215, %cst_90 [1] : vector<128x128xf32> to vector<128xf32>
    %217 = vector.shape_cast %216 : vector<128xf32> to vector<128x1xf32>
    %218 = vector.broadcast %217 : vector<128x1xf32> to vector<128x128xf32>
    %219 = arith.subf %215, %218 : vector<128x128xf32>
    %220 = math.exp %219 : vector<128x128xf32>
    %cst_91 = arith.constant dense<0.000000e+00> : vector<128xf32>
    %221 = vector.multi_reduction <add>, %220, %cst_91 [1] : vector<128x128xf32> to vector<128xf32>
    %222 = vector.shape_cast %221 : vector<128xf32> to vector<128x1xf32>
    %223 = tpu.reciprocal %222 {approx = true} : vector<128x1xf32> -> vector<128x1xf32>
    %224 = vector.broadcast %223 : vector<128x1xf32> to vector<128x128xf32>
    %225 = arith.mulf %220, %224 : vector<128x128xf32>
    %226 = arith.truncf %225 : vector<128x128xf32> to vector<128x128xbf16>
    %cst_92 = arith.constant dense<0.000000e+00> : vector<128x8xf32>
    %227 = tpu.matmul %226, %210, %cst_92 {dimension_numbers = #tpu.dot_dimension_numbers<[1], [0], [0], [1], [0, 0, 1, 1], [], []>} : vector<128x128xbf16>, vector<128x8xbf16>, vector<128x8xf32> -> vector<128x8xf32>
    %c0_93 = arith.constant 0 : index
    %c0_94 = arith.constant 0 : index
    %228 = vector.load %arg18[%c0_93, %c0_94] : memref<128x32xf32, #tpu.memory_space<vmem>>, vector<128x8xf32>
    tpu.vector_store %arg18[%c0_93, %c0_94], %227 {strides = array<i32>} : memref<128x32xf32, #tpu.memory_space<vmem>>, vector<128x8xf32>,
    %229 = vector.extract_strided_slice %204 {offsets = [0, 8], sizes = [128, 8], strides = [1, 1]} : vector<128x32xbf16> to vector<128x8xbf16>
    %230 = vector.extract_strided_slice %206 {offsets = [0, 8], sizes = [128, 8], strides = [1, 1]} : vector<128x32xbf16> to vector<128x8xbf16>
    %231 = vector.extract_strided_slice %207 {offsets = [0, 8], sizes = [128, 8], strides = [1, 1]} : vector<128x32xbf16> to vector<128x8xbf16>
    %cst_95 = arith.constant dense<0.000000e+00> : vector<128x128xf32>
    %232 = tpu.matmul %229, %230, %cst_95 {dimension_numbers = #tpu.dot_dimension_numbers<[1], [1], [0], [0], [0, 0, 1, 0], [], []>} : vector<128x8xbf16>, vector<128x8xbf16>, vector<128x128xf32> -> vector<128x128xf32>
    %cst_96 = arith.constant 0.353553385 : f32
    %233 = vector.broadcast %cst_96 : f32 to vector<128x128xf32>
    %234 = arith.mulf %232, %233 : vector<128x128xf32>
    %235 = vector.broadcast %9 : vector<1x128xf32> to vector<128x128xf32>
    %236 = arith.addf %234, %235 : vector<128x128xf32>
    %cst_97 = arith.constant dense<0xFF800000> : vector<128xf32>
    %237 = vector.multi_reduction <maximumf>, %236, %cst_97 [1] : vector<128x128xf32> to vector<128xf32>
    %238 = vector.shape_cast %237 : vector<128xf32> to vector<128x1xf32>
    %239 = vector.broadcast %238 : vector<128x1xf32> to vector<128x128xf32>
    %240 = arith.subf %236, %239 : vector<128x128xf32>
    %241 = math.exp %240 : vector<128x128xf32>
    %cst_98 = arith.constant dense<0.000000e+00> : vector<128xf32>
    %242 = vector.multi_reduction <add>, %241, %cst_98 [1] : vector<128x128xf32> to vector<128xf32>
    %243 = vector.shape_cast %242 : vector<128xf32> to vector<128x1xf32>
    %244 = tpu.reciprocal %243 {approx = true} : vector<128x1xf32> -> vector<128x1xf32>
    %245 = vector.broadcast %244 : vector<128x1xf32> to vector<128x128xf32>
    %246 = arith.mulf %241, %245 : vector<128x128xf32>
    %247 = arith.truncf %246 : vector<128x128xf32> to vector<128x128xbf16>
    %cst_99 = arith.constant dense<0.000000e+00> : vector<128x8xf32>
    %248 = tpu.matmul %247, %231, %cst_99 {dimension_numbers = #tpu.dot_dimension_numbers<[1], [0], [0], [1], [0, 0, 1, 1], [], []>} : vector<128x128xbf16>, vector<128x8xbf16>, vector<128x8xf32> -> vector<128x8xf32>
    %c0_100 = arith.constant 0 : index
    %c8_101 = arith.constant 8 : index
    %249 = vector.load %arg18[%c0_100, %c8_101] : memref<128x32xf32, #tpu.memory_space<vmem>>, vector<128x8xf32>
    tpu.vector_store %arg18[%c0_100, %c8_101], %248 {strides = array<i32>} : memref<128x32xf32, #tpu.memory_space<vmem>>, vector<128x8xf32>,
    %250 = vector.extract_strided_slice %204 {offsets = [0, 16], sizes = [128, 8], strides = [1, 1]} : vector<128x32xbf16> to vector<128x8xbf16>
    %251 = vector.extract_strided_slice %206 {offsets = [0, 16], sizes = [128, 8], strides = [1, 1]} : vector<128x32xbf16> to vector<128x8xbf16>
    %252 = vector.extract_strided_slice %207 {offsets = [0, 16], sizes = [128, 8], strides = [1, 1]} : vector<128x32xbf16> to vector<128x8xbf16>
    %cst_102 = arith.constant dense<0.000000e+00> : vector<128x128xf32>
    %253 = tpu.matmul %250, %251, %cst_102 {dimension_numbers = #tpu.dot_dimension_numbers<[1], [1], [0], [0], [0, 0, 1, 0], [], []>} : vector<128x8xbf16>, vector<128x8xbf16>, vector<128x128xf32> -> vector<128x128xf32>
    %cst_103 = arith.constant 0.353553385 : f32
    %254 = vector.broadcast %cst_103 : f32 to vector<128x128xf32>
    %255 = arith.mulf %253, %254 : vector<128x128xf32>
    %256 = vector.broadcast %9 : vector<1x128xf32> to vector<128x128xf32>
    %257 = arith.addf %255, %256 : vector<128x128xf32>
    %cst_104 = arith.constant dense<0xFF800000> : vector<128xf32>
    %258 = vector.multi_reduction <maximumf>, %257, %cst_104 [1] : vector<128x128xf32> to vector<128xf32>
    %259 = vector.shape_cast %258 : vector<128xf32> to vector<128x1xf32>
    %260 = vector.broadcast %259 : vector<128x1xf32> to vector<128x128xf32>
    %261 = arith.subf %257, %260 : vector<128x128xf32>
    %262 = math.exp %261 : vector<128x128xf32>
    %cst_105 = arith.constant dense<0.000000e+00> : vector<128xf32>
    %263 = vector.multi_reduction <add>, %262, %cst_105 [1] : vector<128x128xf32> to vector<128xf32>
    %264 = vector.shape_cast %263 : vector<128xf32> to vector<128x1xf32>
    %265 = tpu.reciprocal %264 {approx = true} : vector<128x1xf32> -> vector<128x1xf32>
    %266 = vector.broadcast %265 : vector<128x1xf32> to vector<128x128xf32>
    %267 = arith.mulf %262, %266 : vector<128x128xf32>
    %268 = arith.truncf %267 : vector<128x128xf32> to vector<128x128xbf16>
    %cst_106 = arith.constant dense<0.000000e+00> : vector<128x8xf32>
    %269 = tpu.matmul %268, %252, %cst_106 {dimension_numbers = #tpu.dot_dimension_numbers<[1], [0], [0], [1], [0, 0, 1, 1], [], []>} : vector<128x128xbf16>, vector<128x8xbf16>, vector<128x8xf32> -> vector<128x8xf32>
    %c0_107 = arith.constant 0 : index
    %c16_108 = arith.constant 16 : index
    %270 = vector.load %arg18[%c0_107, %c16_108] : memref<128x32xf32, #tpu.memory_space<vmem>>, vector<128x8xf32>
    tpu.vector_store %arg18[%c0_107, %c16_108], %269 {strides = array<i32>} : memref<128x32xf32, #tpu.memory_space<vmem>>, vector<128x8xf32>,
    %271 = vector.extract_strided_slice %204 {offsets = [0, 24], sizes = [128, 8], strides = [1, 1]} : vector<128x32xbf16> to vector<128x8xbf16>
    %272 = vector.extract_strided_slice %206 {offsets = [0, 24], sizes = [128, 8], strides = [1, 1]} : vector<128x32xbf16> to vector<128x8xbf16>
    %273 = vector.extract_strided_slice %207 {offsets = [0, 24], sizes = [128, 8], strides = [1, 1]} : vector<128x32xbf16> to vector<128x8xbf16>
    %cst_109 = arith.constant dense<0.000000e+00> : vector<128x128xf32>
    %274 = tpu.matmul %271, %272, %cst_109 {dimension_numbers = #tpu.dot_dimension_numbers<[1], [1], [0], [0], [0, 0, 1, 0], [], []>} : vector<128x8xbf16>, vector<128x8xbf16>, vector<128x128xf32> -> vector<128x128xf32>
    %cst_110 = arith.constant 0.353553385 : f32
    %275 = vector.broadcast %cst_110 : f32 to vector<128x128xf32>
    %276 = arith.mulf %274, %275 : vector<128x128xf32>
    %277 = vector.broadcast %9 : vector<1x128xf32> to vector<128x128xf32>
    %278 = arith.addf %276, %277 : vector<128x128xf32>
    %cst_111 = arith.constant dense<0xFF800000> : vector<128xf32>
    %279 = vector.multi_reduction <maximumf>, %278, %cst_111 [1] : vector<128x128xf32> to vector<128xf32>
    %280 = vector.shape_cast %279 : vector<128xf32> to vector<128x1xf32>
    %281 = vector.broadcast %280 : vector<128x1xf32> to vector<128x128xf32>
    %282 = arith.subf %278, %281 : vector<128x128xf32>
    %283 = math.exp %282 : vector<128x128xf32>
    %cst_112 = arith.constant dense<0.000000e+00> : vector<128xf32>
    %284 = vector.multi_reduction <add>, %283, %cst_112 [1] : vector<128x128xf32> to vector<128xf32>
    %285 = vector.shape_cast %284 : vector<128xf32> to vector<128x1xf32>
    %286 = tpu.reciprocal %285 {approx = true} : vector<128x1xf32> -> vector<128x1xf32>
    %287 = vector.broadcast %286 : vector<128x1xf32> to vector<128x128xf32>
    %288 = arith.mulf %283, %287 : vector<128x128xf32>
    %289 = arith.truncf %288 : vector<128x128xf32> to vector<128x128xbf16>
    %cst_113 = arith.constant dense<0.000000e+00> : vector<128x8xf32>
    %290 = tpu.matmul %289, %273, %cst_113 {dimension_numbers = #tpu.dot_dimension_numbers<[1], [0], [0], [1], [0, 0, 1, 1], [], []>} : vector<128x128xbf16>, vector<128x8xbf16>, vector<128x8xf32> -> vector<128x8xf32>
    %c0_114 = arith.constant 0 : index
    %c24_115 = arith.constant 24 : index
    %291 = vector.load %arg18[%c0_114, %c24_115] : memref<128x32xf32, #tpu.memory_space<vmem>>, vector<128x8xf32>
    tpu.vector_store %arg18[%c0_114, %c24_115], %290 {strides = array<i32>} : memref<128x32xf32, #tpu.memory_space<vmem>>, vector<128x8xf32>,
    %c0_116 = arith.constant 0 : index
    %c0_117 = arith.constant 0 : index
    %292 = vector.load %arg18[%c0_116, %c0_117] : memref<128x32xf32, #tpu.memory_space<vmem>>, vector<128x32xf32>
    %293 = arith.truncf %292 : vector<128x32xf32> to vector<128x32xbf16>
    %c0_118 = arith.constant 0 : index
    %c0_119 = arith.constant 0 : index
    %294 = vector.load %arg7[%c0_118, %c0_119] : memref<32x32xbf16, #tpu.memory_space<vmem>>, vector<32x32xbf16>
    %cst_120 = arith.constant dense<0.000000e+00> : vector<128x32xf32>
    %295 = tpu.matmul %293, %294, %cst_120 {dimension_numbers = #tpu.dot_dimension_numbers<[1], [0], [0], [1], [0, 0, 1, 1], [], []>} : vector<128x32xbf16>, vector<32x32xbf16>, vector<128x32xf32> -> vector<128x32xf32>
    %c0_121 = arith.constant 0 : index
    %c0_122 = arith.constant 0 : index
    %296 = vector.load %arg8[%c0_121, %c0_122] : memref<1x32xf32, #tpu.memory_space<vmem>>, vector<1x32xf32>
    %297 = vector.broadcast %296 : vector<1x32xf32> to vector<128x32xf32>
    %298 = arith.addf %295, %297 : vector<128x32xf32>
    %299 = arith.addf %189, %298 : vector<128x32xf32>
    %cst_123 = arith.constant dense<0.000000e+00> : vector<128xf32>
    %300 = vector.multi_reduction <add>, %299, %cst_123 [1] : vector<128x32xf32> to vector<128xf32>
    %301 = vector.shape_cast %300 : vector<128xf32> to vector<128x1xf32>
    %cst_124 = arith.constant 3.200000e+01 : f32
    %302 = vector.broadcast %cst_124 : f32 to vector<128x1xf32>
    %303 = arith.divf %301, %302 : vector<128x1xf32>
    %304 = vector.broadcast %303 : vector<128x1xf32> to vector<128x32xf32>
    %305 = arith.subf %299, %304 : vector<128x32xf32>
    %306 = arith.mulf %305, %305 : vector<128x32xf32>
    %cst_125 = arith.constant dense<0.000000e+00> : vector<128xf32>
    %307 = vector.multi_reduction <add>, %306, %cst_125 [1] : vector<128x32xf32> to vector<128xf32>
    %308 = vector.shape_cast %307 : vector<128xf32> to vector<128x1xf32>
    %cst_126 = arith.constant 3.200000e+01 : f32
    %309 = vector.broadcast %cst_126 : f32 to vector<128x1xf32>
    %310 = arith.divf %308, %309 : vector<128x1xf32>
    %311 = vector.broadcast %303 : vector<128x1xf32> to vector<128x32xf32>
    %312 = arith.subf %299, %311 : vector<128x32xf32>
    %cst_127 = arith.constant 9.99999974E-6 : f32
    %313 = vector.broadcast %cst_127 : f32 to vector<128x1xf32>
    %314 = arith.addf %310, %313 : vector<128x1xf32>
    %315 = math.rsqrt %314 : vector<128x1xf32>
    %316 = vector.broadcast %315 : vector<128x1xf32> to vector<128x32xf32>
    %317 = arith.mulf %312, %316 : vector<128x32xf32>
    %c0_128 = arith.constant 0 : index
    %c0_129 = arith.constant 0 : index
    %318 = vector.load %arg13[%c0_128, %c0_129] : memref<1x32xf32, #tpu.memory_space<vmem>>, vector<1x32xf32>
    %319 = vector.broadcast %318 : vector<1x32xf32> to vector<128x32xf32>
    %320 = arith.mulf %317, %319 : vector<128x32xf32>
    %c0_130 = arith.constant 0 : index
    %c0_131 = arith.constant 0 : index
    %321 = vector.load %arg14[%c0_130, %c0_131] : memref<1x32xf32, #tpu.memory_space<vmem>>, vector<1x32xf32>
    %322 = vector.broadcast %321 : vector<1x32xf32> to vector<128x32xf32>
    %323 = arith.addf %320, %322 : vector<128x32xf32>
    %324 = arith.truncf %323 : vector<128x32xf32> to vector<128x32xbf16>
    %c0_132 = arith.constant 0 : index
    %c0_133 = arith.constant 0 : index
    %325 = vector.load %arg9[%c0_132, %c0_133] : memref<32x64xbf16, #tpu.memory_space<vmem>>, vector<32x64xbf16>
    %cst_134 = arith.constant dense<0.000000e+00> : vector<128x64xf32>
    %326 = tpu.matmul %324, %325, %cst_134 {dimension_numbers = #tpu.dot_dimension_numbers<[1], [0], [0], [1], [0, 0, 1, 1], [], []>} : vector<128x32xbf16>, vector<32x64xbf16>, vector<128x64xf32> -> vector<128x64xf32>
    %c0_135 = arith.constant 0 : index
    %c0_136 = arith.constant 0 : index
    %327 = vector.load %arg10[%c0_135, %c0_136] : memref<1x64xf32, #tpu.memory_space<vmem>>, vector<1x64xf32>
    %328 = vector.broadcast %327 : vector<1x64xf32> to vector<128x64xf32>
    %329 = arith.addf %326, %328 : vector<128x64xf32>
    %cst_137 = arith.constant 0.000000e+00 : f32
    %330 = vector.broadcast %cst_137 : f32 to vector<128x64xf32>
    %331 = arith.maximumf %329, %330 : vector<128x64xf32>
    %332 = arith.truncf %331 : vector<128x64xf32> to vector<128x64xbf16>
    %c0_138 = arith.constant 0 : index
    %c0_139 = arith.constant 0 : index
    %333 = vector.load %arg11[%c0_138, %c0_139] : memref<64x32xbf16, #tpu.memory_space<vmem>>, vector<64x32xbf16>
    %cst_140 = arith.constant dense<0.000000e+00> : vector<128x32xf32>
    %334 = tpu.matmul %332, %333, %cst_140 {dimension_numbers = #tpu.dot_dimension_numbers<[1], [0], [0], [1], [0, 0, 1, 1], [], []>} : vector<128x64xbf16>, vector<64x32xbf16>, vector<128x32xf32> -> vector<128x32xf32>
    %c0_141 = arith.constant 0 : index
    %c0_142 = arith.constant 0 : index
    %335 = vector.load %arg12[%c0_141, %c0_142] : memref<1x32xf32, #tpu.memory_space<vmem>>, vector<1x32xf32>
    %336 = vector.broadcast %335 : vector<1x32xf32> to vector<128x32xf32>
    %337 = arith.addf %334, %336 : vector<128x32xf32>
    %338 = arith.addf %323, %337 : vector<128x32xf32>
    %cst_143 = arith.constant dense<0.000000e+00> : vector<128xf32>
    %339 = vector.multi_reduction <add>, %338, %cst_143 [1] : vector<128x32xf32> to vector<128xf32>
    %340 = vector.shape_cast %339 : vector<128xf32> to vector<128x1xf32>
    %cst_144 = arith.constant 3.200000e+01 : f32
    %341 = vector.broadcast %cst_144 : f32 to vector<128x1xf32>
    %342 = arith.divf %340, %341 : vector<128x1xf32>
    %343 = vector.broadcast %342 : vector<128x1xf32> to vector<128x32xf32>
    %344 = arith.subf %338, %343 : vector<128x32xf32>
    %345 = arith.mulf %344, %344 : vector<128x32xf32>
    %cst_145 = arith.constant dense<0.000000e+00> : vector<128xf32>
    %346 = vector.multi_reduction <add>, %345, %cst_145 [1] : vector<128x32xf32> to vector<128xf32>
    %347 = vector.shape_cast %346 : vector<128xf32> to vector<128x1xf32>
    %cst_146 = arith.constant 3.200000e+01 : f32
    %348 = vector.broadcast %cst_146 : f32 to vector<128x1xf32>
    %349 = arith.divf %347, %348 : vector<128x1xf32>
    %350 = vector.broadcast %342 : vector<128x1xf32> to vector<128x32xf32>
    %351 = arith.subf %338, %350 : vector<128x32xf32>
    %cst_147 = arith.constant 9.99999974E-6 : f32
    %352 = vector.broadcast %cst_147 : f32 to vector<128x1xf32>
    %353 = arith.addf %349, %352 : vector<128x1xf32>
    %354 = math.rsqrt %353 : vector<128x1xf32>
    %355 = vector.broadcast %354 : vector<128x1xf32> to vector<128x32xf32>
    %356 = arith.mulf %351, %355 : vector<128x32xf32>
    %c0_148 = arith.constant 0 : index
    %c0_149 = arith.constant 0 : index
    %357 = vector.load %arg15[%c0_148, %c0_149] : memref<1x32xf32, #tpu.memory_space<vmem>>, vector<1x32xf32>
    %358 = vector.broadcast %357 : vector<1x32xf32> to vector<128x32xf32>
    %359 = arith.mulf %356, %358 : vector<128x32xf32>
    %c0_150 = arith.constant 0 : index
    %c0_151 = arith.constant 0 : index
    %360 = vector.load %arg16[%c0_150, %c0_151] : memref<1x32xf32, #tpu.memory_space<vmem>>, vector<1x32xf32>
    %361 = vector.broadcast %360 : vector<1x32xf32> to vector<128x32xf32>
    %362 = arith.addf %359, %361 : vector<128x32xf32>
    %363 = vector.broadcast %14 : vector<128x1xf32> to vector<128x32xf32>
    %364 = arith.mulf %362, %363 : vector<128x32xf32>
    %c0_152 = arith.constant 0 : index
    %c0_153 = arith.constant 0 : index
    %c0_154 = arith.constant 0 : index
    %365 = vector.load %arg17[%c0_152, %c0_153, %c0_154] : memref<1x128x32xf32, #tpu.memory_space<vmem>>, vector<1x128x32xf32>
    %366 = vector.shape_cast %365 : vector<1x128x32xf32> to vector<128x32xf32>
    %367 = vector.shape_cast %364 : vector<128x32xf32> to vector<1x128x32xf32>
    tpu.vector_store %arg17[%c0_152, %c0_153, %c0_154], %367 {strides = array<i32>} : memref<1x128x32xf32, #tpu.memory_space<vmem>>, vector<1x128x32xf32>,
    return
  }
  func.func @transform_0(%arg0: i32) -> (i32, i32, i32) {
    %c0_i32 = arith.constant 0 : i32
    %c0_i32_0 = arith.constant 0 : i32
    %c0_i32_1 = arith.constant 0 : i32
    return %arg0, %c0_i32, %c0_i32_0 : i32, i32, i32
  }
  func.func @transform_1(%arg0: i32) -> (i32, i32, i32) {
    %c0_i32 = arith.constant 0 : i32
    %c0_i32_0 = arith.constant 0 : i32
    %c0_i32_1 = arith.constant 0 : i32
    return %arg0, %c0_i32, %c0_i32_0 : i32, i32, i32
  }
  func.func @transform_2(%arg0: i32) -> (i32, i32) {
    %c0_i32 = arith.constant 0 : i32
    %c0_i32_0 = arith.constant 0 : i32
    %c0_i32_1 = arith.constant 0 : i32
    return %c0_i32, %c0_i32_0 : i32, i32
  }
  func.func @transform_3(%arg0: i32) -> (i32, i32) {
    %c0_i32 = arith.constant 0 : i32
    %c0_i32_0 = arith.constant 0 : i32
    %c0_i32_1 = arith.constant 0 : i32
    return %c0_i32, %c0_i32_0 : i32, i32
  }
  func.func @transform_4(%arg0: i32) -> (i32, i32) {
    %c0_i32 = arith.constant 0 : i32
    %c0_i32_0 = arith.constant 0 : i32
    %c0_i32_1 = arith.constant 0 : i32
    return %c0_i32, %c0_i32_0 : i32, i32
  }
  func.func @transform_5(%arg0: i32) -> (i32, i32) {
    %c0_i32 = arith.constant 0 : i32
    %c0_i32_0 = arith.constant 0 : i32
    %c0_i32_1 = arith.constant 0 : i32
    return %c0_i32, %c0_i32_0 : i32, i32
  }
  func.func @transform_6(%arg0: i32) -> (i32, i32) {
    %c0_i32 = arith.constant 0 : i32
    %c0_i32_0 = arith.constant 0 : i32
    %c0_i32_1 = arith.constant 0 : i32
    return %c0_i32, %c0_i32_0 : i32, i32
  }
  func.func @transform_7(%arg0: i32) -> (i32, i32) {
    %c0_i32 = arith.constant 0 : i32
    %c0_i32_0 = arith.constant 0 : i32
    %c0_i32_1 = arith.constant 0 : i32
    return %c0_i32, %c0_i32_0 : i32, i32
  }
  func.func @transform_8(%arg0: i32) -> (i32, i32) {
    %c0_i32 = arith.constant 0 : i32
    %c0_i32_0 = arith.constant 0 : i32
    %c0_i32_1 = arith.constant 0 : i32
    return %c0_i32, %c0_i32_0 : i32, i32
  }
  func.func @transform_9(%arg0: i32) -> (i32, i32) {
    %c0_i32 = arith.constant 0 : i32
    %c0_i32_0 = arith.constant 0 : i32
    %c0_i32_1 = arith.constant 0 : i32
    return %c0_i32, %c0_i32_0 : i32, i32
  }
  func.func @transform_10(%arg0: i32) -> (i32, i32) {
    %c0_i32 = arith.constant 0 : i32
    %c0_i32_0 = arith.constant 0 : i32
    %c0_i32_1 = arith.constant 0 : i32
    return %c0_i32, %c0_i32_0 : i32, i32
  }
  func.func @transform_11(%arg0: i32) -> (i32, i32) {
    %c0_i32 = arith.constant 0 : i32
    %c0_i32_0 = arith.constant 0 : i32
    %c0_i32_1 = arith.constant 0 : i32
    return %c0_i32, %c0_i32_0 : i32, i32
  }
  func.func @transform_12(%arg0: i32) -> (i32, i32) {
    %c0_i32 = arith.constant 0 : i32
    %c0_i32_0 = arith.constant 0 : i32
    %c0_i32_1 = arith.constant 0 : i32
    return %c0_i32, %c0_i32_0 : i32, i32
  }
  func.func @transform_13(%arg0: i32) -> (i32, i32) {
    %c0_i32 = arith.constant 0 : i32
    %c0_i32_0 = arith.constant 0 : i32
    %c0_i32_1 = arith.constant 0 : i32
    return %c0_i32, %c0_i32_0 : i32, i32
  }
  func.func @transform_14(%arg0: i32) -> (i32, i32) {
    %c0_i32 = arith.constant 0 : i32
    %c0_i32_0 = arith.constant 0 : i32
    %c0_i32_1 = arith.constant 0 : i32
    return %c0_i32, %c0_i32_0 : i32, i32
  }
  func.func @transform_15(%arg0: i32) -> (i32, i32) {
    %c0_i32 = arith.constant 0 : i32
    %c0_i32_0 = arith.constant 0 : i32
    %c0_i32_1 = arith.constant 0 : i32
    return %c0_i32, %c0_i32_0 : i32, i32
  }
  func.func @transform_16(%arg0: i32) -> (i32, i32, i32) {
    %c0_i32 = arith.constant 0 : i32
    %c0_i32_0 = arith.constant 0 : i32
    %c0_i32_1 = arith.constant 0 : i32
    return %arg0, %c0_i32, %c0_i32_0 : i32, i32, i32
  }
}

</mosaic_0001>

<llo_original>
// kernel: tpu_custom_call.1
$region0: #{tpu_custom_call.1}
  #allocation0 [shape = 'u32[]', space=smem, size = 0x4, offset = 0x4, fixed_abs, tag = 'smem constant byte address 0x4 - core index']
  #allocation1 [shape = 'u32[144,128]{1,0:T(1,128)}', space=vmem, size = 0x12000, scoped, tag = 'internal scratch']
  #allocation2 [shape = 'f32[128,32]{1,0:T(8,128)}', space=vmem, size = 0x10000, scoped, tag = 'scratch operand']
  %s0 = inlined_call_operand.vmem [shape: f32[2,128,32], index: 0, kind: input, shape index: {}]
  %s1 = inlined_call_operand.vmem [shape: f32[2,128,32], index: 1, kind: input, shape index: {}]
  %s2 = inlined_call_operand.vmem [shape: bf16[32,64], index: 2, kind: input, shape index: {}]
  %s3 = inlined_call_operand.vmem [shape: f32[1,64], index: 3, kind: input, shape index: {}]
  %s4 = inlined_call_operand.vmem [shape: bf16[32,32], index: 4, kind: input, shape index: {}]
  %s5 = inlined_call_operand.vmem [shape: f32[1,32], index: 5, kind: input, shape index: {}]
  %s6 = inlined_call_operand.vmem [shape: bf16[32,32], index: 6, kind: input, shape index: {}]
  %s7 = inlined_call_operand.vmem [shape: f32[1,32], index: 7, kind: input, shape index: {}]
  %s8 = inlined_call_operand.vmem [shape: bf16[32,64], index: 8, kind: input, shape index: {}]
  %s9 = inlined_call_operand.vmem [shape: f32[1,64], index: 9, kind: input, shape index: {}]
  %s10 = inlined_call_operand.vmem [shape: bf16[64,32], index: 10, kind: input, shape index: {}]
  %s11 = inlined_call_operand.vmem [shape: f32[1,32], index: 11, kind: input, shape index: {}]
  %s12 = inlined_call_operand.vmem [shape: f32[1,32], index: 12, kind: input, shape index: {}]
  %s13 = inlined_call_operand.vmem [shape: f32[1,32], index: 13, kind: input, shape index: {}]
  %s14 = inlined_call_operand.vmem [shape: f32[1,32], index: 14, kind: input, shape index: {}]
  %s15 = inlined_call_operand.vmem [shape: f32[1,32], index: 15, kind: input, shape index: {}]
  %s16 = inlined_call_operand.vmem [shape: f32[2,128,32], index: 16, kind: output, shape index: {}]
  %s17 = sld [smem:[#allocation0]]
  $region97: #{tpu_custom_call.1} parent=0
    _
  %s19 = ssub.s32 1, %s17
  %s20 = scalar_select 0, %s19, %s17
  loop: start=0, step=1, limit=4
  $region2: #{tpu_custom_call.1} parent=0 // loop_pre_header
    _
  $region3: #{tpu_custom_call.1} parent=0 // loop_header
    %s22 = sphi 0, %s26
    %p23 = scmp.ge.s32.totalorder %s22, 4
    %s32 = sphi 0, %s34
    %s35 = sphi 0, %s32
    %s36 = sphi 0, %s35
    %s52 = sphi 0, %s36
    %s58 = sphi 0, %s60
    %s61 = sphi 0, %s58
    %s62 = sphi 0, %s61
    %s78 = sphi 0, %s62
    %s82 = sphi 0, %s82
    %s84 = sphi 0, %s82
    %s85 = sphi 0, %s84
    %s99 = sphi 0, %s85
    %s103 = sphi 0, %s103
    %s105 = sphi 0, %s103
    %s106 = sphi 0, %s105
    %s120 = sphi 0, %s106
    %s124 = sphi 0, %s124
    %s126 = sphi 0, %s124
    %s127 = sphi 0, %s126
    %s141 = sphi 0, %s127
    %s145 = sphi 0, %s145
    %s147 = sphi 0, %s145
    %s148 = sphi 0, %s147
    %s162 = sphi 0, %s148
    %s166 = sphi 0, %s166
    %s168 = sphi 0, %s166
    %s169 = sphi 0, %s168
    %s183 = sphi 0, %s169
    %s187 = sphi 0, %s187
    %s189 = sphi 0, %s187
    %s190 = sphi 0, %s189
    %s204 = sphi 0, %s190
    %s208 = sphi 0, %s208
    %s210 = sphi 0, %s208
    %s211 = sphi 0, %s210
    %s225 = sphi 0, %s211
    %s229 = sphi 0, %s229
    %s231 = sphi 0, %s229
    %s232 = sphi 0, %s231
    %s246 = sphi 0, %s232
    %s250 = sphi 0, %s250
    %s252 = sphi 0, %s250
    %s253 = sphi 0, %s252
    %s267 = sphi 0, %s253
    %s271 = sphi 0, %s271
    %s273 = sphi 0, %s271
    %s274 = sphi 0, %s273
    %s288 = sphi 0, %s274
    %s292 = sphi 0, %s292
    %s294 = sphi 0, %s292
    %s295 = sphi 0, %s294
    %s309 = sphi 0, %s295
    %s313 = sphi 0, %s313
    %s315 = sphi 0, %s313
    %s316 = sphi 0, %s315
    %s330 = sphi 0, %s316
    %s334 = sphi 0, %s334
    %s336 = sphi 0, %s334
    %s337 = sphi 0, %s336
    %s351 = sphi 0, %s337
    %s355 = sphi 0, %s355
    %s357 = sphi 0, %s355
    %s358 = sphi 0, %s357
    %s372 = sphi 0, %s358
    %s378 = sphi 0, %s380
    %s381 = sphi 0, %s378
    %s382 = sphi 0, %s381
    %s398 = sphi 0, %s382
  $region4: #{tpu_custom_call.1} parent=0 // loop_header_branch
    %25 = sbr.rel (%p23) target = $region8
  $region5: #{tpu_custom_call.1} parent=0 // loop_body
    %s27 = ssub.s32 %s22, 1
    %s28 = ssub.s32 %s22, 2
    %s29 = sadd.s32 %s22, 1
    %s30 = ssub.s32 %s22, %s29
    %p31 = scmp.eq.s32.totalorder %s30, 0
    %s33 = sadd.s32 %s32, 1
    %s34 = scalar_select %p31, %s32, %s33
    %p37 = pneg %p31
    %p38 = scmp.eq.s32.totalorder %s22, 1
    %p39 = por %p37, %p38
    %p40 = scmp.ne.s32.totalorder %s32, %s35
    %p41 = scmp.eq.s32.totalorder %s22, 0
    %p42 = por %p40, %p41
    %p43 = scmp.ne.s32.totalorder %s32, %s35
    %p44 = scmp.eq.s32.totalorder %s27, 1
    %p45 = por %p43, %p44
    %p46 = scmp.ne.s32.totalorder %s35, %s36
    %p47 = scmp.eq.s32.totalorder %s27, 0
    %p48 = por %p46, %p47
    %p49 = scmp.ne.s32.totalorder %s35, %s36
    %p50 = scmp.eq.s32.totalorder %s28, 1
    %p51 = por %p49, %p50
    %p53 = scmp.ne.s32.totalorder %s36, %s52
    %p54 = scmp.eq.s32.totalorder %s28, 0
    %p55 = por %p53, %p54
    %s56 = ssub.s32 %s22, %s29
    %p57 = scmp.eq.s32.totalorder %s56, 0
    %s59 = sadd.s32 %s58, 1
    %s60 = scalar_select %p57, %s58, %s59
    %p63 = pneg %p57
    %p64 = scmp.eq.s32.totalorder %s22, 1
    %p65 = por %p63, %p64
    %p66 = scmp.ne.s32.totalorder %s58, %s61
    %p67 = scmp.eq.s32.totalorder %s22, 0
    %p68 = por %p66, %p67
    %p69 = scmp.ne.s32.totalorder %s58, %s61
    %p70 = scmp.eq.s32.totalorder %s27, 1
    %p71 = por %p69, %p70
    %p72 = scmp.ne.s32.totalorder %s61, %s62
    %p73 = scmp.eq.s32.totalorder %s27, 0
    %p74 = por %p72, %p73
    %p75 = scmp.ne.s32.totalorder %s61, %s62
    %p76 = scmp.eq.s32.totalorder %s28, 1
    %p77 = por %p75, %p76
    %p79 = scmp.ne.s32.totalorder %s62, %s78
    %p80 = scmp.eq.s32.totalorder %s28, 0
    %p81 = por %p79, %p80
    %s83 = sadd.s32 %s82, 1
    %p86 = scmp.eq.s32.totalorder %s22, 1
    %p87 = scmp.ne.s32.totalorder %s82, %s84
    %p88 = scmp.eq.s32.totalorder %s22, 0
    %p89 = por %p87, %p88
    %p90 = scmp.ne.s32.totalorder %s82, %s84
    %p91 = scmp.eq.s32.totalorder %s27, 1
    %p92 = por %p90, %p91
    %p93 = scmp.ne.s32.totalorder %s84, %s85
    %p94 = scmp.eq.s32.totalorder %s27, 0
    %p95 = por %p93, %p94
    %p96 = scmp.ne.s32.totalorder %s84, %s85
    %p97 = scmp.eq.s32.totalorder %s28, 1
    %p98 = por %p96, %p97
    %p100 = scmp.ne.s32.totalorder %s85, %s99
    %p101 = scmp.eq.s32.totalorder %s28, 0
    %p102 = por %p100, %p101
    %s104 = sadd.s32 %s103, 1
    %p107 = scmp.eq.s32.totalorder %s22, 1
    %p108 = scmp.ne.s32.totalorder %s103, %s105
    %p109 = scmp.eq.s32.totalorder %s22, 0
    %p110 = por %p108, %p109
    %p111 = scmp.ne.s32.totalorder %s103, %s105
    %p112 = scmp.eq.s32.totalorder %s27, 1
    %p113 = por %p111, %p112
    %p114 = scmp.ne.s32.totalorder %s105, %s106
    %p115 = scmp.eq.s32.totalorder %s27, 0
    %p116 = por %p114, %p115
    %p117 = scmp.ne.s32.totalorder %s105, %s106
    %p118 = scmp.eq.s32.totalorder %s28, 1
    %p119 = por %p117, %p118
    %p121 = scmp.ne.s32.totalorder %s106, %s120
    %p122 = scmp.eq.s32.totalorder %s28, 0
    %p123 = por %p121, %p122
    %s125 = sadd.s32 %s124, 1
    %p128 = scmp.eq.s32.totalorder %s22, 1
    %p129 = scmp.ne.s32.totalorder %s124, %s126
    %p130 = scmp.eq.s32.totalorder %s22, 0
    %p131 = por %p129, %p130
    %p132 = scmp.ne.s32.totalorder %s124, %s126
    %p133 = scmp.eq.s32.totalorder %s27, 1
    %p134 = por %p132, %p133
    %p135 = scmp.ne.s32.totalorder %s126, %s127
    %p136 = scmp.eq.s32.totalorder %s27, 0
    %p137 = por %p135, %p136
    %p138 = scmp.ne.s32.totalorder %s126, %s127
    %p139 = scmp.eq.s32.totalorder %s28, 1
    %p140 = por %p138, %p139
    %p142 = scmp.ne.s32.totalorder %s127, %s141
    %p143 = scmp.eq.s32.totalorder %s28, 0
    %p144 = por %p142, %p143
    %s146 = sadd.s32 %s145, 1
    %p149 = scmp.eq.s32.totalorder %s22, 1
    %p150 = scmp.ne.s32.totalorder %s145, %s147
    %p151 = scmp.eq.s32.totalorder %s22, 0
    %p152 = por %p150, %p151
    %p153 = scmp.ne.s32.totalorder %s145, %s147
    %p154 = scmp.eq.s32.totalorder %s27, 1
    %p155 = por %p153, %p154
    %p156 = scmp.ne.s32.totalorder %s147, %s148
    %p157 = scmp.eq.s32.totalorder %s27, 0
    %p158 = por %p156, %p157
    %p159 = scmp.ne.s32.totalorder %s147, %s148
    %p160 = scmp.eq.s32.totalorder %s28, 1
    %p161 = por %p159, %p160
    %p163 = scmp.ne.s32.totalorder %s148, %s162
    %p164 = scmp.eq.s32.totalorder %s28, 0
    %p165 = por %p163, %p164
    %s167 = sadd.s32 %s166, 1
    %p170 = scmp.eq.s32.totalorder %s22, 1
    %p171 = scmp.ne.s32.totalorder %s166, %s168
    %p172 = scmp.eq.s32.totalorder %s22, 0
    %p173 = por %p171, %p172
    %p174 = scmp.ne.s32.totalorder %s166, %s168
    %p175 = scmp.eq.s32.totalorder %s27, 1
    %p176 = por %p174, %p175
    %p177 = scmp.ne.s32.totalorder %s168, %s169
    %p178 = scmp.eq.s32.totalorder %s27, 0
    %p179 = por %p177, %p178
    %p180 = scmp.ne.s32.totalorder %s168, %s169
    %p181 = scmp.eq.s32.totalorder %s28, 1
    %p182 = por %p180, %p181
    %p184 = scmp.ne.s32.totalorder %s169, %s183
    %p185 = scmp.eq.s32.totalorder %s28, 0
    %p186 = por %p184, %p185
    %s188 = sadd.s32 %s187, 1
    %p191 = scmp.eq.s32.totalorder %s22, 1
    %p192 = scmp.ne.s32.totalorder %s187, %s189
    %p193 = scmp.eq.s32.totalorder %s22, 0
    %p194 = por %p192, %p193
    %p195 = scmp.ne.s32.totalorder %s187, %s189
    %p196 = scmp.eq.s32.totalorder %s27, 1
    %p197 = por %p195, %p196
    %p198 = scmp.ne.s32.totalorder %s189, %s190
    %p199 = scmp.eq.s32.totalorder %s27, 0
    %p200 = por %p198, %p199
    %p201 = scmp.ne.s32.totalorder %s189, %s190
    %p202 = scmp.eq.s32.totalorder %s28, 1
    %p203 = por %p201, %p202
    %p205 = scmp.ne.s32.totalorder %s190, %s204
    %p206 = scmp.eq.s32.totalorder %s28, 0
    %p207 = por %p205, %p206
    %s209 = sadd.s32 %s208, 1
    %p212 = scmp.eq.s32.totalorder %s22, 1
    %p213 = scmp.ne.s32.totalorder %s208, %s210
    %p214 = scmp.eq.s32.totalorder %s22, 0
    %p215 = por %p213, %p214
    %p216 = scmp.ne.s32.totalorder %s208, %s210
    %p217 = scmp.eq.s32.totalorder %s27, 1
    %p218 = por %p216, %p217
    %p219 = scmp.ne.s32.totalorder %s210, %s211
    %p220 = scmp.eq.s32.totalorder %s27, 0
    %p221 = por %p219, %p220
    %p222 = scmp.ne.s32.totalorder %s210, %s211
    %p223 = scmp.eq.s32.totalorder %s28, 1
    %p224 = por %p222, %p223
    %p226 = scmp.ne.s32.totalorder %s211, %s225
    %p227 = scmp.eq.s32.totalorder %s28, 0
    %p228 = por %p226, %p227
    %s230 = sadd.s32 %s229, 1
    %p233 = scmp.eq.s32.totalorder %s22, 1
    %p234 = scmp.ne.s32.totalorder %s229, %s231
    %p235 = scmp.eq.s32.totalorder %s22, 0
    %p236 = por %p234, %p235
    %p237 = scmp.ne.s32.totalorder %s229, %s231
    %p238 = scmp.eq.s32.totalorder %s27, 1
    %p239 = por %p237, %p238
    %p240 = scmp.ne.s32.totalorder %s231, %s232
    %p241 = scmp.eq.s32.totalorder %s27, 0
    %p242 = por %p240, %p241
    %p243 = scmp.ne.s32.totalorder %s231, %s232
    %p244 = scmp.eq.s32.totalorder %s28, 1
    %p245 = por %p243, %p244
    %p247 = scmp.ne.s32.totalorder %s232, %s246
    %p248 = scmp.eq.s32.totalorder %s28, 0
    %p249 = por %p247, %p248
    %s251 = sadd.s32 %s250, 1
    %p254 = scmp.eq.s32.totalorder %s22, 1
    %p255 = scmp.ne.s32.totalorder %s250, %s252
    %p256 = scmp.eq.s32.totalorder %s22, 0
    %p257 = por %p255, %p256
    %p258 = scmp.ne.s32.totalorder %s250, %s252
    %p259 = scmp.eq.s32.totalorder %s27, 1
    %p260 = por %p258, %p259
    %p261 = scmp.ne.s32.totalorder %s252, %s253
    %p262 = scmp.eq.s32.totalorder %s27, 0
    %p263 = por %p261, %p262
    %p264 = scmp.ne.s32.totalorder %s252, %s253
    %p265 = scmp.eq.s32.totalorder %s28, 1
    %p266 = por %p264, %p265
    %p268 = scmp.ne.s32.totalorder %s253, %s267
    %p269 = scmp.eq.s32.totalorder %s28, 0
    %p270 = por %p268, %p269
    %s272 = sadd.s32 %s271, 1
    %p275 = scmp.eq.s32.totalorder %s22, 1
    %p276 = scmp.ne.s32.totalorder %s271, %s273
    %p277 = scmp.eq.s32.totalorder %s22, 0
    %p278 = por %p276, %p277
    %p279 = scmp.ne.s32.totalorder %s271, %s273
    %p280 = scmp.eq.s32.totalorder %s27, 1
    %p281 = por %p279, %p280
    %p282 = scmp.ne.s32.totalorder %s273, %s274
    %p283 = scmp.eq.s32.totalorder %s27, 0
    %p284 = por %p282, %p283
    %p285 = scmp.ne.s32.totalorder %s273, %s274
    %p286 = scmp.eq.s32.totalorder %s28, 1
    %p287 = por %p285, %p286
    %p289 = scmp.ne.s32.totalorder %s274, %s288
    %p290 = scmp.eq.s32.totalorder %s28, 0
    %p291 = por %p289, %p290
    %s293 = sadd.s32 %s292, 1
    %p296 = scmp.eq.s32.totalorder %s22, 1
    %p297 = scmp.ne.s32.totalorder %s292, %s294
    %p298 = scmp.eq.s32.totalorder %s22, 0
    %p299 = por %p297, %p298
    %p300 = scmp.ne.s32.totalorder %s292, %s294
    %p301 = scmp.eq.s32.totalorder %s27, 1
    %p302 = por %p300, %p301
    %p303 = scmp.ne.s32.totalorder %s294, %s295
    %p304 = scmp.eq.s32.totalorder %s27, 0
    %p305 = por %p303, %p304
    %p306 = scmp.ne.s32.totalorder %s294, %s295
    %p307 = scmp.eq.s32.totalorder %s28, 1
    %p308 = por %p306, %p307
    %p310 = scmp.ne.s32.totalorder %s295, %s309
    %p311 = scmp.eq.s32.totalorder %s28, 0
    %p312 = por %p310, %p311
    %s314 = sadd.s32 %s313, 1
    %p317 = scmp.eq.s32.totalorder %s22, 1
    %p318 = scmp.ne.s32.totalorder %s313, %s315
    %p319 = scmp.eq.s32.totalorder %s22, 0
    %p320 = por %p318, %p319
    %p321 = scmp.ne.s32.totalorder %s313, %s315
    %p322 = scmp.eq.s32.totalorder %s27, 1
    %p323 = por %p321, %p322
    %p324 = scmp.ne.s32.totalorder %s315, %s316
    %p325 = scmp.eq.s32.totalorder %s27, 0
    %p326 = por %p324, %p325
    %p327 = scmp.ne.s32.totalorder %s315, %s316
    %p328 = scmp.eq.s32.totalorder %s28, 1
    %p329 = por %p327, %p328
    %p331 = scmp.ne.s32.totalorder %s316, %s330
    %p332 = scmp.eq.s32.totalorder %s28, 0
    %p333 = por %p331, %p332
    %s335 = sadd.s32 %s334, 1
    %p338 = scmp.eq.s32.totalorder %s22, 1
    %p339 = scmp.ne.s32.totalorder %s334, %s336
    %p340 = scmp.eq.s32.totalorder %s22, 0
    %p341 = por %p339, %p340
    %p342 = scmp.ne.s32.totalorder %s334, %s336
    %p343 = scmp.eq.s32.totalorder %s27, 1
    %p344 = por %p342, %p343
    %p345 = scmp.ne.s32.totalorder %s336, %s337
    %p346 = scmp.eq.s32.totalorder %s27, 0
    %p347 = por %p345, %p346
    %p348 = scmp.ne.s32.totalorder %s336, %s337
    %p349 = scmp.eq.s32.totalorder %s28, 1
    %p350 = por %p348, %p349
    %p352 = scmp.ne.s32.totalorder %s337, %s351
    %p353 = scmp.eq.s32.totalorder %s28, 0
    %p354 = por %p352, %p353
    %s356 = sadd.s32 %s355, 1
    %p359 = scmp.eq.s32.totalorder %s22, 1
    %p360 = scmp.ne.s32.totalorder %s355, %s357
    %p361 = scmp.eq.s32.totalorder %s22, 0
    %p362 = por %p360, %p361
    %p363 = scmp.ne.s32.totalorder %s355, %s357
    %p364 = scmp.eq.s32.totalorder %s27, 1
    %p365 = por %p363, %p364
    %p366 = scmp.ne.s32.totalorder %s357, %s358
    %p367 = scmp.eq.s32.totalorder %s27, 0
    %p368 = por %p366, %p367
    %p369 = scmp.ne.s32.totalorder %s357, %s358
    %p370 = scmp.eq.s32.totalorder %s28, 1
    %p371 = por %p369, %p370
    %p373 = scmp.ne.s32.totalorder %s358, %s372
    %p374 = scmp.eq.s32.totalorder %s28, 0
    %p375 = por %p373, %p374
    %s376 = ssub.s32 %s22, %s29
    %p377 = scmp.eq.s32.totalorder %s376, 0
    %s379 = sadd.s32 %s378, 1
    %s380 = scalar_select %p377, %s378, %s379
    %p383 = pneg %p377
    %p384 = scmp.eq.s32.totalorder %s22, 1
    %p385 = por %p383, %p384
    %p386 = scmp.ne.s32.totalorder %s378, %s381
    %p387 = scmp.eq.s32.totalorder %s22, 0
    %p388 = por %p386, %p387
    %p389 = scmp.ne.s32.totalorder %s378, %s381
    %p390 = scmp.eq.s32.totalorder %s27, 1
    %p391 = por %p389, %p390
    %p392 = scmp.ne.s32.totalorder %s381, %s382
    %p393 = scmp.eq.s32.totalorder %s27, 0
    %p394 = por %p392, %p393
    %p395 = scmp.ne.s32.totalorder %s381, %s382
    %p396 = scmp.eq.s32.totalorder %s28, 1
    %p397 = por %p395, %p396
    %p399 = scmp.ne.s32.totalorder %s382, %s398
    %p400 = scmp.eq.s32.totalorder %s28, 0
    %p401 = por %p399, %p400
    %p402 = scmp.le.s32.totalorder 1, %s22
    %p403 = scmp.lt.s32.totalorder %s22, 3
    %p404 = pnand %p402, %p403
    %p405 = pneg %p404
    // Predicated region
    $region9: #{tpu_custom_call.1} parent=5 // pred_check
      _
    $region10: #{tpu_custom_call.1} parent=5 // pred_check_branch
      %407 = sbr.rel (%p404) target = $region12
    $region11: #{tpu_custom_call.1} parent=5 // pred_region
      %s408 = ssub.s32 %s22, 1
      // Predicated region
      $region13: #{tpu_custom_call.1} parent=11 // pred_check
        %p409 = pneg %p95
      $region14: #{tpu_custom_call.1} parent=11 // pred_check_branch
        %411 = sbr.rel (%p409) target = $region16
      $region15: #{tpu_custom_call.1} parent=11 // pred_region
        _
      $region16: #{tpu_custom_call.1} parent=11 // pred_fallthru
        _
      // Predicated region
      $region17: #{tpu_custom_call.1} parent=11 // pred_check
        %p412 = pneg %p116
      $region18: #{tpu_custom_call.1} parent=11 // pred_check_branch
        %414 = sbr.rel (%p412) target = $region20
      $region19: #{tpu_custom_call.1} parent=11 // pred_region
        _
      $region20: #{tpu_custom_call.1} parent=11 // pred_fallthru
        _
      // Predicated region
      $region21: #{tpu_custom_call.1} parent=11 // pred_check
        %p415 = pneg %p137
      $region22: #{tpu_custom_call.1} parent=11 // pred_check_branch
        %417 = sbr.rel (%p415) target = $region24
      $region23: #{tpu_custom_call.1} parent=11 // pred_region
        _
      $region24: #{tpu_custom_call.1} parent=11 // pred_fallthru
        _
      // Predicated region
      $region25: #{tpu_custom_call.1} parent=11 // pred_check
        %p418 = pneg %p158
      $region26: #{tpu_custom_call.1} parent=11 // pred_check_branch
        %420 = sbr.rel (%p418) target = $region28
      $region27: #{tpu_custom_call.1} parent=11 // pred_region
        _
      $region28: #{tpu_custom_call.1} parent=11 // pred_fallthru
        _
      // Predicated region
      $region29: #{tpu_custom_call.1} parent=11 // pred_check
        %p421 = pneg %p179
      $region30: #{tpu_custom_call.1} parent=11 // pred_check_branch
        %423 = sbr.rel (%p421) target = $region32
      $region31: #{tpu_custom_call.1} parent=11 // pred_region
        _
      $region32: #{tpu_custom_call.1} parent=11 // pred_fallthru
        _
      // Predicated region
      $region33: #{tpu_custom_call.1} parent=11 // pred_check
        %p424 = pneg %p200
      $region34: #{tpu_custom_call.1} parent=11 // pred_check_branch
        %426 = sbr.rel (%p424) target = $region36
      $region35: #{tpu_custom_call.1} parent=11 // pred_region
        _
      $region36: #{tpu_custom_call.1} parent=11 // pred_fallthru
        _
      // Predicated region
      $region37: #{tpu_custom_call.1} parent=11 // pred_check
        %p427 = pneg %p221
      $region38: #{tpu_custom_call.1} parent=11 // pred_check_branch
        %429 = sbr.rel (%p427) target = $region40
      $region39: #{tpu_custom_call.1} parent=11 // pred_region
        _
      $region40: #{tpu_custom_call.1} parent=11 // pred_fallthru
        _
      // Predicated region
      $region41: #{tpu_custom_call.1} parent=11 // pred_check
        %p430 = pneg %p242
      $region42: #{tpu_custom_call.1} parent=11 // pred_check_branch
        %432 = sbr.rel (%p430) target = $region44
      $region43: #{tpu_custom_call.1} parent=11 // pred_region
        _
      $region44: #{tpu_custom_call.1} parent=11 // pred_fallthru
        _
      // Predicated region
      $region45: #{tpu_custom_call.1} parent=11 // pred_check
        %p433 = pneg %p263
      $region46: #{tpu_custom_call.1} parent=11 // pred_check_branch
        %435 = sbr.rel (%p433) target = $region48
      $region47: #{tpu_custom_call.1} parent=11 // pred_region
        _
      $region48: #{tpu_custom_call.1} parent=11 // pred_fallthru
        _
      // Predicated region
      $region49: #{tpu_custom_call.1} parent=11 // pred_check
        %p436 = pneg %p284
      $region50: #{tpu_custom_call.1} parent=11 // pred_check_branch
        %438 = sbr.rel (%p436) target = $region52
      $region51: #{tpu_custom_call.1} parent=11 // pred_region
        _
      $region52: #{tpu_custom_call.1} parent=11 // pred_fallthru
        _
      // Predicated region
      $region53: #{tpu_custom_call.1} parent=11 // pred_check
        %p439 = pneg %p305
      $region54: #{tpu_custom_call.1} parent=11 // pred_check_branch
        %441 = sbr.rel (%p439) target = $region56
      $region55: #{tpu_custom_call.1} parent=11 // pred_region
        _
      $region56: #{tpu_custom_call.1} parent=11 // pred_fallthru
        _
      // Predicated region
      $region57: #{tpu_custom_call.1} parent=11 // pred_check
        %p442 = pneg %p326
      $region58: #{tpu_custom_call.1} parent=11 // pred_check_branch
        %444 = sbr.rel (%p442) target = $region60
      $region59: #{tpu_custom_call.1} parent=11 // pred_region
        _
      $region60: #{tpu_custom_call.1} parent=11 // pred_fallthru
        _
      // Predicated region
      $region61: #{tpu_custom_call.1} parent=11 // pred_check
        %p445 = pneg %p347
      $region62: #{tpu_custom_call.1} parent=11 // pred_check_branch
        %447 = sbr.rel (%p445) target = $region64
      $region63: #{tpu_custom_call.1} parent=11 // pred_region
        _
      $region64: #{tpu_custom_call.1} parent=11 // pred_fallthru
        _
      // Predicated region
      $region65: #{tpu_custom_call.1} parent=11 // pred_check
        %p448 = pneg %p368
      $region66: #{tpu_custom_call.1} parent=11 // pred_check_branch
        %450 = sbr.rel (%p448) target = $region68
      $region67: #{tpu_custom_call.1} parent=11 // pred_region
        _
      $region68: #{tpu_custom_call.1} parent=11 // pred_fallthru
        _
    $region12: #{tpu_custom_call.1} parent=5 // pred_fallthru
      _
    %p451 = scmp.lt.s32.totalorder %s22, 2
    // Predicated region
    $region69: #{tpu_custom_call.1} parent=5 // pred_check
      %p452 = pneg %p451
    $region70: #{tpu_custom_call.1} parent=5 // pred_check_branch
      %454 = sbr.rel (%p452) target = $region72
    $region71: #{tpu_custom_call.1} parent=5 // pred_region
      // Predicated region
      $region73: #{tpu_custom_call.1} parent=71 // pred_check
        %p455 = pneg %p42
      $region74: #{tpu_custom_call.1} parent=71 // pred_check_branch
        %457 = sbr.rel (%p455) target = $region76
      $region75: #{tpu_custom_call.1} parent=71 // pred_region
        %p458 = scmp.lt.s32.totalorder %s22, 1
        %s459 = scalar_select %p458, %s22, 1
        %s460 = smul.addr %s459, 16
        %s461 = smul.addr %s460, 8
        %s462 = scalar_lea.vmem %s0, %s461
      $region76: #{tpu_custom_call.1} parent=71 // pred_fallthru
        _
      // Predicated region
      $region77: #{tpu_custom_call.1} parent=71 // pred_check
        %p463 = pneg %p68
      $region78: #{tpu_custom_call.1} parent=71 // pred_check_branch
        %465 = sbr.rel (%p463) target = $region80
      $region79: #{tpu_custom_call.1} parent=71 // pred_region
        %p466 = scmp.lt.s32.totalorder %s22, 1
        %s467 = scalar_select %p466, %s22, 1
        %s468 = smul.addr %s467, 16
        %s469 = smul.addr %s468, 8
        %s470 = scalar_lea.vmem %s1, %s469
      $region80: #{tpu_custom_call.1} parent=71 // pred_fallthru
        _
    $region72: #{tpu_custom_call.1} parent=5 // pred_fallthru
      _
    %p471 = scmp.le.s32.totalorder 1, %s22
    %p472 = scmp.lt.s32.totalorder %s22, 3
    %p473 = pnand %p471, %p472
    %p474 = pneg %p473
    // Predicated region
    $region81: #{tpu_custom_call.1} parent=5 // pred_check
      _
    $region82: #{tpu_custom_call.1} parent=5 // pred_check_branch
      %476 = sbr.rel (%p473) target = $region84
    $region83: #{tpu_custom_call.1} parent=5 // pred_region
      %s477 = ssub.s32 %s22, 1
      %p478 = scmp.lt.s32.totalorder %s27, 1
      %s479 = scalar_select %p478, %s27, 1
      %s480 = smul.addr %s479, 16
      %s481 = smul.addr %s480, 8
      %s482 = scalar_lea.vmem %s0, %s481
      %p483 = pneg %p48
      %p484 = pneg %p45
      %p485 = scmp.lt.s32.totalorder %s27, 1
      %s486 = scalar_select %p485, %s27, 1
      %s487 = smul.addr %s486, 16
      %s488 = smul.addr %s487, 8
      %s489 = scalar_lea.vmem %s1, %s488
      %p490 = pneg %p74
      %p491 = pneg %p71
      %p492 = pneg %p95
      %p493 = pneg %p92
      %p494 = pneg %p116
      %p495 = pneg %p113
      %p496 = pneg %p137
      %p497 = pneg %p134
      %p498 = pneg %p158
      %p499 = pneg %p155
      %p500 = pneg %p179
      %p501 = pneg %p176
      %p502 = pneg %p200
      %p503 = pneg %p197
      %p504 = pneg %p221
      %p505 = pneg %p218
      %p506 = pneg %p242
      %p507 = pneg %p239
      %p508 = pneg %p263
      %p509 = pneg %p260
      %p510 = pneg %p284
      %p511 = pneg %p281
      %p512 = pneg %p305
      %p513 = pneg %p302
      %p514 = pneg %p326
      %p515 = pneg %p323
      %p516 = pneg %p347
      %p517 = pneg %p344
      %p518 = pneg %p368
      %p519 = pneg %p365
      %p520 = pneg %p394
      %p521 = pneg %p391
      %p522 = scmp.lt.s32.totalorder %s27, 1
      %s523 = scalar_select %p522, %s27, 1
      %s524 = smul.addr %s523, 16
      %s525 = smul.addr %s524, 8
      %s526 = scalar_lea.vmem %s16, %s525
      %p527 = scmp.lt.s32.totalorder %s27, 1
      %s528 = scalar_select %p527, %s27, 1
      %s529 = smul.addr %s528, 16
      %s530 = smul.addr %s529, 8
      %s531 = scalar_lea.vmem %s0, %s530
      %p532 = scmp.lt.s32.totalorder %s27, 1
      %s533 = scalar_select %p532, %s27, 1
      %s534 = smul.addr %s533, 16
      %s535 = smul.addr %s534, 8
      %s536 = scalar_lea.vmem %s1, %s535
      %p537 = scmp.lt.s32.totalorder %s27, 1
      %s538 = scalar_select %p537, %s27, 1
      %s539 = smul.addr %s538, 16
      %s540 = smul.addr %s539, 8
      %s541 = scalar_lea.vmem %s16, %s540
      %v543 = vld [vmem:[%s531] sm:$0xff]
      %v544 = vld [vmem:[%s531 + $0x8] sm:$0xff]
      %v545 = vld [vmem:[%s531 + $0x10] sm:$0xff]
      %v546 = vld [vmem:[%s531 + $0x18] sm:$0xff]
      %v547 = vld [vmem:[%s531 + $0x20] sm:$0xff]
      %v548 = vld [vmem:[%s531 + $0x28] sm:$0xff]
      %v549 = vld [vmem:[%s531 + $0x30] sm:$0xff]
      %v550 = vld [vmem:[%s531 + $0x38] sm:$0xff]
      %v551 = vld [vmem:[%s531 + $0x40] sm:$0xff]
      %v552 = vld [vmem:[%s531 + $0x48] sm:$0xff]
      %v553 = vld [vmem:[%s531 + $0x50] sm:$0xff]
      %v554 = vld [vmem:[%s531 + $0x58] sm:$0xff]
      %v555 = vld [vmem:[%s531 + $0x60] sm:$0xff]
      %v556 = vld [vmem:[%s531 + $0x68] sm:$0xff]
      %v557 = vld [vmem:[%s531 + $0x70] sm:$0xff]
      %v558 = vld [vmem:[%s531 + $0x78] sm:$0xff]
      %v559 = vld [vmem:[%s536] sm:$0xff]
      %v560 = vld [vmem:[%s536 + $0x8] sm:$0xff]
      %v561 = vld [vmem:[%s536 + $0x10] sm:$0xff]
      %v562 = vld [vmem:[%s536 + $0x18] sm:$0xff]
      %v563 = vld [vmem:[%s536 + $0x20] sm:$0xff]
      %v564 = vld [vmem:[%s536 + $0x28] sm:$0xff]
      %v565 = vld [vmem:[%s536 + $0x30] sm:$0xff]
      %v566 = vld [vmem:[%s536 + $0x38] sm:$0xff]
      %v567 = vld [vmem:[%s536 + $0x40] sm:$0xff]
      %v568 = vld [vmem:[%s536 + $0x48] sm:$0xff]
      %v569 = vld [vmem:[%s536 + $0x50] sm:$0xff]
      %v570 = vld [vmem:[%s536 + $0x58] sm:$0xff]
      %v571 = vld [vmem:[%s536 + $0x60] sm:$0xff]
      %v572 = vld [vmem:[%s536 + $0x68] sm:$0xff]
      %v573 = vld [vmem:[%s536 + $0x70] sm:$0xff]
      %v574 = vld [vmem:[%s536 + $0x78] sm:$0xff]
      %v575 = vlaneseq
      %v576 = vand.u32 %v575, 127
      %vm577 = vcmp.lt.s32.totalorder %v576, 84
      %v578 = vsel %vm577, 0.0, -1e+30
      %v579 = vlaneseq
      %v580 = vshrl.u32 %v579, 7
      %v581 = vadd.s32 %v580, 8
      %v582 = vadd.s32 %v580, 16
      %v583 = vadd.s32 %v580, 24
      %v584 = vadd.s32 %v580, 32
      %v585 = vadd.s32 %v580, 40
      %v586 = vadd.s32 %v580, 48
      %v587 = vadd.s32 %v580, 56
      %v588 = vadd.s32 %v580, 64
      %v589 = vadd.s32 %v580, 72
      %v590 = vadd.s32 %v580, 80
      %v591 = vadd.s32 %v580, 88
      %v592 = vadd.s32 %v580, 96
      %v593 = vadd.s32 %v580, 104
      %v594 = vadd.s32 %v580, 112
      %v595 = vadd.s32 %v580, 120
      %vm596 = vcmp.lt.s32.totalorder %v580, 84
      %vm597 = vcmp.lt.s32.totalorder %v581, 84
      %vm598 = vcmp.lt.s32.totalorder %v582, 84
      %vm599 = vcmp.lt.s32.totalorder %v583, 84
      %vm600 = vcmp.lt.s32.totalorder %v584, 84
      %vm601 = vcmp.lt.s32.totalorder %v585, 84
      %vm602 = vcmp.lt.s32.totalorder %v586, 84
      %vm603 = vcmp.lt.s32.totalorder %v587, 84
      %vm604 = vcmp.lt.s32.totalorder %v588, 84
      %vm605 = vcmp.lt.s32.totalorder %v589, 84
      %vm606 = vcmp.lt.s32.totalorder %v590, 84
      %vm607 = vcmp.lt.s32.totalorder %v591, 84
      %vm608 = vcmp.lt.s32.totalorder %v592, 84
      %vm609 = vcmp.lt.s32.totalorder %v593, 84
      %vm610 = vcmp.lt.s32.totalorder %v594, 84
      %vm611 = vcmp.lt.s32.totalorder %v595, 84
      %v612 = vsel %vm596, 1, 0
      %v613 = vsel %vm597, 1, 0
      %v614 = vsel %vm598, 1, 0
      %v615 = vsel %vm599, 1, 0
      %v616 = vsel %vm600, 1, 0
      %v617 = vsel %vm601, 1, 0
      %v618 = vsel %vm602, 1, 0
      %v619 = vsel %vm603, 1, 0
      %v620 = vsel %vm604, 1, 0
      %v621 = vsel %vm605, 1, 0
      %v622 = vsel %vm606, 1, 0
      %v623 = vsel %vm607, 1, 0
      %v624 = vsel %vm608, 1, 0
      %v625 = vsel %vm609, 1, 0
      %v626 = vsel %vm610, 1, 0
      %v627 = vsel %vm611, 1, 0
      %v628 = vcvt.s32.f32 %v612
      %v629 = vcvt.s32.f32 %v613
      %v630 = vcvt.s32.f32 %v614
      %v631 = vcvt.s32.f32 %v615
      %v632 = vcvt.s32.f32 %v616
      %v633 = vcvt.s32.f32 %v617
      %v634 = vcvt.s32.f32 %v618
      %v635 = vcvt.s32.f32 %v619
      %v636 = vcvt.s32.f32 %v620
      %v637 = vcvt.s32.f32 %v621
      %v638 = vcvt.s32.f32 %v622
      %v639 = vcvt.s32.f32 %v623
      %v640 = vcvt.s32.f32 %v624
      %v641 = vcvt.s32.f32 %v625
      %v642 = vcvt.s32.f32 %v626
      %v643 = vcvt.s32.f32 %v627
      %v644 = vadd.f32 %v543, %v559
      %v645 = vadd.f32 %v544, %v560
      %v646 = vadd.f32 %v545, %v561
      %v647 = vadd.f32 %v546, %v562
      %v648 = vadd.f32 %v547, %v563
      %v649 = vadd.f32 %v548, %v564
      %v650 = vadd.f32 %v549, %v565
      %v651 = vadd.f32 %v550, %v566
      %v652 = vadd.f32 %v551, %v567
      %v653 = vadd.f32 %v552, %v568
      %v654 = vadd.f32 %v553, %v569
      %v655 = vadd.f32 %v554, %v570
      %v656 = vadd.f32 %v555, %v571
      %v657 = vadd.f32 %v556, %v572
      %v658 = vadd.f32 %v557, %v573
      %v659 = vadd.f32 %v558, %v574
      %v660 = vpack.c.bf16 %v645, %v644
      %v661 = vpack.c.bf16 %v647, %v646
      %v662 = vpack.c.bf16 %v649, %v648
      %v663 = vpack.c.bf16 %v651, %v650
      %v664 = vpack.c.bf16 %v653, %v652
      %v665 = vpack.c.bf16 %v655, %v654
      %v666 = vpack.c.bf16 %v657, %v656
      %v667 = vpack.c.bf16 %v659, %v658
      %v668 = vld [vmem:[%s2] sm:$0xf]
      %v669 = vld [vmem:[%s2 + $0x4] sm:$0xf]
      %v670 = vld [vmem:[%s2 + $0x8] sm:$0xf]
      %v671 = vld [vmem:[%s2 + $0xc] sm:$0xf]
      %v672 = vld [vmem:[%s3] sm:$0x1]
      %v674 = vlaneseq
      %v675 = vshrl.u32 %v674, 7
      %v676 = vsub.s32 0, %v675
      %v677 = vrot.slane %v672, %v676
      %v683 = vunpack.c.l.b16 %v668
      %v684 = vunpack.c.l.b16 %v669
      %v685 = vunpack.c.l.b16 %v670
      %v686 = vunpack.c.l.b16 %v671
      %v687 = vpack.c.b16 %v684, %v683
      %v688 = vpack.c.b16 %v686, %v685
      %vm691 = vcmask 261120
      %v693 = vsel %vm691, %v660, 0
      %v696 = vsel %vm691, %v661, 0
      %v699 = vsel %vm691, %v662, 0
      %v702 = vsel %vm691, %v663, 0
      %v705 = vsel %vm691, %v664, 0
      %v708 = vsel %vm691, %v665, 0
      %v711 = vsel %vm691, %v666, 0
      %v714 = vsel %vm691, %v667, 0
      %716 = vmatprep.subr.bf16.mxu0 0
      %717 = vmatpush1.bf16.msra.mxu0 0
      %718 = vmatprep.subr.bf16.mxu0 0
      %719 = vmatpush1.bf16.msra.mxu0 0
      %720 = vmatprep.subr.bf16.mxu0 0
      %721 = vmatpush1.bf16.msra.mxu0 0
      %722 = vmatprep.subr.bf16.mxu0 0
      %723 = vmatpush1.bf16.msra.mxu0 0
      %724 = vmatprep.subr.bf16.mxu0 0
      %725 = vmatpush1.bf16.msra.mxu0 0
      %726 = vmatprep.subr.bf16.mxu0 0
      %727 = vmatpush1.bf16.msra.mxu0 0
      %728 = vmatprep.subr.bf16.mxu0 0
      %729 = vmatpush1.bf16.msra.mxu0 %v688
      %730 = vmatprep.subr.bf16.mxu0 0
      %731 = vmatpush1.bf16.msra.mxu0 %v687
      %732 = vmatprep.subr.bf16.mxu0 0
      %733 = vmatpush2.bf16.msra.mxu0 0
      %734 = vmatprep.subr.bf16.mxu0 0
      %735 = vmatpush2.bf16.msra.mxu0 0
      %736 = vmatprep.subr.bf16.mxu0 0
      %737 = vmatpush2.bf16.msra.mxu0 0
      %738 = vmatprep.subr.bf16.mxu0 0
      %739 = vmatpush2.bf16.msra.mxu0 0
      %740 = vmatprep.subr.bf16.mxu0 0
      %741 = vmatpush2.bf16.msra.mxu0 0
      %742 = vmatprep.subr.bf16.mxu0 0
      %743 = vmatpush2.bf16.msra.mxu0 0
      %744 = vmatprep.subr.bf16.mxu0 0
      %745 = vmatpush2.bf16.msra.mxu0 0
      %746 = vmatprep.subr.bf16.mxu0 0
      %747 = vmatpush2.bf16.msra.mxu0 0
      %748 = vmatprep.mubr.bf16.mxu0 0
      %749 = vmatmul.mubr.bf16.gmra.mxu0 %v693
      %v750 = vpop.f32.mrf.mxu0
      %v751 = vadd.f32 %v677, %v750
      %v752 = vpop.f32.mrf.mxu0
      %v753 = vpop.f32.mrf.mxu0
      %v754 = vadd.f32 %v677, %v753
      %v755 = vpop.f32.mrf.mxu0
      %756 = vmatprep.mubr.bf16.mxu0 0
      %757 = vmatmul.mubr.bf16.gmra.mxu0 %v696
      %v758 = vpop.f32.mrf.mxu0
      %v759 = vadd.f32 %v677, %v758
      %v760 = vpop.f32.mrf.mxu0
      %v761 = vpop.f32.mrf.mxu0
      %v762 = vadd.f32 %v677, %v761
      %v763 = vpop.f32.mrf.mxu0
      %764 = vmatprep.mubr.bf16.mxu0 0
      %765 = vmatmul.mubr.bf16.gmra.mxu0 %v699
      %v766 = vpop.f32.mrf.mxu0
      %v767 = vadd.f32 %v677, %v766
      %v768 = vpop.f32.mrf.mxu0
      %v769 = vpop.f32.mrf.mxu0
      %v770 = vadd.f32 %v677, %v769
      %v771 = vpop.f32.mrf.mxu0
      %772 = vmatprep.mubr.bf16.mxu0 0
      %773 = vmatmul.mubr.bf16.gmra.mxu0 %v702
      %v774 = vpop.f32.mrf.mxu0
      %v775 = vadd.f32 %v677, %v774
      %v776 = vpop.f32.mrf.mxu0
      %v777 = vpop.f32.mrf.mxu0
      %v778 = vadd.f32 %v677, %v777
      %v779 = vpop.f32.mrf.mxu0
      %780 = vmatprep.mubr.bf16.mxu0 0
      %781 = vmatmul.mubr.bf16.gmra.mxu0 %v705
      %v782 = vpop.f32.mrf.mxu0
      %v783 = vadd.f32 %v677, %v782
      %v784 = vpop.f32.mrf.mxu0
      %v785 = vpop.f32.mrf.mxu0
      %v786 = vadd.f32 %v677, %v785
      %v787 = vpop.f32.mrf.mxu0
      %788 = vmatprep.mubr.bf16.mxu0 0
      %789 = vmatmul.mubr.bf16.gmra.mxu0 %v708
      %v790 = vpop.f32.mrf.mxu0
      %v791 = vadd.f32 %v677, %v790
      %v792 = vpop.f32.mrf.mxu0
      %v793 = vpop.f32.mrf.mxu0
      %v794 = vadd.f32 %v677, %v793
      %v795 = vpop.f32.mrf.mxu0
      %796 = vmatprep.mubr.bf16.mxu0 0
      %797 = vmatmul.mubr.bf16.gmra.mxu0 %v711
      %v798 = vpop.f32.mrf.mxu0
      %v799 = vadd.f32 %v677, %v798
      %v800 = vpop.f32.mrf.mxu0
      %v801 = vpop.f32.mrf.mxu0
      %v802 = vadd.f32 %v677, %v801
      %v803 = vpop.f32.mrf.mxu0
      %804 = vmatprep.mubr.bf16.mxu0 0
      %805 = vmatmul.mubr.bf16.gmra.mxu0 %v714
      %v806 = vpop.f32.mrf.mxu0
      %v807 = vadd.f32 %v677, %v806
      %v808 = vpop.f32.mrf.mxu0
      %v809 = vpop.f32.mrf.mxu0
      %v810 = vadd.f32 %v677, %v809
      %v811 = vpop.f32.mrf.mxu0
      %812 = vdwg.mxu0
      %v813 = vpack.c.bf16 %v544, %v543
      %v814 = vpack.c.bf16 %v546, %v545
      %v815 = vpack.c.bf16 %v548, %v547
      %v816 = vpack.c.bf16 %v550, %v549
      %v817 = vpack.c.bf16 %v552, %v551
      %v818 = vpack.c.bf16 %v554, %v553
      %v819 = vpack.c.bf16 %v556, %v555
      %v820 = vpack.c.bf16 %v558, %v557
      %v821 = vld [vmem:[%s4] sm:$0xf]
      %v822 = vld [vmem:[%s4 + $0x4] sm:$0xf]
      %v823 = vld [vmem:[%s4 + $0x8] sm:$0xf]
      %v824 = vld [vmem:[%s4 + $0xc] sm:$0xf]
      %v825 = vld [vmem:[%s5] sm:$0x1]
      %v827 = vlaneseq
      %v828 = vshrl.u32 %v827, 7
      %v829 = vsub.s32 0, %v828
      %v830 = vrot.slane %v825, %v829
      %v836 = vunpack.c.l.b16 %v821
      %v837 = vunpack.c.l.b16 %v822
      %v838 = vunpack.c.l.b16 %v823
      %v839 = vunpack.c.l.b16 %v824
      %v840 = vpack.c.b16 %v837, %v836
      %v841 = vpack.c.b16 %v839, %v838
      %v845 = vsel %vm691, %v813, 0
      %v848 = vsel %vm691, %v814, 0
      %v851 = vsel %vm691, %v815, 0
      %v854 = vsel %vm691, %v816, 0
      %v857 = vsel %vm691, %v817, 0
      %v860 = vsel %vm691, %v818, 0
      %v863 = vsel %vm691, %v819, 0
      %v866 = vsel %vm691, %v820, 0
      %868 = vmatprep.subr.bf16.mxu0 0
      %869 = vmatpush1.bf16.msra.mxu0 0
      %870 = vmatprep.subr.bf16.mxu0 0
      %871 = vmatpush1.bf16.msra.mxu0 0
      %872 = vmatprep.subr.bf16.mxu0 0
      %873 = vmatpush1.bf16.msra.mxu0 0
      %874 = vmatprep.subr.bf16.mxu0 0
      %875 = vmatpush1.bf16.msra.mxu0 0
      %876 = vmatprep.subr.bf16.mxu0 0
      %877 = vmatpush1.bf16.msra.mxu0 0
      %878 = vmatprep.subr.bf16.mxu0 0
      %879 = vmatpush1.bf16.msra.mxu0 0
      %880 = vmatprep.subr.bf16.mxu0 0
      %881 = vmatpush1.bf16.msra.mxu0 %v841
      %882 = vmatprep.subr.bf16.mxu0 0
      %883 = vmatpush1.bf16.msra.mxu0 %v840
      %884 = vmatprep.subr.bf16.mxu0 0
      %885 = vmatpush2.bf16.msra.mxu0 0
      %886 = vmatprep.subr.bf16.mxu0 0
      %887 = vmatpush2.bf16.msra.mxu0 0
      %888 = vmatprep.subr.bf16.mxu0 0
      %889 = vmatpush2.bf16.msra.mxu0 0
      %890 = vmatprep.subr.bf16.mxu0 0
      %891 = vmatpush2.bf16.msra.mxu0 0
      %892 = vmatprep.subr.bf16.mxu0 0
      %893 = vmatpush2.bf16.msra.mxu0 0
      %894 = vmatprep.subr.bf16.mxu0 0
      %895 = vmatpush2.bf16.msra.mxu0 0
      %896 = vmatprep.subr.bf16.mxu0 0
      %897 = vmatpush2.bf16.msra.mxu0 0
      %898 = vmatprep.subr.bf16.mxu0 0
      %899 = vmatpush2.bf16.msra.mxu0 0
      %900 = vmatprep.mubr.bf16.mxu0 0
      %901 = vmatmul.mubr.bf16.gmra.mxu0 %v845
      %v902 = vpop.f32.mrf.mxu0
      %v903 = vadd.f32 %v830, %v902
      %v904 = vpop.f32.mrf.mxu0
      %v905 = vpop.f32.mrf.mxu0
      %v906 = vadd.f32 %v830, %v905
      %v907 = vpop.f32.mrf.mxu0
      %908 = vmatprep.mubr.bf16.mxu0 0
      %909 = vmatmul.mubr.bf16.gmra.mxu0 %v848
      %v910 = vpop.f32.mrf.mxu0
      %v911 = vadd.f32 %v830, %v910
      %v912 = vpop.f32.mrf.mxu0
      %v913 = vpop.f32.mrf.mxu0
      %v914 = vadd.f32 %v830, %v913
      %v915 = vpop.f32.mrf.mxu0
      %916 = vmatprep.mubr.bf16.mxu0 0
      %917 = vmatmul.mubr.bf16.gmra.mxu0 %v851
      %v918 = vpop.f32.mrf.mxu0
      %v919 = vadd.f32 %v830, %v918
      %v920 = vpop.f32.mrf.mxu0
      %v921 = vpop.f32.mrf.mxu0
      %v922 = vadd.f32 %v830, %v921
      %v923 = vpop.f32.mrf.mxu0
      %924 = vmatprep.mubr.bf16.mxu0 0
      %925 = vmatmul.mubr.bf16.gmra.mxu0 %v854
      %v926 = vpop.f32.mrf.mxu0
      %v927 = vadd.f32 %v830, %v926
      %v928 = vpop.f32.mrf.mxu0
      %v929 = vpop.f32.mrf.mxu0
      %v930 = vadd.f32 %v830, %v929
      %v931 = vpop.f32.mrf.mxu0
      %932 = vmatprep.mubr.bf16.mxu0 0
      %933 = vmatmul.mubr.bf16.gmra.mxu0 %v857
      %v934 = vpop.f32.mrf.mxu0
      %v935 = vadd.f32 %v830, %v934
      %v936 = vpop.f32.mrf.mxu0
      %v937 = vpop.f32.mrf.mxu0
      %v938 = vadd.f32 %v830, %v937
      %v939 = vpop.f32.mrf.mxu0
      %940 = vmatprep.mubr.bf16.mxu0 0
      %941 = vmatmul.mubr.bf16.gmra.mxu0 %v860
      %v942 = vpop.f32.mrf.mxu0
      %v943 = vadd.f32 %v830, %v942
      %v944 = vpop.f32.mrf.mxu0
      %v945 = vpop.f32.mrf.mxu0
      %v946 = vadd.f32 %v830, %v945
      %v947 = vpop.f32.mrf.mxu0
      %948 = vmatprep.mubr.bf16.mxu0 0
      %949 = vmatmul.mubr.bf16.gmra.mxu0 %v863
      %v950 = vpop.f32.mrf.mxu0
      %v951 = vadd.f32 %v830, %v950
      %v952 = vpop.f32.mrf.mxu0
      %v953 = vpop.f32.mrf.mxu0
      %v954 = vadd.f32 %v830, %v953
      %v955 = vpop.f32.mrf.mxu0
      %956 = vmatprep.mubr.bf16.mxu0 0
      %957 = vmatmul.mubr.bf16.gmra.mxu0 %v866
      %v958 = vpop.f32.mrf.mxu0
      %v959 = vadd.f32 %v830, %v958
      %v960 = vpop.f32.mrf.mxu0
      %v961 = vpop.f32.mrf.mxu0
      %v962 = vadd.f32 %v830, %v961
      %v963 = vpop.f32.mrf.mxu0
      %964 = vdwg.mxu0
      %v965 = vpack.c.bf16 %v754, %v751
      %v966 = vpack.c.bf16 %v762, %v759
      %v967 = vpack.c.bf16 %v770, %v767
      %v968 = vpack.c.bf16 %v778, %v775
      %v969 = vpack.c.bf16 %v786, %v783
      %v970 = vpack.c.bf16 %v794, %v791
      %v971 = vpack.c.bf16 %v802, %v799
      %v972 = vpack.c.bf16 %v810, %v807
      %v973 = vpack.c.bf16 %v906, %v903
      %v974 = vpack.c.bf16 %v914, %v911
      %v975 = vpack.c.bf16 %v922, %v919
      %v976 = vpack.c.bf16 %v930, %v927
      %v977 = vpack.c.bf16 %v938, %v935
      %v978 = vpack.c.bf16 %v946, %v943
      %v979 = vpack.c.bf16 %v954, %v951
      %v980 = vpack.c.bf16 %v962, %v959
      %989 = vrot.lane.b32.xlu0 %v965, 96
      %v990 = vpop.permute.xlu0 %989
      %991 = vrot.lane.b32.xlu0 %v966, 96
      %v992 = vpop.permute.xlu0 %991
      %993 = vrot.lane.b32.xlu0 %v967, 96
      %v994 = vpop.permute.xlu0 %993
      %995 = vrot.lane.b32.xlu0 %v968, 96
      %v996 = vpop.permute.xlu0 %995
      %997 = vrot.lane.b32.xlu0 %v969, 96
      %v998 = vpop.permute.xlu0 %997
      %999 = vrot.lane.b32.xlu0 %v970, 96
      %v1000 = vpop.permute.xlu0 %999
      %1001 = vrot.lane.b32.xlu0 %v971, 96
      %v1002 = vpop.permute.xlu0 %1001
      %1003 = vrot.lane.b32.xlu0 %v972, 96
      %v1004 = vpop.permute.xlu0 %1003
      %vm1005 = vcmask 64512
      %v1007 = vsel %vm1005, %v965, 0
      %v1010 = vsel %vm1005, %v966, 0
      %v1013 = vsel %vm1005, %v967, 0
      %v1016 = vsel %vm1005, %v968, 0
      %v1019 = vsel %vm1005, %v969, 0
      %v1022 = vsel %vm1005, %v970, 0
      %v1025 = vsel %vm1005, %v971, 0
      %v1028 = vsel %vm1005, %v972, 0
      %v1031 = vsel %vm1005, %v990, 0
      %v1034 = vsel %vm1005, %v992, 0
      %v1037 = vsel %vm1005, %v994, 0
      %v1040 = vsel %vm1005, %v996, 0
      %v1043 = vsel %vm1005, %v998, 0
      %v1046 = vsel %vm1005, %v1000, 0
      %v1049 = vsel %vm1005, %v1002, 0
      %v1052 = vsel %vm1005, %v1004, 0
      %1054 = vmatprep.subr.bf16.mxu0 0
      %1055 = vmatpush1.bf16.xpose.msra.mxu0 %v1052
      %1056 = vmatprep.subr.bf16.mxu0 0
      %1057 = vmatpush1.bf16.xpose.msra.mxu0 %v1049
      %1058 = vmatprep.subr.bf16.mxu0 0
      %1059 = vmatpush1.bf16.xpose.msra.mxu0 %v1046
      %1060 = vmatprep.subr.bf16.mxu0 0
      %1061 = vmatpush1.bf16.xpose.msra.mxu0 %v1043
      %1062 = vmatprep.subr.bf16.mxu0 0
      %1063 = vmatpush1.bf16.xpose.msra.mxu0 %v1040
      %1064 = vmatprep.subr.bf16.mxu0 0
      %1065 = vmatpush1.bf16.xpose.msra.mxu0 %v1037
      %1066 = vmatprep.subr.bf16.mxu0 0
      %1067 = vmatpush1.bf16.xpose.msra.mxu0 %v1034
      %1068 = vmatprep.subr.bf16.mxu0 0
      %1069 = vmatpush1.bf16.xpose.msra.mxu0 %v1031
      %1070 = vmatprep.subr.bf16.mxu0 0
      %1071 = vmatpush2.bf16.xpose.msra.mxu0 0
      %1072 = vmatprep.subr.bf16.mxu0 0
      %1073 = vmatpush2.bf16.xpose.msra.mxu0 0
      %1074 = vmatprep.subr.bf16.mxu0 0
      %1075 = vmatpush2.bf16.xpose.msra.mxu0 0
      %1076 = vmatprep.subr.bf16.mxu0 0
      %1077 = vmatpush2.bf16.xpose.msra.mxu0 0
      %1078 = vmatprep.subr.bf16.mxu0 0
      %1079 = vmatpush2.bf16.xpose.msra.mxu0 0
      %1080 = vmatprep.subr.bf16.mxu0 0
      %1081 = vmatpush2.bf16.xpose.msra.mxu0 0
      %1082 = vmatprep.subr.bf16.mxu0 0
      %1083 = vmatpush2.bf16.xpose.msra.mxu0 0
      %1084 = vmatprep.subr.bf16.mxu0 0
      %1085 = vmatpush2.bf16.xpose.msra.mxu0 0
      %1086 = vmatprep.mubr.bf16.mxu0 0
      %1087 = vmatmul.mubr.bf16.gmra.mxu0 %v1007
      %v1088 = vpop.f32.mrf.mxu0
      %v1089 = vadd.f32 0.0, %v1088
      %v1090 = vpop.f32.mrf.mxu0
      %v1091 = vpop.f32.mrf.mxu0
      %v1092 = vadd.f32 0.0, %v1091
      %v1093 = vpop.f32.mrf.mxu0
      %1094 = vmatprep.mubr.bf16.mxu0 0
      %1095 = vmatmul.mubr.bf16.gmra.mxu0 %v1010
      %v1096 = vpop.f32.mrf.mxu0
      %v1097 = vadd.f32 0.0, %v1096
      %v1098 = vpop.f32.mrf.mxu0
      %v1099 = vpop.f32.mrf.mxu0
      %v1100 = vadd.f32 0.0, %v1099
      %v1101 = vpop.f32.mrf.mxu0
      %1102 = vmatprep.mubr.bf16.mxu0 0
      %1103 = vmatmul.mubr.bf16.gmra.mxu0 %v1013
      %v1104 = vpop.f32.mrf.mxu0
      %v1105 = vadd.f32 0.0, %v1104
      %v1106 = vpop.f32.mrf.mxu0
      %v1107 = vpop.f32.mrf.mxu0
      %v1108 = vadd.f32 0.0, %v1107
      %v1109 = vpop.f32.mrf.mxu0
      %1110 = vmatprep.mubr.bf16.mxu0 0
      %1111 = vmatmul.mubr.bf16.gmra.mxu0 %v1016
      %v1112 = vpop.f32.mrf.mxu0
      %v1113 = vadd.f32 0.0, %v1112
      %v1114 = vpop.f32.mrf.mxu0
      %v1115 = vpop.f32.mrf.mxu0
      %v1116 = vadd.f32 0.0, %v1115
      %v1117 = vpop.f32.mrf.mxu0
      %1118 = vmatprep.mubr.bf16.mxu0 0
      %1119 = vmatmul.mubr.bf16.gmra.mxu0 %v1019
      %v1120 = vpop.f32.mrf.mxu0
      %v1121 = vadd.f32 0.0, %v1120
      %v1122 = vpop.f32.mrf.mxu0
      %v1123 = vpop.f32.mrf.mxu0
      %v1124 = vadd.f32 0.0, %v1123
      %v1125 = vpop.f32.mrf.mxu0
      %1126 = vmatprep.mubr.bf16.mxu0 0
      %1127 = vmatmul.mubr.bf16.gmra.mxu0 %v1022
      %v1128 = vpop.f32.mrf.mxu0
      %v1129 = vadd.f32 0.0, %v1128
      %v1130 = vpop.f32.mrf.mxu0
      %v1131 = vpop.f32.mrf.mxu0
      %v1132 = vadd.f32 0.0, %v1131
      %v1133 = vpop.f32.mrf.mxu0
      %1134 = vmatprep.mubr.bf16.mxu0 0
      %1135 = vmatmul.mubr.bf16.gmra.mxu0 %v1025
      %v1136 = vpop.f32.mrf.mxu0
      %v1137 = vadd.f32 0.0, %v1136
      %v1138 = vpop.f32.mrf.mxu0
      %v1139 = vpop.f32.mrf.mxu0
      %v1140 = vadd.f32 0.0, %v1139
      %v1141 = vpop.f32.mrf.mxu0
      %1142 = vmatprep.mubr.bf16.mxu0 0
      %1143 = vmatmul.mubr.bf16.gmra.mxu0 %v1028
      %v1144 = vpop.f32.mrf.mxu0
      %v1145 = vadd.f32 0.0, %v1144
      %v1146 = vpop.f32.mrf.mxu0
      %v1147 = vpop.f32.mrf.mxu0
      %v1148 = vadd.f32 0.0, %v1147
      %v1149 = vpop.f32.mrf.mxu0
      %1150 = vdwg.mxu0
      %v1151 = vmul.f32 %v1089, 0.35355338
      %v1152 = vmul.f32 %v1092, 0.35355338
      %v1153 = vmul.f32 %v1097, 0.35355338
      %v1154 = vmul.f32 %v1100, 0.35355338
      %v1155 = vmul.f32 %v1105, 0.35355338
      %v1156 = vmul.f32 %v1108, 0.35355338
      %v1157 = vmul.f32 %v1113, 0.35355338
      %v1158 = vmul.f32 %v1116, 0.35355338
      %v1159 = vmul.f32 %v1121, 0.35355338
      %v1160 = vmul.f32 %v1124, 0.35355338
      %v1161 = vmul.f32 %v1129, 0.35355338
      %v1162 = vmul.f32 %v1132, 0.35355338
      %v1163 = vmul.f32 %v1137, 0.35355338
      %v1164 = vmul.f32 %v1140, 0.35355338
      %v1165 = vmul.f32 %v1145, 0.35355338
      %v1166 = vmul.f32 %v1148, 0.35355338
      %v1167 = vadd.f32 %v1151, %v578
      %v1168 = vadd.f32 %v1152, %v578
      %v1169 = vadd.f32 %v1153, %v578
      %v1170 = vadd.f32 %v1154, %v578
      %v1171 = vadd.f32 %v1155, %v578
      %v1172 = vadd.f32 %v1156, %v578
      %v1173 = vadd.f32 %v1157, %v578
      %v1174 = vadd.f32 %v1158, %v578
      %v1175 = vadd.f32 %v1159, %v578
      %v1176 = vadd.f32 %v1160, %v578
      %v1177 = vadd.f32 %v1161, %v578
      %v1178 = vadd.f32 %v1162, %v578
      %v1179 = vadd.f32 %v1163, %v578
      %v1180 = vadd.f32 %v1164, %v578
      %v1181 = vadd.f32 %v1165, %v578
      %v1182 = vadd.f32 %v1166, %v578
      %1183 = vmax.xlane.f32.xlu0 %v1167
      %v1184 = vpop.xlane.xlu0 %1183
      %1185 = vmax.xlane.f32.xlu0 %v1168
      %v1186 = vpop.xlane.xlu0 %1185
      %1187 = vmax.xlane.f32.xlu0 %v1169
      %v1188 = vpop.xlane.xlu0 %1187
      %1189 = vmax.xlane.f32.xlu0 %v1170
      %v1190 = vpop.xlane.xlu0 %1189
      %1191 = vmax.xlane.f32.xlu0 %v1171
      %v1192 = vpop.xlane.xlu0 %1191
      %1193 = vmax.xlane.f32.xlu0 %v1172
      %v1194 = vpop.xlane.xlu0 %1193
      %1195 = vmax.xlane.f32.xlu0 %v1173
      %v1196 = vpop.xlane.xlu0 %1195
      %1197 = vmax.xlane.f32.xlu0 %v1174
      %v1198 = vpop.xlane.xlu0 %1197
      %1199 = vmax.xlane.f32.xlu0 %v1175
      %v1200 = vpop.xlane.xlu0 %1199
      %1201 = vmax.xlane.f32.xlu0 %v1176
      %v1202 = vpop.xlane.xlu0 %1201
      %1203 = vmax.xlane.f32.xlu0 %v1177
      %v1204 = vpop.xlane.xlu0 %1203
      %1205 = vmax.xlane.f32.xlu0 %v1178
      %v1206 = vpop.xlane.xlu0 %1205
      %1207 = vmax.xlane.f32.xlu0 %v1179
      %v1208 = vpop.xlane.xlu0 %1207
      %1209 = vmax.xlane.f32.xlu0 %v1180
      %v1210 = vpop.xlane.xlu0 %1209
      %1211 = vmax.xlane.f32.xlu0 %v1181
      %v1212 = vpop.xlane.xlu0 %1211
      %1213 = vmax.xlane.f32.xlu0 %v1182
      %v1214 = vpop.xlane.xlu0 %1213
      %v1215 = vsub.f32 %v1167, %v1184
      %v1216 = vsub.f32 %v1168, %v1186
      %v1217 = vsub.f32 %v1169, %v1188
      %v1218 = vsub.f32 %v1170, %v1190
      %v1219 = vsub.f32 %v1171, %v1192
      %v1220 = vsub.f32 %v1172, %v1194
      %v1221 = vsub.f32 %v1173, %v1196
      %v1222 = vsub.f32 %v1174, %v1198
      %v1223 = vsub.f32 %v1175, %v1200
      %v1224 = vsub.f32 %v1176, %v1202
      %v1225 = vsub.f32 %v1177, %v1204
      %v1226 = vsub.f32 %v1178, %v1206
      %v1227 = vsub.f32 %v1179, %v1208
      %v1228 = vsub.f32 %v1180, %v1210
      %v1229 = vsub.f32 %v1181, %v1212
      %v1230 = vsub.f32 %v1182, %v1214
      %v1231 = vmul.f32 %v1215, 1.442695
      %v1232 = vpow.pop %v1231
      %v1233 = vmul.f32 %v1216, 1.442695
      %v1234 = vpow.pop %v1233
      %v1235 = vmul.f32 %v1217, 1.442695
      %v1236 = vpow.pop %v1235
      %v1237 = vmul.f32 %v1218, 1.442695
      %v1238 = vpow.pop %v1237
      %v1239 = vmul.f32 %v1219, 1.442695
      %v1240 = vpow.pop %v1239
      %v1241 = vmul.f32 %v1220, 1.442695
      %v1242 = vpow.pop %v1241
      %v1243 = vmul.f32 %v1221, 1.442695
      %v1244 = vpow.pop %v1243
      %v1245 = vmul.f32 %v1222, 1.442695
      %v1246 = vpow.pop %v1245
      %v1247 = vmul.f32 %v1223, 1.442695
      %v1248 = vpow.pop %v1247
      %v1249 = vmul.f32 %v1224, 1.442695
      %v1250 = vpow.pop %v1249
      %v1251 = vmul.f32 %v1225, 1.442695
      %v1252 = vpow.pop %v1251
      %v1253 = vmul.f32 %v1226, 1.442695
      %v1254 = vpow.pop %v1253
      %v1255 = vmul.f32 %v1227, 1.442695
      %v1256 = vpow.pop %v1255
      %v1257 = vmul.f32 %v1228, 1.442695
      %v1258 = vpow.pop %v1257
      %v1259 = vmul.f32 %v1229, 1.442695
      %v1260 = vpow.pop %v1259
      %v1261 = vmul.f32 %v1230, 1.442695
      %v1262 = vpow.pop %v1261
      %1263 = vadd.xlane.f32.xlu0 %v1232
      %v1264 = vpop.xlane.xlu0 %1263
      %1265 = vadd.xlane.f32.xlu0 %v1234
      %v1266 = vpop.xlane.xlu0 %1265
      %1267 = vadd.xlane.f32.xlu0 %v1236
      %v1268 = vpop.xlane.xlu0 %1267
      %1269 = vadd.xlane.f32.xlu0 %v1238
      %v1270 = vpop.xlane.xlu0 %1269
      %1271 = vadd.xlane.f32.xlu0 %v1240
      %v1272 = vpop.xlane.xlu0 %1271
      %1273 = vadd.xlane.f32.xlu0 %v1242
      %v1274 = vpop.xlane.xlu0 %1273
      %1275 = vadd.xlane.f32.xlu0 %v1244
      %v1276 = vpop.xlane.xlu0 %1275
      %1277 = vadd.xlane.f32.xlu0 %v1246
      %v1278 = vpop.xlane.xlu0 %1277
      %1279 = vadd.xlane.f32.xlu0 %v1248
      %v1280 = vpop.xlane.xlu0 %1279
      %1281 = vadd.xlane.f32.xlu0 %v1250
      %v1282 = vpop.xlane.xlu0 %1281
      %1283 = vadd.xlane.f32.xlu0 %v1252
      %v1284 = vpop.xlane.xlu0 %1283
      %1285 = vadd.xlane.f32.xlu0 %v1254
      %v1286 = vpop.xlane.xlu0 %1285
      %1287 = vadd.xlane.f32.xlu0 %v1256
      %v1288 = vpop.xlane.xlu0 %1287
      %1289 = vadd.xlane.f32.xlu0 %v1258
      %v1290 = vpop.xlane.xlu0 %1289
      %1291 = vadd.xlane.f32.xlu0 %v1260
      %v1292 = vpop.xlane.xlu0 %1291
      %1293 = vadd.xlane.f32.xlu0 %v1262
      %v1294 = vpop.xlane.xlu0 %1293
      %v1295 = vrcp.pop %v1264
      %v1296 = vrcp.pop %v1266
      %v1297 = vrcp.pop %v1268
      %v1298 = vrcp.pop %v1270
      %v1299 = vrcp.pop %v1272
      %v1300 = vrcp.pop %v1274
      %v1301 = vrcp.pop %v1276
      %v1302 = vrcp.pop %v1278
      %v1303 = vrcp.pop %v1280
      %v1304 = vrcp.pop %v1282
      %v1305 = vrcp.pop %v1284
      %v1306 = vrcp.pop %v1286
      %v1307 = vrcp.pop %v1288
      %v1308 = vrcp.pop %v1290
      %v1309 = vrcp.pop %v1292
      %v1310 = vrcp.pop %v1294
      %v1311 = vmul.f32 %v1232, %v1295
      %v1312 = vmul.f32 %v1234, %v1296
      %v1313 = vmul.f32 %v1236, %v1297
      %v1314 = vmul.f32 %v1238, %v1298
      %v1315 = vmul.f32 %v1240, %v1299
      %v1316 = vmul.f32 %v1242, %v1300
      %v1317 = vmul.f32 %v1244, %v1301
      %v1318 = vmul.f32 %v1246, %v1302
      %v1319 = vmul.f32 %v1248, %v1303
      %v1320 = vmul.f32 %v1250, %v1304
      %v1321 = vmul.f32 %v1252, %v1305
      %v1322 = vmul.f32 %v1254, %v1306
      %v1323 = vmul.f32 %v1256, %v1307
      %v1324 = vmul.f32 %v1258, %v1308
      %v1325 = vmul.f32 %v1260, %v1309
      %v1326 = vmul.f32 %v1262, %v1310
      %v1327 = vpack.c.bf16 %v1312, %v1311
      %v1328 = vpack.c.bf16 %v1314, %v1313
      %v1329 = vpack.c.bf16 %v1316, %v1315
      %v1330 = vpack.c.bf16 %v1318, %v1317
      %v1331 = vpack.c.bf16 %v1320, %v1319
      %v1332 = vpack.c.bf16 %v1322, %v1321
      %v1333 = vpack.c.bf16 %v1324, %v1323
      %v1334 = vpack.c.bf16 %v1326, %v1325
      %1335 = vmatprep.subr.bf16.mxu0 0
      %1336 = vmatpush1.bf16.msra.mxu0 %v980
      %1337 = vmatprep.subr.bf16.mxu0 0
      %1338 = vmatpush1.bf16.msra.mxu0 %v979
      %1339 = vmatprep.subr.bf16.mxu0 0
      %1340 = vmatpush1.bf16.msra.mxu0 %v978
      %1341 = vmatprep.subr.bf16.mxu0 0
      %1342 = vmatpush1.bf16.msra.mxu0 %v977
      %1343 = vmatprep.subr.bf16.mxu0 0
      %1344 = vmatpush1.bf16.msra.mxu0 %v976
      %1345 = vmatprep.subr.bf16.mxu0 0
      %1346 = vmatpush1.bf16.msra.mxu0 %v975
      %1347 = vmatprep.subr.bf16.mxu0 0
      %1348 = vmatpush1.bf16.msra.mxu0 %v974
      %1349 = vmatprep.subr.bf16.mxu0 0
      %1350 = vmatpush1.bf16.msra.mxu0 %v973
      %1351 = vmatprep.subr.bf16.mxu0 0
      %1352 = vmatpush2.bf16.msra.mxu0 0
      %1353 = vmatprep.subr.bf16.mxu0 0
      %1354 = vmatpush2.bf16.msra.mxu0 0
      %1355 = vmatprep.subr.bf16.mxu0 0
      %1356 = vmatpush2.bf16.msra.mxu0 0
      %1357 = vmatprep.subr.bf16.mxu0 0
      %1358 = vmatpush2.bf16.msra.mxu0 0
      %1359 = vmatprep.subr.bf16.mxu0 0
      %1360 = vmatpush2.bf16.msra.mxu0 0
      %1361 = vmatprep.subr.bf16.mxu0 0
      %1362 = vmatpush2.bf16.msra.mxu0 0
      %1363 = vmatprep.subr.bf16.mxu0 0
      %1364 = vmatpush2.bf16.msra.mxu0 0
      %1365 = vmatprep.subr.bf16.mxu0 0
      %1366 = vmatpush2.bf16.msra.mxu0 0
      %1367 = vmatprep.mubr.bf16.mxu0 0
      %1368 = vmatmul.mubr.bf16.gmra.mxu0 %v1327
      %v1369 = vpop.f32.mrf.mxu0
      %v1370 = vadd.f32 0.0, %v1369
      %v1371 = vpop.f32.mrf.mxu0
      %v1372 = vpop.f32.mrf.mxu0
      %v1373 = vadd.f32 0.0, %v1372
      %v1374 = vpop.f32.mrf.mxu0
      %1375 = vmatprep.mubr.bf16.mxu0 0
      %1376 = vmatmul.mubr.bf16.gmra.mxu0 %v1328
      %v1377 = vpop.f32.mrf.mxu0
      %v1378 = vadd.f32 0.0, %v1377
      %v1379 = vpop.f32.mrf.mxu0
      %v1380 = vpop.f32.mrf.mxu0
      %v1381 = vadd.f32 0.0, %v1380
      %v1382 = vpop.f32.mrf.mxu0
      %1383 = vmatprep.mubr.bf16.mxu0 0
      %1384 = vmatmul.mubr.bf16.gmra.mxu0 %v1329
      %v1385 = vpop.f32.mrf.mxu0
      %v1386 = vadd.f32 0.0, %v1385
      %v1387 = vpop.f32.mrf.mxu0
      %v1388 = vpop.f32.mrf.mxu0
      %v1389 = vadd.f32 0.0, %v1388
      %v1390 = vpop.f32.mrf.mxu0
      %1391 = vmatprep.mubr.bf16.mxu0 0
      %1392 = vmatmul.mubr.bf16.gmra.mxu0 %v1330
      %v1393 = vpop.f32.mrf.mxu0
      %v1394 = vadd.f32 0.0, %v1393
      %v1395 = vpop.f32.mrf.mxu0
      %v1396 = vpop.f32.mrf.mxu0
      %v1397 = vadd.f32 0.0, %v1396
      %v1398 = vpop.f32.mrf.mxu0
      %1399 = vmatprep.mubr.bf16.mxu0 0
      %1400 = vmatmul.mubr.bf16.gmra.mxu0 %v1331
      %v1401 = vpop.f32.mrf.mxu0
      %v1402 = vadd.f32 0.0, %v1401
      %v1403 = vpop.f32.mrf.mxu0
      %v1404 = vpop.f32.mrf.mxu0
      %v1405 = vadd.f32 0.0, %v1404
      %v1406 = vpop.f32.mrf.mxu0
      %1407 = vmatprep.mubr.bf16.mxu0 0
      %1408 = vmatmul.mubr.bf16.gmra.mxu0 %v1332
      %v1409 = vpop.f32.mrf.mxu0
      %v1410 = vadd.f32 0.0, %v1409
      %v1411 = vpop.f32.mrf.mxu0
      %v1412 = vpop.f32.mrf.mxu0
      %v1413 = vadd.f32 0.0, %v1412
      %v1414 = vpop.f32.mrf.mxu0
      %1415 = vmatprep.mubr.bf16.mxu0 0
      %1416 = vmatmul.mubr.bf16.gmra.mxu0 %v1333
      %v1417 = vpop.f32.mrf.mxu0
      %v1418 = vadd.f32 0.0, %v1417
      %v1419 = vpop.f32.mrf.mxu0
      %v1420 = vpop.f32.mrf.mxu0
      %v1421 = vadd.f32 0.0, %v1420
      %v1422 = vpop.f32.mrf.mxu0
      %1423 = vmatprep.mubr.bf16.mxu0 0
      %1424 = vmatmul.mubr.bf16.gmra.mxu0 %v1334
      %v1425 = vpop.f32.mrf.mxu0
      %v1426 = vadd.f32 0.0, %v1425
      %v1427 = vpop.f32.mrf.mxu0
      %v1428 = vpop.f32.mrf.mxu0
      %v1429 = vadd.f32 0.0, %v1428
      %v1430 = vpop.f32.mrf.mxu0
      %1431 = vdwg.mxu0
      %1432 = vst.msk [vmem:[#allocation2] sm:$0xff] %vm1005, %v1370
      %1433 = vst.msk [vmem:[#allocation2 + $0x8] sm:$0xff] %vm1005, %v1373
      %1434 = vst.msk [vmem:[#allocation2 + $0x10] sm:$0xff] %vm1005, %v1378
      %1435 = vst.msk [vmem:[#allocation2 + $0x18] sm:$0xff] %vm1005, %v1381
      %1436 = vst.msk [vmem:[#allocation2 + $0x20] sm:$0xff] %vm1005, %v1386
      %1437 = vst.msk [vmem:[#allocation2 + $0x28] sm:$0xff] %vm1005, %v1389
      %1438 = vst.msk [vmem:[#allocation2 + $0x30] sm:$0xff] %vm1005, %v1394
      %1439 = vst.msk [vmem:[#allocation2 + $0x38] sm:$0xff] %vm1005, %v1397
      %1440 = vst.msk [vmem:[#allocation2 + $0x40] sm:$0xff] %vm1005, %v1402
      %1441 = vst.msk [vmem:[#allocation2 + $0x48] sm:$0xff] %vm1005, %v1405
      %1442 = vst.msk [vmem:[#allocation2 + $0x50] sm:$0xff] %vm1005, %v1410
      %1443 = vst.msk [vmem:[#allocation2 + $0x58] sm:$0xff] %vm1005, %v1413
      %1444 = vst.msk [vmem:[#allocation2 + $0x60] sm:$0xff] %vm1005, %v1418
      %1445 = vst.msk [vmem:[#allocation2 + $0x68] sm:$0xff] %vm1005, %v1421
      %1446 = vst.msk [vmem:[#allocation2 + $0x70] sm:$0xff] %vm1005, %v1426
      %1447 = vst.msk [vmem:[#allocation2 + $0x78] sm:$0xff] %vm1005, %v1429
      %1448 = vrot.lane.b32.xlu0 %v965, 120
      %v1449 = vpop.permute.xlu0 %1448
      %1450 = vrot.lane.b32.xlu0 %v966, 120
      %v1451 = vpop.permute.xlu0 %1450
      %1452 = vrot.lane.b32.xlu0 %v967, 120
      %v1453 = vpop.permute.xlu0 %1452
      %1454 = vrot.lane.b32.xlu0 %v968, 120
      %v1455 = vpop.permute.xlu0 %1454
      %1456 = vrot.lane.b32.xlu0 %v969, 120
      %v1457 = vpop.permute.xlu0 %1456
      %1458 = vrot.lane.b32.xlu0 %v970, 120
      %v1459 = vpop.permute.xlu0 %1458
      %1460 = vrot.lane.b32.xlu0 %v971, 120
      %v1461 = vpop.permute.xlu0 %1460
      %1462 = vrot.lane.b32.xlu0 %v972, 120
      %v1463 = vpop.permute.xlu0 %1462
      %1464 = vrot.lane.b32.xlu0 %v965, 88
      %v1465 = vpop.permute.xlu0 %1464
      %1466 = vrot.lane.b32.xlu0 %v966, 88
      %v1467 = vpop.permute.xlu0 %1466
      %1468 = vrot.lane.b32.xlu0 %v967, 88
      %v1469 = vpop.permute.xlu0 %1468
      %1470 = vrot.lane.b32.xlu0 %v968, 88
      %v1471 = vpop.permute.xlu0 %1470
      %1472 = vrot.lane.b32.xlu0 %v969, 88
      %v1473 = vpop.permute.xlu0 %1472
      %1474 = vrot.lane.b32.xlu0 %v970, 88
      %v1475 = vpop.permute.xlu0 %1474
      %1476 = vrot.lane.b32.xlu0 %v971, 88
      %v1477 = vpop.permute.xlu0 %1476
      %1478 = vrot.lane.b32.xlu0 %v972, 88
      %v1479 = vpop.permute.xlu0 %1478
      %v1481 = vsel %vm1005, %v1449, 0
      %v1484 = vsel %vm1005, %v1451, 0
      %v1487 = vsel %vm1005, %v1453, 0
      %v1490 = vsel %vm1005, %v1455, 0
      %v1493 = vsel %vm1005, %v1457, 0
      %v1496 = vsel %vm1005, %v1459, 0
      %v1499 = vsel %vm1005, %v1461, 0
      %v1502 = vsel %vm1005, %v1463, 0
      %v1505 = vsel %vm1005, %v1465, 0
      %v1508 = vsel %vm1005, %v1467, 0
      %v1511 = vsel %vm1005, %v1469, 0
      %v1514 = vsel %vm1005, %v1471, 0
      %v1517 = vsel %vm1005, %v1473, 0
      %v1520 = vsel %vm1005, %v1475, 0
      %v1523 = vsel %vm1005, %v1477, 0
      %v1526 = vsel %vm1005, %v1479, 0
      %1528 = vmatprep.subr.bf16.mxu0 0
      %1529 = vmatpush1.bf16.xpose.msra.mxu0 %v1526
      %1530 = vmatprep.subr.bf16.mxu0 0
      %1531 = vmatpush1.bf16.xpose.msra.mxu0 %v1523
      %1532 = vmatprep.subr.bf16.mxu0 0
      %1533 = vmatpush1.bf16.xpose.msra.mxu0 %v1520
      %1534 = vmatprep.subr.bf16.mxu0 0
      %1535 = vmatpush1.bf16.xpose.msra.mxu0 %v1517
      %1536 = vmatprep.subr.bf16.mxu0 0
      %1537 = vmatpush1.bf16.xpose.msra.mxu0 %v1514
      %1538 = vmatprep.subr.bf16.mxu0 0
      %1539 = vmatpush1.bf16.xpose.msra.mxu0 %v1511
      %1540 = vmatprep.subr.bf16.mxu0 0
      %1541 = vmatpush1.bf16.xpose.msra.mxu0 %v1508
      %1542 = vmatprep.subr.bf16.mxu0 0
      %1543 = vmatpush1.bf16.xpose.msra.mxu0 %v1505
      %1544 = vmatprep.subr.bf16.mxu0 0
      %1545 = vmatpush2.bf16.xpose.msra.mxu0 0
      %1546 = vmatprep.subr.bf16.mxu0 0
      %1547 = vmatpush2.bf16.xpose.msra.mxu0 0
      %1548 = vmatprep.subr.bf16.mxu0 0
      %1549 = vmatpush2.bf16.xpose.msra.mxu0 0
      %1550 = vmatprep.subr.bf16.mxu0 0
      %1551 = vmatpush2.bf16.xpose.msra.mxu0 0
      %1552 = vmatprep.subr.bf16.mxu0 0
      %1553 = vmatpush2.bf16.xpose.msra.mxu0 0
      %1554 = vmatprep.subr.bf16.mxu0 0
      %1555 = vmatpush2.bf16.xpose.msra.mxu0 0
      %1556 = vmatprep.subr.bf16.mxu0 0
      %1557 = vmatpush2.bf16.xpose.msra.mxu0 0
      %1558 = vmatprep.subr.bf16.mxu0 0
      %1559 = vmatpush2.bf16.xpose.msra.mxu0 0
      %1560 = vmatprep.mubr.bf16.mxu0 0
      %1561 = vmatmul.mubr.bf16.gmra.mxu0 %v1481
      %v1562 = vpop.f32.mrf.mxu0
      %v1563 = vadd.f32 0.0, %v1562
      %v1564 = vpop.f32.mrf.mxu0
      %v1565 = vpop.f32.mrf.mxu0
      %v1566 = vadd.f32 0.0, %v1565
      %v1567 = vpop.f32.mrf.mxu0
      %1568 = vmatprep.mubr.bf16.mxu0 0
      %1569 = vmatmul.mubr.bf16.gmra.mxu0 %v1484
      %v1570 = vpop.f32.mrf.mxu0
      %v1571 = vadd.f32 0.0, %v1570
      %v1572 = vpop.f32.mrf.mxu0
      %v1573 = vpop.f32.mrf.mxu0
      %v1574 = vadd.f32 0.0, %v1573
      %v1575 = vpop.f32.mrf.mxu0
      %1576 = vmatprep.mubr.bf16.mxu0 0
      %1577 = vmatmul.mubr.bf16.gmra.mxu0 %v1487
      %v1578 = vpop.f32.mrf.mxu0
      %v1579 = vadd.f32 0.0, %v1578
      %v1580 = vpop.f32.mrf.mxu0
      %v1581 = vpop.f32.mrf.mxu0
      %v1582 = vadd.f32 0.0, %v1581
      %v1583 = vpop.f32.mrf.mxu0
      %1584 = vmatprep.mubr.bf16.mxu0 0
      %1585 = vmatmul.mubr.bf16.gmra.mxu0 %v1490
      %v1586 = vpop.f32.mrf.mxu0
      %v1587 = vadd.f32 0.0, %v1586
      %v1588 = vpop.f32.mrf.mxu0
      %v1589 = vpop.f32.mrf.mxu0
      %v1590 = vadd.f32 0.0, %v1589
      %v1591 = vpop.f32.mrf.mxu0
      %1592 = vmatprep.mubr.bf16.mxu0 0
      %1593 = vmatmul.mubr.bf16.gmra.mxu0 %v1493
      %v1594 = vpop.f32.mrf.mxu0
      %v1595 = vadd.f32 0.0, %v1594
      %v1596 = vpop.f32.mrf.mxu0
      %v1597 = vpop.f32.mrf.mxu0
      %v1598 = vadd.f32 0.0, %v1597
      %v1599 = vpop.f32.mrf.mxu0
      %1600 = vmatprep.mubr.bf16.mxu0 0
      %1601 = vmatmul.mubr.bf16.gmra.mxu0 %v1496
      %v1602 = vpop.f32.mrf.mxu0
      %v1603 = vadd.f32 0.0, %v1602
      %v1604 = vpop.f32.mrf.mxu0
      %v1605 = vpop.f32.mrf.mxu0
      %v1606 = vadd.f32 0.0, %v1605
      %v1607 = vpop.f32.mrf.mxu0
      %1608 = vmatprep.mubr.bf16.mxu0 0
      %1609 = vmatmul.mubr.bf16.gmra.mxu0 %v1499
      %v1610 = vpop.f32.mrf.mxu0
      %v1611 = vadd.f32 0.0, %v1610
      %v1612 = vpop.f32.mrf.mxu0
      %v1613 = vpop.f32.mrf.mxu0
      %v1614 = vadd.f32 0.0, %v1613
      %v1615 = vpop.f32.mrf.mxu0
      %1616 = vmatprep.mubr.bf16.mxu0 0
      %1617 = vmatmul.mubr.bf16.gmra.mxu0 %v1502
      %v1618 = vpop.f32.mrf.mxu0
      %v1619 = vadd.f32 0.0, %v1618
      %v1620 = vpop.f32.mrf.mxu0
      %v1621 = vpop.f32.mrf.mxu0
      %v1622 = vadd.f32 0.0, %v1621
      %v1623 = vpop.f32.mrf.mxu0
      %1624 = vdwg.mxu0
      %v1625 = vmul.f32 %v1563, 0.35355338
      %v1626 = vmul.f32 %v1566, 0.35355338
      %v1627 = vmul.f32 %v1571, 0.35355338
      %v1628 = vmul.f32 %v1574, 0.35355338
      %v1629 = vmul.f32 %v1579, 0.35355338
      %v1630 = vmul.f32 %v1582, 0.35355338
      %v1631 = vmul.f32 %v1587, 0.35355338
      %v1632 = vmul.f32 %v1590, 0.35355338
      %v1633 = vmul.f32 %v1595, 0.35355338
      %v1634 = vmul.f32 %v1598, 0.35355338
      %v1635 = vmul.f32 %v1603, 0.35355338
      %v1636 = vmul.f32 %v1606, 0.35355338
      %v1637 = vmul.f32 %v1611, 0.35355338
      %v1638 = vmul.f32 %v1614, 0.35355338
      %v1639 = vmul.f32 %v1619, 0.35355338
      %v1640 = vmul.f32 %v1622, 0.35355338
      %v1641 = vadd.f32 %v1625, %v578
      %v1642 = vadd.f32 %v1626, %v578
      %v1643 = vadd.f32 %v1627, %v578
      %v1644 = vadd.f32 %v1628, %v578
      %v1645 = vadd.f32 %v1629, %v578
      %v1646 = vadd.f32 %v1630, %v578
      %v1647 = vadd.f32 %v1631, %v578
      %v1648 = vadd.f32 %v1632, %v578
      %v1649 = vadd.f32 %v1633, %v578
      %v1650 = vadd.f32 %v1634, %v578
      %v1651 = vadd.f32 %v1635, %v578
      %v1652 = vadd.f32 %v1636, %v578
      %v1653 = vadd.f32 %v1637, %v578
      %v1654 = vadd.f32 %v1638, %v578
      %v1655 = vadd.f32 %v1639, %v578
      %v1656 = vadd.f32 %v1640, %v578
      %1657 = vmax.xlane.f32.xlu0 %v1641
      %v1658 = vpop.xlane.xlu0 %1657
      %1659 = vmax.xlane.f32.xlu0 %v1642
      %v1660 = vpop.xlane.xlu0 %1659
      %1661 = vmax.xlane.f32.xlu0 %v1643
      %v1662 = vpop.xlane.xlu0 %1661
      %1663 = vmax.xlane.f32.xlu0 %v1644
      %v1664 = vpop.xlane.xlu0 %1663
      %1665 = vmax.xlane.f32.xlu0 %v1645
      %v1666 = vpop.xlane.xlu0 %1665
      %1667 = vmax.xlane.f32.xlu0 %v1646
      %v1668 = vpop.xlane.xlu0 %1667
      %1669 = vmax.xlane.f32.xlu0 %v1647
      %v1670 = vpop.xlane.xlu0 %1669
      %1671 = vmax.xlane.f32.xlu0 %v1648
      %v1672 = vpop.xlane.xlu0 %1671
      %1673 = vmax.xlane.f32.xlu0 %v1649
      %v1674 = vpop.xlane.xlu0 %1673
      %1675 = vmax.xlane.f32.xlu0 %v1650
      %v1676 = vpop.xlane.xlu0 %1675
      %1677 = vmax.xlane.f32.xlu0 %v1651
      %v1678 = vpop.xlane.xlu0 %1677
      %1679 = vmax.xlane.f32.xlu0 %v1652
      %v1680 = vpop.xlane.xlu0 %1679
      %1681 = vmax.xlane.f32.xlu0 %v1653
      %v1682 = vpop.xlane.xlu0 %1681
      %1683 = vmax.xlane.f32.xlu0 %v1654
      %v1684 = vpop.xlane.xlu0 %1683
      %1685 = vmax.xlane.f32.xlu0 %v1655
      %v1686 = vpop.xlane.xlu0 %1685
      %1687 = vmax.xlane.f32.xlu0 %v1656
      %v1688 = vpop.xlane.xlu0 %1687
      %v1689 = vsub.f32 %v1641, %v1658
      %v1690 = vsub.f32 %v1642, %v1660
      %v1691 = vsub.f32 %v1643, %v1662
      %v1692 = vsub.f32 %v1644, %v1664
      %v1693 = vsub.f32 %v1645, %v1666
      %v1694 = vsub.f32 %v1646, %v1668
      %v1695 = vsub.f32 %v1647, %v1670
      %v1696 = vsub.f32 %v1648, %v1672
      %v1697 = vsub.f32 %v1649, %v1674
      %v1698 = vsub.f32 %v1650, %v1676
      %v1699 = vsub.f32 %v1651, %v1678
      %v1700 = vsub.f32 %v1652, %v1680
      %v1701 = vsub.f32 %v1653, %v1682
      %v1702 = vsub.f32 %v1654, %v1684
      %v1703 = vsub.f32 %v1655, %v1686
      %v1704 = vsub.f32 %v1656, %v1688
      %v1705 = vmul.f32 %v1689, 1.442695
      %v1706 = vpow.pop %v1705
      %v1707 = vmul.f32 %v1690, 1.442695
      %v1708 = vpow.pop %v1707
      %v1709 = vmul.f32 %v1691, 1.442695
      %v1710 = vpow.pop %v1709
      %v1711 = vmul.f32 %v1692, 1.442695
      %v1712 = vpow.pop %v1711
      %v1713 = vmul.f32 %v1693, 1.442695
      %v1714 = vpow.pop %v1713
      %v1715 = vmul.f32 %v1694, 1.442695
      %v1716 = vpow.pop %v1715
      %v1717 = vmul.f32 %v1695, 1.442695
      %v1718 = vpow.pop %v1717
      %v1719 = vmul.f32 %v1696, 1.442695
      %v1720 = vpow.pop %v1719
      %v1721 = vmul.f32 %v1697, 1.442695
      %v1722 = vpow.pop %v1721
      %v1723 = vmul.f32 %v1698, 1.442695
      %v1724 = vpow.pop %v1723
      %v1725 = vmul.f32 %v1699, 1.442695
      %v1726 = vpow.pop %v1725
      %v1727 = vmul.f32 %v1700, 1.442695
      %v1728 = vpow.pop %v1727
      %v1729 = vmul.f32 %v1701, 1.442695
      %v1730 = vpow.pop %v1729
      %v1731 = vmul.f32 %v1702, 1.442695
      %v1732 = vpow.pop %v1731
      %v1733 = vmul.f32 %v1703, 1.442695
      %v1734 = vpow.pop %v1733
      %v1735 = vmul.f32 %v1704, 1.442695
      %v1736 = vpow.pop %v1735
      %1737 = vadd.xlane.f32.xlu0 %v1706
      %v1738 = vpop.xlane.xlu0 %1737
      %1739 = vadd.xlane.f32.xlu0 %v1708
      %v1740 = vpop.xlane.xlu0 %1739
      %1741 = vadd.xlane.f32.xlu0 %v1710
      %v1742 = vpop.xlane.xlu0 %1741
      %1743 = vadd.xlane.f32.xlu0 %v1712
      %v1744 = vpop.xlane.xlu0 %1743
      %1745 = vadd.xlane.f32.xlu0 %v1714
      %v1746 = vpop.xlane.xlu0 %1745
      %1747 = vadd.xlane.f32.xlu0 %v1716
      %v1748 = vpop.xlane.xlu0 %1747
      %1749 = vadd.xlane.f32.xlu0 %v1718
      %v1750 = vpop.xlane.xlu0 %1749
      %1751 = vadd.xlane.f32.xlu0 %v1720
      %v1752 = vpop.xlane.xlu0 %1751
      %1753 = vadd.xlane.f32.xlu0 %v1722
      %v1754 = vpop.xlane.xlu0 %1753
      %1755 = vadd.xlane.f32.xlu0 %v1724
      %v1756 = vpop.xlane.xlu0 %1755
      %1757 = vadd.xlane.f32.xlu0 %v1726
      %v1758 = vpop.xlane.xlu0 %1757
      %1759 = vadd.xlane.f32.xlu0 %v1728
      %v1760 = vpop.xlane.xlu0 %1759
      %1761 = vadd.xlane.f32.xlu0 %v1730
      %v1762 = vpop.xlane.xlu0 %1761
      %1763 = vadd.xlane.f32.xlu0 %v1732
      %v1764 = vpop.xlane.xlu0 %1763
      %1765 = vadd.xlane.f32.xlu0 %v1734
      %v1766 = vpop.xlane.xlu0 %1765
      %1767 = vadd.xlane.f32.xlu0 %v1736
      %v1768 = vpop.xlane.xlu0 %1767
      %v1769 = vrcp.pop %v1738
      %v1770 = vrcp.pop %v1740
      %v1771 = vrcp.pop %v1742
      %v1772 = vrcp.pop %v1744
      %v1773 = vrcp.pop %v1746
      %v1774 = vrcp.pop %v1748
      %v1775 = vrcp.pop %v1750
      %v1776 = vrcp.pop %v1752
      %v1777 = vrcp.pop %v1754
      %v1778 = vrcp.pop %v1756
      %v1779 = vrcp.pop %v1758
      %v1780 = vrcp.pop %v1760
      %v1781 = vrcp.pop %v1762
      %v1782 = vrcp.pop %v1764
      %v1783 = vrcp.pop %v1766
      %v1784 = vrcp.pop %v1768
      %v1785 = vmul.f32 %v1706, %v1769
      %v1786 = vmul.f32 %v1708, %v1770
      %v1787 = vmul.f32 %v1710, %v1771
      %v1788 = vmul.f32 %v1712, %v1772
      %v1789 = vmul.f32 %v1714, %v1773
      %v1790 = vmul.f32 %v1716, %v1774
      %v1791 = vmul.f32 %v1718, %v1775
      %v1792 = vmul.f32 %v1720, %v1776
      %v1793 = vmul.f32 %v1722, %v1777
      %v1794 = vmul.f32 %v1724, %v1778
      %v1795 = vmul.f32 %v1726, %v1779
      %v1796 = vmul.f32 %v1728, %v1780
      %v1797 = vmul.f32 %v1730, %v1781
      %v1798 = vmul.f32 %v1732, %v1782
      %v1799 = vmul.f32 %v1734, %v1783
      %v1800 = vmul.f32 %v1736, %v1784
      %v1801 = vpack.c.bf16 %v1786, %v1785
      %v1802 = vpack.c.bf16 %v1788, %v1787
      %v1803 = vpack.c.bf16 %v1790, %v1789
      %v1804 = vpack.c.bf16 %v1792, %v1791
      %v1805 = vpack.c.bf16 %v1794, %v1793
      %v1806 = vpack.c.bf16 %v1796, %v1795
      %v1807 = vpack.c.bf16 %v1798, %v1797
      %v1808 = vpack.c.bf16 %v1800, %v1799
      %1817 = vrot.lane.b32.xlu0 %v973, 120
      %v1818 = vpop.permute.xlu0 %1817
      %1819 = vrot.lane.b32.xlu0 %v974, 120
      %v1820 = vpop.permute.xlu0 %1819
      %1821 = vrot.lane.b32.xlu0 %v975, 120
      %v1822 = vpop.permute.xlu0 %1821
      %1823 = vrot.lane.b32.xlu0 %v976, 120
      %v1824 = vpop.permute.xlu0 %1823
      %1825 = vrot.lane.b32.xlu0 %v977, 120
      %v1826 = vpop.permute.xlu0 %1825
      %1827 = vrot.lane.b32.xlu0 %v978, 120
      %v1828 = vpop.permute.xlu0 %1827
      %1829 = vrot.lane.b32.xlu0 %v979, 120
      %v1830 = vpop.permute.xlu0 %1829
      %1831 = vrot.lane.b32.xlu0 %v980, 120
      %v1832 = vpop.permute.xlu0 %1831
      %1841 = vmatprep.subr.bf16.mxu0 0
      %1842 = vmatpush1.bf16.msra.mxu0 %v1832
      %1843 = vmatprep.subr.bf16.mxu0 0
      %1844 = vmatpush1.bf16.msra.mxu0 %v1830
      %1845 = vmatprep.subr.bf16.mxu0 0
      %1846 = vmatpush1.bf16.msra.mxu0 %v1828
      %1847 = vmatprep.subr.bf16.mxu0 0
      %1848 = vmatpush1.bf16.msra.mxu0 %v1826
      %1849 = vmatprep.subr.bf16.mxu0 0
      %1850 = vmatpush1.bf16.msra.mxu0 %v1824
      %1851 = vmatprep.subr.bf16.mxu0 0
      %1852 = vmatpush1.bf16.msra.mxu0 %v1822
      %1853 = vmatprep.subr.bf16.mxu0 0
      %1854 = vmatpush1.bf16.msra.mxu0 %v1820
      %1855 = vmatprep.subr.bf16.mxu0 0
      %1856 = vmatpush1.bf16.msra.mxu0 %v1818
      %1857 = vmatprep.subr.bf16.mxu0 0
      %1858 = vmatpush2.bf16.msra.mxu0 0
      %1859 = vmatprep.subr.bf16.mxu0 0
      %1860 = vmatpush2.bf16.msra.mxu0 0
      %1861 = vmatprep.subr.bf16.mxu0 0
      %1862 = vmatpush2.bf16.msra.mxu0 0
      %1863 = vmatprep.subr.bf16.mxu0 0
      %1864 = vmatpush2.bf16.msra.mxu0 0
      %1865 = vmatprep.subr.bf16.mxu0 0
      %1866 = vmatpush2.bf16.msra.mxu0 0
      %1867 = vmatprep.subr.bf16.mxu0 0
      %1868 = vmatpush2.bf16.msra.mxu0 0
      %1869 = vmatprep.subr.bf16.mxu0 0
      %1870 = vmatpush2.bf16.msra.mxu0 0
      %1871 = vmatprep.subr.bf16.mxu0 0
      %1872 = vmatpush2.bf16.msra.mxu0 0
      %1873 = vmatprep.mubr.bf16.mxu0 0
      %1874 = vmatmul.mubr.bf16.gmra.mxu0 %v1801
      %v1875 = vpop.f32.mrf.mxu0
      %v1876 = vadd.f32 0.0, %v1875
      %v1877 = vpop.f32.mrf.mxu0
      %v1878 = vpop.f32.mrf.mxu0
      %v1879 = vadd.f32 0.0, %v1878
      %v1880 = vpop.f32.mrf.mxu0
      %1881 = vmatprep.mubr.bf16.mxu0 0
      %1882 = vmatmul.mubr.bf16.gmra.mxu0 %v1802
      %v1883 = vpop.f32.mrf.mxu0
      %v1884 = vadd.f32 0.0, %v1883
      %v1885 = vpop.f32.mrf.mxu0
      %v1886 = vpop.f32.mrf.mxu0
      %v1887 = vadd.f32 0.0, %v1886
      %v1888 = vpop.f32.mrf.mxu0
      %1889 = vmatprep.mubr.bf16.mxu0 0
      %1890 = vmatmul.mubr.bf16.gmra.mxu0 %v1803
      %v1891 = vpop.f32.mrf.mxu0
      %v1892 = vadd.f32 0.0, %v1891
      %v1893 = vpop.f32.mrf.mxu0
      %v1894 = vpop.f32.mrf.mxu0
      %v1895 = vadd.f32 0.0, %v1894
      %v1896 = vpop.f32.mrf.mxu0
      %1897 = vmatprep.mubr.bf16.mxu0 0
      %1898 = vmatmul.mubr.bf16.gmra.mxu0 %v1804
      %v1899 = vpop.f32.mrf.mxu0
      %v1900 = vadd.f32 0.0, %v1899
      %v1901 = vpop.f32.mrf.mxu0
      %v1902 = vpop.f32.mrf.mxu0
      %v1903 = vadd.f32 0.0, %v1902
      %v1904 = vpop.f32.mrf.mxu0
      %1905 = vmatprep.mubr.bf16.mxu0 0
      %1906 = vmatmul.mubr.bf16.gmra.mxu0 %v1805
      %v1907 = vpop.f32.mrf.mxu0
      %v1908 = vadd.f32 0.0, %v1907
      %v1909 = vpop.f32.mrf.mxu0
      %v1910 = vpop.f32.mrf.mxu0
      %v1911 = vadd.f32 0.0, %v1910
      %v1912 = vpop.f32.mrf.mxu0
      %1913 = vmatprep.mubr.bf16.mxu0 0
      %1914 = vmatmul.mubr.bf16.gmra.mxu0 %v1806
      %v1915 = vpop.f32.mrf.mxu0
      %v1916 = vadd.f32 0.0, %v1915
      %v1917 = vpop.f32.mrf.mxu0
      %v1918 = vpop.f32.mrf.mxu0
      %v1919 = vadd.f32 0.0, %v1918
      %v1920 = vpop.f32.mrf.mxu0
      %1921 = vmatprep.mubr.bf16.mxu0 0
      %1922 = vmatmul.mubr.bf16.gmra.mxu0 %v1807
      %v1923 = vpop.f32.mrf.mxu0
      %v1924 = vadd.f32 0.0, %v1923
      %v1925 = vpop.f32.mrf.mxu0
      %v1926 = vpop.f32.mrf.mxu0
      %v1927 = vadd.f32 0.0, %v1926
      %v1928 = vpop.f32.mrf.mxu0
      %1929 = vmatprep.mubr.bf16.mxu0 0
      %1930 = vmatmul.mubr.bf16.gmra.mxu0 %v1808
      %v1931 = vpop.f32.mrf.mxu0
      %v1932 = vadd.f32 0.0, %v1931
      %v1933 = vpop.f32.mrf.mxu0
      %v1934 = vpop.f32.mrf.mxu0
      %v1935 = vadd.f32 0.0, %v1934
      %v1936 = vpop.f32.mrf.mxu0
      %1937 = vdwg.mxu0
      %1954 = vrot.lane.b32.xlu0 %v1876, 8
      %v1955 = vpop.permute.xlu0 %1954
      %1956 = vrot.lane.b32.xlu0 %v1879, 8
      %v1957 = vpop.permute.xlu0 %1956
      %1958 = vrot.lane.b32.xlu0 %v1884, 8
      %v1959 = vpop.permute.xlu0 %1958
      %1960 = vrot.lane.b32.xlu0 %v1887, 8
      %v1961 = vpop.permute.xlu0 %1960
      %1962 = vrot.lane.b32.xlu0 %v1892, 8
      %v1963 = vpop.permute.xlu0 %1962
      %1964 = vrot.lane.b32.xlu0 %v1895, 8
      %v1965 = vpop.permute.xlu0 %1964
      %1966 = vrot.lane.b32.xlu0 %v1900, 8
      %v1967 = vpop.permute.xlu0 %1966
      %1968 = vrot.lane.b32.xlu0 %v1903, 8
      %v1969 = vpop.permute.xlu0 %1968
      %1970 = vrot.lane.b32.xlu0 %v1908, 8
      %v1971 = vpop.permute.xlu0 %1970
      %1972 = vrot.lane.b32.xlu0 %v1911, 8
      %v1973 = vpop.permute.xlu0 %1972
      %1974 = vrot.lane.b32.xlu0 %v1916, 8
      %v1975 = vpop.permute.xlu0 %1974
      %1976 = vrot.lane.b32.xlu0 %v1919, 8
      %v1977 = vpop.permute.xlu0 %1976
      %1978 = vrot.lane.b32.xlu0 %v1924, 8
      %v1979 = vpop.permute.xlu0 %1978
      %1980 = vrot.lane.b32.xlu0 %v1927, 8
      %v1981 = vpop.permute.xlu0 %1980
      %1982 = vrot.lane.b32.xlu0 %v1932, 8
      %v1983 = vpop.permute.xlu0 %1982
      %1984 = vrot.lane.b32.xlu0 %v1935, 8
      %v1985 = vpop.permute.xlu0 %1984
      %vm2002 = vcmask 130112
      %2003 = vst.msk [vmem:[#allocation2] sm:$0xff] %vm2002, %v1955
      %2004 = vst.msk [vmem:[#allocation2 + $0x8] sm:$0xff] %vm2002, %v1957
      %2005 = vst.msk [vmem:[#allocation2 + $0x10] sm:$0xff] %vm2002, %v1959
      %2006 = vst.msk [vmem:[#allocation2 + $0x18] sm:$0xff] %vm2002, %v1961
      %2007 = vst.msk [vmem:[#allocation2 + $0x20] sm:$0xff] %vm2002, %v1963
      %2008 = vst.msk [vmem:[#allocation2 + $0x28] sm:$0xff] %vm2002, %v1965
      %2009 = vst.msk [vmem:[#allocation2 + $0x30] sm:$0xff] %vm2002, %v1967
      %2010 = vst.msk [vmem:[#allocation2 + $0x38] sm:$0xff] %vm2002, %v1969
      %2011 = vst.msk [vmem:[#allocation2 + $0x40] sm:$0xff] %vm2002, %v1971
      %2012 = vst.msk [vmem:[#allocation2 + $0x48] sm:$0xff] %vm2002, %v1973
      %2013 = vst.msk [vmem:[#allocation2 + $0x50] sm:$0xff] %vm2002, %v1975
      %2014 = vst.msk [vmem:[#allocation2 + $0x58] sm:$0xff] %vm2002, %v1977
      %2015 = vst.msk [vmem:[#allocation2 + $0x60] sm:$0xff] %vm2002, %v1979
      %2016 = vst.msk [vmem:[#allocation2 + $0x68] sm:$0xff] %vm2002, %v1981
      %2017 = vst.msk [vmem:[#allocation2 + $0x70] sm:$0xff] %vm2002, %v1983
      %2018 = vst.msk [vmem:[#allocation2 + $0x78] sm:$0xff] %vm2002, %v1985
      %2019 = vrot.lane.b32.xlu0 %v965, 112
      %v2020 = vpop.permute.xlu0 %2019
      %2021 = vrot.lane.b32.xlu0 %v966, 112
      %v2022 = vpop.permute.xlu0 %2021
      %2023 = vrot.lane.b32.xlu0 %v967, 112
      %v2024 = vpop.permute.xlu0 %2023
      %2025 = vrot.lane.b32.xlu0 %v968, 112
      %v2026 = vpop.permute.xlu0 %2025
      %2027 = vrot.lane.b32.xlu0 %v969, 112
      %v2028 = vpop.permute.xlu0 %2027
      %2029 = vrot.lane.b32.xlu0 %v970, 112
      %v2030 = vpop.permute.xlu0 %2029
      %2031 = vrot.lane.b32.xlu0 %v971, 112
      %v2032 = vpop.permute.xlu0 %2031
      %2033 = vrot.lane.b32.xlu0 %v972, 112
      %v2034 = vpop.permute.xlu0 %2033
      %2035 = vrot.lane.b32.xlu0 %v965, 80
      %v2036 = vpop.permute.xlu0 %2035
      %2037 = vrot.lane.b32.xlu0 %v966, 80
      %v2038 = vpop.permute.xlu0 %2037
      %2039 = vrot.lane.b32.xlu0 %v967, 80
      %v2040 = vpop.permute.xlu0 %2039
      %2041 = vrot.lane.b32.xlu0 %v968, 80
      %v2042 = vpop.permute.xlu0 %2041
      %2043 = vrot.lane.b32.xlu0 %v969, 80
      %v2044 = vpop.permute.xlu0 %2043
      %2045 = vrot.lane.b32.xlu0 %v970, 80
      %v2046 = vpop.permute.xlu0 %2045
      %2047 = vrot.lane.b32.xlu0 %v971, 80
      %v2048 = vpop.permute.xlu0 %2047
      %2049 = vrot.lane.b32.xlu0 %v972, 80
      %v2050 = vpop.permute.xlu0 %2049
      %v2052 = vsel %vm1005, %v2020, 0
      %v2055 = vsel %vm1005, %v2022, 0
      %v2058 = vsel %vm1005, %v2024, 0
      %v2061 = vsel %vm1005, %v2026, 0
      %v2064 = vsel %vm1005, %v2028, 0
      %v2067 = vsel %vm1005, %v2030, 0
      %v2070 = vsel %vm1005, %v2032, 0
      %v2073 = vsel %vm1005, %v2034, 0
      %v2076 = vsel %vm1005, %v2036, 0
      %v2079 = vsel %vm1005, %v2038, 0
      %v2082 = vsel %vm1005, %v2040, 0
      %v2085 = vsel %vm1005, %v2042, 0
      %v2088 = vsel %vm1005, %v2044, 0
      %v2091 = vsel %vm1005, %v2046, 0
      %v2094 = vsel %vm1005, %v2048, 0
      %v2097 = vsel %vm1005, %v2050, 0
      %2099 = vmatprep.subr.bf16.mxu0 0
      %2100 = vmatpush1.bf16.xpose.msra.mxu0 %v2097
      %2101 = vmatprep.subr.bf16.mxu0 0
      %2102 = vmatpush1.bf16.xpose.msra.mxu0 %v2094
      %2103 = vmatprep.subr.bf16.mxu0 0
      %2104 = vmatpush1.bf16.xpose.msra.mxu0 %v2091
      %2105 = vmatprep.subr.bf16.mxu0 0
      %2106 = vmatpush1.bf16.xpose.msra.mxu0 %v2088
      %2107 = vmatprep.subr.bf16.mxu0 0
      %2108 = vmatpush1.bf16.xpose.msra.mxu0 %v2085
      %2109 = vmatprep.subr.bf16.mxu0 0
      %2110 = vmatpush1.bf16.xpose.msra.mxu0 %v2082
      %2111 = vmatprep.subr.bf16.mxu0 0
      %2112 = vmatpush1.bf16.xpose.msra.mxu0 %v2079
      %2113 = vmatprep.subr.bf16.mxu0 0
      %2114 = vmatpush1.bf16.xpose.msra.mxu0 %v2076
      %2115 = vmatprep.subr.bf16.mxu0 0
      %2116 = vmatpush2.bf16.xpose.msra.mxu0 0
      %2117 = vmatprep.subr.bf16.mxu0 0
      %2118 = vmatpush2.bf16.xpose.msra.mxu0 0
      %2119 = vmatprep.subr.bf16.mxu0 0
      %2120 = vmatpush2.bf16.xpose.msra.mxu0 0
      %2121 = vmatprep.subr.bf16.mxu0 0
      %2122 = vmatpush2.bf16.xpose.msra.mxu0 0
      %2123 = vmatprep.subr.bf16.mxu0 0
      %2124 = vmatpush2.bf16.xpose.msra.mxu0 0
      %2125 = vmatprep.subr.bf16.mxu0 0
      %2126 = vmatpush2.bf16.xpose.msra.mxu0 0
      %2127 = vmatprep.subr.bf16.mxu0 0
      %2128 = vmatpush2.bf16.xpose.msra.mxu0 0
      %2129 = vmatprep.subr.bf16.mxu0 0
      %2130 = vmatpush2.bf16.xpose.msra.mxu0 0
      %2131 = vmatprep.mubr.bf16.mxu0 0
      %2132 = vmatmul.mubr.bf16.gmra.mxu0 %v2052
      %v2133 = vpop.f32.mrf.mxu0
      %v2134 = vadd.f32 0.0, %v2133
      %v2135 = vpop.f32.mrf.mxu0
      %v2136 = vpop.f32.mrf.mxu0
      %v2137 = vadd.f32 0.0, %v2136
      %v2138 = vpop.f32.mrf.mxu0
      %2139 = vmatprep.mubr.bf16.mxu0 0
      %2140 = vmatmul.mubr.bf16.gmra.mxu0 %v2055
      %v2141 = vpop.f32.mrf.mxu0
      %v2142 = vadd.f32 0.0, %v2141
      %v2143 = vpop.f32.mrf.mxu0
      %v2144 = vpop.f32.mrf.mxu0
      %v2145 = vadd.f32 0.0, %v2144
      %v2146 = vpop.f32.mrf.mxu0
      %2147 = vmatprep.mubr.bf16.mxu0 0
      %2148 = vmatmul.mubr.bf16.gmra.mxu0 %v2058
      %v2149 = vpop.f32.mrf.mxu0
      %v2150 = vadd.f32 0.0, %v2149
      %v2151 = vpop.f32.mrf.mxu0
      %v2152 = vpop.f32.mrf.mxu0
      %v2153 = vadd.f32 0.0, %v2152
      %v2154 = vpop.f32.mrf.mxu0
      %2155 = vmatprep.mubr.bf16.mxu0 0
      %2156 = vmatmul.mubr.bf16.gmra.mxu0 %v2061
      %v2157 = vpop.f32.mrf.mxu0
      %v2158 = vadd.f32 0.0, %v2157
      %v2159 = vpop.f32.mrf.mxu0
      %v2160 = vpop.f32.mrf.mxu0
      %v2161 = vadd.f32 0.0, %v2160
      %v2162 = vpop.f32.mrf.mxu0
      %2163 = vmatprep.mubr.bf16.mxu0 0
      %2164 = vmatmul.mubr.bf16.gmra.mxu0 %v2064
      %v2165 = vpop.f32.mrf.mxu0
      %v2166 = vadd.f32 0.0, %v2165
      %v2167 = vpop.f32.mrf.mxu0
      %v2168 = vpop.f32.mrf.mxu0
      %v2169 = vadd.f32 0.0, %v2168
      %v2170 = vpop.f32.mrf.mxu0
      %2171 = vmatprep.mubr.bf16.mxu0 0
      %2172 = vmatmul.mubr.bf16.gmra.mxu0 %v2067
      %v2173 = vpop.f32.mrf.mxu0
      %v2174 = vadd.f32 0.0, %v2173
      %v2175 = vpop.f32.mrf.mxu0
      %v2176 = vpop.f32.mrf.mxu0
      %v2177 = vadd.f32 0.0, %v2176
      %v2178 = vpop.f32.mrf.mxu0
      %2179 = vmatprep.mubr.bf16.mxu0 0
      %2180 = vmatmul.mubr.bf16.gmra.mxu0 %v2070
      %v2181 = vpop.f32.mrf.mxu0
      %v2182 = vadd.f32 0.0, %v2181
      %v2183 = vpop.f32.mrf.mxu0
      %v2184 = vpop.f32.mrf.mxu0
      %v2185 = vadd.f32 0.0, %v2184
      %v2186 = vpop.f32.mrf.mxu0
      %2187 = vmatprep.mubr.bf16.mxu0 0
      %2188 = vmatmul.mubr.bf16.gmra.mxu0 %v2073
      %v2189 = vpop.f32.mrf.mxu0
      %v2190 = vadd.f32 0.0, %v2189
      %v2191 = vpop.f32.mrf.mxu0
      %v2192 = vpop.f32.mrf.mxu0
      %v2193 = vadd.f32 0.0, %v2192
      %v2194 = vpop.f32.mrf.mxu0
      %2195 = vdwg.mxu0
      %v2196 = vmul.f32 %v2134, 0.35355338
      %v2197 = vmul.f32 %v2137, 0.35355338
      %v2198 = vmul.f32 %v2142, 0.35355338
      %v2199 = vmul.f32 %v2145, 0.35355338
      %v2200 = vmul.f32 %v2150, 0.35355338
      %v2201 = vmul.f32 %v2153, 0.35355338
      %v2202 = vmul.f32 %v2158, 0.35355338
      %v2203 = vmul.f32 %v2161, 0.35355338
      %v2204 = vmul.f32 %v2166, 0.35355338
      %v2205 = vmul.f32 %v2169, 0.35355338
      %v2206 = vmul.f32 %v2174, 0.35355338
      %v2207 = vmul.f32 %v2177, 0.35355338
      %v2208 = vmul.f32 %v2182, 0.35355338
      %v2209 = vmul.f32 %v2185, 0.35355338
      %v2210 = vmul.f32 %v2190, 0.35355338
      %v2211 = vmul.f32 %v2193, 0.35355338
      %v2212 = vadd.f32 %v2196, %v578
      %v2213 = vadd.f32 %v2197, %v578
      %v2214 = vadd.f32 %v2198, %v578
      %v2215 = vadd.f32 %v2199, %v578
      %v2216 = vadd.f32 %v2200, %v578
      %v2217 = vadd.f32 %v2201, %v578
      %v2218 = vadd.f32 %v2202, %v578
      %v2219 = vadd.f32 %v2203, %v578
      %v2220 = vadd.f32 %v2204, %v578
      %v2221 = vadd.f32 %v2205, %v578
      %v2222 = vadd.f32 %v2206, %v578
      %v2223 = vadd.f32 %v2207, %v578
      %v2224 = vadd.f32 %v2208, %v578
      %v2225 = vadd.f32 %v2209, %v578
      %v2226 = vadd.f32 %v2210, %v578
      %v2227 = vadd.f32 %v2211, %v578
      %2228 = vmax.xlane.f32.xlu0 %v2212
      %v2229 = vpop.xlane.xlu0 %2228
      %2230 = vmax.xlane.f32.xlu0 %v2213
      %v2231 = vpop.xlane.xlu0 %2230
      %2232 = vmax.xlane.f32.xlu0 %v2214
      %v2233 = vpop.xlane.xlu0 %2232
      %2234 = vmax.xlane.f32.xlu0 %v2215
      %v2235 = vpop.xlane.xlu0 %2234
      %2236 = vmax.xlane.f32.xlu0 %v2216
      %v2237 = vpop.xlane.xlu0 %2236
      %2238 = vmax.xlane.f32.xlu0 %v2217
      %v2239 = vpop.xlane.xlu0 %2238
      %2240 = vmax.xlane.f32.xlu0 %v2218
      %v2241 = vpop.xlane.xlu0 %2240
      %2242 = vmax.xlane.f32.xlu0 %v2219
      %v2243 = vpop.xlane.xlu0 %2242
      %2244 = vmax.xlane.f32.xlu0 %v2220
      %v2245 = vpop.xlane.xlu0 %2244
      %2246 = vmax.xlane.f32.xlu0 %v2221
      %v2247 = vpop.xlane.xlu0 %2246
      %2248 = vmax.xlane.f32.xlu0 %v2222
      %v2249 = vpop.xlane.xlu0 %2248
      %2250 = vmax.xlane.f32.xlu0 %v2223
      %v2251 = vpop.xlane.xlu0 %2250
      %2252 = vmax.xlane.f32.xlu0 %v2224
      %v2253 = vpop.xlane.xlu0 %2252
      %2254 = vmax.xlane.f32.xlu0 %v2225
      %v2255 = vpop.xlane.xlu0 %2254
      %2256 = vmax.xlane.f32.xlu0 %v2226
      %v2257 = vpop.xlane.xlu0 %2256
      %2258 = vmax.xlane.f32.xlu0 %v2227
      %v2259 = vpop.xlane.xlu0 %2258
      %v2260 = vsub.f32 %v2212, %v2229
      %v2261 = vsub.f32 %v2213, %v2231
      %v2262 = vsub.f32 %v2214, %v2233
      %v2263 = vsub.f32 %v2215, %v2235
      %v2264 = vsub.f32 %v2216, %v2237
      %v2265 = vsub.f32 %v2217, %v2239
      %v2266 = vsub.f32 %v2218, %v2241
      %v2267 = vsub.f32 %v2219, %v2243
      %v2268 = vsub.f32 %v2220, %v2245
      %v2269 = vsub.f32 %v2221, %v2247
      %v2270 = vsub.f32 %v2222, %v2249
      %v2271 = vsub.f32 %v2223, %v2251
      %v2272 = vsub.f32 %v2224, %v2253
      %v2273 = vsub.f32 %v2225, %v2255
      %v2274 = vsub.f32 %v2226, %v2257
      %v2275 = vsub.f32 %v2227, %v2259
      %v2276 = vmul.f32 %v2260, 1.442695
      %v2277 = vpow.pop %v2276
      %v2278 = vmul.f32 %v2261, 1.442695
      %v2279 = vpow.pop %v2278
      %v2280 = vmul.f32 %v2262, 1.442695
      %v2281 = vpow.pop %v2280
      %v2282 = vmul.f32 %v2263, 1.442695
      %v2283 = vpow.pop %v2282
      %v2284 = vmul.f32 %v2264, 1.442695
      %v2285 = vpow.pop %v2284
      %v2286 = vmul.f32 %v2265, 1.442695
      %v2287 = vpow.pop %v2286
      %v2288 = vmul.f32 %v2266, 1.442695
      %v2289 = vpow.pop %v2288
      %v2290 = vmul.f32 %v2267, 1.442695
      %v2291 = vpow.pop %v2290
      %v2292 = vmul.f32 %v2268, 1.442695
      %v2293 = vpow.pop %v2292
      %v2294 = vmul.f32 %v2269, 1.442695
      %v2295 = vpow.pop %v2294
      %v2296 = vmul.f32 %v2270, 1.442695
      %v2297 = vpow.pop %v2296
      %v2298 = vmul.f32 %v2271, 1.442695
      %v2299 = vpow.pop %v2298
      %v2300 = vmul.f32 %v2272, 1.442695
      %v2301 = vpow.pop %v2300
      %v2302 = vmul.f32 %v2273, 1.442695
      %v2303 = vpow.pop %v2302
      %v2304 = vmul.f32 %v2274, 1.442695
      %v2305 = vpow.pop %v2304
      %v2306 = vmul.f32 %v2275, 1.442695
      %v2307 = vpow.pop %v2306
      %2308 = vadd.xlane.f32.xlu0 %v2277
      %v2309 = vpop.xlane.xlu0 %2308
      %2310 = vadd.xlane.f32.xlu0 %v2279
      %v2311 = vpop.xlane.xlu0 %2310
      %2312 = vadd.xlane.f32.xlu0 %v2281
      %v2313 = vpop.xlane.xlu0 %2312
      %2314 = vadd.xlane.f32.xlu0 %v2283
      %v2315 = vpop.xlane.xlu0 %2314
      %2316 = vadd.xlane.f32.xlu0 %v2285
      %v2317 = vpop.xlane.xlu0 %2316
      %2318 = vadd.xlane.f32.xlu0 %v2287
      %v2319 = vpop.xlane.xlu0 %2318
      %2320 = vadd.xlane.f32.xlu0 %v2289
      %v2321 = vpop.xlane.xlu0 %2320
      %2322 = vadd.xlane.f32.xlu0 %v2291
      %v2323 = vpop.xlane.xlu0 %2322
      %2324 = vadd.xlane.f32.xlu0 %v2293
      %v2325 = vpop.xlane.xlu0 %2324
      %2326 = vadd.xlane.f32.xlu0 %v2295
      %v2327 = vpop.xlane.xlu0 %2326
      %2328 = vadd.xlane.f32.xlu0 %v2297
      %v2329 = vpop.xlane.xlu0 %2328
      %2330 = vadd.xlane.f32.xlu0 %v2299
      %v2331 = vpop.xlane.xlu0 %2330
      %2332 = vadd.xlane.f32.xlu0 %v2301
      %v2333 = vpop.xlane.xlu0 %2332
      %2334 = vadd.xlane.f32.xlu0 %v2303
      %v2335 = vpop.xlane.xlu0 %2334
      %2336 = vadd.xlane.f32.xlu0 %v2305
      %v2337 = vpop.xlane.xlu0 %2336
      %2338 = vadd.xlane.f32.xlu0 %v2307
      %v2339 = vpop.xlane.xlu0 %2338
      %v2340 = vrcp.pop %v2309
      %v2341 = vrcp.pop %v2311
      %v2342 = vrcp.pop %v2313
      %v2343 = vrcp.pop %v2315
      %v2344 = vrcp.pop %v2317
      %v2345 = vrcp.pop %v2319
      %v2346 = vrcp.pop %v2321
      %v2347 = vrcp.pop %v2323
      %v2348 = vrcp.pop %v2325
      %v2349 = vrcp.pop %v2327
      %v2350 = vrcp.pop %v2329
      %v2351 = vrcp.pop %v2331
      %v2352 = vrcp.pop %v2333
      %v2353 = vrcp.pop %v2335
      %v2354 = vrcp.pop %v2337
      %v2355 = vrcp.pop %v2339
      %v2356 = vmul.f32 %v2277, %v2340
      %v2357 = vmul.f32 %v2279, %v2341
      %v2358 = vmul.f32 %v2281, %v2342
      %v2359 = vmul.f32 %v2283, %v2343
      %v2360 = vmul.f32 %v2285, %v2344
      %v2361 = vmul.f32 %v2287, %v2345
      %v2362 = vmul.f32 %v2289, %v2346
      %v2363 = vmul.f32 %v2291, %v2347
      %v2364 = vmul.f32 %v2293, %v2348
      %v2365 = vmul.f32 %v2295, %v2349
      %v2366 = vmul.f32 %v2297, %v2350
      %v2367 = vmul.f32 %v2299, %v2351
      %v2368 = vmul.f32 %v2301, %v2352
      %v2369 = vmul.f32 %v2303, %v2353
      %v2370 = vmul.f32 %v2305, %v2354
      %v2371 = vmul.f32 %v2307, %v2355
      %v2372 = vpack.c.bf16 %v2357, %v2356
      %v2373 = vpack.c.bf16 %v2359, %v2358
      %v2374 = vpack.c.bf16 %v2361, %v2360
      %v2375 = vpack.c.bf16 %v2363, %v2362
      %v2376 = vpack.c.bf16 %v2365, %v2364
      %v2377 = vpack.c.bf16 %v2367, %v2366
      %v2378 = vpack.c.bf16 %v2369, %v2368
      %v2379 = vpack.c.bf16 %v2371, %v2370
      %2380 = vrot.lane.b32.xlu0 %v973, 112
      %v2381 = vpop.permute.xlu0 %2380
      %2382 = vrot.lane.b32.xlu0 %v974, 112
      %v2383 = vpop.permute.xlu0 %2382
      %2384 = vrot.lane.b32.xlu0 %v975, 112
      %v2385 = vpop.permute.xlu0 %2384
      %2386 = vrot.lane.b32.xlu0 %v976, 112
      %v2387 = vpop.permute.xlu0 %2386
      %2388 = vrot.lane.b32.xlu0 %v977, 112
      %v2389 = vpop.permute.xlu0 %2388
      %2390 = vrot.lane.b32.xlu0 %v978, 112
      %v2391 = vpop.permute.xlu0 %2390
      %2392 = vrot.lane.b32.xlu0 %v979, 112
      %v2393 = vpop.permute.xlu0 %2392
      %2394 = vrot.lane.b32.xlu0 %v980, 112
      %v2395 = vpop.permute.xlu0 %2394
      %2404 = vmatprep.subr.bf16.mxu0 0
      %2405 = vmatpush1.bf16.msra.mxu0 %v2395
      %2406 = vmatprep.subr.bf16.mxu0 0
      %2407 = vmatpush1.bf16.msra.mxu0 %v2393
      %2408 = vmatprep.subr.bf16.mxu0 0
      %2409 = vmatpush1.bf16.msra.mxu0 %v2391
      %2410 = vmatprep.subr.bf16.mxu0 0
      %2411 = vmatpush1.bf16.msra.mxu0 %v2389
      %2412 = vmatprep.subr.bf16.mxu0 0
      %2413 = vmatpush1.bf16.msra.mxu0 %v2387
      %2414 = vmatprep.subr.bf16.mxu0 0
      %2415 = vmatpush1.bf16.msra.mxu0 %v2385
      %2416 = vmatprep.subr.bf16.mxu0 0
      %2417 = vmatpush1.bf16.msra.mxu0 %v2383
      %2418 = vmatprep.subr.bf16.mxu0 0
      %2419 = vmatpush1.bf16.msra.mxu0 %v2381
      %2420 = vmatprep.subr.bf16.mxu0 0
      %2421 = vmatpush2.bf16.msra.mxu0 0
      %2422 = vmatprep.subr.bf16.mxu0 0
      %2423 = vmatpush2.bf16.msra.mxu0 0
      %2424 = vmatprep.subr.bf16.mxu0 0
      %2425 = vmatpush2.bf16.msra.mxu0 0
      %2426 = vmatprep.subr.bf16.mxu0 0
      %2427 = vmatpush2.bf16.msra.mxu0 0
      %2428 = vmatprep.subr.bf16.mxu0 0
      %2429 = vmatpush2.bf16.msra.mxu0 0
      %2430 = vmatprep.subr.bf16.mxu0 0
      %2431 = vmatpush2.bf16.msra.mxu0 0
      %2432 = vmatprep.subr.bf16.mxu0 0
      %2433 = vmatpush2.bf16.msra.mxu0 0
      %2434 = vmatprep.subr.bf16.mxu0 0
      %2435 = vmatpush2.bf16.msra.mxu0 0
      %2436 = vmatprep.mubr.bf16.mxu0 0
      %2437 = vmatmul.mubr.bf16.gmra.mxu0 %v2372
      %v2438 = vpop.f32.mrf.mxu0
      %v2439 = vadd.f32 0.0, %v2438
      %v2440 = vpop.f32.mrf.mxu0
      %v2441 = vpop.f32.mrf.mxu0
      %v2442 = vadd.f32 0.0, %v2441
      %v2443 = vpop.f32.mrf.mxu0
      %2444 = vmatprep.mubr.bf16.mxu0 0
      %2445 = vmatmul.mubr.bf16.gmra.mxu0 %v2373
      %v2446 = vpop.f32.mrf.mxu0
      %v2447 = vadd.f32 0.0, %v2446
      %v2448 = vpop.f32.mrf.mxu0
      %v2449 = vpop.f32.mrf.mxu0
      %v2450 = vadd.f32 0.0, %v2449
      %v2451 = vpop.f32.mrf.mxu0
      %2452 = vmatprep.mubr.bf16.mxu0 0
      %2453 = vmatmul.mubr.bf16.gmra.mxu0 %v2374
      %v2454 = vpop.f32.mrf.mxu0
      %v2455 = vadd.f32 0.0, %v2454
      %v2456 = vpop.f32.mrf.mxu0
      %v2457 = vpop.f32.mrf.mxu0
      %v2458 = vadd.f32 0.0, %v2457
      %v2459 = vpop.f32.mrf.mxu0
      %2460 = vmatprep.mubr.bf16.mxu0 0
      %2461 = vmatmul.mubr.bf16.gmra.mxu0 %v2375
      %v2462 = vpop.f32.mrf.mxu0
      %v2463 = vadd.f32 0.0, %v2462
      %v2464 = vpop.f32.mrf.mxu0
      %v2465 = vpop.f32.mrf.mxu0
      %v2466 = vadd.f32 0.0, %v2465
      %v2467 = vpop.f32.mrf.mxu0
      %2468 = vmatprep.mubr.bf16.mxu0 0
      %2469 = vmatmul.mubr.bf16.gmra.mxu0 %v2376
      %v2470 = vpop.f32.mrf.mxu0
      %v2471 = vadd.f32 0.0, %v2470
      %v2472 = vpop.f32.mrf.mxu0
      %v2473 = vpop.f32.mrf.mxu0
      %v2474 = vadd.f32 0.0, %v2473
      %v2475 = vpop.f32.mrf.mxu0
      %2476 = vmatprep.mubr.bf16.mxu0 0
      %2477 = vmatmul.mubr.bf16.gmra.mxu0 %v2377
      %v2478 = vpop.f32.mrf.mxu0
      %v2479 = vadd.f32 0.0, %v2478
      %v2480 = vpop.f32.mrf.mxu0
      %v2481 = vpop.f32.mrf.mxu0
      %v2482 = vadd.f32 0.0, %v2481
      %v2483 = vpop.f32.mrf.mxu0
      %2484 = vmatprep.mubr.bf16.mxu0 0
      %2485 = vmatmul.mubr.bf16.gmra.mxu0 %v2378
      %v2486 = vpop.f32.mrf.mxu0
      %v2487 = vadd.f32 0.0, %v2486
      %v2488 = vpop.f32.mrf.mxu0
      %v2489 = vpop.f32.mrf.mxu0
      %v2490 = vadd.f32 0.0, %v2489
      %v2491 = vpop.f32.mrf.mxu0
      %2492 = vmatprep.mubr.bf16.mxu0 0
      %2493 = vmatmul.mubr.bf16.gmra.mxu0 %v2379
      %v2494 = vpop.f32.mrf.mxu0
      %v2495 = vadd.f32 0.0, %v2494
      %v2496 = vpop.f32.mrf.mxu0
      %v2497 = vpop.f32.mrf.mxu0
      %v2498 = vadd.f32 0.0, %v2497
      %v2499 = vpop.f32.mrf.mxu0
      %2500 = vdwg.mxu0
      %2517 = vrot.lane.b32.xlu0 %v2439, 16
      %v2518 = vpop.permute.xlu0 %2517
      %2519 = vrot.lane.b32.xlu0 %v2442, 16
      %v2520 = vpop.permute.xlu0 %2519
      %2521 = vrot.lane.b32.xlu0 %v2447, 16
      %v2522 = vpop.permute.xlu0 %2521
      %2523 = vrot.lane.b32.xlu0 %v2450, 16
      %v2524 = vpop.permute.xlu0 %2523
      %2525 = vrot.lane.b32.xlu0 %v2455, 16
      %v2526 = vpop.permute.xlu0 %2525
      %2527 = vrot.lane.b32.xlu0 %v2458, 16
      %v2528 = vpop.permute.xlu0 %2527
      %2529 = vrot.lane.b32.xlu0 %v2463, 16
      %v2530 = vpop.permute.xlu0 %2529
      %2531 = vrot.lane.b32.xlu0 %v2466, 16
      %v2532 = vpop.permute.xlu0 %2531
      %2533 = vrot.lane.b32.xlu0 %v2471, 16
      %v2534 = vpop.permute.xlu0 %2533
      %2535 = vrot.lane.b32.xlu0 %v2474, 16
      %v2536 = vpop.permute.xlu0 %2535
      %2537 = vrot.lane.b32.xlu0 %v2479, 16
      %v2538 = vpop.permute.xlu0 %2537
      %2539 = vrot.lane.b32.xlu0 %v2482, 16
      %v2540 = vpop.permute.xlu0 %2539
      %2541 = vrot.lane.b32.xlu0 %v2487, 16
      %v2542 = vpop.permute.xlu0 %2541
      %2543 = vrot.lane.b32.xlu0 %v2490, 16
      %v2544 = vpop.permute.xlu0 %2543
      %2545 = vrot.lane.b32.xlu0 %v2495, 16
      %v2546 = vpop.permute.xlu0 %2545
      %2547 = vrot.lane.b32.xlu0 %v2498, 16
      %v2548 = vpop.permute.xlu0 %2547
      %vm2565 = vcmask 195712
      %2566 = vst.msk [vmem:[#allocation2] sm:$0xff] %vm2565, %v2518
      %2567 = vst.msk [vmem:[#allocation2 + $0x8] sm:$0xff] %vm2565, %v2520
      %2568 = vst.msk [vmem:[#allocation2 + $0x10] sm:$0xff] %vm2565, %v2522
      %2569 = vst.msk [vmem:[#allocation2 + $0x18] sm:$0xff] %vm2565, %v2524
      %2570 = vst.msk [vmem:[#allocation2 + $0x20] sm:$0xff] %vm2565, %v2526
      %2571 = vst.msk [vmem:[#allocation2 + $0x28] sm:$0xff] %vm2565, %v2528
      %2572 = vst.msk [vmem:[#allocation2 + $0x30] sm:$0xff] %vm2565, %v2530
      %2573 = vst.msk [vmem:[#allocation2 + $0x38] sm:$0xff] %vm2565, %v2532
      %2574 = vst.msk [vmem:[#allocation2 + $0x40] sm:$0xff] %vm2565, %v2534
      %2575 = vst.msk [vmem:[#allocation2 + $0x48] sm:$0xff] %vm2565, %v2536
      %2576 = vst.msk [vmem:[#allocation2 + $0x50] sm:$0xff] %vm2565, %v2538
      %2577 = vst.msk [vmem:[#allocation2 + $0x58] sm:$0xff] %vm2565, %v2540
      %2578 = vst.msk [vmem:[#allocation2 + $0x60] sm:$0xff] %vm2565, %v2542
      %2579 = vst.msk [vmem:[#allocation2 + $0x68] sm:$0xff] %vm2565, %v2544
      %2580 = vst.msk [vmem:[#allocation2 + $0x70] sm:$0xff] %vm2565, %v2546
      %2581 = vst.msk [vmem:[#allocation2 + $0x78] sm:$0xff] %vm2565, %v2548
      %2582 = vrot.lane.b32.xlu0 %v965, 104
      %v2583 = vpop.permute.xlu0 %2582
      %2584 = vrot.lane.b32.xlu0 %v966, 104
      %v2585 = vpop.permute.xlu0 %2584
      %2586 = vrot.lane.b32.xlu0 %v967, 104
      %v2587 = vpop.permute.xlu0 %2586
      %2588 = vrot.lane.b32.xlu0 %v968, 104
      %v2589 = vpop.permute.xlu0 %2588
      %2590 = vrot.lane.b32.xlu0 %v969, 104
      %v2591 = vpop.permute.xlu0 %2590
      %2592 = vrot.lane.b32.xlu0 %v970, 104
      %v2593 = vpop.permute.xlu0 %2592
      %2594 = vrot.lane.b32.xlu0 %v971, 104
      %v2595 = vpop.permute.xlu0 %2594
      %2596 = vrot.lane.b32.xlu0 %v972, 104
      %v2597 = vpop.permute.xlu0 %2596
      %2598 = vrot.lane.b32.xlu0 %v965, 72
      %v2599 = vpop.permute.xlu0 %2598
      %2600 = vrot.lane.b32.xlu0 %v966, 72
      %v2601 = vpop.permute.xlu0 %2600
      %2602 = vrot.lane.b32.xlu0 %v967, 72
      %v2603 = vpop.permute.xlu0 %2602
      %2604 = vrot.lane.b32.xlu0 %v968, 72
      %v2605 = vpop.permute.xlu0 %2604
      %2606 = vrot.lane.b32.xlu0 %v969, 72
      %v2607 = vpop.permute.xlu0 %2606
      %2608 = vrot.lane.b32.xlu0 %v970, 72
      %v2609 = vpop.permute.xlu0 %2608
      %2610 = vrot.lane.b32.xlu0 %v971, 72
      %v2611 = vpop.permute.xlu0 %2610
      %2612 = vrot.lane.b32.xlu0 %v972, 72
      %v2613 = vpop.permute.xlu0 %2612
      %v2615 = vsel %vm1005, %v2583, 0
      %v2618 = vsel %vm1005, %v2585, 0
      %v2621 = vsel %vm1005, %v2587, 0
      %v2624 = vsel %vm1005, %v2589, 0
      %v2627 = vsel %vm1005, %v2591, 0
      %v2630 = vsel %vm1005, %v2593, 0
      %v2633 = vsel %vm1005, %v2595, 0
      %v2636 = vsel %vm1005, %v2597, 0
      %v2639 = vsel %vm1005, %v2599, 0
      %v2642 = vsel %vm1005, %v2601, 0
      %v2645 = vsel %vm1005, %v2603, 0
      %v2648 = vsel %vm1005, %v2605, 0
      %v2651 = vsel %vm1005, %v2607, 0
      %v2654 = vsel %vm1005, %v2609, 0
      %v2657 = vsel %vm1005, %v2611, 0
      %v2660 = vsel %vm1005, %v2613, 0
      %2662 = vmatprep.subr.bf16.mxu0 0
      %2663 = vmatpush1.bf16.xpose.msra.mxu0 %v2660
      %2664 = vmatprep.subr.bf16.mxu0 0
      %2665 = vmatpush1.bf16.xpose.msra.mxu0 %v2657
      %2666 = vmatprep.subr.bf16.mxu0 0
      %2667 = vmatpush1.bf16.xpose.msra.mxu0 %v2654
      %2668 = vmatprep.subr.bf16.mxu0 0
      %2669 = vmatpush1.bf16.xpose.msra.mxu0 %v2651
      %2670 = vmatprep.subr.bf16.mxu0 0
      %2671 = vmatpush1.bf16.xpose.msra.mxu0 %v2648
      %2672 = vmatprep.subr.bf16.mxu0 0
      %2673 = vmatpush1.bf16.xpose.msra.mxu0 %v2645
      %2674 = vmatprep.subr.bf16.mxu0 0
      %2675 = vmatpush1.bf16.xpose.msra.mxu0 %v2642
      %2676 = vmatprep.subr.bf16.mxu0 0
      %2677 = vmatpush1.bf16.xpose.msra.mxu0 %v2639
      %2678 = vmatprep.subr.bf16.mxu0 0
      %2679 = vmatpush2.bf16.xpose.msra.mxu0 0
      %2680 = vmatprep.subr.bf16.mxu0 0
      %2681 = vmatpush2.bf16.xpose.msra.mxu0 0
      %2682 = vmatprep.subr.bf16.mxu0 0
      %2683 = vmatpush2.bf16.xpose.msra.mxu0 0
      %2684 = vmatprep.subr.bf16.mxu0 0
      %2685 = vmatpush2.bf16.xpose.msra.mxu0 0
      %2686 = vmatprep.subr.bf16.mxu0 0
      %2687 = vmatpush2.bf16.xpose.msra.mxu0 0
      %2688 = vmatprep.subr.bf16.mxu0 0
      %2689 = vmatpush2.bf16.xpose.msra.mxu0 0
      %2690 = vmatprep.subr.bf16.mxu0 0
      %2691 = vmatpush2.bf16.xpose.msra.mxu0 0
      %2692 = vmatprep.subr.bf16.mxu0 0
      %2693 = vmatpush2.bf16.xpose.msra.mxu0 0
      %2694 = vmatprep.mubr.bf16.mxu0 0
      %2695 = vmatmul.mubr.bf16.gmra.mxu0 %v2615
      %v2696 = vpop.f32.mrf.mxu0
      %v2697 = vadd.f32 0.0, %v2696
      %v2698 = vpop.f32.mrf.mxu0
      %v2699 = vpop.f32.mrf.mxu0
      %v2700 = vadd.f32 0.0, %v2699
      %v2701 = vpop.f32.mrf.mxu0
      %2702 = vmatprep.mubr.bf16.mxu0 0
      %2703 = vmatmul.mubr.bf16.gmra.mxu0 %v2618
      %v2704 = vpop.f32.mrf.mxu0
      %v2705 = vadd.f32 0.0, %v2704
      %v2706 = vpop.f32.mrf.mxu0
      %v2707 = vpop.f32.mrf.mxu0
      %v2708 = vadd.f32 0.0, %v2707
      %v2709 = vpop.f32.mrf.mxu0
      %2710 = vmatprep.mubr.bf16.mxu0 0
      %2711 = vmatmul.mubr.bf16.gmra.mxu0 %v2621
      %v2712 = vpop.f32.mrf.mxu0
      %v2713 = vadd.f32 0.0, %v2712
      %v2714 = vpop.f32.mrf.mxu0
      %v2715 = vpop.f32.mrf.mxu0
      %v2716 = vadd.f32 0.0, %v2715
      %v2717 = vpop.f32.mrf.mxu0
      %2718 = vmatprep.mubr.bf16.mxu0 0
      %2719 = vmatmul.mubr.bf16.gmra.mxu0 %v2624
      %v2720 = vpop.f32.mrf.mxu0
      %v2721 = vadd.f32 0.0, %v2720
      %v2722 = vpop.f32.mrf.mxu0
      %v2723 = vpop.f32.mrf.mxu0
      %v2724 = vadd.f32 0.0, %v2723
      %v2725 = vpop.f32.mrf.mxu0
      %2726 = vmatprep.mubr.bf16.mxu0 0
      %2727 = vmatmul.mubr.bf16.gmra.mxu0 %v2627
      %v2728 = vpop.f32.mrf.mxu0
      %v2729 = vadd.f32 0.0, %v2728
      %v2730 = vpop.f32.mrf.mxu0
      %v2731 = vpop.f32.mrf.mxu0
      %v2732 = vadd.f32 0.0, %v2731
      %v2733 = vpop.f32.mrf.mxu0
      %2734 = vmatprep.mubr.bf16.mxu0 0
      %2735 = vmatmul.mubr.bf16.gmra.mxu0 %v2630
      %v2736 = vpop.f32.mrf.mxu0
      %v2737 = vadd.f32 0.0, %v2736
      %v2738 = vpop.f32.mrf.mxu0
      %v2739 = vpop.f32.mrf.mxu0
      %v2740 = vadd.f32 0.0, %v2739
      %v2741 = vpop.f32.mrf.mxu0
      %2742 = vmatprep.mubr.bf16.mxu0 0
      %2743 = vmatmul.mubr.bf16.gmra.mxu0 %v2633
      %v2744 = vpop.f32.mrf.mxu0
      %v2745 = vadd.f32 0.0, %v2744
      %v2746 = vpop.f32.mrf.mxu0
      %v2747 = vpop.f32.mrf.mxu0
      %v2748 = vadd.f32 0.0, %v2747
      %v2749 = vpop.f32.mrf.mxu0
      %2750 = vmatprep.mubr.bf16.mxu0 0
      %2751 = vmatmul.mubr.bf16.gmra.mxu0 %v2636
      %v2752 = vpop.f32.mrf.mxu0
      %v2753 = vadd.f32 0.0, %v2752
      %v2754 = vpop.f32.mrf.mxu0
      %v2755 = vpop.f32.mrf.mxu0
      %v2756 = vadd.f32 0.0, %v2755
      %v2757 = vpop.f32.mrf.mxu0
      %2758 = vdwg.mxu0
      %v2759 = vmul.f32 %v2697, 0.35355338
      %v2760 = vmul.f32 %v2700, 0.35355338
      %v2761 = vmul.f32 %v2705, 0.35355338
      %v2762 = vmul.f32 %v2708, 0.35355338
      %v2763 = vmul.f32 %v2713, 0.35355338
      %v2764 = vmul.f32 %v2716, 0.35355338
      %v2765 = vmul.f32 %v2721, 0.35355338
      %v2766 = vmul.f32 %v2724, 0.35355338
      %v2767 = vmul.f32 %v2729, 0.35355338
      %v2768 = vmul.f32 %v2732, 0.35355338
      %v2769 = vmul.f32 %v2737, 0.35355338
      %v2770 = vmul.f32 %v2740, 0.35355338
      %v2771 = vmul.f32 %v2745, 0.35355338
      %v2772 = vmul.f32 %v2748, 0.35355338
      %v2773 = vmul.f32 %v2753, 0.35355338
      %v2774 = vmul.f32 %v2756, 0.35355338
      %v2775 = vadd.f32 %v2759, %v578
      %v2776 = vadd.f32 %v2760, %v578
      %v2777 = vadd.f32 %v2761, %v578
      %v2778 = vadd.f32 %v2762, %v578
      %v2779 = vadd.f32 %v2763, %v578
      %v2780 = vadd.f32 %v2764, %v578
      %v2781 = vadd.f32 %v2765, %v578
      %v2782 = vadd.f32 %v2766, %v578
      %v2783 = vadd.f32 %v2767, %v578
      %v2784 = vadd.f32 %v2768, %v578
      %v2785 = vadd.f32 %v2769, %v578
      %v2786 = vadd.f32 %v2770, %v578
      %v2787 = vadd.f32 %v2771, %v578
      %v2788 = vadd.f32 %v2772, %v578
      %v2789 = vadd.f32 %v2773, %v578
      %v2790 = vadd.f32 %v2774, %v578
      %2791 = vmax.xlane.f32.xlu0 %v2775
      %v2792 = vpop.xlane.xlu0 %2791
      %2793 = vmax.xlane.f32.xlu0 %v2776
      %v2794 = vpop.xlane.xlu0 %2793
      %2795 = vmax.xlane.f32.xlu0 %v2777
      %v2796 = vpop.xlane.xlu0 %2795
      %2797 = vmax.xlane.f32.xlu0 %v2778
      %v2798 = vpop.xlane.xlu0 %2797
      %2799 = vmax.xlane.f32.xlu0 %v2779
      %v2800 = vpop.xlane.xlu0 %2799
      %2801 = vmax.xlane.f32.xlu0 %v2780
      %v2802 = vpop.xlane.xlu0 %2801
      %2803 = vmax.xlane.f32.xlu0 %v2781
      %v2804 = vpop.xlane.xlu0 %2803
      %2805 = vmax.xlane.f32.xlu0 %v2782
      %v2806 = vpop.xlane.xlu0 %2805
      %2807 = vmax.xlane.f32.xlu0 %v2783
      %v2808 = vpop.xlane.xlu0 %2807
      %2809 = vmax.xlane.f32.xlu0 %v2784
      %v2810 = vpop.xlane.xlu0 %2809
      %2811 = vmax.xlane.f32.xlu0 %v2785
      %v2812 = vpop.xlane.xlu0 %2811
      %2813 = vmax.xlane.f32.xlu0 %v2786
      %v2814 = vpop.xlane.xlu0 %2813
      %2815 = vmax.xlane.f32.xlu0 %v2787
      %v2816 = vpop.xlane.xlu0 %2815
      %2817 = vmax.xlane.f32.xlu0 %v2788
      %v2818 = vpop.xlane.xlu0 %2817
      %2819 = vmax.xlane.f32.xlu0 %v2789
      %v2820 = vpop.xlane.xlu0 %2819
      %2821 = vmax.xlane.f32.xlu0 %v2790
      %v2822 = vpop.xlane.xlu0 %2821
      %v2823 = vsub.f32 %v2775, %v2792
      %v2824 = vsub.f32 %v2776, %v2794
      %v2825 = vsub.f32 %v2777, %v2796
      %v2826 = vsub.f32 %v2778, %v2798
      %v2827 = vsub.f32 %v2779, %v2800
      %v2828 = vsub.f32 %v2780, %v2802
      %v2829 = vsub.f32 %v2781, %v2804
      %v2830 = vsub.f32 %v2782, %v2806
      %v2831 = vsub.f32 %v2783, %v2808
      %v2832 = vsub.f32 %v2784, %v2810
      %v2833 = vsub.f32 %v2785, %v2812
      %v2834 = vsub.f32 %v2786, %v2814
      %v2835 = vsub.f32 %v2787, %v2816
      %v2836 = vsub.f32 %v2788, %v2818
      %v2837 = vsub.f32 %v2789, %v2820
      %v2838 = vsub.f32 %v2790, %v2822
      %v2839 = vmul.f32 %v2823, 1.442695
      %v2840 = vpow.pop %v2839
      %v2841 = vmul.f32 %v2824, 1.442695
      %v2842 = vpow.pop %v2841
      %v2843 = vmul.f32 %v2825, 1.442695
      %v2844 = vpow.pop %v2843
      %v2845 = vmul.f32 %v2826, 1.442695
      %v2846 = vpow.pop %v2845
      %v2847 = vmul.f32 %v2827, 1.442695
      %v2848 = vpow.pop %v2847
      %v2849 = vmul.f32 %v2828, 1.442695
      %v2850 = vpow.pop %v2849
      %v2851 = vmul.f32 %v2829, 1.442695
      %v2852 = vpow.pop %v2851
      %v2853 = vmul.f32 %v2830, 1.442695
      %v2854 = vpow.pop %v2853
      %v2855 = vmul.f32 %v2831, 1.442695
      %v2856 = vpow.pop %v2855
      %v2857 = vmul.f32 %v2832, 1.442695
      %v2858 = vpow.pop %v2857
      %v2859 = vmul.f32 %v2833, 1.442695
      %v2860 = vpow.pop %v2859
      %v2861 = vmul.f32 %v2834, 1.442695
      %v2862 = vpow.pop %v2861
      %v2863 = vmul.f32 %v2835, 1.442695
      %v2864 = vpow.pop %v2863
      %v2865 = vmul.f32 %v2836, 1.442695
      %v2866 = vpow.pop %v2865
      %v2867 = vmul.f32 %v2837, 1.442695
      %v2868 = vpow.pop %v2867
      %v2869 = vmul.f32 %v2838, 1.442695
      %v2870 = vpow.pop %v2869
      %2871 = vadd.xlane.f32.xlu0 %v2840
      %v2872 = vpop.xlane.xlu0 %2871
      %2873 = vadd.xlane.f32.xlu0 %v2842
      %v2874 = vpop.xlane.xlu0 %2873
      %2875 = vadd.xlane.f32.xlu0 %v2844
      %v2876 = vpop.xlane.xlu0 %2875
      %2877 = vadd.xlane.f32.xlu0 %v2846
      %v2878 = vpop.xlane.xlu0 %2877
      %2879 = vadd.xlane.f32.xlu0 %v2848
      %v2880 = vpop.xlane.xlu0 %2879
      %2881 = vadd.xlane.f32.xlu0 %v2850
      %v2882 = vpop.xlane.xlu0 %2881
      %2883 = vadd.xlane.f32.xlu0 %v2852
      %v2884 = vpop.xlane.xlu0 %2883
      %2885 = vadd.xlane.f32.xlu0 %v2854
      %v2886 = vpop.xlane.xlu0 %2885
      %2887 = vadd.xlane.f32.xlu0 %v2856
      %v2888 = vpop.xlane.xlu0 %2887
      %2889 = vadd.xlane.f32.xlu0 %v2858
      %v2890 = vpop.xlane.xlu0 %2889
      %2891 = vadd.xlane.f32.xlu0 %v2860
      %v2892 = vpop.xlane.xlu0 %2891
      %2893 = vadd.xlane.f32.xlu0 %v2862
      %v2894 = vpop.xlane.xlu0 %2893
      %2895 = vadd.xlane.f32.xlu0 %v2864
      %v2896 = vpop.xlane.xlu0 %2895
      %2897 = vadd.xlane.f32.xlu0 %v2866
      %v2898 = vpop.xlane.xlu0 %2897
      %2899 = vadd.xlane.f32.xlu0 %v2868
      %v2900 = vpop.xlane.xlu0 %2899
      %2901 = vadd.xlane.f32.xlu0 %v2870
      %v2902 = vpop.xlane.xlu0 %2901
      %v2903 = vrcp.pop %v2872
      %v2904 = vrcp.pop %v2874
      %v2905 = vrcp.pop %v2876
      %v2906 = vrcp.pop %v2878
      %v2907 = vrcp.pop %v2880
      %v2908 = vrcp.pop %v2882
      %v2909 = vrcp.pop %v2884
      %v2910 = vrcp.pop %v2886
      %v2911 = vrcp.pop %v2888
      %v2912 = vrcp.pop %v2890
      %v2913 = vrcp.pop %v2892
      %v2914 = vrcp.pop %v2894
      %v2915 = vrcp.pop %v2896
      %v2916 = vrcp.pop %v2898
      %v2917 = vrcp.pop %v2900
      %v2918 = vrcp.pop %v2902
      %v2919 = vmul.f32 %v2840, %v2903
      %v2920 = vmul.f32 %v2842, %v2904
      %v2921 = vmul.f32 %v2844, %v2905
      %v2922 = vmul.f32 %v2846, %v2906
      %v2923 = vmul.f32 %v2848, %v2907
      %v2924 = vmul.f32 %v2850, %v2908
      %v2925 = vmul.f32 %v2852, %v2909
      %v2926 = vmul.f32 %v2854, %v2910
      %v2927 = vmul.f32 %v2856, %v2911
      %v2928 = vmul.f32 %v2858, %v2912
      %v2929 = vmul.f32 %v2860, %v2913
      %v2930 = vmul.f32 %v2862, %v2914
      %v2931 = vmul.f32 %v2864, %v2915
      %v2932 = vmul.f32 %v2866, %v2916
      %v2933 = vmul.f32 %v2868, %v2917
      %v2934 = vmul.f32 %v2870, %v2918
      %v2935 = vpack.c.bf16 %v2920, %v2919
      %v2936 = vpack.c.bf16 %v2922, %v2921
      %v2937 = vpack.c.bf16 %v2924, %v2923
      %v2938 = vpack.c.bf16 %v2926, %v2925
      %v2939 = vpack.c.bf16 %v2928, %v2927
      %v2940 = vpack.c.bf16 %v2930, %v2929
      %v2941 = vpack.c.bf16 %v2932, %v2931
      %v2942 = vpack.c.bf16 %v2934, %v2933
      %2943 = vrot.lane.b32.xlu0 %v973, 104
      %v2944 = vpop.permute.xlu0 %2943
      %2945 = vrot.lane.b32.xlu0 %v974, 104
      %v2946 = vpop.permute.xlu0 %2945
      %2947 = vrot.lane.b32.xlu0 %v975, 104
      %v2948 = vpop.permute.xlu0 %2947
      %2949 = vrot.lane.b32.xlu0 %v976, 104
      %v2950 = vpop.permute.xlu0 %2949
      %2951 = vrot.lane.b32.xlu0 %v977, 104
      %v2952 = vpop.permute.xlu0 %2951
      %2953 = vrot.lane.b32.xlu0 %v978, 104
      %v2954 = vpop.permute.xlu0 %2953
      %2955 = vrot.lane.b32.xlu0 %v979, 104
      %v2956 = vpop.permute.xlu0 %2955
      %2957 = vrot.lane.b32.xlu0 %v980, 104
      %v2958 = vpop.permute.xlu0 %2957
      %2967 = vmatprep.subr.bf16.mxu0 0
      %2968 = vmatpush1.bf16.msra.mxu0 %v2958
      %2969 = vmatprep.subr.bf16.mxu0 0
      %2970 = vmatpush1.bf16.msra.mxu0 %v2956
      %2971 = vmatprep.subr.bf16.mxu0 0
      %2972 = vmatpush1.bf16.msra.mxu0 %v2954
      %2973 = vmatprep.subr.bf16.mxu0 0
      %2974 = vmatpush1.bf16.msra.mxu0 %v2952
      %2975 = vmatprep.subr.bf16.mxu0 0
      %2976 = vmatpush1.bf16.msra.mxu0 %v2950
      %2977 = vmatprep.subr.bf16.mxu0 0
      %2978 = vmatpush1.bf16.msra.mxu0 %v2948
      %2979 = vmatprep.subr.bf16.mxu0 0
      %2980 = vmatpush1.bf16.msra.mxu0 %v2946
      %2981 = vmatprep.subr.bf16.mxu0 0
      %2982 = vmatpush1.bf16.msra.mxu0 %v2944
      %2983 = vmatprep.subr.bf16.mxu0 0
      %2984 = vmatpush2.bf16.msra.mxu0 0
      %2985 = vmatprep.subr.bf16.mxu0 0
      %2986 = vmatpush2.bf16.msra.mxu0 0
      %2987 = vmatprep.subr.bf16.mxu0 0
      %2988 = vmatpush2.bf16.msra.mxu0 0
      %2989 = vmatprep.subr.bf16.mxu0 0
      %2990 = vmatpush2.bf16.msra.mxu0 0
      %2991 = vmatprep.subr.bf16.mxu0 0
      %2992 = vmatpush2.bf16.msra.mxu0 0
      %2993 = vmatprep.subr.bf16.mxu0 0
      %2994 = vmatpush2.bf16.msra.mxu0 0
      %2995 = vmatprep.subr.bf16.mxu0 0
      %2996 = vmatpush2.bf16.msra.mxu0 0
      %2997 = vmatprep.subr.bf16.mxu0 0
      %2998 = vmatpush2.bf16.msra.mxu0 0
      %2999 = vmatprep.mubr.bf16.mxu0 0
      %3000 = vmatmul.mubr.bf16.gmra.mxu0 %v2935
      %v3001 = vpop.f32.mrf.mxu0
      %v3002 = vadd.f32 0.0, %v3001
      %v3003 = vpop.f32.mrf.mxu0
      %v3004 = vpop.f32.mrf.mxu0
      %v3005 = vadd.f32 0.0, %v3004
      %v3006 = vpop.f32.mrf.mxu0
      %3007 = vmatprep.mubr.bf16.mxu0 0
      %3008 = vmatmul.mubr.bf16.gmra.mxu0 %v2936
      %v3009 = vpop.f32.mrf.mxu0
      %v3010 = vadd.f32 0.0, %v3009
      %v3011 = vpop.f32.mrf.mxu0
      %v3012 = vpop.f32.mrf.mxu0
      %v3013 = vadd.f32 0.0, %v3012
      %v3014 = vpop.f32.mrf.mxu0
      %3015 = vmatprep.mubr.bf16.mxu0 0
      %3016 = vmatmul.mubr.bf16.gmra.mxu0 %v2937
      %v3017 = vpop.f32.mrf.mxu0
      %v3018 = vadd.f32 0.0, %v3017
      %v3019 = vpop.f32.mrf.mxu0
      %v3020 = vpop.f32.mrf.mxu0
      %v3021 = vadd.f32 0.0, %v3020
      %v3022 = vpop.f32.mrf.mxu0
      %3023 = vmatprep.mubr.bf16.mxu0 0
      %3024 = vmatmul.mubr.bf16.gmra.mxu0 %v2938
      %v3025 = vpop.f32.mrf.mxu0
      %v3026 = vadd.f32 0.0, %v3025
      %v3027 = vpop.f32.mrf.mxu0
      %v3028 = vpop.f32.mrf.mxu0
      %v3029 = vadd.f32 0.0, %v3028
      %v3030 = vpop.f32.mrf.mxu0
      %3031 = vmatprep.mubr.bf16.mxu0 0
      %3032 = vmatmul.mubr.bf16.gmra.mxu0 %v2939
      %v3033 = vpop.f32.mrf.mxu0
      %v3034 = vadd.f32 0.0, %v3033
      %v3035 = vpop.f32.mrf.mxu0
      %v3036 = vpop.f32.mrf.mxu0
      %v3037 = vadd.f32 0.0, %v3036
      %v3038 = vpop.f32.mrf.mxu0
      %3039 = vmatprep.mubr.bf16.mxu0 0
      %3040 = vmatmul.mubr.bf16.gmra.mxu0 %v2940
      %v3041 = vpop.f32.mrf.mxu0
      %v3042 = vadd.f32 0.0, %v3041
      %v3043 = vpop.f32.mrf.mxu0
      %v3044 = vpop.f32.mrf.mxu0
      %v3045 = vadd.f32 0.0, %v3044
      %v3046 = vpop.f32.mrf.mxu0
      %3047 = vmatprep.mubr.bf16.mxu0 0
      %3048 = vmatmul.mubr.bf16.gmra.mxu0 %v2941
      %v3049 = vpop.f32.mrf.mxu0
      %v3050 = vadd.f32 0.0, %v3049
      %v3051 = vpop.f32.mrf.mxu0
      %v3052 = vpop.f32.mrf.mxu0
      %v3053 = vadd.f32 0.0, %v3052
      %v3054 = vpop.f32.mrf.mxu0
      %3055 = vmatprep.mubr.bf16.mxu0 0
      %3056 = vmatmul.mubr.bf16.gmra.mxu0 %v2942
      %v3057 = vpop.f32.mrf.mxu0
      %v3058 = vadd.f32 0.0, %v3057
      %v3059 = vpop.f32.mrf.mxu0
      %v3060 = vpop.f32.mrf.mxu0
      %v3061 = vadd.f32 0.0, %v3060
      %v3062 = vpop.f32.mrf.mxu0
      %3063 = vdwg.mxu0
      %3080 = vrot.lane.b32.xlu0 %v3002, 24
      %v3081 = vpop.permute.xlu0 %3080
      %3082 = vrot.lane.b32.xlu0 %v3005, 24
      %v3083 = vpop.permute.xlu0 %3082
      %3084 = vrot.lane.b32.xlu0 %v3010, 24
      %v3085 = vpop.permute.xlu0 %3084
      %3086 = vrot.lane.b32.xlu0 %v3013, 24
      %v3087 = vpop.permute.xlu0 %3086
      %3088 = vrot.lane.b32.xlu0 %v3018, 24
      %v3089 = vpop.permute.xlu0 %3088
      %3090 = vrot.lane.b32.xlu0 %v3021, 24
      %v3091 = vpop.permute.xlu0 %3090
      %3092 = vrot.lane.b32.xlu0 %v3026, 24
      %v3093 = vpop.permute.xlu0 %3092
      %3094 = vrot.lane.b32.xlu0 %v3029, 24
      %v3095 = vpop.permute.xlu0 %3094
      %3096 = vrot.lane.b32.xlu0 %v3034, 24
      %v3097 = vpop.permute.xlu0 %3096
      %3098 = vrot.lane.b32.xlu0 %v3037, 24
      %v3099 = vpop.permute.xlu0 %3098
      %3100 = vrot.lane.b32.xlu0 %v3042, 24
      %v3101 = vpop.permute.xlu0 %3100
      %3102 = vrot.lane.b32.xlu0 %v3045, 24
      %v3103 = vpop.permute.xlu0 %3102
      %3104 = vrot.lane.b32.xlu0 %v3050, 24
      %v3105 = vpop.permute.xlu0 %3104
      %3106 = vrot.lane.b32.xlu0 %v3053, 24
      %v3107 = vpop.permute.xlu0 %3106
      %3108 = vrot.lane.b32.xlu0 %v3058, 24
      %v3109 = vpop.permute.xlu0 %3108
      %3110 = vrot.lane.b32.xlu0 %v3061, 24
      %v3111 = vpop.permute.xlu0 %3110
      %vm3128 = vcmask 261312
      %3129 = vst.msk [vmem:[#allocation2] sm:$0xff] %vm3128, %v3081
      %3130 = vst.msk [vmem:[#allocation2 + $0x8] sm:$0xff] %vm3128, %v3083
      %3131 = vst.msk [vmem:[#allocation2 + $0x10] sm:$0xff] %vm3128, %v3085
      %3132 = vst.msk [vmem:[#allocation2 + $0x18] sm:$0xff] %vm3128, %v3087
      %3133 = vst.msk [vmem:[#allocation2 + $0x20] sm:$0xff] %vm3128, %v3089
      %3134 = vst.msk [vmem:[#allocation2 + $0x28] sm:$0xff] %vm3128, %v3091
      %3135 = vst.msk [vmem:[#allocation2 + $0x30] sm:$0xff] %vm3128, %v3093
      %3136 = vst.msk [vmem:[#allocation2 + $0x38] sm:$0xff] %vm3128, %v3095
      %3137 = vst.msk [vmem:[#allocation2 + $0x40] sm:$0xff] %vm3128, %v3097
      %3138 = vst.msk [vmem:[#allocation2 + $0x48] sm:$0xff] %vm3128, %v3099
      %3139 = vst.msk [vmem:[#allocation2 + $0x50] sm:$0xff] %vm3128, %v3101
      %3140 = vst.msk [vmem:[#allocation2 + $0x58] sm:$0xff] %vm3128, %v3103
      %3141 = vst.msk [vmem:[#allocation2 + $0x60] sm:$0xff] %vm3128, %v3105
      %3142 = vst.msk [vmem:[#allocation2 + $0x68] sm:$0xff] %vm3128, %v3107
      %3143 = vst.msk [vmem:[#allocation2 + $0x70] sm:$0xff] %vm3128, %v3109
      %3144 = vst.msk [vmem:[#allocation2 + $0x78] sm:$0xff] %vm3128, %v3111
      %v3145 = vld [vmem:[#allocation2] sm:$0xff]
      %v3146 = vld [vmem:[#allocation2 + $0x8] sm:$0xff]
      %v3147 = vld [vmem:[#allocation2 + $0x10] sm:$0xff]
      %v3148 = vld [vmem:[#allocation2 + $0x18] sm:$0xff]
      %v3149 = vld [vmem:[#allocation2 + $0x20] sm:$0xff]
      %v3150 = vld [vmem:[#allocation2 + $0x28] sm:$0xff]
      %v3151 = vld [vmem:[#allocation2 + $0x30] sm:$0xff]
      %v3152 = vld [vmem:[#allocation2 + $0x38] sm:$0xff]
      %v3153 = vld [vmem:[#allocation2 + $0x40] sm:$0xff]
      %v3154 = vld [vmem:[#allocation2 + $0x48] sm:$0xff]
      %v3155 = vld [vmem:[#allocation2 + $0x50] sm:$0xff]
      %v3156 = vld [vmem:[#allocation2 + $0x58] sm:$0xff]
      %v3157 = vld [vmem:[#allocation2 + $0x60] sm:$0xff]
      %v3158 = vld [vmem:[#allocation2 + $0x68] sm:$0xff]
      %v3159 = vld [vmem:[#allocation2 + $0x70] sm:$0xff]
      %v3160 = vld [vmem:[#allocation2 + $0x78] sm:$0xff]
      %v3161 = vpack.c.bf16 %v3146, %v3145
      %v3162 = vpack.c.bf16 %v3148, %v3147
      %v3163 = vpack.c.bf16 %v3150, %v3149
      %v3164 = vpack.c.bf16 %v3152, %v3151
      %v3165 = vpack.c.bf16 %v3154, %v3153
      %v3166 = vpack.c.bf16 %v3156, %v3155
      %v3167 = vpack.c.bf16 %v3158, %v3157
      %v3168 = vpack.c.bf16 %v3160, %v3159
      %v3169 = vld [vmem:[%s6] sm:$0xf]
      %v3170 = vld [vmem:[%s6 + $0x4] sm:$0xf]
      %v3171 = vld [vmem:[%s6 + $0x8] sm:$0xf]
      %v3172 = vld [vmem:[%s6 + $0xc] sm:$0xf]
      %v3173 = vld [vmem:[%s7] sm:$0x1]
      %v3175 = vlaneseq
      %v3176 = vshrl.u32 %v3175, 7
      %v3177 = vsub.s32 0, %v3176
      %v3178 = vrot.slane %v3173, %v3177
      %v3184 = vunpack.c.l.b16 %v3169
      %v3185 = vunpack.c.l.b16 %v3170
      %v3186 = vunpack.c.l.b16 %v3171
      %v3187 = vunpack.c.l.b16 %v3172
      %v3188 = vpack.c.b16 %v3185, %v3184
      %v3189 = vpack.c.b16 %v3187, %v3186
      %v3193 = vsel %vm691, %v3161, 0
      %v3196 = vsel %vm691, %v3162, 0
      %v3199 = vsel %vm691, %v3163, 0
      %v3202 = vsel %vm691, %v3164, 0
      %v3205 = vsel %vm691, %v3165, 0
      %v3208 = vsel %vm691, %v3166, 0
      %v3211 = vsel %vm691, %v3167, 0
      %v3214 = vsel %vm691, %v3168, 0
      %3216 = vmatprep.subr.bf16.mxu0 0
      %3217 = vmatpush1.bf16.msra.mxu0 0
      %3218 = vmatprep.subr.bf16.mxu0 0
      %3219 = vmatpush1.bf16.msra.mxu0 0
      %3220 = vmatprep.subr.bf16.mxu0 0
      %3221 = vmatpush1.bf16.msra.mxu0 0
      %3222 = vmatprep.subr.bf16.mxu0 0
      %3223 = vmatpush1.bf16.msra.mxu0 0
      %3224 = vmatprep.subr.bf16.mxu0 0
      %3225 = vmatpush1.bf16.msra.mxu0 0
      %3226 = vmatprep.subr.bf16.mxu0 0
      %3227 = vmatpush1.bf16.msra.mxu0 0
      %3228 = vmatprep.subr.bf16.mxu0 0
      %3229 = vmatpush1.bf16.msra.mxu0 %v3189
      %3230 = vmatprep.subr.bf16.mxu0 0
      %3231 = vmatpush1.bf16.msra.mxu0 %v3188
      %3232 = vmatprep.subr.bf16.mxu0 0
      %3233 = vmatpush2.bf16.msra.mxu0 0
      %3234 = vmatprep.subr.bf16.mxu0 0
      %3235 = vmatpush2.bf16.msra.mxu0 0
      %3236 = vmatprep.subr.bf16.mxu0 0
      %3237 = vmatpush2.bf16.msra.mxu0 0
      %3238 = vmatprep.subr.bf16.mxu0 0
      %3239 = vmatpush2.bf16.msra.mxu0 0
      %3240 = vmatprep.subr.bf16.mxu0 0
      %3241 = vmatpush2.bf16.msra.mxu0 0
      %3242 = vmatprep.subr.bf16.mxu0 0
      %3243 = vmatpush2.bf16.msra.mxu0 0
      %3244 = vmatprep.subr.bf16.mxu0 0
      %3245 = vmatpush2.bf16.msra.mxu0 0
      %3246 = vmatprep.subr.bf16.mxu0 0
      %3247 = vmatpush2.bf16.msra.mxu0 0
      %3248 = vmatprep.mubr.bf16.mxu0 0
      %3249 = vmatmul.mubr.bf16.gmra.mxu0 %v3193
      %v3250 = vpop.f32.mrf.mxu0
      %v3251 = vadd.f32 %v3178, %v3250
      %v3252 = vpop.f32.mrf.mxu0
      %v3253 = vpop.f32.mrf.mxu0
      %v3254 = vadd.f32 %v3178, %v3253
      %v3255 = vpop.f32.mrf.mxu0
      %3256 = vmatprep.mubr.bf16.mxu0 0
      %3257 = vmatmul.mubr.bf16.gmra.mxu0 %v3196
      %v3258 = vpop.f32.mrf.mxu0
      %v3259 = vadd.f32 %v3178, %v3258
      %v3260 = vpop.f32.mrf.mxu0
      %v3261 = vpop.f32.mrf.mxu0
      %v3262 = vadd.f32 %v3178, %v3261
      %v3263 = vpop.f32.mrf.mxu0
      %3264 = vmatprep.mubr.bf16.mxu0 0
      %3265 = vmatmul.mubr.bf16.gmra.mxu0 %v3199
      %v3266 = vpop.f32.mrf.mxu0
      %v3267 = vadd.f32 %v3178, %v3266
      %v3268 = vpop.f32.mrf.mxu0
      %v3269 = vpop.f32.mrf.mxu0
      %v3270 = vadd.f32 %v3178, %v3269
      %v3271 = vpop.f32.mrf.mxu0
      %3272 = vmatprep.mubr.bf16.mxu0 0
      %3273 = vmatmul.mubr.bf16.gmra.mxu0 %v3202
      %v3274 = vpop.f32.mrf.mxu0
      %v3275 = vadd.f32 %v3178, %v3274
      %v3276 = vpop.f32.mrf.mxu0
      %v3277 = vpop.f32.mrf.mxu0
      %v3278 = vadd.f32 %v3178, %v3277
      %v3279 = vpop.f32.mrf.mxu0
      %3280 = vmatprep.mubr.bf16.mxu0 0
      %3281 = vmatmul.mubr.bf16.gmra.mxu0 %v3205
      %v3282 = vpop.f32.mrf.mxu0
      %v3283 = vadd.f32 %v3178, %v3282
      %v3284 = vpop.f32.mrf.mxu0
      %v3285 = vpop.f32.mrf.mxu0
      %v3286 = vadd.f32 %v3178, %v3285
      %v3287 = vpop.f32.mrf.mxu0
      %3288 = vmatprep.mubr.bf16.mxu0 0
      %3289 = vmatmul.mubr.bf16.gmra.mxu0 %v3208
      %v3290 = vpop.f32.mrf.mxu0
      %v3291 = vadd.f32 %v3178, %v3290
      %v3292 = vpop.f32.mrf.mxu0
      %v3293 = vpop.f32.mrf.mxu0
      %v3294 = vadd.f32 %v3178, %v3293
      %v3295 = vpop.f32.mrf.mxu0
      %3296 = vmatprep.mubr.bf16.mxu0 0
      %3297 = vmatmul.mubr.bf16.gmra.mxu0 %v3211
      %v3298 = vpop.f32.mrf.mxu0
      %v3299 = vadd.f32 %v3178, %v3298
      %v3300 = vpop.f32.mrf.mxu0
      %v3301 = vpop.f32.mrf.mxu0
      %v3302 = vadd.f32 %v3178, %v3301
      %v3303 = vpop.f32.mrf.mxu0
      %3304 = vmatprep.mubr.bf16.mxu0 0
      %3305 = vmatmul.mubr.bf16.gmra.mxu0 %v3214
      %v3306 = vpop.f32.mrf.mxu0
      %v3307 = vadd.f32 %v3178, %v3306
      %v3308 = vpop.f32.mrf.mxu0
      %v3309 = vpop.f32.mrf.mxu0
      %v3310 = vadd.f32 %v3178, %v3309
      %v3311 = vpop.f32.mrf.mxu0
      %3312 = vdwg.mxu0
      %v3313 = vadd.f32 %v543, %v3251
      %v3314 = vadd.f32 %v544, %v3254
      %v3315 = vadd.f32 %v545, %v3259
      %v3316 = vadd.f32 %v546, %v3262
      %v3317 = vadd.f32 %v547, %v3267
      %v3318 = vadd.f32 %v548, %v3270
      %v3319 = vadd.f32 %v549, %v3275
      %v3320 = vadd.f32 %v550, %v3278
      %v3321 = vadd.f32 %v551, %v3283
      %v3322 = vadd.f32 %v552, %v3286
      %v3323 = vadd.f32 %v553, %v3291
      %v3324 = vadd.f32 %v554, %v3294
      %v3325 = vadd.f32 %v555, %v3299
      %v3326 = vadd.f32 %v556, %v3302
      %v3327 = vadd.f32 %v557, %v3307
      %v3328 = vadd.f32 %v558, %v3310
      %v3329 = vsel %vm691, %v3313, 0.0
      %3330 = vadd.xlane.f32.xlu0 %v3329
      %v3331 = vpop.xlane.xlu0 %3330
      %v3332 = vsel %vm691, %v3314, 0.0
      %3333 = vadd.xlane.f32.xlu0 %v3332
      %v3334 = vpop.xlane.xlu0 %3333
      %v3335 = vsel %vm691, %v3315, 0.0
      %3336 = vadd.xlane.f32.xlu0 %v3335
      %v3337 = vpop.xlane.xlu0 %3336
      %v3338 = vsel %vm691, %v3316, 0.0
      %3339 = vadd.xlane.f32.xlu0 %v3338
      %v3340 = vpop.xlane.xlu0 %3339
      %v3341 = vsel %vm691, %v3317, 0.0
      %3342 = vadd.xlane.f32.xlu0 %v3341
      %v3343 = vpop.xlane.xlu0 %3342
      %v3344 = vsel %vm691, %v3318, 0.0
      %3345 = vadd.xlane.f32.xlu0 %v3344
      %v3346 = vpop.xlane.xlu0 %3345
      %v3347 = vsel %vm691, %v3319, 0.0
      %3348 = vadd.xlane.f32.xlu0 %v3347
      %v3349 = vpop.xlane.xlu0 %3348
      %v3350 = vsel %vm691, %v3320, 0.0
      %3351 = vadd.xlane.f32.xlu0 %v3350
      %v3352 = vpop.xlane.xlu0 %3351
      %v3353 = vsel %vm691, %v3321, 0.0
      %3354 = vadd.xlane.f32.xlu0 %v3353
      %v3355 = vpop.xlane.xlu0 %3354
      %v3356 = vsel %vm691, %v3322, 0.0
      %3357 = vadd.xlane.f32.xlu0 %v3356
      %v3358 = vpop.xlane.xlu0 %3357
      %v3359 = vsel %vm691, %v3323, 0.0
      %3360 = vadd.xlane.f32.xlu0 %v3359
      %v3361 = vpop.xlane.xlu0 %3360
      %v3362 = vsel %vm691, %v3324, 0.0
      %3363 = vadd.xlane.f32.xlu0 %v3362
      %v3364 = vpop.xlane.xlu0 %3363
      %v3365 = vsel %vm691, %v3325, 0.0
      %3366 = vadd.xlane.f32.xlu0 %v3365
      %v3367 = vpop.xlane.xlu0 %3366
      %v3368 = vsel %vm691, %v3326, 0.0
      %3369 = vadd.xlane.f32.xlu0 %v3368
      %v3370 = vpop.xlane.xlu0 %3369
      %v3371 = vsel %vm691, %v3327, 0.0
      %3372 = vadd.xlane.f32.xlu0 %v3371
      %v3373 = vpop.xlane.xlu0 %3372
      %v3374 = vsel %vm691, %v3328, 0.0
      %3375 = vadd.xlane.f32.xlu0 %v3374
      %v3376 = vpop.xlane.xlu0 %3375
      %v3377 = vrcp.pop 32.0
      %v3378 = vmul.f32 %v3331, %v3377
      %v3379 = vmul.f32 %v3334, %v3377
      %v3380 = vmul.f32 %v3337, %v3377
      %v3381 = vmul.f32 %v3340, %v3377
      %v3382 = vmul.f32 %v3343, %v3377
      %v3383 = vmul.f32 %v3346, %v3377
      %v3384 = vmul.f32 %v3349, %v3377
      %v3385 = vmul.f32 %v3352, %v3377
      %v3386 = vmul.f32 %v3355, %v3377
      %v3387 = vmul.f32 %v3358, %v3377
      %v3388 = vmul.f32 %v3361, %v3377
      %v3389 = vmul.f32 %v3364, %v3377
      %v3390 = vmul.f32 %v3367, %v3377
      %v3391 = vmul.f32 %v3370, %v3377
      %v3392 = vmul.f32 %v3373, %v3377
      %v3393 = vmul.f32 %v3376, %v3377
      %v3394 = vsub.f32 %v3313, %v3378
      %v3395 = vsub.f32 %v3314, %v3379
      %v3396 = vsub.f32 %v3315, %v3380
      %v3397 = vsub.f32 %v3316, %v3381
      %v3398 = vsub.f32 %v3317, %v3382
      %v3399 = vsub.f32 %v3318, %v3383
      %v3400 = vsub.f32 %v3319, %v3384
      %v3401 = vsub.f32 %v3320, %v3385
      %v3402 = vsub.f32 %v3321, %v3386
      %v3403 = vsub.f32 %v3322, %v3387
      %v3404 = vsub.f32 %v3323, %v3388
      %v3405 = vsub.f32 %v3324, %v3389
      %v3406 = vsub.f32 %v3325, %v3390
      %v3407 = vsub.f32 %v3326, %v3391
      %v3408 = vsub.f32 %v3327, %v3392
      %v3409 = vsub.f32 %v3328, %v3393
      %v3410 = vmul.f32 %v3394, %v3394
      %v3411 = vmul.f32 %v3395, %v3395
      %v3412 = vmul.f32 %v3396, %v3396
      %v3413 = vmul.f32 %v3397, %v3397
      %v3414 = vmul.f32 %v3398, %v3398
      %v3415 = vmul.f32 %v3399, %v3399
      %v3416 = vmul.f32 %v3400, %v3400
      %v3417 = vmul.f32 %v3401, %v3401
      %v3418 = vmul.f32 %v3402, %v3402
      %v3419 = vmul.f32 %v3403, %v3403
      %v3420 = vmul.f32 %v3404, %v3404
      %v3421 = vmul.f32 %v3405, %v3405
      %v3422 = vmul.f32 %v3406, %v3406
      %v3423 = vmul.f32 %v3407, %v3407
      %v3424 = vmul.f32 %v3408, %v3408
      %v3425 = vmul.f32 %v3409, %v3409
      %v3426 = vsel %vm691, %v3410, 0.0
      %3427 = vadd.xlane.f32.xlu0 %v3426
      %v3428 = vpop.xlane.xlu0 %3427
      %v3429 = vsel %vm691, %v3411, 0.0
      %3430 = vadd.xlane.f32.xlu0 %v3429
      %v3431 = vpop.xlane.xlu0 %3430
      %v3432 = vsel %vm691, %v3412, 0.0
      %3433 = vadd.xlane.f32.xlu0 %v3432
      %v3434 = vpop.xlane.xlu0 %3433
      %v3435 = vsel %vm691, %v3413, 0.0
      %3436 = vadd.xlane.f32.xlu0 %v3435
      %v3437 = vpop.xlane.xlu0 %3436
      %v3438 = vsel %vm691, %v3414, 0.0
      %3439 = vadd.xlane.f32.xlu0 %v3438
      %v3440 = vpop.xlane.xlu0 %3439
      %v3441 = vsel %vm691, %v3415, 0.0
      %3442 = vadd.xlane.f32.xlu0 %v3441
      %v3443 = vpop.xlane.xlu0 %3442
      %v3444 = vsel %vm691, %v3416, 0.0
      %3445 = vadd.xlane.f32.xlu0 %v3444
      %v3446 = vpop.xlane.xlu0 %3445
      %v3447 = vsel %vm691, %v3417, 0.0
      %3448 = vadd.xlane.f32.xlu0 %v3447
      %v3449 = vpop.xlane.xlu0 %3448
      %v3450 = vsel %vm691, %v3418, 0.0
      %3451 = vadd.xlane.f32.xlu0 %v3450
      %v3452 = vpop.xlane.xlu0 %3451
      %v3453 = vsel %vm691, %v3419, 0.0
      %3454 = vadd.xlane.f32.xlu0 %v3453
      %v3455 = vpop.xlane.xlu0 %3454
      %v3456 = vsel %vm691, %v3420, 0.0
      %3457 = vadd.xlane.f32.xlu0 %v3456
      %v3458 = vpop.xlane.xlu0 %3457
      %v3459 = vsel %vm691, %v3421, 0.0
      %3460 = vadd.xlane.f32.xlu0 %v3459
      %v3461 = vpop.xlane.xlu0 %3460
      %v3462 = vsel %vm691, %v3422, 0.0
      %3463 = vadd.xlane.f32.xlu0 %v3462
      %v3464 = vpop.xlane.xlu0 %3463
      %v3465 = vsel %vm691, %v3423, 0.0
      %3466 = vadd.xlane.f32.xlu0 %v3465
      %v3467 = vpop.xlane.xlu0 %3466
      %v3468 = vsel %vm691, %v3424, 0.0
      %3469 = vadd.xlane.f32.xlu0 %v3468
      %v3470 = vpop.xlane.xlu0 %3469
      %v3471 = vsel %vm691, %v3425, 0.0
      %3472 = vadd.xlane.f32.xlu0 %v3471
      %v3473 = vpop.xlane.xlu0 %3472
      %v3474 = vmul.f32 %v3428, %v3377
      %v3475 = vmul.f32 %v3431, %v3377
      %v3476 = vmul.f32 %v3434, %v3377
      %v3477 = vmul.f32 %v3437, %v3377
      %v3478 = vmul.f32 %v3440, %v3377
      %v3479 = vmul.f32 %v3443, %v3377
      %v3480 = vmul.f32 %v3446, %v3377
      %v3481 = vmul.f32 %v3449, %v3377
      %v3482 = vmul.f32 %v3452, %v3377
      %v3483 = vmul.f32 %v3455, %v3377
      %v3484 = vmul.f32 %v3458, %v3377
      %v3485 = vmul.f32 %v3461, %v3377
      %v3486 = vmul.f32 %v3464, %v3377
      %v3487 = vmul.f32 %v3467, %v3377
      %v3488 = vmul.f32 %v3470, %v3377
      %v3489 = vmul.f32 %v3473, %v3377
      %v3490 = vadd.f32 %v3474, 1e-05
      %v3491 = vadd.f32 %v3475, 1e-05
      %v3492 = vadd.f32 %v3476, 1e-05
      %v3493 = vadd.f32 %v3477, 1e-05
      %v3494 = vadd.f32 %v3478, 1e-05
      %v3495 = vadd.f32 %v3479, 1e-05
      %v3496 = vadd.f32 %v3480, 1e-05
      %v3497 = vadd.f32 %v3481, 1e-05
      %v3498 = vadd.f32 %v3482, 1e-05
      %v3499 = vadd.f32 %v3483, 1e-05
      %v3500 = vadd.f32 %v3484, 1e-05
      %v3501 = vadd.f32 %v3485, 1e-05
      %v3502 = vadd.f32 %v3486, 1e-05
      %v3503 = vadd.f32 %v3487, 1e-05
      %v3504 = vadd.f32 %v3488, 1e-05
      %v3505 = vadd.f32 %v3489, 1e-05
      %v3506 = vrsqrt.pop %v3490
      %v3507 = vrsqrt.pop %v3491
      %v3508 = vrsqrt.pop %v3492
      %v3509 = vrsqrt.pop %v3493
      %v3510 = vrsqrt.pop %v3494
      %v3511 = vrsqrt.pop %v3495
      %v3512 = vrsqrt.pop %v3496
      %v3513 = vrsqrt.pop %v3497
      %v3514 = vrsqrt.pop %v3498
      %v3515 = vrsqrt.pop %v3499
      %v3516 = vrsqrt.pop %v3500
      %v3517 = vrsqrt.pop %v3501
      %v3518 = vrsqrt.pop %v3502
      %v3519 = vrsqrt.pop %v3503
      %v3520 = vrsqrt.pop %v3504
      %v3521 = vrsqrt.pop %v3505
      %v3522 = vmul.f32 %v3394, %v3506
      %v3523 = vmul.f32 %v3395, %v3507
      %v3524 = vmul.f32 %v3396, %v3508
      %v3525 = vmul.f32 %v3397, %v3509
      %v3526 = vmul.f32 %v3398, %v3510
      %v3527 = vmul.f32 %v3399, %v3511
      %v3528 = vmul.f32 %v3400, %v3512
      %v3529 = vmul.f32 %v3401, %v3513
      %v3530 = vmul.f32 %v3402, %v3514
      %v3531 = vmul.f32 %v3403, %v3515
      %v3532 = vmul.f32 %v3404, %v3516
      %v3533 = vmul.f32 %v3405, %v3517
      %v3534 = vmul.f32 %v3406, %v3518
      %v3535 = vmul.f32 %v3407, %v3519
      %v3536 = vmul.f32 %v3408, %v3520
      %v3537 = vmul.f32 %v3409, %v3521
      %v3538 = vld [vmem:[%s12] sm:$0x1]
      %v3540 = vlaneseq
      %v3541 = vshrl.u32 %v3540, 7
      %v3542 = vsub.s32 0, %v3541
      %v3543 = vrot.slane %v3538, %v3542
      %v3545 = vmul.f32 %v3522, %v3543
      %v3546 = vmul.f32 %v3523, %v3543
      %v3547 = vmul.f32 %v3524, %v3543
      %v3548 = vmul.f32 %v3525, %v3543
      %v3549 = vmul.f32 %v3526, %v3543
      %v3550 = vmul.f32 %v3527, %v3543
      %v3551 = vmul.f32 %v3528, %v3543
      %v3552 = vmul.f32 %v3529, %v3543
      %v3553 = vmul.f32 %v3530, %v3543
      %v3554 = vmul.f32 %v3531, %v3543
      %v3555 = vmul.f32 %v3532, %v3543
      %v3556 = vmul.f32 %v3533, %v3543
      %v3557 = vmul.f32 %v3534, %v3543
      %v3558 = vmul.f32 %v3535, %v3543
      %v3559 = vmul.f32 %v3536, %v3543
      %v3560 = vmul.f32 %v3537, %v3543
      %v3561 = vld [vmem:[%s13] sm:$0x1]
      %v3563 = vlaneseq
      %v3564 = vshrl.u32 %v3563, 7
      %v3565 = vsub.s32 0, %v3564
      %v3566 = vrot.slane %v3561, %v3565
      %v3568 = vadd.f32 %v3545, %v3566
      %v3569 = vadd.f32 %v3546, %v3566
      %v3570 = vadd.f32 %v3547, %v3566
      %v3571 = vadd.f32 %v3548, %v3566
      %v3572 = vadd.f32 %v3549, %v3566
      %v3573 = vadd.f32 %v3550, %v3566
      %v3574 = vadd.f32 %v3551, %v3566
      %v3575 = vadd.f32 %v3552, %v3566
      %v3576 = vadd.f32 %v3553, %v3566
      %v3577 = vadd.f32 %v3554, %v3566
      %v3578 = vadd.f32 %v3555, %v3566
      %v3579 = vadd.f32 %v3556, %v3566
      %v3580 = vadd.f32 %v3557, %v3566
      %v3581 = vadd.f32 %v3558, %v3566
      %v3582 = vadd.f32 %v3559, %v3566
      %v3583 = vadd.f32 %v3560, %v3566
      %v3584 = vpack.c.bf16 %v3569, %v3568
      %v3585 = vpack.c.bf16 %v3571, %v3570
      %v3586 = vpack.c.bf16 %v3573, %v3572
      %v3587 = vpack.c.bf16 %v3575, %v3574
      %v3588 = vpack.c.bf16 %v3577, %v3576
      %v3589 = vpack.c.bf16 %v3579, %v3578
      %v3590 = vpack.c.bf16 %v3581, %v3580
      %v3591 = vpack.c.bf16 %v3583, %v3582
      %v3592 = vld [vmem:[%s8] sm:$0xf]
      %v3593 = vld [vmem:[%s8 + $0x4] sm:$0xf]
      %v3594 = vld [vmem:[%s8 + $0x8] sm:$0xf]
      %v3595 = vld [vmem:[%s8 + $0xc] sm:$0xf]
      %v3596 = vld [vmem:[%s9] sm:$0x1]
      %v3598 = vlaneseq
      %v3599 = vshrl.u32 %v3598, 7
      %v3600 = vsub.s32 0, %v3599
      %v3601 = vrot.slane %v3596, %v3600
      %v3607 = vunpack.c.l.b16 %v3592
      %v3608 = vunpack.c.l.b16 %v3593
      %v3609 = vunpack.c.l.b16 %v3594
      %v3610 = vunpack.c.l.b16 %v3595
      %v3611 = vpack.c.b16 %v3608, %v3607
      %v3612 = vpack.c.b16 %v3610, %v3609
      %v3616 = vsel %vm691, %v3584, 0
      %v3619 = vsel %vm691, %v3585, 0
      %v3622 = vsel %vm691, %v3586, 0
      %v3625 = vsel %vm691, %v3587, 0
      %v3628 = vsel %vm691, %v3588, 0
      %v3631 = vsel %vm691, %v3589, 0
      %v3634 = vsel %vm691, %v3590, 0
      %v3637 = vsel %vm691, %v3591, 0
      %3639 = vmatprep.subr.bf16.mxu0 0
      %3640 = vmatpush1.bf16.msra.mxu0 0
      %3641 = vmatprep.subr.bf16.mxu0 0
      %3642 = vmatpush1.bf16.msra.mxu0 0
      %3643 = vmatprep.subr.bf16.mxu0 0
      %3644 = vmatpush1.bf16.msra.mxu0 0
      %3645 = vmatprep.subr.bf16.mxu0 0
      %3646 = vmatpush1.bf16.msra.mxu0 0
      %3647 = vmatprep.subr.bf16.mxu0 0
      %3648 = vmatpush1.bf16.msra.mxu0 0
      %3649 = vmatprep.subr.bf16.mxu0 0
      %3650 = vmatpush1.bf16.msra.mxu0 0
      %3651 = vmatprep.subr.bf16.mxu0 0
      %3652 = vmatpush1.bf16.msra.mxu0 %v3612
      %3653 = vmatprep.subr.bf16.mxu0 0
      %3654 = vmatpush1.bf16.msra.mxu0 %v3611
      %3655 = vmatprep.subr.bf16.mxu0 0
      %3656 = vmatpush2.bf16.msra.mxu0 0
      %3657 = vmatprep.subr.bf16.mxu0 0
      %3658 = vmatpush2.bf16.msra.mxu0 0
      %3659 = vmatprep.subr.bf16.mxu0 0
      %3660 = vmatpush2.bf16.msra.mxu0 0
      %3661 = vmatprep.subr.bf16.mxu0 0
      %3662 = vmatpush2.bf16.msra.mxu0 0
      %3663 = vmatprep.subr.bf16.mxu0 0
      %3664 = vmatpush2.bf16.msra.mxu0 0
      %3665 = vmatprep.subr.bf16.mxu0 0
      %3666 = vmatpush2.bf16.msra.mxu0 0
      %3667 = vmatprep.subr.bf16.mxu0 0
      %3668 = vmatpush2.bf16.msra.mxu0 0
      %3669 = vmatprep.subr.bf16.mxu0 0
      %3670 = vmatpush2.bf16.msra.mxu0 0
      %3671 = vmatprep.mubr.bf16.mxu0 0
      %3672 = vmatmul.mubr.bf16.gmra.mxu0 %v3616
      %v3673 = vpop.f32.mrf.mxu0
      %v3674 = vadd.f32 %v3601, %v3673
      %v3675 = vpop.f32.mrf.mxu0
      %v3676 = vpop.f32.mrf.mxu0
      %v3677 = vadd.f32 %v3601, %v3676
      %v3678 = vpop.f32.mrf.mxu0
      %3679 = vmatprep.mubr.bf16.mxu0 0
      %3680 = vmatmul.mubr.bf16.gmra.mxu0 %v3619
      %v3681 = vpop.f32.mrf.mxu0
      %v3682 = vadd.f32 %v3601, %v3681
      %v3683 = vpop.f32.mrf.mxu0
      %v3684 = vpop.f32.mrf.mxu0
      %v3685 = vadd.f32 %v3601, %v3684
      %v3686 = vpop.f32.mrf.mxu0
      %3687 = vmatprep.mubr.bf16.mxu0 0
      %3688 = vmatmul.mubr.bf16.gmra.mxu0 %v3622
      %v3689 = vpop.f32.mrf.mxu0
      %v3690 = vadd.f32 %v3601, %v3689
      %v3691 = vpop.f32.mrf.mxu0
      %v3692 = vpop.f32.mrf.mxu0
      %v3693 = vadd.f32 %v3601, %v3692
      %v3694 = vpop.f32.mrf.mxu0
      %3695 = vmatprep.mubr.bf16.mxu0 0
      %3696 = vmatmul.mubr.bf16.gmra.mxu0 %v3625
      %v3697 = vpop.f32.mrf.mxu0
      %v3698 = vadd.f32 %v3601, %v3697
      %v3699 = vpop.f32.mrf.mxu0
      %v3700 = vpop.f32.mrf.mxu0
      %v3701 = vadd.f32 %v3601, %v3700
      %v3702 = vpop.f32.mrf.mxu0
      %3703 = vmatprep.mubr.bf16.mxu0 0
      %3704 = vmatmul.mubr.bf16.gmra.mxu0 %v3628
      %v3705 = vpop.f32.mrf.mxu0
      %v3706 = vadd.f32 %v3601, %v3705
      %v3707 = vpop.f32.mrf.mxu0
      %v3708 = vpop.f32.mrf.mxu0
      %v3709 = vadd.f32 %v3601, %v3708
      %v3710 = vpop.f32.mrf.mxu0
      %3711 = vmatprep.mubr.bf16.mxu0 0
      %3712 = vmatmul.mubr.bf16.gmra.mxu0 %v3631
      %v3713 = vpop.f32.mrf.mxu0
      %v3714 = vadd.f32 %v3601, %v3713
      %v3715 = vpop.f32.mrf.mxu0
      %v3716 = vpop.f32.mrf.mxu0
      %v3717 = vadd.f32 %v3601, %v3716
      %v3718 = vpop.f32.mrf.mxu0
      %3719 = vmatprep.mubr.bf16.mxu0 0
      %3720 = vmatmul.mubr.bf16.gmra.mxu0 %v3634
      %v3721 = vpop.f32.mrf.mxu0
      %v3722 = vadd.f32 %v3601, %v3721
      %v3723 = vpop.f32.mrf.mxu0
      %v3724 = vpop.f32.mrf.mxu0
      %v3725 = vadd.f32 %v3601, %v3724
      %v3726 = vpop.f32.mrf.mxu0
      %3727 = vmatprep.mubr.bf16.mxu0 0
      %3728 = vmatmul.mubr.bf16.gmra.mxu0 %v3637
      %v3729 = vpop.f32.mrf.mxu0
      %v3730 = vadd.f32 %v3601, %v3729
      %v3731 = vpop.f32.mrf.mxu0
      %v3732 = vpop.f32.mrf.mxu0
      %v3733 = vadd.f32 %v3601, %v3732
      %v3734 = vpop.f32.mrf.mxu0
      %3735 = vdwg.mxu0
      %v3736 = vmax.f32 %v3674, 0.0
      %v3737 = vmax.f32 %v3677, 0.0
      %v3738 = vmax.f32 %v3682, 0.0
      %v3739 = vmax.f32 %v3685, 0.0
      %v3740 = vmax.f32 %v3690, 0.0
      %v3741 = vmax.f32 %v3693, 0.0
      %v3742 = vmax.f32 %v3698, 0.0
      %v3743 = vmax.f32 %v3701, 0.0
      %v3744 = vmax.f32 %v3706, 0.0
      %v3745 = vmax.f32 %v3709, 0.0
      %v3746 = vmax.f32 %v3714, 0.0
      %v3747 = vmax.f32 %v3717, 0.0
      %v3748 = vmax.f32 %v3722, 0.0
      %v3749 = vmax.f32 %v3725, 0.0
      %v3750 = vmax.f32 %v3730, 0.0
      %v3751 = vmax.f32 %v3733, 0.0
      %v3752 = vpack.c.bf16 %v3737, %v3736
      %v3753 = vpack.c.bf16 %v3739, %v3738
      %v3754 = vpack.c.bf16 %v3741, %v3740
      %v3755 = vpack.c.bf16 %v3743, %v3742
      %v3756 = vpack.c.bf16 %v3745, %v3744
      %v3757 = vpack.c.bf16 %v3747, %v3746
      %v3758 = vpack.c.bf16 %v3749, %v3748
      %v3759 = vpack.c.bf16 %v3751, %v3750
      %v3760 = vld [vmem:[%s10] sm:$0xf]
      %v3761 = vld [vmem:[%s10 + $0x4] sm:$0xf]
      %v3762 = vld [vmem:[%s10 + $0x8] sm:$0xf]
      %v3763 = vld [vmem:[%s10 + $0xc] sm:$0xf]
      %v3764 = vld [vmem:[%s10 + $0x10] sm:$0xf]
      %v3765 = vld [vmem:[%s10 + $0x14] sm:$0xf]
      %v3766 = vld [vmem:[%s10 + $0x18] sm:$0xf]
      %v3767 = vld [vmem:[%s10 + $0x1c] sm:$0xf]
      %v3768 = vld [vmem:[%s11] sm:$0x1]
      %v3770 = vlaneseq
      %v3771 = vshrl.u32 %v3770, 7
      %v3772 = vsub.s32 0, %v3771
      %v3773 = vrot.slane %v3768, %v3772
      %v3783 = vunpack.c.l.b16 %v3760
      %v3784 = vunpack.c.l.b16 %v3761
      %v3785 = vunpack.c.l.b16 %v3762
      %v3786 = vunpack.c.l.b16 %v3763
      %v3787 = vunpack.c.l.b16 %v3764
      %v3788 = vunpack.c.l.b16 %v3765
      %v3789 = vunpack.c.l.b16 %v3766
      %v3790 = vunpack.c.l.b16 %v3767
      %v3791 = vpack.c.b16 %v3784, %v3783
      %v3792 = vpack.c.b16 %v3786, %v3785
      %v3793 = vpack.c.b16 %v3788, %v3787
      %v3794 = vpack.c.b16 %v3790, %v3789
      %vm3799 = vcmask 523264
      %v3801 = vsel %vm3799, %v3752, 0
      %v3804 = vsel %vm3799, %v3753, 0
      %v3807 = vsel %vm3799, %v3754, 0
      %v3810 = vsel %vm3799, %v3755, 0
      %v3813 = vsel %vm3799, %v3756, 0
      %v3816 = vsel %vm3799, %v3757, 0
      %v3819 = vsel %vm3799, %v3758, 0
      %v3822 = vsel %vm3799, %v3759, 0
      %3824 = vmatprep.subr.bf16.mxu0 0
      %3825 = vmatpush1.bf16.msra.mxu0 0
      %3826 = vmatprep.subr.bf16.mxu0 0
      %3827 = vmatpush1.bf16.msra.mxu0 0
      %3828 = vmatprep.subr.bf16.mxu0 0
      %3829 = vmatpush1.bf16.msra.mxu0 0
      %3830 = vmatprep.subr.bf16.mxu0 0
      %3831 = vmatpush1.bf16.msra.mxu0 0
      %3832 = vmatprep.subr.bf16.mxu0 0
      %3833 = vmatpush1.bf16.msra.mxu0 %v3794
      %3834 = vmatprep.subr.bf16.mxu0 0
      %3835 = vmatpush1.bf16.msra.mxu0 %v3793
      %3836 = vmatprep.subr.bf16.mxu0 0
      %3837 = vmatpush1.bf16.msra.mxu0 %v3792
      %3838 = vmatprep.subr.bf16.mxu0 0
      %3839 = vmatpush1.bf16.msra.mxu0 %v3791
      %3840 = vmatprep.subr.bf16.mxu0 0
      %3841 = vmatpush2.bf16.msra.mxu0 0
      %3842 = vmatprep.subr.bf16.mxu0 0
      %3843 = vmatpush2.bf16.msra.mxu0 0
      %3844 = vmatprep.subr.bf16.mxu0 0
      %3845 = vmatpush2.bf16.msra.mxu0 0
      %3846 = vmatprep.subr.bf16.mxu0 0
      %3847 = vmatpush2.bf16.msra.mxu0 0
      %3848 = vmatprep.subr.bf16.mxu0 0
      %3849 = vmatpush2.bf16.msra.mxu0 0
      %3850 = vmatprep.subr.bf16.mxu0 0
      %3851 = vmatpush2.bf16.msra.mxu0 0
      %3852 = vmatprep.subr.bf16.mxu0 0
      %3853 = vmatpush2.bf16.msra.mxu0 0
      %3854 = vmatprep.subr.bf16.mxu0 0
      %3855 = vmatpush2.bf16.msra.mxu0 0
      %3856 = vmatprep.mubr.bf16.mxu0 0
      %3857 = vmatmul.mubr.bf16.gmra.mxu0 %v3801
      %v3858 = vpop.f32.mrf.mxu0
      %v3859 = vadd.f32 %v3773, %v3858
      %v3860 = vpop.f32.mrf.mxu0
      %v3861 = vpop.f32.mrf.mxu0
      %v3862 = vadd.f32 %v3773, %v3861
      %v3863 = vpop.f32.mrf.mxu0
      %3864 = vmatprep.mubr.bf16.mxu0 0
      %3865 = vmatmul.mubr.bf16.gmra.mxu0 %v3804
      %v3866 = vpop.f32.mrf.mxu0
      %v3867 = vadd.f32 %v3773, %v3866
      %v3868 = vpop.f32.mrf.mxu0
      %v3869 = vpop.f32.mrf.mxu0
      %v3870 = vadd.f32 %v3773, %v3869
      %v3871 = vpop.f32.mrf.mxu0
      %3872 = vmatprep.mubr.bf16.mxu0 0
      %3873 = vmatmul.mubr.bf16.gmra.mxu0 %v3807
      %v3874 = vpop.f32.mrf.mxu0
      %v3875 = vadd.f32 %v3773, %v3874
      %v3876 = vpop.f32.mrf.mxu0
      %v3877 = vpop.f32.mrf.mxu0
      %v3878 = vadd.f32 %v3773, %v3877
      %v3879 = vpop.f32.mrf.mxu0
      %3880 = vmatprep.mubr.bf16.mxu0 0
      %3881 = vmatmul.mubr.bf16.gmra.mxu0 %v3810
      %v3882 = vpop.f32.mrf.mxu0
      %v3883 = vadd.f32 %v3773, %v3882
      %v3884 = vpop.f32.mrf.mxu0
      %v3885 = vpop.f32.mrf.mxu0
      %v3886 = vadd.f32 %v3773, %v3885
      %v3887 = vpop.f32.mrf.mxu0
      %3888 = vmatprep.mubr.bf16.mxu0 0
      %3889 = vmatmul.mubr.bf16.gmra.mxu0 %v3813
      %v3890 = vpop.f32.mrf.mxu0
      %v3891 = vadd.f32 %v3773, %v3890
      %v3892 = vpop.f32.mrf.mxu0
      %v3893 = vpop.f32.mrf.mxu0
      %v3894 = vadd.f32 %v3773, %v3893
      %v3895 = vpop.f32.mrf.mxu0
      %3896 = vmatprep.mubr.bf16.mxu0 0
      %3897 = vmatmul.mubr.bf16.gmra.mxu0 %v3816
      %v3898 = vpop.f32.mrf.mxu0
      %v3899 = vadd.f32 %v3773, %v3898
      %v3900 = vpop.f32.mrf.mxu0
      %v3901 = vpop.f32.mrf.mxu0
      %v3902 = vadd.f32 %v3773, %v3901
      %v3903 = vpop.f32.mrf.mxu0
      %3904 = vmatprep.mubr.bf16.mxu0 0
      %3905 = vmatmul.mubr.bf16.gmra.mxu0 %v3819
      %v3906 = vpop.f32.mrf.mxu0
      %v3907 = vadd.f32 %v3773, %v3906
      %v3908 = vpop.f32.mrf.mxu0
      %v3909 = vpop.f32.mrf.mxu0
      %v3910 = vadd.f32 %v3773, %v3909
      %v3911 = vpop.f32.mrf.mxu0
      %3912 = vmatprep.mubr.bf16.mxu0 0
      %3913 = vmatmul.mubr.bf16.gmra.mxu0 %v3822
      %v3914 = vpop.f32.mrf.mxu0
      %v3915 = vadd.f32 %v3773, %v3914
      %v3916 = vpop.f32.mrf.mxu0
      %v3917 = vpop.f32.mrf.mxu0
      %v3918 = vadd.f32 %v3773, %v3917
      %v3919 = vpop.f32.mrf.mxu0
      %3920 = vdwg.mxu0
      %v3921 = vadd.f32 %v3568, %v3859
      %v3922 = vadd.f32 %v3569, %v3862
      %v3923 = vadd.f32 %v3570, %v3867
      %v3924 = vadd.f32 %v3571, %v3870
      %v3925 = vadd.f32 %v3572, %v3875
      %v3926 = vadd.f32 %v3573, %v3878
      %v3927 = vadd.f32 %v3574, %v3883
      %v3928 = vadd.f32 %v3575, %v3886
      %v3929 = vadd.f32 %v3576, %v3891
      %v3930 = vadd.f32 %v3577, %v3894
      %v3931 = vadd.f32 %v3578, %v3899
      %v3932 = vadd.f32 %v3579, %v3902
      %v3933 = vadd.f32 %v3580, %v3907
      %v3934 = vadd.f32 %v3581, %v3910
      %v3935 = vadd.f32 %v3582, %v3915
      %v3936 = vadd.f32 %v3583, %v3918
      %v3937 = vsel %vm691, %v3921, 0.0
      %3938 = vadd.xlane.f32.xlu0 %v3937
      %v3939 = vpop.xlane.xlu0 %3938
      %v3940 = vsel %vm691, %v3922, 0.0
      %3941 = vadd.xlane.f32.xlu0 %v3940
      %v3942 = vpop.xlane.xlu0 %3941
      %v3943 = vsel %vm691, %v3923, 0.0
      %3944 = vadd.xlane.f32.xlu0 %v3943
      %v3945 = vpop.xlane.xlu0 %3944
      %v3946 = vsel %vm691, %v3924, 0.0
      %3947 = vadd.xlane.f32.xlu0 %v3946
      %v3948 = vpop.xlane.xlu0 %3947
      %v3949 = vsel %vm691, %v3925, 0.0
      %3950 = vadd.xlane.f32.xlu0 %v3949
      %v3951 = vpop.xlane.xlu0 %3950
      %v3952 = vsel %vm691, %v3926, 0.0
      %3953 = vadd.xlane.f32.xlu0 %v3952
      %v3954 = vpop.xlane.xlu0 %3953
      %v3955 = vsel %vm691, %v3927, 0.0
      %3956 = vadd.xlane.f32.xlu0 %v3955
      %v3957 = vpop.xlane.xlu0 %3956
      %v3958 = vsel %vm691, %v3928, 0.0
      %3959 = vadd.xlane.f32.xlu0 %v3958
      %v3960 = vpop.xlane.xlu0 %3959
      %v3961 = vsel %vm691, %v3929, 0.0
      %3962 = vadd.xlane.f32.xlu0 %v3961
      %v3963 = vpop.xlane.xlu0 %3962
      %v3964 = vsel %vm691, %v3930, 0.0
      %3965 = vadd.xlane.f32.xlu0 %v3964
      %v3966 = vpop.xlane.xlu0 %3965
      %v3967 = vsel %vm691, %v3931, 0.0
      %3968 = vadd.xlane.f32.xlu0 %v3967
      %v3969 = vpop.xlane.xlu0 %3968
      %v3970 = vsel %vm691, %v3932, 0.0
      %3971 = vadd.xlane.f32.xlu0 %v3970
      %v3972 = vpop.xlane.xlu0 %3971
      %v3973 = vsel %vm691, %v3933, 0.0
      %3974 = vadd.xlane.f32.xlu0 %v3973
      %v3975 = vpop.xlane.xlu0 %3974
      %v3976 = vsel %vm691, %v3934, 0.0
      %3977 = vadd.xlane.f32.xlu0 %v3976
      %v3978 = vpop.xlane.xlu0 %3977
      %v3979 = vsel %vm691, %v3935, 0.0
      %3980 = vadd.xlane.f32.xlu0 %v3979
      %v3981 = vpop.xlane.xlu0 %3980
      %v3982 = vsel %vm691, %v3936, 0.0
      %3983 = vadd.xlane.f32.xlu0 %v3982
      %v3984 = vpop.xlane.xlu0 %3983
      %v3985 = vmul.f32 %v3939, %v3377
      %v3986 = vmul.f32 %v3942, %v3377
      %v3987 = vmul.f32 %v3945, %v3377
      %v3988 = vmul.f32 %v3948, %v3377
      %v3989 = vmul.f32 %v3951, %v3377
      %v3990 = vmul.f32 %v3954, %v3377
      %v3991 = vmul.f32 %v3957, %v3377
      %v3992 = vmul.f32 %v3960, %v3377
      %v3993 = vmul.f32 %v3963, %v3377
      %v3994 = vmul.f32 %v3966, %v3377
      %v3995 = vmul.f32 %v3969, %v3377
      %v3996 = vmul.f32 %v3972, %v3377
      %v3997 = vmul.f32 %v3975, %v3377
      %v3998 = vmul.f32 %v3978, %v3377
      %v3999 = vmul.f32 %v3981, %v3377
      %v4000 = vmul.f32 %v3984, %v3377
      %v4001 = vsub.f32 %v3921, %v3985
      %v4002 = vsub.f32 %v3922, %v3986
      %v4003 = vsub.f32 %v3923, %v3987
      %v4004 = vsub.f32 %v3924, %v3988
      %v4005 = vsub.f32 %v3925, %v3989
      %v4006 = vsub.f32 %v3926, %v3990
      %v4007 = vsub.f32 %v3927, %v3991
      %v4008 = vsub.f32 %v3928, %v3992
      %v4009 = vsub.f32 %v3929, %v3993
      %v4010 = vsub.f32 %v3930, %v3994
      %v4011 = vsub.f32 %v3931, %v3995
      %v4012 = vsub.f32 %v3932, %v3996
      %v4013 = vsub.f32 %v3933, %v3997
      %v4014 = vsub.f32 %v3934, %v3998
      %v4015 = vsub.f32 %v3935, %v3999
      %v4016 = vsub.f32 %v3936, %v4000
      %v4017 = vmul.f32 %v4001, %v4001
      %v4018 = vmul.f32 %v4002, %v4002
      %v4019 = vmul.f32 %v4003, %v4003
      %v4020 = vmul.f32 %v4004, %v4004
      %v4021 = vmul.f32 %v4005, %v4005
      %v4022 = vmul.f32 %v4006, %v4006
      %v4023 = vmul.f32 %v4007, %v4007
      %v4024 = vmul.f32 %v4008, %v4008
      %v4025 = vmul.f32 %v4009, %v4009
      %v4026 = vmul.f32 %v4010, %v4010
      %v4027 = vmul.f32 %v4011, %v4011
      %v4028 = vmul.f32 %v4012, %v4012
      %v4029 = vmul.f32 %v4013, %v4013
      %v4030 = vmul.f32 %v4014, %v4014
      %v4031 = vmul.f32 %v4015, %v4015
      %v4032 = vmul.f32 %v4016, %v4016
      %v4033 = vsel %vm691, %v4017, 0.0
      %4034 = vadd.xlane.f32.xlu0 %v4033
      %v4035 = vpop.xlane.xlu0 %4034
      %v4036 = vsel %vm691, %v4018, 0.0
      %4037 = vadd.xlane.f32.xlu0 %v4036
      %v4038 = vpop.xlane.xlu0 %4037
      %v4039 = vsel %vm691, %v4019, 0.0
      %4040 = vadd.xlane.f32.xlu0 %v4039
      %v4041 = vpop.xlane.xlu0 %4040
      %v4042 = vsel %vm691, %v4020, 0.0
      %4043 = vadd.xlane.f32.xlu0 %v4042
      %v4044 = vpop.xlane.xlu0 %4043
      %v4045 = vsel %vm691, %v4021, 0.0
      %4046 = vadd.xlane.f32.xlu0 %v4045
      %v4047 = vpop.xlane.xlu0 %4046
      %v4048 = vsel %vm691, %v4022, 0.0
      %4049 = vadd.xlane.f32.xlu0 %v4048
      %v4050 = vpop.xlane.xlu0 %4049
      %v4051 = vsel %vm691, %v4023, 0.0
      %4052 = vadd.xlane.f32.xlu0 %v4051
      %v4053 = vpop.xlane.xlu0 %4052
      %v4054 = vsel %vm691, %v4024, 0.0
      %4055 = vadd.xlane.f32.xlu0 %v4054
      %v4056 = vpop.xlane.xlu0 %4055
      %v4057 = vsel %vm691, %v4025, 0.0
      %4058 = vadd.xlane.f32.xlu0 %v4057
      %v4059 = vpop.xlane.xlu0 %4058
      %v4060 = vsel %vm691, %v4026, 0.0
      %4061 = vadd.xlane.f32.xlu0 %v4060
      %v4062 = vpop.xlane.xlu0 %4061
      %v4063 = vsel %vm691, %v4027, 0.0
      %4064 = vadd.xlane.f32.xlu0 %v4063
      %v4065 = vpop.xlane.xlu0 %4064
      %v4066 = vsel %vm691, %v4028, 0.0
      %4067 = vadd.xlane.f32.xlu0 %v4066
      %v4068 = vpop.xlane.xlu0 %4067
      %v4069 = vsel %vm691, %v4029, 0.0
      %4070 = vadd.xlane.f32.xlu0 %v4069
      %v4071 = vpop.xlane.xlu0 %4070
      %v4072 = vsel %vm691, %v4030, 0.0
      %4073 = vadd.xlane.f32.xlu0 %v4072
      %v4074 = vpop.xlane.xlu0 %4073
      %v4075 = vsel %vm691, %v4031, 0.0
      %4076 = vadd.xlane.f32.xlu0 %v4075
      %v4077 = vpop.xlane.xlu0 %4076
      %v4078 = vsel %vm691, %v4032, 0.0
      %4079 = vadd.xlane.f32.xlu0 %v4078
      %v4080 = vpop.xlane.xlu0 %4079
      %v4081 = vmul.f32 %v4035, %v3377
      %v4082 = vmul.f32 %v4038, %v3377
      %v4083 = vmul.f32 %v4041, %v3377
      %v4084 = vmul.f32 %v4044, %v3377
      %v4085 = vmul.f32 %v4047, %v3377
      %v4086 = vmul.f32 %v4050, %v3377
      %v4087 = vmul.f32 %v4053, %v3377
      %v4088 = vmul.f32 %v4056, %v3377
      %v4089 = vmul.f32 %v4059, %v3377
      %v4090 = vmul.f32 %v4062, %v3377
      %v4091 = vmul.f32 %v4065, %v3377
      %v4092 = vmul.f32 %v4068, %v3377
      %v4093 = vmul.f32 %v4071, %v3377
      %v4094 = vmul.f32 %v4074, %v3377
      %v4095 = vmul.f32 %v4077, %v3377
      %v4096 = vmul.f32 %v4080, %v3377
      %v4097 = vadd.f32 %v4081, 1e-05
      %v4098 = vadd.f32 %v4082, 1e-05
      %v4099 = vadd.f32 %v4083, 1e-05
      %v4100 = vadd.f32 %v4084, 1e-05
      %v4101 = vadd.f32 %v4085, 1e-05
      %v4102 = vadd.f32 %v4086, 1e-05
      %v4103 = vadd.f32 %v4087, 1e-05
      %v4104 = vadd.f32 %v4088, 1e-05
      %v4105 = vadd.f32 %v4089, 1e-05
      %v4106 = vadd.f32 %v4090, 1e-05
      %v4107 = vadd.f32 %v4091, 1e-05
      %v4108 = vadd.f32 %v4092, 1e-05
      %v4109 = vadd.f32 %v4093, 1e-05
      %v4110 = vadd.f32 %v4094, 1e-05
      %v4111 = vadd.f32 %v4095, 1e-05
      %v4112 = vadd.f32 %v4096, 1e-05
      %v4113 = vrsqrt.pop %v4097
      %v4114 = vrsqrt.pop %v4098
      %v4115 = vrsqrt.pop %v4099
      %v4116 = vrsqrt.pop %v4100
      %v4117 = vrsqrt.pop %v4101
      %v4118 = vrsqrt.pop %v4102
      %v4119 = vrsqrt.pop %v4103
      %v4120 = vrsqrt.pop %v4104
      %v4121 = vrsqrt.pop %v4105
      %v4122 = vrsqrt.pop %v4106
      %v4123 = vrsqrt.pop %v4107
      %v4124 = vrsqrt.pop %v4108
      %v4125 = vrsqrt.pop %v4109
      %v4126 = vrsqrt.pop %v4110
      %v4127 = vrsqrt.pop %v4111
      %v4128 = vrsqrt.pop %v4112
      %v4129 = vmul.f32 %v4001, %v4113
      %v4130 = vmul.f32 %v4002, %v4114
      %v4131 = vmul.f32 %v4003, %v4115
      %v4132 = vmul.f32 %v4004, %v4116
      %v4133 = vmul.f32 %v4005, %v4117
      %v4134 = vmul.f32 %v4006, %v4118
      %v4135 = vmul.f32 %v4007, %v4119
      %v4136 = vmul.f32 %v4008, %v4120
      %v4137 = vmul.f32 %v4009, %v4121
      %v4138 = vmul.f32 %v4010, %v4122
      %v4139 = vmul.f32 %v4011, %v4123
      %v4140 = vmul.f32 %v4012, %v4124
      %v4141 = vmul.f32 %v4013, %v4125
      %v4142 = vmul.f32 %v4014, %v4126
      %v4143 = vmul.f32 %v4015, %v4127
      %v4144 = vmul.f32 %v4016, %v4128
      %v4145 = vld [vmem:[%s14] sm:$0x1]
      %v4147 = vlaneseq
      %v4148 = vshrl.u32 %v4147, 7
      %v4149 = vsub.s32 0, %v4148
      %v4150 = vrot.slane %v4145, %v4149
      %v4152 = vmul.f32 %v4129, %v4150
      %v4153 = vmul.f32 %v4130, %v4150
      %v4154 = vmul.f32 %v4131, %v4150
      %v4155 = vmul.f32 %v4132, %v4150
      %v4156 = vmul.f32 %v4133, %v4150
      %v4157 = vmul.f32 %v4134, %v4150
      %v4158 = vmul.f32 %v4135, %v4150
      %v4159 = vmul.f32 %v4136, %v4150
      %v4160 = vmul.f32 %v4137, %v4150
      %v4161 = vmul.f32 %v4138, %v4150
      %v4162 = vmul.f32 %v4139, %v4150
      %v4163 = vmul.f32 %v4140, %v4150
      %v4164 = vmul.f32 %v4141, %v4150
      %v4165 = vmul.f32 %v4142, %v4150
      %v4166 = vmul.f32 %v4143, %v4150
      %v4167 = vmul.f32 %v4144, %v4150
      %v4168 = vld [vmem:[%s15] sm:$0x1]
      %v4170 = vlaneseq
      %v4171 = vshrl.u32 %v4170, 7
      %v4172 = vsub.s32 0, %v4171
      %v4173 = vrot.slane %v4168, %v4172
      %v4175 = vadd.f32 %v4152, %v4173
      %v4176 = vadd.f32 %v4153, %v4173
      %v4177 = vadd.f32 %v4154, %v4173
      %v4178 = vadd.f32 %v4155, %v4173
      %v4179 = vadd.f32 %v4156, %v4173
      %v4180 = vadd.f32 %v4157, %v4173
      %v4181 = vadd.f32 %v4158, %v4173
      %v4182 = vadd.f32 %v4159, %v4173
      %v4183 = vadd.f32 %v4160, %v4173
      %v4184 = vadd.f32 %v4161, %v4173
      %v4185 = vadd.f32 %v4162, %v4173
      %v4186 = vadd.f32 %v4163, %v4173
      %v4187 = vadd.f32 %v4164, %v4173
      %v4188 = vadd.f32 %v4165, %v4173
      %v4189 = vadd.f32 %v4166, %v4173
      %v4190 = vadd.f32 %v4167, %v4173
      %v4191 = vmul.f32 %v4175, %v628
      %v4192 = vmul.f32 %v4176, %v629
      %v4193 = vmul.f32 %v4177, %v630
      %v4194 = vmul.f32 %v4178, %v631
      %v4195 = vmul.f32 %v4179, %v632
      %v4196 = vmul.f32 %v4180, %v633
      %v4197 = vmul.f32 %v4181, %v634
      %v4198 = vmul.f32 %v4182, %v635
      %v4199 = vmul.f32 %v4183, %v636
      %v4200 = vmul.f32 %v4184, %v637
      %v4201 = vmul.f32 %v4185, %v638
      %v4202 = vmul.f32 %v4186, %v639
      %v4203 = vmul.f32 %v4187, %v640
      %v4204 = vmul.f32 %v4188, %v641
      %v4205 = vmul.f32 %v4189, %v642
      %v4206 = vmul.f32 %v4190, %v643
      %v4207 = vadd.f32 %v4191, %v559
      %v4208 = vadd.f32 %v4192, %v560
      %v4209 = vadd.f32 %v4193, %v561
      %v4210 = vadd.f32 %v4194, %v562
      %v4211 = vadd.f32 %v4195, %v563
      %v4212 = vadd.f32 %v4196, %v564
      %v4213 = vadd.f32 %v4197, %v565
      %v4214 = vadd.f32 %v4198, %v566
      %v4215 = vadd.f32 %v4199, %v567
      %v4216 = vadd.f32 %v4200, %v568
      %v4217 = vadd.f32 %v4201, %v569
      %v4218 = vadd.f32 %v4202, %v570
      %v4219 = vadd.f32 %v4203, %v571
      %v4220 = vadd.f32 %v4204, %v572
      %v4221 = vadd.f32 %v4205, %v573
      %v4222 = vadd.f32 %v4206, %v574
      %v4223 = vpack.c.bf16 %v4208, %v4207
      %v4224 = vpack.c.bf16 %v4210, %v4209
      %v4225 = vpack.c.bf16 %v4212, %v4211
      %v4226 = vpack.c.bf16 %v4214, %v4213
      %v4227 = vpack.c.bf16 %v4216, %v4215
      %v4228 = vpack.c.bf16 %v4218, %v4217
      %v4229 = vpack.c.bf16 %v4220, %v4219
      %v4230 = vpack.c.bf16 %v4222, %v4221
      %v4231 = vld [vmem:[%s2] sm:$0xf]
      %v4232 = vld [vmem:[%s2 + $0x4] sm:$0xf]
      %v4233 = vld [vmem:[%s2 + $0x8] sm:$0xf]
      %v4234 = vld [vmem:[%s2 + $0xc] sm:$0xf]
      %v4235 = vld [vmem:[%s3] sm:$0x1]
      %v4237 = vlaneseq
      %v4238 = vshrl.u32 %v4237, 7
      %v4239 = vsub.s32 0, %v4238
      %v4240 = vrot.slane %v4235, %v4239
      %v4246 = vunpack.c.l.b16 %v4231
      %v4247 = vunpack.c.l.b16 %v4232
      %v4248 = vunpack.c.l.b16 %v4233
      %v4249 = vunpack.c.l.b16 %v4234
      %v4250 = vpack.c.b16 %v4247, %v4246
      %v4251 = vpack.c.b16 %v4249, %v4248
      %v4255 = vsel %vm691, %v4223, 0
      %v4258 = vsel %vm691, %v4224, 0
      %v4261 = vsel %vm691, %v4225, 0
      %v4264 = vsel %vm691, %v4226, 0
      %v4267 = vsel %vm691, %v4227, 0
      %v4270 = vsel %vm691, %v4228, 0
      %v4273 = vsel %vm691, %v4229, 0
      %v4276 = vsel %vm691, %v4230, 0
      %4278 = vmatprep.subr.bf16.mxu0 0
      %4279 = vmatpush1.bf16.msra.mxu0 0
      %4280 = vmatprep.subr.bf16.mxu0 0
      %4281 = vmatpush1.bf16.msra.mxu0 0
      %4282 = vmatprep.subr.bf16.mxu0 0
      %4283 = vmatpush1.bf16.msra.mxu0 0
      %4284 = vmatprep.subr.bf16.mxu0 0
      %4285 = vmatpush1.bf16.msra.mxu0 0
      %4286 = vmatprep.subr.bf16.mxu0 0
      %4287 = vmatpush1.bf16.msra.mxu0 0
      %4288 = vmatprep.subr.bf16.mxu0 0
      %4289 = vmatpush1.bf16.msra.mxu0 0
      %4290 = vmatprep.subr.bf16.mxu0 0
      %4291 = vmatpush1.bf16.msra.mxu0 %v4251
      %4292 = vmatprep.subr.bf16.mxu0 0
      %4293 = vmatpush1.bf16.msra.mxu0 %v4250
      %4294 = vmatprep.subr.bf16.mxu0 0
      %4295 = vmatpush2.bf16.msra.mxu0 0
      %4296 = vmatprep.subr.bf16.mxu0 0
      %4297 = vmatpush2.bf16.msra.mxu0 0
      %4298 = vmatprep.subr.bf16.mxu0 0
      %4299 = vmatpush2.bf16.msra.mxu0 0
      %4300 = vmatprep.subr.bf16.mxu0 0
      %4301 = vmatpush2.bf16.msra.mxu0 0
      %4302 = vmatprep.subr.bf16.mxu0 0
      %4303 = vmatpush2.bf16.msra.mxu0 0
      %4304 = vmatprep.subr.bf16.mxu0 0
      %4305 = vmatpush2.bf16.msra.mxu0 0
      %4306 = vmatprep.subr.bf16.mxu0 0
      %4307 = vmatpush2.bf16.msra.mxu0 0
      %4308 = vmatprep.subr.bf16.mxu0 0
      %4309 = vmatpush2.bf16.msra.mxu0 0
      %4310 = vmatprep.mubr.bf16.mxu0 0
      %4311 = vmatmul.mubr.bf16.gmra.mxu0 %v4255
      %v4312 = vpop.f32.mrf.mxu0
      %v4313 = vadd.f32 %v4240, %v4312
      %v4314 = vpop.f32.mrf.mxu0
      %v4315 = vpop.f32.mrf.mxu0
      %v4316 = vadd.f32 %v4240, %v4315
      %v4317 = vpop.f32.mrf.mxu0
      %4318 = vmatprep.mubr.bf16.mxu0 0
      %4319 = vmatmul.mubr.bf16.gmra.mxu0 %v4258
      %v4320 = vpop.f32.mrf.mxu0
      %v4321 = vadd.f32 %v4240, %v4320
      %v4322 = vpop.f32.mrf.mxu0
      %v4323 = vpop.f32.mrf.mxu0
      %v4324 = vadd.f32 %v4240, %v4323
      %v4325 = vpop.f32.mrf.mxu0
      %4326 = vmatprep.mubr.bf16.mxu0 0
      %4327 = vmatmul.mubr.bf16.gmra.mxu0 %v4261
      %v4328 = vpop.f32.mrf.mxu0
      %v4329 = vadd.f32 %v4240, %v4328
      %v4330 = vpop.f32.mrf.mxu0
      %v4331 = vpop.f32.mrf.mxu0
      %v4332 = vadd.f32 %v4240, %v4331
      %v4333 = vpop.f32.mrf.mxu0
      %4334 = vmatprep.mubr.bf16.mxu0 0
      %4335 = vmatmul.mubr.bf16.gmra.mxu0 %v4264
      %v4336 = vpop.f32.mrf.mxu0
      %v4337 = vadd.f32 %v4240, %v4336
      %v4338 = vpop.f32.mrf.mxu0
      %v4339 = vpop.f32.mrf.mxu0
      %v4340 = vadd.f32 %v4240, %v4339
      %v4341 = vpop.f32.mrf.mxu0
      %4342 = vmatprep.mubr.bf16.mxu0 0
      %4343 = vmatmul.mubr.bf16.gmra.mxu0 %v4267
      %v4344 = vpop.f32.mrf.mxu0
      %v4345 = vadd.f32 %v4240, %v4344
      %v4346 = vpop.f32.mrf.mxu0
      %v4347 = vpop.f32.mrf.mxu0
      %v4348 = vadd.f32 %v4240, %v4347
      %v4349 = vpop.f32.mrf.mxu0
      %4350 = vmatprep.mubr.bf16.mxu0 0
      %4351 = vmatmul.mubr.bf16.gmra.mxu0 %v4270
      %v4352 = vpop.f32.mrf.mxu0
      %v4353 = vadd.f32 %v4240, %v4352
      %v4354 = vpop.f32.mrf.mxu0
      %v4355 = vpop.f32.mrf.mxu0
      %v4356 = vadd.f32 %v4240, %v4355
      %v4357 = vpop.f32.mrf.mxu0
      %4358 = vmatprep.mubr.bf16.mxu0 0
      %4359 = vmatmul.mubr.bf16.gmra.mxu0 %v4273
      %v4360 = vpop.f32.mrf.mxu0
      %v4361 = vadd.f32 %v4240, %v4360
      %v4362 = vpop.f32.mrf.mxu0
      %v4363 = vpop.f32.mrf.mxu0
      %v4364 = vadd.f32 %v4240, %v4363
      %v4365 = vpop.f32.mrf.mxu0
      %4366 = vmatprep.mubr.bf16.mxu0 0
      %4367 = vmatmul.mubr.bf16.gmra.mxu0 %v4276
      %v4368 = vpop.f32.mrf.mxu0
      %v4369 = vadd.f32 %v4240, %v4368
      %v4370 = vpop.f32.mrf.mxu0
      %v4371 = vpop.f32.mrf.mxu0
      %v4372 = vadd.f32 %v4240, %v4371
      %v4373 = vpop.f32.mrf.mxu0
      %4374 = vdwg.mxu0
      %v4375 = vpack.c.bf16 %v4192, %v4191
      %v4376 = vpack.c.bf16 %v4194, %v4193
      %v4377 = vpack.c.bf16 %v4196, %v4195
      %v4378 = vpack.c.bf16 %v4198, %v4197
      %v4379 = vpack.c.bf16 %v4200, %v4199
      %v4380 = vpack.c.bf16 %v4202, %v4201
      %v4381 = vpack.c.bf16 %v4204, %v4203
      %v4382 = vpack.c.bf16 %v4206, %v4205
      %v4383 = vld [vmem:[%s4] sm:$0xf]
      %v4384 = vld [vmem:[%s4 + $0x4] sm:$0xf]
      %v4385 = vld [vmem:[%s4 + $0x8] sm:$0xf]
      %v4386 = vld [vmem:[%s4 + $0xc] sm:$0xf]
      %v4387 = vld [vmem:[%s5] sm:$0x1]
      %v4389 = vlaneseq
      %v4390 = vshrl.u32 %v4389, 7
      %v4391 = vsub.s32 0, %v4390
      %v4392 = vrot.slane %v4387, %v4391
      %v4398 = vunpack.c.l.b16 %v4383
      %v4399 = vunpack.c.l.b16 %v4384
      %v4400 = vunpack.c.l.b16 %v4385
      %v4401 = vunpack.c.l.b16 %v4386
      %v4402 = vpack.c.b16 %v4399, %v4398
      %v4403 = vpack.c.b16 %v4401, %v4400
      %v4407 = vsel %vm691, %v4375, 0
      %v4410 = vsel %vm691, %v4376, 0
      %v4413 = vsel %vm691, %v4377, 0
      %v4416 = vsel %vm691, %v4378, 0
      %v4419 = vsel %vm691, %v4379, 0
      %v4422 = vsel %vm691, %v4380, 0
      %v4425 = vsel %vm691, %v4381, 0
      %v4428 = vsel %vm691, %v4382, 0
      %4430 = vmatprep.subr.bf16.mxu0 0
      %4431 = vmatpush1.bf16.msra.mxu0 0
      %4432 = vmatprep.subr.bf16.mxu0 0
      %4433 = vmatpush1.bf16.msra.mxu0 0
      %4434 = vmatprep.subr.bf16.mxu0 0
      %4435 = vmatpush1.bf16.msra.mxu0 0
      %4436 = vmatprep.subr.bf16.mxu0 0
      %4437 = vmatpush1.bf16.msra.mxu0 0
      %4438 = vmatprep.subr.bf16.mxu0 0
      %4439 = vmatpush1.bf16.msra.mxu0 0
      %4440 = vmatprep.subr.bf16.mxu0 0
      %4441 = vmatpush1.bf16.msra.mxu0 0
      %4442 = vmatprep.subr.bf16.mxu0 0
      %4443 = vmatpush1.bf16.msra.mxu0 %v4403
      %4444 = vmatprep.subr.bf16.mxu0 0
      %4445 = vmatpush1.bf16.msra.mxu0 %v4402
      %4446 = vmatprep.subr.bf16.mxu0 0
      %4447 = vmatpush2.bf16.msra.mxu0 0
      %4448 = vmatprep.subr.bf16.mxu0 0
      %4449 = vmatpush2.bf16.msra.mxu0 0
      %4450 = vmatprep.subr.bf16.mxu0 0
      %4451 = vmatpush2.bf16.msra.mxu0 0
      %4452 = vmatprep.subr.bf16.mxu0 0
      %4453 = vmatpush2.bf16.msra.mxu0 0
      %4454 = vmatprep.subr.bf16.mxu0 0
      %4455 = vmatpush2.bf16.msra.mxu0 0
      %4456 = vmatprep.subr.bf16.mxu0 0
      %4457 = vmatpush2.bf16.msra.mxu0 0
      %4458 = vmatprep.subr.bf16.mxu0 0
      %4459 = vmatpush2.bf16.msra.mxu0 0
      %4460 = vmatprep.subr.bf16.mxu0 0
      %4461 = vmatpush2.bf16.msra.mxu0 0
      %4462 = vmatprep.mubr.bf16.mxu0 0
      %4463 = vmatmul.mubr.bf16.gmra.mxu0 %v4407
      %v4464 = vpop.f32.mrf.mxu0
      %v4465 = vadd.f32 %v4392, %v4464
      %v4466 = vpop.f32.mrf.mxu0
      %v4467 = vpop.f32.mrf.mxu0
      %v4468 = vadd.f32 %v4392, %v4467
      %v4469 = vpop.f32.mrf.mxu0
      %4470 = vmatprep.mubr.bf16.mxu0 0
      %4471 = vmatmul.mubr.bf16.gmra.mxu0 %v4410
      %v4472 = vpop.f32.mrf.mxu0
      %v4473 = vadd.f32 %v4392, %v4472
      %v4474 = vpop.f32.mrf.mxu0
      %v4475 = vpop.f32.mrf.mxu0
      %v4476 = vadd.f32 %v4392, %v4475
      %v4477 = vpop.f32.mrf.mxu0
      %4478 = vmatprep.mubr.bf16.mxu0 0
      %4479 = vmatmul.mubr.bf16.gmra.mxu0 %v4413
      %v4480 = vpop.f32.mrf.mxu0
      %v4481 = vadd.f32 %v4392, %v4480
      %v4482 = vpop.f32.mrf.mxu0
      %v4483 = vpop.f32.mrf.mxu0
      %v4484 = vadd.f32 %v4392, %v4483
      %v4485 = vpop.f32.mrf.mxu0
      %4486 = vmatprep.mubr.bf16.mxu0 0
      %4487 = vmatmul.mubr.bf16.gmra.mxu0 %v4416
      %v4488 = vpop.f32.mrf.mxu0
      %v4489 = vadd.f32 %v4392, %v4488
      %v4490 = vpop.f32.mrf.mxu0
      %v4491 = vpop.f32.mrf.mxu0
      %v4492 = vadd.f32 %v4392, %v4491
      %v4493 = vpop.f32.mrf.mxu0
      %4494 = vmatprep.mubr.bf16.mxu0 0
      %4495 = vmatmul.mubr.bf16.gmra.mxu0 %v4419
      %v4496 = vpop.f32.mrf.mxu0
      %v4497 = vadd.f32 %v4392, %v4496
      %v4498 = vpop.f32.mrf.mxu0
      %v4499 = vpop.f32.mrf.mxu0
      %v4500 = vadd.f32 %v4392, %v4499
      %v4501 = vpop.f32.mrf.mxu0
      %4502 = vmatprep.mubr.bf16.mxu0 0
      %4503 = vmatmul.mubr.bf16.gmra.mxu0 %v4422
      %v4504 = vpop.f32.mrf.mxu0
      %v4505 = vadd.f32 %v4392, %v4504
      %v4506 = vpop.f32.mrf.mxu0
      %v4507 = vpop.f32.mrf.mxu0
      %v4508 = vadd.f32 %v4392, %v4507
      %v4509 = vpop.f32.mrf.mxu0
      %4510 = vmatprep.mubr.bf16.mxu0 0
      %4511 = vmatmul.mubr.bf16.gmra.mxu0 %v4425
      %v4512 = vpop.f32.mrf.mxu0
      %v4513 = vadd.f32 %v4392, %v4512
      %v4514 = vpop.f32.mrf.mxu0
      %v4515 = vpop.f32.mrf.mxu0
      %v4516 = vadd.f32 %v4392, %v4515
      %v4517 = vpop.f32.mrf.mxu0
      %4518 = vmatprep.mubr.bf16.mxu0 0
      %4519 = vmatmul.mubr.bf16.gmra.mxu0 %v4428
      %v4520 = vpop.f32.mrf.mxu0
      %v4521 = vadd.f32 %v4392, %v4520
      %v4522 = vpop.f32.mrf.mxu0
      %v4523 = vpop.f32.mrf.mxu0
      %v4524 = vadd.f32 %v4392, %v4523
      %v4525 = vpop.f32.mrf.mxu0
      %4526 = vdwg.mxu0
      %v4527 = vpack.c.bf16 %v4316, %v4313
      %v4528 = vpack.c.bf16 %v4324, %v4321
      %v4529 = vpack.c.bf16 %v4332, %v4329
      %v4530 = vpack.c.bf16 %v4340, %v4337
      %v4531 = vpack.c.bf16 %v4348, %v4345
      %v4532 = vpack.c.bf16 %v4356, %v4353
      %v4533 = vpack.c.bf16 %v4364, %v4361
      %v4534 = vpack.c.bf16 %v4372, %v4369
      %v4535 = vpack.c.bf16 %v4468, %v4465
      %v4536 = vpack.c.bf16 %v4476, %v4473
      %v4537 = vpack.c.bf16 %v4484, %v4481
      %v4538 = vpack.c.bf16 %v4492, %v4489
      %v4539 = vpack.c.bf16 %v4500, %v4497
      %v4540 = vpack.c.bf16 %v4508, %v4505
      %v4541 = vpack.c.bf16 %v4516, %v4513
      %v4542 = vpack.c.bf16 %v4524, %v4521
      %4551 = vrot.lane.b32.xlu0 %v4527, 96
      %v4552 = vpop.permute.xlu0 %4551
      %4553 = vrot.lane.b32.xlu0 %v4528, 96
      %v4554 = vpop.permute.xlu0 %4553
      %4555 = vrot.lane.b32.xlu0 %v4529, 96
      %v4556 = vpop.permute.xlu0 %4555
      %4557 = vrot.lane.b32.xlu0 %v4530, 96
      %v4558 = vpop.permute.xlu0 %4557
      %4559 = vrot.lane.b32.xlu0 %v4531, 96
      %v4560 = vpop.permute.xlu0 %4559
      %4561 = vrot.lane.b32.xlu0 %v4532, 96
      %v4562 = vpop.permute.xlu0 %4561
      %4563 = vrot.lane.b32.xlu0 %v4533, 96
      %v4564 = vpop.permute.xlu0 %4563
      %4565 = vrot.lane.b32.xlu0 %v4534, 96
      %v4566 = vpop.permute.xlu0 %4565
      %v4568 = vsel %vm1005, %v4527, 0
      %v4571 = vsel %vm1005, %v4528, 0
      %v4574 = vsel %vm1005, %v4529, 0
      %v4577 = vsel %vm1005, %v4530, 0
      %v4580 = vsel %vm1005, %v4531, 0
      %v4583 = vsel %vm1005, %v4532, 0
      %v4586 = vsel %vm1005, %v4533, 0
      %v4589 = vsel %vm1005, %v4534, 0
      %v4592 = vsel %vm1005, %v4552, 0
      %v4595 = vsel %vm1005, %v4554, 0
      %v4598 = vsel %vm1005, %v4556, 0
      %v4601 = vsel %vm1005, %v4558, 0
      %v4604 = vsel %vm1005, %v4560, 0
      %v4607 = vsel %vm1005, %v4562, 0
      %v4610 = vsel %vm1005, %v4564, 0
      %v4613 = vsel %vm1005, %v4566, 0
      %4615 = vmatprep.subr.bf16.mxu0 0
      %4616 = vmatpush1.bf16.xpose.msra.mxu0 %v4613
      %4617 = vmatprep.subr.bf16.mxu0 0
      %4618 = vmatpush1.bf16.xpose.msra.mxu0 %v4610
      %4619 = vmatprep.subr.bf16.mxu0 0
      %4620 = vmatpush1.bf16.xpose.msra.mxu0 %v4607
      %4621 = vmatprep.subr.bf16.mxu0 0
      %4622 = vmatpush1.bf16.xpose.msra.mxu0 %v4604
      %4623 = vmatprep.subr.bf16.mxu0 0
      %4624 = vmatpush1.bf16.xpose.msra.mxu0 %v4601
      %4625 = vmatprep.subr.bf16.mxu0 0
      %4626 = vmatpush1.bf16.xpose.msra.mxu0 %v4598
      %4627 = vmatprep.subr.bf16.mxu0 0
      %4628 = vmatpush1.bf16.xpose.msra.mxu0 %v4595
      %4629 = vmatprep.subr.bf16.mxu0 0
      %4630 = vmatpush1.bf16.xpose.msra.mxu0 %v4592
      %4631 = vmatprep.subr.bf16.mxu0 0
      %4632 = vmatpush2.bf16.xpose.msra.mxu0 0
      %4633 = vmatprep.subr.bf16.mxu0 0
      %4634 = vmatpush2.bf16.xpose.msra.mxu0 0
      %4635 = vmatprep.subr.bf16.mxu0 0
      %4636 = vmatpush2.bf16.xpose.msra.mxu0 0
      %4637 = vmatprep.subr.bf16.mxu0 0
      %4638 = vmatpush2.bf16.xpose.msra.mxu0 0
      %4639 = vmatprep.subr.bf16.mxu0 0
      %4640 = vmatpush2.bf16.xpose.msra.mxu0 0
      %4641 = vmatprep.subr.bf16.mxu0 0
      %4642 = vmatpush2.bf16.xpose.msra.mxu0 0
      %4643 = vmatprep.subr.bf16.mxu0 0
      %4644 = vmatpush2.bf16.xpose.msra.mxu0 0
      %4645 = vmatprep.subr.bf16.mxu0 0
      %4646 = vmatpush2.bf16.xpose.msra.mxu0 0
      %4647 = vmatprep.mubr.bf16.mxu0 0
      %4648 = vmatmul.mubr.bf16.gmra.mxu0 %v4568
      %v4649 = vpop.f32.mrf.mxu0
      %v4650 = vadd.f32 0.0, %v4649
      %v4651 = vpop.f32.mrf.mxu0
      %v4652 = vpop.f32.mrf.mxu0
      %v4653 = vadd.f32 0.0, %v4652
      %v4654 = vpop.f32.mrf.mxu0
      %4655 = vmatprep.mubr.bf16.mxu0 0
      %4656 = vmatmul.mubr.bf16.gmra.mxu0 %v4571
      %v4657 = vpop.f32.mrf.mxu0
      %v4658 = vadd.f32 0.0, %v4657
      %v4659 = vpop.f32.mrf.mxu0
      %v4660 = vpop.f32.mrf.mxu0
      %v4661 = vadd.f32 0.0, %v4660
      %v4662 = vpop.f32.mrf.mxu0
      %4663 = vmatprep.mubr.bf16.mxu0 0
      %4664 = vmatmul.mubr.bf16.gmra.mxu0 %v4574
      %v4665 = vpop.f32.mrf.mxu0
      %v4666 = vadd.f32 0.0, %v4665
      %v4667 = vpop.f32.mrf.mxu0
      %v4668 = vpop.f32.mrf.mxu0
      %v4669 = vadd.f32 0.0, %v4668
      %v4670 = vpop.f32.mrf.mxu0
      %4671 = vmatprep.mubr.bf16.mxu0 0
      %4672 = vmatmul.mubr.bf16.gmra.mxu0 %v4577
      %v4673 = vpop.f32.mrf.mxu0
      %v4674 = vadd.f32 0.0, %v4673
      %v4675 = vpop.f32.mrf.mxu0
      %v4676 = vpop.f32.mrf.mxu0
      %v4677 = vadd.f32 0.0, %v4676
      %v4678 = vpop.f32.mrf.mxu0
      %4679 = vmatprep.mubr.bf16.mxu0 0
      %4680 = vmatmul.mubr.bf16.gmra.mxu0 %v4580
      %v4681 = vpop.f32.mrf.mxu0
      %v4682 = vadd.f32 0.0, %v4681
      %v4683 = vpop.f32.mrf.mxu0
      %v4684 = vpop.f32.mrf.mxu0
      %v4685 = vadd.f32 0.0, %v4684
      %v4686 = vpop.f32.mrf.mxu0
      %4687 = vmatprep.mubr.bf16.mxu0 0
      %4688 = vmatmul.mubr.bf16.gmra.mxu0 %v4583
      %v4689 = vpop.f32.mrf.mxu0
      %v4690 = vadd.f32 0.0, %v4689
      %v4691 = vpop.f32.mrf.mxu0
      %v4692 = vpop.f32.mrf.mxu0
      %v4693 = vadd.f32 0.0, %v4692
      %v4694 = vpop.f32.mrf.mxu0
      %4695 = vmatprep.mubr.bf16.mxu0 0
      %4696 = vmatmul.mubr.bf16.gmra.mxu0 %v4586
      %v4697 = vpop.f32.mrf.mxu0
      %v4698 = vadd.f32 0.0, %v4697
      %v4699 = vpop.f32.mrf.mxu0
      %v4700 = vpop.f32.mrf.mxu0
      %v4701 = vadd.f32 0.0, %v4700
      %v4702 = vpop.f32.mrf.mxu0
      %4703 = vmatprep.mubr.bf16.mxu0 0
      %4704 = vmatmul.mubr.bf16.gmra.mxu0 %v4589
      %v4705 = vpop.f32.mrf.mxu0
      %v4706 = vadd.f32 0.0, %v4705
      %v4707 = vpop.f32.mrf.mxu0
      %v4708 = vpop.f32.mrf.mxu0
      %v4709 = vadd.f32 0.0, %v4708
      %v4710 = vpop.f32.mrf.mxu0
      %4711 = vdwg.mxu0
      %v4712 = vmul.f32 %v4650, 0.35355338
      %v4713 = vmul.f32 %v4653, 0.35355338
      %v4714 = vmul.f32 %v4658, 0.35355338
      %v4715 = vmul.f32 %v4661, 0.35355338
      %v4716 = vmul.f32 %v4666, 0.35355338
      %v4717 = vmul.f32 %v4669, 0.35355338
      %v4718 = vmul.f32 %v4674, 0.35355338
      %v4719 = vmul.f32 %v4677, 0.35355338
      %v4720 = vmul.f32 %v4682, 0.35355338
      %v4721 = vmul.f32 %v4685, 0.35355338
      %v4722 = vmul.f32 %v4690, 0.35355338
      %v4723 = vmul.f32 %v4693, 0.35355338
      %v4724 = vmul.f32 %v4698, 0.35355338
      %v4725 = vmul.f32 %v4701, 0.35355338
      %v4726 = vmul.f32 %v4706, 0.35355338
      %v4727 = vmul.f32 %v4709, 0.35355338
      %v4728 = vadd.f32 %v4712, %v578
      %v4729 = vadd.f32 %v4713, %v578
      %v4730 = vadd.f32 %v4714, %v578
      %v4731 = vadd.f32 %v4715, %v578
      %v4732 = vadd.f32 %v4716, %v578
      %v4733 = vadd.f32 %v4717, %v578
      %v4734 = vadd.f32 %v4718, %v578
      %v4735 = vadd.f32 %v4719, %v578
      %v4736 = vadd.f32 %v4720, %v578
      %v4737 = vadd.f32 %v4721, %v578
      %v4738 = vadd.f32 %v4722, %v578
      %v4739 = vadd.f32 %v4723, %v578
      %v4740 = vadd.f32 %v4724, %v578
      %v4741 = vadd.f32 %v4725, %v578
      %v4742 = vadd.f32 %v4726, %v578
      %v4743 = vadd.f32 %v4727, %v578
      %4744 = vmax.xlane.f32.xlu0 %v4728
      %v4745 = vpop.xlane.xlu0 %4744
      %4746 = vmax.xlane.f32.xlu0 %v4729
      %v4747 = vpop.xlane.xlu0 %4746
      %4748 = vmax.xlane.f32.xlu0 %v4730
      %v4749 = vpop.xlane.xlu0 %4748
      %4750 = vmax.xlane.f32.xlu0 %v4731
      %v4751 = vpop.xlane.xlu0 %4750
      %4752 = vmax.xlane.f32.xlu0 %v4732
      %v4753 = vpop.xlane.xlu0 %4752
      %4754 = vmax.xlane.f32.xlu0 %v4733
      %v4755 = vpop.xlane.xlu0 %4754
      %4756 = vmax.xlane.f32.xlu0 %v4734
      %v4757 = vpop.xlane.xlu0 %4756
      %4758 = vmax.xlane.f32.xlu0 %v4735
      %v4759 = vpop.xlane.xlu0 %4758
      %4760 = vmax.xlane.f32.xlu0 %v4736
      %v4761 = vpop.xlane.xlu0 %4760
      %4762 = vmax.xlane.f32.xlu0 %v4737
      %v4763 = vpop.xlane.xlu0 %4762
      %4764 = vmax.xlane.f32.xlu0 %v4738
      %v4765 = vpop.xlane.xlu0 %4764
      %4766 = vmax.xlane.f32.xlu0 %v4739
      %v4767 = vpop.xlane.xlu0 %4766
      %4768 = vmax.xlane.f32.xlu0 %v4740
      %v4769 = vpop.xlane.xlu0 %4768
      %4770 = vmax.xlane.f32.xlu0 %v4741
      %v4771 = vpop.xlane.xlu0 %4770
      %4772 = vmax.xlane.f32.xlu0 %v4742
      %v4773 = vpop.xlane.xlu0 %4772
      %4774 = vmax.xlane.f32.xlu0 %v4743
      %v4775 = vpop.xlane.xlu0 %4774
      %v4776 = vsub.f32 %v4728, %v4745
      %v4777 = vsub.f32 %v4729, %v4747
      %v4778 = vsub.f32 %v4730, %v4749
      %v4779 = vsub.f32 %v4731, %v4751
      %v4780 = vsub.f32 %v4732, %v4753
      %v4781 = vsub.f32 %v4733, %v4755
      %v4782 = vsub.f32 %v4734, %v4757
      %v4783 = vsub.f32 %v4735, %v4759
      %v4784 = vsub.f32 %v4736, %v4761
      %v4785 = vsub.f32 %v4737, %v4763
      %v4786 = vsub.f32 %v4738, %v4765
      %v4787 = vsub.f32 %v4739, %v4767
      %v4788 = vsub.f32 %v4740, %v4769
      %v4789 = vsub.f32 %v4741, %v4771
      %v4790 = vsub.f32 %v4742, %v4773
      %v4791 = vsub.f32 %v4743, %v4775
      %v4792 = vmul.f32 %v4776, 1.442695
      %v4793 = vpow.pop %v4792
      %v4794 = vmul.f32 %v4777, 1.442695
      %v4795 = vpow.pop %v4794
      %v4796 = vmul.f32 %v4778, 1.442695
      %v4797 = vpow.pop %v4796
      %v4798 = vmul.f32 %v4779, 1.442695
      %v4799 = vpow.pop %v4798
      %v4800 = vmul.f32 %v4780, 1.442695
      %v4801 = vpow.pop %v4800
      %v4802 = vmul.f32 %v4781, 1.442695
      %v4803 = vpow.pop %v4802
      %v4804 = vmul.f32 %v4782, 1.442695
      %v4805 = vpow.pop %v4804
      %v4806 = vmul.f32 %v4783, 1.442695
      %v4807 = vpow.pop %v4806
      %v4808 = vmul.f32 %v4784, 1.442695
      %v4809 = vpow.pop %v4808
      %v4810 = vmul.f32 %v4785, 1.442695
      %v4811 = vpow.pop %v4810
      %v4812 = vmul.f32 %v4786, 1.442695
      %v4813 = vpow.pop %v4812
      %v4814 = vmul.f32 %v4787, 1.442695
      %v4815 = vpow.pop %v4814
      %v4816 = vmul.f32 %v4788, 1.442695
      %v4817 = vpow.pop %v4816
      %v4818 = vmul.f32 %v4789, 1.442695
      %v4819 = vpow.pop %v4818
      %v4820 = vmul.f32 %v4790, 1.442695
      %v4821 = vpow.pop %v4820
      %v4822 = vmul.f32 %v4791, 1.442695
      %v4823 = vpow.pop %v4822
      %4824 = vadd.xlane.f32.xlu0 %v4793
      %v4825 = vpop.xlane.xlu0 %4824
      %4826 = vadd.xlane.f32.xlu0 %v4795
      %v4827 = vpop.xlane.xlu0 %4826
      %4828 = vadd.xlane.f32.xlu0 %v4797
      %v4829 = vpop.xlane.xlu0 %4828
      %4830 = vadd.xlane.f32.xlu0 %v4799
      %v4831 = vpop.xlane.xlu0 %4830
      %4832 = vadd.xlane.f32.xlu0 %v4801
      %v4833 = vpop.xlane.xlu0 %4832
      %4834 = vadd.xlane.f32.xlu0 %v4803
      %v4835 = vpop.xlane.xlu0 %4834
      %4836 = vadd.xlane.f32.xlu0 %v4805
      %v4837 = vpop.xlane.xlu0 %4836
      %4838 = vadd.xlane.f32.xlu0 %v4807
      %v4839 = vpop.xlane.xlu0 %4838
      %4840 = vadd.xlane.f32.xlu0 %v4809
      %v4841 = vpop.xlane.xlu0 %4840
      %4842 = vadd.xlane.f32.xlu0 %v4811
      %v4843 = vpop.xlane.xlu0 %4842
      %4844 = vadd.xlane.f32.xlu0 %v4813
      %v4845 = vpop.xlane.xlu0 %4844
      %4846 = vadd.xlane.f32.xlu0 %v4815
      %v4847 = vpop.xlane.xlu0 %4846
      %4848 = vadd.xlane.f32.xlu0 %v4817
      %v4849 = vpop.xlane.xlu0 %4848
      %4850 = vadd.xlane.f32.xlu0 %v4819
      %v4851 = vpop.xlane.xlu0 %4850
      %4852 = vadd.xlane.f32.xlu0 %v4821
      %v4853 = vpop.xlane.xlu0 %4852
      %4854 = vadd.xlane.f32.xlu0 %v4823
      %v4855 = vpop.xlane.xlu0 %4854
      %v4856 = vrcp.pop %v4825
      %v4857 = vrcp.pop %v4827
      %v4858 = vrcp.pop %v4829
      %v4859 = vrcp.pop %v4831
      %v4860 = vrcp.pop %v4833
      %v4861 = vrcp.pop %v4835
      %v4862 = vrcp.pop %v4837
      %v4863 = vrcp.pop %v4839
      %v4864 = vrcp.pop %v4841
      %v4865 = vrcp.pop %v4843
      %v4866 = vrcp.pop %v4845
      %v4867 = vrcp.pop %v4847
      %v4868 = vrcp.pop %v4849
      %v4869 = vrcp.pop %v4851
      %v4870 = vrcp.pop %v4853
      %v4871 = vrcp.pop %v4855
      %v4872 = vmul.f32 %v4793, %v4856
      %v4873 = vmul.f32 %v4795, %v4857
      %v4874 = vmul.f32 %v4797, %v4858
      %v4875 = vmul.f32 %v4799, %v4859
      %v4876 = vmul.f32 %v4801, %v4860
      %v4877 = vmul.f32 %v4803, %v4861
      %v4878 = vmul.f32 %v4805, %v4862
      %v4879 = vmul.f32 %v4807, %v4863
      %v4880 = vmul.f32 %v4809, %v4864
      %v4881 = vmul.f32 %v4811, %v4865
      %v4882 = vmul.f32 %v4813, %v4866
      %v4883 = vmul.f32 %v4815, %v4867
      %v4884 = vmul.f32 %v4817, %v4868
      %v4885 = vmul.f32 %v4819, %v4869
      %v4886 = vmul.f32 %v4821, %v4870
      %v4887 = vmul.f32 %v4823, %v4871
      %v4888 = vpack.c.bf16 %v4873, %v4872
      %v4889 = vpack.c.bf16 %v4875, %v4874
      %v4890 = vpack.c.bf16 %v4877, %v4876
      %v4891 = vpack.c.bf16 %v4879, %v4878
      %v4892 = vpack.c.bf16 %v4881, %v4880
      %v4893 = vpack.c.bf16 %v4883, %v4882
      %v4894 = vpack.c.bf16 %v4885, %v4884
      %v4895 = vpack.c.bf16 %v4887, %v4886
      %4896 = vmatprep.subr.bf16.mxu0 0
      %4897 = vmatpush1.bf16.msra.mxu0 %v4542
      %4898 = vmatprep.subr.bf16.mxu0 0
      %4899 = vmatpush1.bf16.msra.mxu0 %v4541
      %4900 = vmatprep.subr.bf16.mxu0 0
      %4901 = vmatpush1.bf16.msra.mxu0 %v4540
      %4902 = vmatprep.subr.bf16.mxu0 0
      %4903 = vmatpush1.bf16.msra.mxu0 %v4539
      %4904 = vmatprep.subr.bf16.mxu0 0
      %4905 = vmatpush1.bf16.msra.mxu0 %v4538
      %4906 = vmatprep.subr.bf16.mxu0 0
      %4907 = vmatpush1.bf16.msra.mxu0 %v4537
      %4908 = vmatprep.subr.bf16.mxu0 0
      %4909 = vmatpush1.bf16.msra.mxu0 %v4536
      %4910 = vmatprep.subr.bf16.mxu0 0
      %4911 = vmatpush1.bf16.msra.mxu0 %v4535
      %4912 = vmatprep.subr.bf16.mxu0 0
      %4913 = vmatpush2.bf16.msra.mxu0 0
      %4914 = vmatprep.subr.bf16.mxu0 0
      %4915 = vmatpush2.bf16.msra.mxu0 0
      %4916 = vmatprep.subr.bf16.mxu0 0
      %4917 = vmatpush2.bf16.msra.mxu0 0
      %4918 = vmatprep.subr.bf16.mxu0 0
      %4919 = vmatpush2.bf16.msra.mxu0 0
      %4920 = vmatprep.subr.bf16.mxu0 0
      %4921 = vmatpush2.bf16.msra.mxu0 0
      %4922 = vmatprep.subr.bf16.mxu0 0
      %4923 = vmatpush2.bf16.msra.mxu0 0
      %4924 = vmatprep.subr.bf16.mxu0 0
      %4925 = vmatpush2.bf16.msra.mxu0 0
      %4926 = vmatprep.subr.bf16.mxu0 0
      %4927 = vmatpush2.bf16.msra.mxu0 0
      %4928 = vmatprep.mubr.bf16.mxu0 0
      %4929 = vmatmul.mubr.bf16.gmra.mxu0 %v4888
      %v4930 = vpop.f32.mrf.mxu0
      %v4931 = vadd.f32 0.0, %v4930
      %v4932 = vpop.f32.mrf.mxu0
      %v4933 = vpop.f32.mrf.mxu0
      %v4934 = vadd.f32 0.0, %v4933
      %v4935 = vpop.f32.mrf.mxu0
      %4936 = vmatprep.mubr.bf16.mxu0 0
      %4937 = vmatmul.mubr.bf16.gmra.mxu0 %v4889
      %v4938 = vpop.f32.mrf.mxu0
      %v4939 = vadd.f32 0.0, %v4938
      %v4940 = vpop.f32.mrf.mxu0
      %v4941 = vpop.f32.mrf.mxu0
      %v4942 = vadd.f32 0.0, %v4941
      %v4943 = vpop.f32.mrf.mxu0
      %4944 = vmatprep.mubr.bf16.mxu0 0
      %4945 = vmatmul.mubr.bf16.gmra.mxu0 %v4890
      %v4946 = vpop.f32.mrf.mxu0
      %v4947 = vadd.f32 0.0, %v4946
      %v4948 = vpop.f32.mrf.mxu0
      %v4949 = vpop.f32.mrf.mxu0
      %v4950 = vadd.f32 0.0, %v4949
      %v4951 = vpop.f32.mrf.mxu0
      %4952 = vmatprep.mubr.bf16.mxu0 0
      %4953 = vmatmul.mubr.bf16.gmra.mxu0 %v4891
      %v4954 = vpop.f32.mrf.mxu0
      %v4955 = vadd.f32 0.0, %v4954
      %v4956 = vpop.f32.mrf.mxu0
      %v4957 = vpop.f32.mrf.mxu0
      %v4958 = vadd.f32 0.0, %v4957
      %v4959 = vpop.f32.mrf.mxu0
      %4960 = vmatprep.mubr.bf16.mxu0 0
      %4961 = vmatmul.mubr.bf16.gmra.mxu0 %v4892
      %v4962 = vpop.f32.mrf.mxu0
      %v4963 = vadd.f32 0.0, %v4962
      %v4964 = vpop.f32.mrf.mxu0
      %v4965 = vpop.f32.mrf.mxu0
      %v4966 = vadd.f32 0.0, %v4965
      %v4967 = vpop.f32.mrf.mxu0
      %4968 = vmatprep.mubr.bf16.mxu0 0
      %4969 = vmatmul.mubr.bf16.gmra.mxu0 %v4893
      %v4970 = vpop.f32.mrf.mxu0
      %v4971 = vadd.f32 0.0, %v4970
      %v4972 = vpop.f32.mrf.mxu0
      %v4973 = vpop.f32.mrf.mxu0
      %v4974 = vadd.f32 0.0, %v4973
      %v4975 = vpop.f32.mrf.mxu0
      %4976 = vmatprep.mubr.bf16.mxu0 0
      %4977 = vmatmul.mubr.bf16.gmra.mxu0 %v4894
      %v4978 = vpop.f32.mrf.mxu0
      %v4979 = vadd.f32 0.0, %v4978
      %v4980 = vpop.f32.mrf.mxu0
      %v4981 = vpop.f32.mrf.mxu0
      %v4982 = vadd.f32 0.0, %v4981
      %v4983 = vpop.f32.mrf.mxu0
      %4984 = vmatprep.mubr.bf16.mxu0 0
      %4985 = vmatmul.mubr.bf16.gmra.mxu0 %v4895
      %v4986 = vpop.f32.mrf.mxu0
      %v4987 = vadd.f32 0.0, %v4986
      %v4988 = vpop.f32.mrf.mxu0
      %v4989 = vpop.f32.mrf.mxu0
      %v4990 = vadd.f32 0.0, %v4989
      %v4991 = vpop.f32.mrf.mxu0
      %4992 = vdwg.mxu0
      %4993 = vst.msk [vmem:[#allocation2] sm:$0xff] %vm1005, %v4931
      %4994 = vst.msk [vmem:[#allocation2 + $0x8] sm:$0xff] %vm1005, %v4934
      %4995 = vst.msk [vmem:[#allocation2 + $0x10] sm:$0xff] %vm1005, %v4939
      %4996 = vst.msk [vmem:[#allocation2 + $0x18] sm:$0xff] %vm1005, %v4942
      %4997 = vst.msk [vmem:[#allocation2 + $0x20] sm:$0xff] %vm1005, %v4947
      %4998 = vst.msk [vmem:[#allocation2 + $0x28] sm:$0xff] %vm1005, %v4950
      %4999 = vst.msk [vmem:[#allocation2 + $0x30] sm:$0xff] %vm1005, %v4955
      %5000 = vst.msk [vmem:[#allocation2 + $0x38] sm:$0xff] %vm1005, %v4958
      %5001 = vst.msk [vmem:[#allocation2 + $0x40] sm:$0xff] %vm1005, %v4963
      %5002 = vst.msk [vmem:[#allocation2 + $0x48] sm:$0xff] %vm1005, %v4966
      %5003 = vst.msk [vmem:[#allocation2 + $0x50] sm:$0xff] %vm1005, %v4971
      %5004 = vst.msk [vmem:[#allocation2 + $0x58] sm:$0xff] %vm1005, %v4974
      %5005 = vst.msk [vmem:[#allocation2 + $0x60] sm:$0xff] %vm1005, %v4979
      %5006 = vst.msk [vmem:[#allocation2 + $0x68] sm:$0xff] %vm1005, %v4982
      %5007 = vst.msk [vmem:[#allocation2 + $0x70] sm:$0xff] %vm1005, %v4987
      %5008 = vst.msk [vmem:[#allocation2 + $0x78] sm:$0xff] %vm1005, %v4990
      %5009 = vrot.lane.b32.xlu0 %v4527, 120
      %v5010 = vpop.permute.xlu0 %5009
      %5011 = vrot.lane.b32.xlu0 %v4528, 120
      %v5012 = vpop.permute.xlu0 %5011
      %5013 = vrot.lane.b32.xlu0 %v4529, 120
      %v5014 = vpop.permute.xlu0 %5013
      %5015 = vrot.lane.b32.xlu0 %v4530, 120
      %v5016 = vpop.permute.xlu0 %5015
      %5017 = vrot.lane.b32.xlu0 %v4531, 120
      %v5018 = vpop.permute.xlu0 %5017
      %5019 = vrot.lane.b32.xlu0 %v4532, 120
      %v5020 = vpop.permute.xlu0 %5019
      %5021 = vrot.lane.b32.xlu0 %v4533, 120
      %v5022 = vpop.permute.xlu0 %5021
      %5023 = vrot.lane.b32.xlu0 %v4534, 120
      %v5024 = vpop.permute.xlu0 %5023
      %5025 = vrot.lane.b32.xlu0 %v4527, 88
      %v5026 = vpop.permute.xlu0 %5025
      %5027 = vrot.lane.b32.xlu0 %v4528, 88
      %v5028 = vpop.permute.xlu0 %5027
      %5029 = vrot.lane.b32.xlu0 %v4529, 88
      %v5030 = vpop.permute.xlu0 %5029
      %5031 = vrot.lane.b32.xlu0 %v4530, 88
      %v5032 = vpop.permute.xlu0 %5031
      %5033 = vrot.lane.b32.xlu0 %v4531, 88
      %v5034 = vpop.permute.xlu0 %5033
      %5035 = vrot.lane.b32.xlu0 %v4532, 88
      %v5036 = vpop.permute.xlu0 %5035
      %5037 = vrot.lane.b32.xlu0 %v4533, 88
      %v5038 = vpop.permute.xlu0 %5037
      %5039 = vrot.lane.b32.xlu0 %v4534, 88
      %v5040 = vpop.permute.xlu0 %5039
      %v5042 = vsel %vm1005, %v5010, 0
      %v5045 = vsel %vm1005, %v5012, 0
      %v5048 = vsel %vm1005, %v5014, 0
      %v5051 = vsel %vm1005, %v5016, 0
      %v5054 = vsel %vm1005, %v5018, 0
      %v5057 = vsel %vm1005, %v5020, 0
      %v5060 = vsel %vm1005, %v5022, 0
      %v5063 = vsel %vm1005, %v5024, 0
      %v5066 = vsel %vm1005, %v5026, 0
      %v5069 = vsel %vm1005, %v5028, 0
      %v5072 = vsel %vm1005, %v5030, 0
      %v5075 = vsel %vm1005, %v5032, 0
      %v5078 = vsel %vm1005, %v5034, 0
      %v5081 = vsel %vm1005, %v5036, 0
      %v5084 = vsel %vm1005, %v5038, 0
      %v5087 = vsel %vm1005, %v5040, 0
      %5089 = vmatprep.subr.bf16.mxu0 0
      %5090 = vmatpush1.bf16.xpose.msra.mxu0 %v5087
      %5091 = vmatprep.subr.bf16.mxu0 0
      %5092 = vmatpush1.bf16.xpose.msra.mxu0 %v5084
      %5093 = vmatprep.subr.bf16.mxu0 0
      %5094 = vmatpush1.bf16.xpose.msra.mxu0 %v5081
      %5095 = vmatprep.subr.bf16.mxu0 0
      %5096 = vmatpush1.bf16.xpose.msra.mxu0 %v5078
      %5097 = vmatprep.subr.bf16.mxu0 0
      %5098 = vmatpush1.bf16.xpose.msra.mxu0 %v5075
      %5099 = vmatprep.subr.bf16.mxu0 0
      %5100 = vmatpush1.bf16.xpose.msra.mxu0 %v5072
      %5101 = vmatprep.subr.bf16.mxu0 0
      %5102 = vmatpush1.bf16.xpose.msra.mxu0 %v5069
      %5103 = vmatprep.subr.bf16.mxu0 0
      %5104 = vmatpush1.bf16.xpose.msra.mxu0 %v5066
      %5105 = vmatprep.subr.bf16.mxu0 0
      %5106 = vmatpush2.bf16.xpose.msra.mxu0 0
      %5107 = vmatprep.subr.bf16.mxu0 0
      %5108 = vmatpush2.bf16.xpose.msra.mxu0 0
      %5109 = vmatprep.subr.bf16.mxu0 0
      %5110 = vmatpush2.bf16.xpose.msra.mxu0 0
      %5111 = vmatprep.subr.bf16.mxu0 0
      %5112 = vmatpush2.bf16.xpose.msra.mxu0 0
      %5113 = vmatprep.subr.bf16.mxu0 0
      %5114 = vmatpush2.bf16.xpose.msra.mxu0 0
      %5115 = vmatprep.subr.bf16.mxu0 0
      %5116 = vmatpush2.bf16.xpose.msra.mxu0 0
      %5117 = vmatprep.subr.bf16.mxu0 0
      %5118 = vmatpush2.bf16.xpose.msra.mxu0 0
      %5119 = vmatprep.subr.bf16.mxu0 0
      %5120 = vmatpush2.bf16.xpose.msra.mxu0 0
      %5121 = vmatprep.mubr.bf16.mxu0 0
      %5122 = vmatmul.mubr.bf16.gmra.mxu0 %v5042
      %v5123 = vpop.f32.mrf.mxu0
      %v5124 = vadd.f32 0.0, %v5123
      %v5125 = vpop.f32.mrf.mxu0
      %v5126 = vpop.f32.mrf.mxu0
      %v5127 = vadd.f32 0.0, %v5126
      %v5128 = vpop.f32.mrf.mxu0
      %5129 = vmatprep.mubr.bf16.mxu0 0
      %5130 = vmatmul.mubr.bf16.gmra.mxu0 %v5045
      %v5131 = vpop.f32.mrf.mxu0
      %v5132 = vadd.f32 0.0, %v5131
      %v5133 = vpop.f32.mrf.mxu0
      %v5134 = vpop.f32.mrf.mxu0
      %v5135 = vadd.f32 0.0, %v5134
      %v5136 = vpop.f32.mrf.mxu0
      %5137 = vmatprep.mubr.bf16.mxu0 0
      %5138 = vmatmul.mubr.bf16.gmra.mxu0 %v5048
      %v5139 = vpop.f32.mrf.mxu0
      %v5140 = vadd.f32 0.0, %v5139
      %v5141 = vpop.f32.mrf.mxu0
      %v5142 = vpop.f32.mrf.mxu0
      %v5143 = vadd.f32 0.0, %v5142
      %v5144 = vpop.f32.mrf.mxu0
      %5145 = vmatprep.mubr.bf16.mxu0 0
      %5146 = vmatmul.mubr.bf16.gmra.mxu0 %v5051
      %v5147 = vpop.f32.mrf.mxu0
      %v5148 = vadd.f32 0.0, %v5147
      %v5149 = vpop.f32.mrf.mxu0
      %v5150 = vpop.f32.mrf.mxu0
      %v5151 = vadd.f32 0.0, %v5150
      %v5152 = vpop.f32.mrf.mxu0
      %5153 = vmatprep.mubr.bf16.mxu0 0
      %5154 = vmatmul.mubr.bf16.gmra.mxu0 %v5054
      %v5155 = vpop.f32.mrf.mxu0
      %v5156 = vadd.f32 0.0, %v5155
      %v5157 = vpop.f32.mrf.mxu0
      %v5158 = vpop.f32.mrf.mxu0
      %v5159 = vadd.f32 0.0, %v5158
      %v5160 = vpop.f32.mrf.mxu0
      %5161 = vmatprep.mubr.bf16.mxu0 0
      %5162 = vmatmul.mubr.bf16.gmra.mxu0 %v5057
      %v5163 = vpop.f32.mrf.mxu0
      %v5164 = vadd.f32 0.0, %v5163
      %v5165 = vpop.f32.mrf.mxu0
      %v5166 = vpop.f32.mrf.mxu0
      %v5167 = vadd.f32 0.0, %v5166
      %v5168 = vpop.f32.mrf.mxu0
      %5169 = vmatprep.mubr.bf16.mxu0 0
      %5170 = vmatmul.mubr.bf16.gmra.mxu0 %v5060
      %v5171 = vpop.f32.mrf.mxu0
      %v5172 = vadd.f32 0.0, %v5171
      %v5173 = vpop.f32.mrf.mxu0
      %v5174 = vpop.f32.mrf.mxu0
      %v5175 = vadd.f32 0.0, %v5174
      %v5176 = vpop.f32.mrf.mxu0
      %5177 = vmatprep.mubr.bf16.mxu0 0
      %5178 = vmatmul.mubr.bf16.gmra.mxu0 %v5063
      %v5179 = vpop.f32.mrf.mxu0
      %v5180 = vadd.f32 0.0, %v5179
      %v5181 = vpop.f32.mrf.mxu0
      %v5182 = vpop.f32.mrf.mxu0
      %v5183 = vadd.f32 0.0, %v5182
      %v5184 = vpop.f32.mrf.mxu0
      %5185 = vdwg.mxu0
      %v5186 = vmul.f32 %v5124, 0.35355338
      %v5187 = vmul.f32 %v5127, 0.35355338
      %v5188 = vmul.f32 %v5132, 0.35355338
      %v5189 = vmul.f32 %v5135, 0.35355338
      %v5190 = vmul.f32 %v5140, 0.35355338
      %v5191 = vmul.f32 %v5143, 0.35355338
      %v5192 = vmul.f32 %v5148, 0.35355338
      %v5193 = vmul.f32 %v5151, 0.35355338
      %v5194 = vmul.f32 %v5156, 0.35355338
      %v5195 = vmul.f32 %v5159, 0.35355338
      %v5196 = vmul.f32 %v5164, 0.35355338
      %v5197 = vmul.f32 %v5167, 0.35355338
      %v5198 = vmul.f32 %v5172, 0.35355338
      %v5199 = vmul.f32 %v5175, 0.35355338
      %v5200 = vmul.f32 %v5180, 0.35355338
      %v5201 = vmul.f32 %v5183, 0.35355338
      %v5202 = vadd.f32 %v5186, %v578
      %v5203 = vadd.f32 %v5187, %v578
      %v5204 = vadd.f32 %v5188, %v578
      %v5205 = vadd.f32 %v5189, %v578
      %v5206 = vadd.f32 %v5190, %v578
      %v5207 = vadd.f32 %v5191, %v578
      %v5208 = vadd.f32 %v5192, %v578
      %v5209 = vadd.f32 %v5193, %v578
      %v5210 = vadd.f32 %v5194, %v578
      %v5211 = vadd.f32 %v5195, %v578
      %v5212 = vadd.f32 %v5196, %v578
      %v5213 = vadd.f32 %v5197, %v578
      %v5214 = vadd.f32 %v5198, %v578
      %v5215 = vadd.f32 %v5199, %v578
      %v5216 = vadd.f32 %v5200, %v578
      %v5217 = vadd.f32 %v5201, %v578
      %5218 = vmax.xlane.f32.xlu0 %v5202
      %v5219 = vpop.xlane.xlu0 %5218
      %5220 = vmax.xlane.f32.xlu0 %v5203
      %v5221 = vpop.xlane.xlu0 %5220
      %5222 = vmax.xlane.f32.xlu0 %v5204
      %v5223 = vpop.xlane.xlu0 %5222
      %5224 = vmax.xlane.f32.xlu0 %v5205
      %v5225 = vpop.xlane.xlu0 %5224
      %5226 = vmax.xlane.f32.xlu0 %v5206
      %v5227 = vpop.xlane.xlu0 %5226
      %5228 = vmax.xlane.f32.xlu0 %v5207
      %v5229 = vpop.xlane.xlu0 %5228
      %5230 = vmax.xlane.f32.xlu0 %v5208
      %v5231 = vpop.xlane.xlu0 %5230
      %5232 = vmax.xlane.f32.xlu0 %v5209
      %v5233 = vpop.xlane.xlu0 %5232
      %5234 = vmax.xlane.f32.xlu0 %v5210
      %v5235 = vpop.xlane.xlu0 %5234
      %5236 = vmax.xlane.f32.xlu0 %v5211
      %v5237 = vpop.xlane.xlu0 %5236
      %5238 = vmax.xlane.f32.xlu0 %v5212
      %v5239 = vpop.xlane.xlu0 %5238
      %5240 = vmax.xlane.f32.xlu0 %v5213
      %v5241 = vpop.xlane.xlu0 %5240
      %5242 = vmax.xlane.f32.xlu0 %v5214
      %v5243 = vpop.xlane.xlu0 %5242
      %5244 = vmax.xlane.f32.xlu0 %v5215
      %v5245 = vpop.xlane.xlu0 %5244
      %5246 = vmax.xlane.f32.xlu0 %v5216
      %v5247 = vpop.xlane.xlu0 %5246
      %5248 = vmax.xlane.f32.xlu0 %v5217
      %v5249 = vpop.xlane.xlu0 %5248
      %v5250 = vsub.f32 %v5202, %v5219
      %v5251 = vsub.f32 %v5203, %v5221
      %v5252 = vsub.f32 %v5204, %v5223
      %v5253 = vsub.f32 %v5205, %v5225
      %v5254 = vsub.f32 %v5206, %v5227
      %v5255 = vsub.f32 %v5207, %v5229
      %v5256 = vsub.f32 %v5208, %v5231
      %v5257 = vsub.f32 %v5209, %v5233
      %v5258 = vsub.f32 %v5210, %v5235
      %v5259 = vsub.f32 %v5211, %v5237
      %v5260 = vsub.f32 %v5212, %v5239
      %v5261 = vsub.f32 %v5213, %v5241
      %v5262 = vsub.f32 %v5214, %v5243
      %v5263 = vsub.f32 %v5215, %v5245
      %v5264 = vsub.f32 %v5216, %v5247
      %v5265 = vsub.f32 %v5217, %v5249
      %v5266 = vmul.f32 %v5250, 1.442695
      %v5267 = vpow.pop %v5266
      %v5268 = vmul.f32 %v5251, 1.442695
      %v5269 = vpow.pop %v5268
      %v5270 = vmul.f32 %v5252, 1.442695
      %v5271 = vpow.pop %v5270
      %v5272 = vmul.f32 %v5253, 1.442695
      %v5273 = vpow.pop %v5272
      %v5274 = vmul.f32 %v5254, 1.442695
      %v5275 = vpow.pop %v5274
      %v5276 = vmul.f32 %v5255, 1.442695
      %v5277 = vpow.pop %v5276
      %v5278 = vmul.f32 %v5256, 1.442695
      %v5279 = vpow.pop %v5278
      %v5280 = vmul.f32 %v5257, 1.442695
      %v5281 = vpow.pop %v5280
      %v5282 = vmul.f32 %v5258, 1.442695
      %v5283 = vpow.pop %v5282
      %v5284 = vmul.f32 %v5259, 1.442695
      %v5285 = vpow.pop %v5284
      %v5286 = vmul.f32 %v5260, 1.442695
      %v5287 = vpow.pop %v5286
      %v5288 = vmul.f32 %v5261, 1.442695
      %v5289 = vpow.pop %v5288
      %v5290 = vmul.f32 %v5262, 1.442695
      %v5291 = vpow.pop %v5290
      %v5292 = vmul.f32 %v5263, 1.442695
      %v5293 = vpow.pop %v5292
      %v5294 = vmul.f32 %v5264, 1.442695
      %v5295 = vpow.pop %v5294
      %v5296 = vmul.f32 %v5265, 1.442695
      %v5297 = vpow.pop %v5296
      %5298 = vadd.xlane.f32.xlu0 %v5267
      %v5299 = vpop.xlane.xlu0 %5298
      %5300 = vadd.xlane.f32.xlu0 %v5269
      %v5301 = vpop.xlane.xlu0 %5300
      %5302 = vadd.xlane.f32.xlu0 %v5271
      %v5303 = vpop.xlane.xlu0 %5302
      %5304 = vadd.xlane.f32.xlu0 %v5273
      %v5305 = vpop.xlane.xlu0 %5304
      %5306 = vadd.xlane.f32.xlu0 %v5275
      %v5307 = vpop.xlane.xlu0 %5306
      %5308 = vadd.xlane.f32.xlu0 %v5277
      %v5309 = vpop.xlane.xlu0 %5308
      %5310 = vadd.xlane.f32.xlu0 %v5279
      %v5311 = vpop.xlane.xlu0 %5310
      %5312 = vadd.xlane.f32.xlu0 %v5281
      %v5313 = vpop.xlane.xlu0 %5312
      %5314 = vadd.xlane.f32.xlu0 %v5283
      %v5315 = vpop.xlane.xlu0 %5314
      %5316 = vadd.xlane.f32.xlu0 %v5285
      %v5317 = vpop.xlane.xlu0 %5316
      %5318 = vadd.xlane.f32.xlu0 %v5287
      %v5319 = vpop.xlane.xlu0 %5318
      %5320 = vadd.xlane.f32.xlu0 %v5289
      %v5321 = vpop.xlane.xlu0 %5320
      %5322 = vadd.xlane.f32.xlu0 %v5291
      %v5323 = vpop.xlane.xlu0 %5322
      %5324 = vadd.xlane.f32.xlu0 %v5293
      %v5325 = vpop.xlane.xlu0 %5324
      %5326 = vadd.xlane.f32.xlu0 %v5295
      %v5327 = vpop.xlane.xlu0 %5326
      %5328 = vadd.xlane.f32.xlu0 %v5297
      %v5329 = vpop.xlane.xlu0 %5328
      %v5330 = vrcp.pop %v5299
      %v5331 = vrcp.pop %v5301
      %v5332 = vrcp.pop %v5303
      %v5333 = vrcp.pop %v5305
      %v5334 = vrcp.pop %v5307
      %v5335 = vrcp.pop %v5309
      %v5336 = vrcp.pop %v5311
      %v5337 = vrcp.pop %v5313
      %v5338 = vrcp.pop %v5315
      %v5339 = vrcp.pop %v5317
      %v5340 = vrcp.pop %v5319
      %v5341 = vrcp.pop %v5321
      %v5342 = vrcp.pop %v5323
      %v5343 = vrcp.pop %v5325
      %v5344 = vrcp.pop %v5327
      %v5345 = vrcp.pop %v5329
      %v5346 = vmul.f32 %v5267, %v5330
      %v5347 = vmul.f32 %v5269, %v5331
      %v5348 = vmul.f32 %v5271, %v5332
      %v5349 = vmul.f32 %v5273, %v5333
      %v5350 = vmul.f32 %v5275, %v5334
      %v5351 = vmul.f32 %v5277, %v5335
      %v5352 = vmul.f32 %v5279, %v5336
      %v5353 = vmul.f32 %v5281, %v5337
      %v5354 = vmul.f32 %v5283, %v5338
      %v5355 = vmul.f32 %v5285, %v5339
      %v5356 = vmul.f32 %v5287, %v5340
      %v5357 = vmul.f32 %v5289, %v5341
      %v5358 = vmul.f32 %v5291, %v5342
      %v5359 = vmul.f32 %v5293, %v5343
      %v5360 = vmul.f32 %v5295, %v5344
      %v5361 = vmul.f32 %v5297, %v5345
      %v5362 = vpack.c.bf16 %v5347, %v5346
      %v5363 = vpack.c.bf16 %v5349, %v5348
      %v5364 = vpack.c.bf16 %v5351, %v5350
      %v5365 = vpack.c.bf16 %v5353, %v5352
      %v5366 = vpack.c.bf16 %v5355, %v5354
      %v5367 = vpack.c.bf16 %v5357, %v5356
      %v5368 = vpack.c.bf16 %v5359, %v5358
      %v5369 = vpack.c.bf16 %v5361, %v5360
      %5378 = vrot.lane.b32.xlu0 %v4535, 120
      %v5379 = vpop.permute.xlu0 %5378
      %5380 = vrot.lane.b32.xlu0 %v4536, 120
      %v5381 = vpop.permute.xlu0 %5380
      %5382 = vrot.lane.b32.xlu0 %v4537, 120
      %v5383 = vpop.permute.xlu0 %5382
      %5384 = vrot.lane.b32.xlu0 %v4538, 120
      %v5385 = vpop.permute.xlu0 %5384
      %5386 = vrot.lane.b32.xlu0 %v4539, 120
      %v5387 = vpop.permute.xlu0 %5386
      %5388 = vrot.lane.b32.xlu0 %v4540, 120
      %v5389 = vpop.permute.xlu0 %5388
      %5390 = vrot.lane.b32.xlu0 %v4541, 120
      %v5391 = vpop.permute.xlu0 %5390
      %5392 = vrot.lane.b32.xlu0 %v4542, 120
      %v5393 = vpop.permute.xlu0 %5392
      %5402 = vmatprep.subr.bf16.mxu0 0
      %5403 = vmatpush1.bf16.msra.mxu0 %v5393
      %5404 = vmatprep.subr.bf16.mxu0 0
      %5405 = vmatpush1.bf16.msra.mxu0 %v5391
      %5406 = vmatprep.subr.bf16.mxu0 0
      %5407 = vmatpush1.bf16.msra.mxu0 %v5389
      %5408 = vmatprep.subr.bf16.mxu0 0
      %5409 = vmatpush1.bf16.msra.mxu0 %v5387
      %5410 = vmatprep.subr.bf16.mxu0 0
      %5411 = vmatpush1.bf16.msra.mxu0 %v5385
      %5412 = vmatprep.subr.bf16.mxu0 0
      %5413 = vmatpush1.bf16.msra.mxu0 %v5383
      %5414 = vmatprep.subr.bf16.mxu0 0
      %5415 = vmatpush1.bf16.msra.mxu0 %v5381
      %5416 = vmatprep.subr.bf16.mxu0 0
      %5417 = vmatpush1.bf16.msra.mxu0 %v5379
      %5418 = vmatprep.subr.bf16.mxu0 0
      %5419 = vmatpush2.bf16.msra.mxu0 0
      %5420 = vmatprep.subr.bf16.mxu0 0
      %5421 = vmatpush2.bf16.msra.mxu0 0
      %5422 = vmatprep.subr.bf16.mxu0 0
      %5423 = vmatpush2.bf16.msra.mxu0 0
      %5424 = vmatprep.subr.bf16.mxu0 0
      %5425 = vmatpush2.bf16.msra.mxu0 0
      %5426 = vmatprep.subr.bf16.mxu0 0
      %5427 = vmatpush2.bf16.msra.mxu0 0
      %5428 = vmatprep.subr.bf16.mxu0 0
      %5429 = vmatpush2.bf16.msra.mxu0 0
      %5430 = vmatprep.subr.bf16.mxu0 0
      %5431 = vmatpush2.bf16.msra.mxu0 0
      %5432 = vmatprep.subr.bf16.mxu0 0
      %5433 = vmatpush2.bf16.msra.mxu0 0
      %5434 = vmatprep.mubr.bf16.mxu0 0
      %5435 = vmatmul.mubr.bf16.gmra.mxu0 %v5362
      %v5436 = vpop.f32.mrf.mxu0
      %v5437 = vadd.f32 0.0, %v5436
      %v5438 = vpop.f32.mrf.mxu0
      %v5439 = vpop.f32.mrf.mxu0
      %v5440 = vadd.f32 0.0, %v5439
      %v5441 = vpop.f32.mrf.mxu0
      %5442 = vmatprep.mubr.bf16.mxu0 0
      %5443 = vmatmul.mubr.bf16.gmra.mxu0 %v5363
      %v5444 = vpop.f32.mrf.mxu0
      %v5445 = vadd.f32 0.0, %v5444
      %v5446 = vpop.f32.mrf.mxu0
      %v5447 = vpop.f32.mrf.mxu0
      %v5448 = vadd.f32 0.0, %v5447
      %v5449 = vpop.f32.mrf.mxu0
      %5450 = vmatprep.mubr.bf16.mxu0 0
      %5451 = vmatmul.mubr.bf16.gmra.mxu0 %v5364
      %v5452 = vpop.f32.mrf.mxu0
      %v5453 = vadd.f32 0.0, %v5452
      %v5454 = vpop.f32.mrf.mxu0
      %v5455 = vpop.f32.mrf.mxu0
      %v5456 = vadd.f32 0.0, %v5455
      %v5457 = vpop.f32.mrf.mxu0
      %5458 = vmatprep.mubr.bf16.mxu0 0
      %5459 = vmatmul.mubr.bf16.gmra.mxu0 %v5365
      %v5460 = vpop.f32.mrf.mxu0
      %v5461 = vadd.f32 0.0, %v5460
      %v5462 = vpop.f32.mrf.mxu0
      %v5463 = vpop.f32.mrf.mxu0
      %v5464 = vadd.f32 0.0, %v5463
      %v5465 = vpop.f32.mrf.mxu0
      %5466 = vmatprep.mubr.bf16.mxu0 0
      %5467 = vmatmul.mubr.bf16.gmra.mxu0 %v5366
      %v5468 = vpop.f32.mrf.mxu0
      %v5469 = vadd.f32 0.0, %v5468
      %v5470 = vpop.f32.mrf.mxu0
      %v5471 = vpop.f32.mrf.mxu0
      %v5472 = vadd.f32 0.0, %v5471
      %v5473 = vpop.f32.mrf.mxu0
      %5474 = vmatprep.mubr.bf16.mxu0 0
      %5475 = vmatmul.mubr.bf16.gmra.mxu0 %v5367
      %v5476 = vpop.f32.mrf.mxu0
      %v5477 = vadd.f32 0.0, %v5476
      %v5478 = vpop.f32.mrf.mxu0
      %v5479 = vpop.f32.mrf.mxu0
      %v5480 = vadd.f32 0.0, %v5479
      %v5481 = vpop.f32.mrf.mxu0
      %5482 = vmatprep.mubr.bf16.mxu0 0
      %5483 = vmatmul.mubr.bf16.gmra.mxu0 %v5368
      %v5484 = vpop.f32.mrf.mxu0
      %v5485 = vadd.f32 0.0, %v5484
      %v5486 = vpop.f32.mrf.mxu0
      %v5487 = vpop.f32.mrf.mxu0
      %v5488 = vadd.f32 0.0, %v5487
      %v5489 = vpop.f32.mrf.mxu0
      %5490 = vmatprep.mubr.bf16.mxu0 0
      %5491 = vmatmul.mubr.bf16.gmra.mxu0 %v5369
      %v5492 = vpop.f32.mrf.mxu0
      %v5493 = vadd.f32 0.0, %v5492
      %v5494 = vpop.f32.mrf.mxu0
      %v5495 = vpop.f32.mrf.mxu0
      %v5496 = vadd.f32 0.0, %v5495
      %v5497 = vpop.f32.mrf.mxu0
      %5498 = vdwg.mxu0
      %5515 = vrot.lane.b32.xlu0 %v5437, 8
      %v5516 = vpop.permute.xlu0 %5515
      %5517 = vrot.lane.b32.xlu0 %v5440, 8
      %v5518 = vpop.permute.xlu0 %5517
      %5519 = vrot.lane.b32.xlu0 %v5445, 8
      %v5520 = vpop.permute.xlu0 %5519
      %5521 = vrot.lane.b32.xlu0 %v5448, 8
      %v5522 = vpop.permute.xlu0 %5521
      %5523 = vrot.lane.b32.xlu0 %v5453, 8
      %v5524 = vpop.permute.xlu0 %5523
      %5525 = vrot.lane.b32.xlu0 %v5456, 8
      %v5526 = vpop.permute.xlu0 %5525
      %5527 = vrot.lane.b32.xlu0 %v5461, 8
      %v5528 = vpop.permute.xlu0 %5527
      %5529 = vrot.lane.b32.xlu0 %v5464, 8
      %v5530 = vpop.permute.xlu0 %5529
      %5531 = vrot.lane.b32.xlu0 %v5469, 8
      %v5532 = vpop.permute.xlu0 %5531
      %5533 = vrot.lane.b32.xlu0 %v5472, 8
      %v5534 = vpop.permute.xlu0 %5533
      %5535 = vrot.lane.b32.xlu0 %v5477, 8
      %v5536 = vpop.permute.xlu0 %5535
      %5537 = vrot.lane.b32.xlu0 %v5480, 8
      %v5538 = vpop.permute.xlu0 %5537
      %5539 = vrot.lane.b32.xlu0 %v5485, 8
      %v5540 = vpop.permute.xlu0 %5539
      %5541 = vrot.lane.b32.xlu0 %v5488, 8
      %v5542 = vpop.permute.xlu0 %5541
      %5543 = vrot.lane.b32.xlu0 %v5493, 8
      %v5544 = vpop.permute.xlu0 %5543
      %5545 = vrot.lane.b32.xlu0 %v5496, 8
      %v5546 = vpop.permute.xlu0 %5545
      %5563 = vst.msk [vmem:[#allocation2] sm:$0xff] %vm2002, %v5516
      %5564 = vst.msk [vmem:[#allocation2 + $0x8] sm:$0xff] %vm2002, %v5518
      %5565 = vst.msk [vmem:[#allocation2 + $0x10] sm:$0xff] %vm2002, %v5520
      %5566 = vst.msk [vmem:[#allocation2 + $0x18] sm:$0xff] %vm2002, %v5522
      %5567 = vst.msk [vmem:[#allocation2 + $0x20] sm:$0xff] %vm2002, %v5524
      %5568 = vst.msk [vmem:[#allocation2 + $0x28] sm:$0xff] %vm2002, %v5526
      %5569 = vst.msk [vmem:[#allocation2 + $0x30] sm:$0xff] %vm2002, %v5528
      %5570 = vst.msk [vmem:[#allocation2 + $0x38] sm:$0xff] %vm2002, %v5530
      %5571 = vst.msk [vmem:[#allocation2 + $0x40] sm:$0xff] %vm2002, %v5532
      %5572 = vst.msk [vmem:[#allocation2 + $0x48] sm:$0xff] %vm2002, %v5534
      %5573 = vst.msk [vmem:[#allocation2 + $0x50] sm:$0xff] %vm2002, %v5536
      %5574 = vst.msk [vmem:[#allocation2 + $0x58] sm:$0xff] %vm2002, %v5538
      %5575 = vst.msk [vmem:[#allocation2 + $0x60] sm:$0xff] %vm2002, %v5540
      %5576 = vst.msk [vmem:[#allocation2 + $0x68] sm:$0xff] %vm2002, %v5542
      %5577 = vst.msk [vmem:[#allocation2 + $0x70] sm:$0xff] %vm2002, %v5544
      %5578 = vst.msk [vmem:[#allocation2 + $0x78] sm:$0xff] %vm2002, %v5546
      %5579 = vrot.lane.b32.xlu0 %v4527, 112
      %v5580 = vpop.permute.xlu0 %5579
      %5581 = vrot.lane.b32.xlu0 %v4528, 112
      %v5582 = vpop.permute.xlu0 %5581
      %5583 = vrot.lane.b32.xlu0 %v4529, 112
      %v5584 = vpop.permute.xlu0 %5583
      %5585 = vrot.lane.b32.xlu0 %v4530, 112
      %v5586 = vpop.permute.xlu0 %5585
      %5587 = vrot.lane.b32.xlu0 %v4531, 112
      %v5588 = vpop.permute.xlu0 %5587
      %5589 = vrot.lane.b32.xlu0 %v4532, 112
      %v5590 = vpop.permute.xlu0 %5589
      %5591 = vrot.lane.b32.xlu0 %v4533, 112
      %v5592 = vpop.permute.xlu0 %5591
      %5593 = vrot.lane.b32.xlu0 %v4534, 112
      %v5594 = vpop.permute.xlu0 %5593
      %5595 = vrot.lane.b32.xlu0 %v4527, 80
      %v5596 = vpop.permute.xlu0 %5595
      %5597 = vrot.lane.b32.xlu0 %v4528, 80
      %v5598 = vpop.permute.xlu0 %5597
      %5599 = vrot.lane.b32.xlu0 %v4529, 80
      %v5600 = vpop.permute.xlu0 %5599
      %5601 = vrot.lane.b32.xlu0 %v4530, 80
      %v5602 = vpop.permute.xlu0 %5601
      %5603 = vrot.lane.b32.xlu0 %v4531, 80
      %v5604 = vpop.permute.xlu0 %5603
      %5605 = vrot.lane.b32.xlu0 %v4532, 80
      %v5606 = vpop.permute.xlu0 %5605
      %5607 = vrot.lane.b32.xlu0 %v4533, 80
      %v5608 = vpop.permute.xlu0 %5607
      %5609 = vrot.lane.b32.xlu0 %v4534, 80
      %v5610 = vpop.permute.xlu0 %5609
      %v5612 = vsel %vm1005, %v5580, 0
      %v5615 = vsel %vm1005, %v5582, 0
      %v5618 = vsel %vm1005, %v5584, 0
      %v5621 = vsel %vm1005, %v5586, 0
      %v5624 = vsel %vm1005, %v5588, 0
      %v5627 = vsel %vm1005, %v5590, 0
      %v5630 = vsel %vm1005, %v5592, 0
      %v5633 = vsel %vm1005, %v5594, 0
      %v5636 = vsel %vm1005, %v5596, 0
      %v5639 = vsel %vm1005, %v5598, 0
      %v5642 = vsel %vm1005, %v5600, 0
      %v5645 = vsel %vm1005, %v5602, 0
      %v5648 = vsel %vm1005, %v5604, 0
      %v5651 = vsel %vm1005, %v5606, 0
      %v5654 = vsel %vm1005, %v5608, 0
      %v5657 = vsel %vm1005, %v5610, 0
      %5659 = vmatprep.subr.bf16.mxu0 0
      %5660 = vmatpush1.bf16.xpose.msra.mxu0 %v5657
      %5661 = vmatprep.subr.bf16.mxu0 0
      %5662 = vmatpush1.bf16.xpose.msra.mxu0 %v5654
      %5663 = vmatprep.subr.bf16.mxu0 0
      %5664 = vmatpush1.bf16.xpose.msra.mxu0 %v5651
      %5665 = vmatprep.subr.bf16.mxu0 0
      %5666 = vmatpush1.bf16.xpose.msra.mxu0 %v5648
      %5667 = vmatprep.subr.bf16.mxu0 0
      %5668 = vmatpush1.bf16.xpose.msra.mxu0 %v5645
      %5669 = vmatprep.subr.bf16.mxu0 0
      %5670 = vmatpush1.bf16.xpose.msra.mxu0 %v5642
      %5671 = vmatprep.subr.bf16.mxu0 0
      %5672 = vmatpush1.bf16.xpose.msra.mxu0 %v5639
      %5673 = vmatprep.subr.bf16.mxu0 0
      %5674 = vmatpush1.bf16.xpose.msra.mxu0 %v5636
      %5675 = vmatprep.subr.bf16.mxu0 0
      %5676 = vmatpush2.bf16.xpose.msra.mxu0 0
      %5677 = vmatprep.subr.bf16.mxu0 0
      %5678 = vmatpush2.bf16.xpose.msra.mxu0 0
      %5679 = vmatprep.subr.bf16.mxu0 0
      %5680 = vmatpush2.bf16.xpose.msra.mxu0 0
      %5681 = vmatprep.subr.bf16.mxu0 0
      %5682 = vmatpush2.bf16.xpose.msra.mxu0 0
      %5683 = vmatprep.subr.bf16.mxu0 0
      %5684 = vmatpush2.bf16.xpose.msra.mxu0 0
      %5685 = vmatprep.subr.bf16.mxu0 0
      %5686 = vmatpush2.bf16.xpose.msra.mxu0 0
      %5687 = vmatprep.subr.bf16.mxu0 0
      %5688 = vmatpush2.bf16.xpose.msra.mxu0 0
      %5689 = vmatprep.subr.bf16.mxu0 0
      %5690 = vmatpush2.bf16.xpose.msra.mxu0 0
      %5691 = vmatprep.mubr.bf16.mxu0 0
      %5692 = vmatmul.mubr.bf16.gmra.mxu0 %v5612
      %v5693 = vpop.f32.mrf.mxu0
      %v5694 = vadd.f32 0.0, %v5693
      %v5695 = vpop.f32.mrf.mxu0
      %v5696 = vpop.f32.mrf.mxu0
      %v5697 = vadd.f32 0.0, %v5696
      %v5698 = vpop.f32.mrf.mxu0
      %5699 = vmatprep.mubr.bf16.mxu0 0
      %5700 = vmatmul.mubr.bf16.gmra.mxu0 %v5615
      %v5701 = vpop.f32.mrf.mxu0
      %v5702 = vadd.f32 0.0, %v5701
      %v5703 = vpop.f32.mrf.mxu0
      %v5704 = vpop.f32.mrf.mxu0
      %v5705 = vadd.f32 0.0, %v5704
      %v5706 = vpop.f32.mrf.mxu0
      %5707 = vmatprep.mubr.bf16.mxu0 0
      %5708 = vmatmul.mubr.bf16.gmra.mxu0 %v5618
      %v5709 = vpop.f32.mrf.mxu0
      %v5710 = vadd.f32 0.0, %v5709
      %v5711 = vpop.f32.mrf.mxu0
      %v5712 = vpop.f32.mrf.mxu0
      %v5713 = vadd.f32 0.0, %v5712
      %v5714 = vpop.f32.mrf.mxu0
      %5715 = vmatprep.mubr.bf16.mxu0 0
      %5716 = vmatmul.mubr.bf16.gmra.mxu0 %v5621
      %v5717 = vpop.f32.mrf.mxu0
      %v5718 = vadd.f32 0.0, %v5717
      %v5719 = vpop.f32.mrf.mxu0
      %v5720 = vpop.f32.mrf.mxu0
      %v5721 = vadd.f32 0.0, %v5720
      %v5722 = vpop.f32.mrf.mxu0
      %5723 = vmatprep.mubr.bf16.mxu0 0
      %5724 = vmatmul.mubr.bf16.gmra.mxu0 %v5624
      %v5725 = vpop.f32.mrf.mxu0
      %v5726 = vadd.f32 0.0, %v5725
      %v5727 = vpop.f32.mrf.mxu0
      %v5728 = vpop.f32.mrf.mxu0
      %v5729 = vadd.f32 0.0, %v5728
      %v5730 = vpop.f32.mrf.mxu0
      %5731 = vmatprep.mubr.bf16.mxu0 0
      %5732 = vmatmul.mubr.bf16.gmra.mxu0 %v5627
      %v5733 = vpop.f32.mrf.mxu0
      %v5734 = vadd.f32 0.0, %v5733
      %v5735 = vpop.f32.mrf.mxu0
      %v5736 = vpop.f32.mrf.mxu0
      %v5737 = vadd.f32 0.0, %v5736
      %v5738 = vpop.f32.mrf.mxu0
      %5739 = vmatprep.mubr.bf16.mxu0 0
      %5740 = vmatmul.mubr.bf16.gmra.mxu0 %v5630
      %v5741 = vpop.f32.mrf.mxu0
      %v5742 = vadd.f32 0.0, %v5741
      %v5743 = vpop.f32.mrf.mxu0
      %v5744 = vpop.f32.mrf.mxu0
      %v5745 = vadd.f32 0.0, %v5744
      %v5746 = vpop.f32.mrf.mxu0
      %5747 = vmatprep.mubr.bf16.mxu0 0
      %5748 = vmatmul.mubr.bf16.gmra.mxu0 %v5633
      %v5749 = vpop.f32.mrf.mxu0
      %v5750 = vadd.f32 0.0, %v5749
      %v5751 = vpop.f32.mrf.mxu0
      %v5752 = vpop.f32.mrf.mxu0
      %v5753 = vadd.f32 0.0, %v5752
      %v5754 = vpop.f32.mrf.mxu0
      %5755 = vdwg.mxu0
      %v5756 = vmul.f32 %v5694, 0.35355338
      %v5757 = vmul.f32 %v5697, 0.35355338
      %v5758 = vmul.f32 %v5702, 0.35355338
      %v5759 = vmul.f32 %v5705, 0.35355338
      %v5760 = vmul.f32 %v5710, 0.35355338
      %v5761 = vmul.f32 %v5713, 0.35355338
      %v5762 = vmul.f32 %v5718, 0.35355338
      %v5763 = vmul.f32 %v5721, 0.35355338
      %v5764 = vmul.f32 %v5726, 0.35355338
      %v5765 = vmul.f32 %v5729, 0.35355338
      %v5766 = vmul.f32 %v5734, 0.35355338
      %v5767 = vmul.f32 %v5737, 0.35355338
      %v5768 = vmul.f32 %v5742, 0.35355338
      %v5769 = vmul.f32 %v5745, 0.35355338
      %v5770 = vmul.f32 %v5750, 0.35355338
      %v5771 = vmul.f32 %v5753, 0.35355338
      %v5772 = vadd.f32 %v5756, %v578
      %v5773 = vadd.f32 %v5757, %v578
      %v5774 = vadd.f32 %v5758, %v578
      %v5775 = vadd.f32 %v5759, %v578
      %v5776 = vadd.f32 %v5760, %v578
      %v5777 = vadd.f32 %v5761, %v578
      %v5778 = vadd.f32 %v5762, %v578
      %v5779 = vadd.f32 %v5763, %v578
      %v5780 = vadd.f32 %v5764, %v578
      %v5781 = vadd.f32 %v5765, %v578
      %v5782 = vadd.f32 %v5766, %v578
      %v5783 = vadd.f32 %v5767, %v578
      %v5784 = vadd.f32 %v5768, %v578
      %v5785 = vadd.f32 %v5769, %v578
      %v5786 = vadd.f32 %v5770, %v578
      %v5787 = vadd.f32 %v5771, %v578
      %5788 = vmax.xlane.f32.xlu0 %v5772
      %v5789 = vpop.xlane.xlu0 %5788
      %5790 = vmax.xlane.f32.xlu0 %v5773
      %v5791 = vpop.xlane.xlu0 %5790
      %5792 = vmax.xlane.f32.xlu0 %v5774
      %v5793 = vpop.xlane.xlu0 %5792
      %5794 = vmax.xlane.f32.xlu0 %v5775
      %v5795 = vpop.xlane.xlu0 %5794
      %5796 = vmax.xlane.f32.xlu0 %v5776
      %v5797 = vpop.xlane.xlu0 %5796
      %5798 = vmax.xlane.f32.xlu0 %v5777
      %v5799 = vpop.xlane.xlu0 %5798
      %5800 = vmax.xlane.f32.xlu0 %v5778
      %v5801 = vpop.xlane.xlu0 %5800
      %5802 = vmax.xlane.f32.xlu0 %v5779
      %v5803 = vpop.xlane.xlu0 %5802
      %5804 = vmax.xlane.f32.xlu0 %v5780
      %v5805 = vpop.xlane.xlu0 %5804
      %5806 = vmax.xlane.f32.xlu0 %v5781
      %v5807 = vpop.xlane.xlu0 %5806
      %5808 = vmax.xlane.f32.xlu0 %v5782
      %v5809 = vpop.xlane.xlu0 %5808
      %5810 = vmax.xlane.f32.xlu0 %v5783
      %v5811 = vpop.xlane.xlu0 %5810
      %5812 = vmax.xlane.f32.xlu0 %v5784
      %v5813 = vpop.xlane.xlu0 %5812
      %5814 = vmax.xlane.f32.xlu0 %v5785
      %v5815 = vpop.xlane.xlu0 %5814
      %5816 = vmax.xlane.f32.xlu0 %v5786
      %v5817 = vpop.xlane.xlu0 %5816
      %5818 = vmax.xlane.f32.xlu0 %v5787
      %v5819 = vpop.xlane.xlu0 %5818
      %v5820 = vsub.f32 %v5772, %v5789
      %v5821 = vsub.f32 %v5773, %v5791
      %v5822 = vsub.f32 %v5774, %v5793
      %v5823 = vsub.f32 %v5775, %v5795
      %v5824 = vsub.f32 %v5776, %v5797
      %v5825 = vsub.f32 %v5777, %v5799
      %v5826 = vsub.f32 %v5778, %v5801
      %v5827 = vsub.f32 %v5779, %v5803
      %v5828 = vsub.f32 %v5780, %v5805
      %v5829 = vsub.f32 %v5781, %v5807
      %v5830 = vsub.f32 %v5782, %v5809
      %v5831 = vsub.f32 %v5783, %v5811
      %v5832 = vsub.f32 %v5784, %v5813
      %v5833 = vsub.f32 %v5785, %v5815
      %v5834 = vsub.f32 %v5786, %v5817
      %v5835 = vsub.f32 %v5787, %v5819
      %v5836 = vmul.f32 %v5820, 1.442695
      %v5837 = vpow.pop %v5836
      %v5838 = vmul.f32 %v5821, 1.442695
      %v5839 = vpow.pop %v5838
      %v5840 = vmul.f32 %v5822, 1.442695
      %v5841 = vpow.pop %v5840
      %v5842 = vmul.f32 %v5823, 1.442695
      %v5843 = vpow.pop %v5842
      %v5844 = vmul.f32 %v5824, 1.442695
      %v5845 = vpow.pop %v5844
      %v5846 = vmul.f32 %v5825, 1.442695
      %v5847 = vpow.pop %v5846
      %v5848 = vmul.f32 %v5826, 1.442695
      %v5849 = vpow.pop %v5848
      %v5850 = vmul.f32 %v5827, 1.442695
      %v5851 = vpow.pop %v5850
      %v5852 = vmul.f32 %v5828, 1.442695
      %v5853 = vpow.pop %v5852
      %v5854 = vmul.f32 %v5829, 1.442695
      %v5855 = vpow.pop %v5854
      %v5856 = vmul.f32 %v5830, 1.442695
      %v5857 = vpow.pop %v5856
      %v5858 = vmul.f32 %v5831, 1.442695
      %v5859 = vpow.pop %v5858
      %v5860 = vmul.f32 %v5832, 1.442695
      %v5861 = vpow.pop %v5860
      %v5862 = vmul.f32 %v5833, 1.442695
      %v5863 = vpow.pop %v5862
      %v5864 = vmul.f32 %v5834, 1.442695
      %v5865 = vpow.pop %v5864
      %v5866 = vmul.f32 %v5835, 1.442695
      %v5867 = vpow.pop %v5866
      %5868 = vadd.xlane.f32.xlu0 %v5837
      %v5869 = vpop.xlane.xlu0 %5868
      %5870 = vadd.xlane.f32.xlu0 %v5839
      %v5871 = vpop.xlane.xlu0 %5870
      %5872 = vadd.xlane.f32.xlu0 %v5841
      %v5873 = vpop.xlane.xlu0 %5872
      %5874 = vadd.xlane.f32.xlu0 %v5843
      %v5875 = vpop.xlane.xlu0 %5874
      %5876 = vadd.xlane.f32.xlu0 %v5845
      %v5877 = vpop.xlane.xlu0 %5876
      %5878 = vadd.xlane.f32.xlu0 %v5847
      %v5879 = vpop.xlane.xlu0 %5878
      %5880 = vadd.xlane.f32.xlu0 %v5849
      %v5881 = vpop.xlane.xlu0 %5880
      %5882 = vadd.xlane.f32.xlu0 %v5851
      %v5883 = vpop.xlane.xlu0 %5882
      %5884 = vadd.xlane.f32.xlu0 %v5853
      %v5885 = vpop.xlane.xlu0 %5884
      %5886 = vadd.xlane.f32.xlu0 %v5855
      %v5887 = vpop.xlane.xlu0 %5886
      %5888 = vadd.xlane.f32.xlu0 %v5857
      %v5889 = vpop.xlane.xlu0 %5888
      %5890 = vadd.xlane.f32.xlu0 %v5859
      %v5891 = vpop.xlane.xlu0 %5890
      %5892 = vadd.xlane.f32.xlu0 %v5861
      %v5893 = vpop.xlane.xlu0 %5892
      %5894 = vadd.xlane.f32.xlu0 %v5863
      %v5895 = vpop.xlane.xlu0 %5894
      %5896 = vadd.xlane.f32.xlu0 %v5865
      %v5897 = vpop.xlane.xlu0 %5896
      %5898 = vadd.xlane.f32.xlu0 %v5867
      %v5899 = vpop.xlane.xlu0 %5898
      %v5900 = vrcp.pop %v5869
      %v5901 = vrcp.pop %v5871
      %v5902 = vrcp.pop %v5873
      %v5903 = vrcp.pop %v5875
      %v5904 = vrcp.pop %v5877
      %v5905 = vrcp.pop %v5879
      %v5906 = vrcp.pop %v5881
      %v5907 = vrcp.pop %v5883
      %v5908 = vrcp.pop %v5885
      %v5909 = vrcp.pop %v5887
      %v5910 = vrcp.pop %v5889
      %v5911 = vrcp.pop %v5891
      %v5912 = vrcp.pop %v5893
      %v5913 = vrcp.pop %v5895
      %v5914 = vrcp.pop %v5897
      %v5915 = vrcp.pop %v5899
      %v5916 = vmul.f32 %v5837, %v5900
      %v5917 = vmul.f32 %v5839, %v5901
      %v5918 = vmul.f32 %v5841, %v5902
      %v5919 = vmul.f32 %v5843, %v5903
      %v5920 = vmul.f32 %v5845, %v5904
      %v5921 = vmul.f32 %v5847, %v5905
      %v5922 = vmul.f32 %v5849, %v5906
      %v5923 = vmul.f32 %v5851, %v5907
      %v5924 = vmul.f32 %v5853, %v5908
      %v5925 = vmul.f32 %v5855, %v5909
      %v5926 = vmul.f32 %v5857, %v5910
      %v5927 = vmul.f32 %v5859, %v5911
      %v5928 = vmul.f32 %v5861, %v5912
      %v5929 = vmul.f32 %v5863, %v5913
      %v5930 = vmul.f32 %v5865, %v5914
      %v5931 = vmul.f32 %v5867, %v5915
      %v5932 = vpack.c.bf16 %v5917, %v5916
      %v5933 = vpack.c.bf16 %v5919, %v5918
      %v5934 = vpack.c.bf16 %v5921, %v5920
      %v5935 = vpack.c.bf16 %v5923, %v5922
      %v5936 = vpack.c.bf16 %v5925, %v5924
      %v5937 = vpack.c.bf16 %v5927, %v5926
      %v5938 = vpack.c.bf16 %v5929, %v5928
      %v5939 = vpack.c.bf16 %v5931, %v5930
      %5940 = vrot.lane.b32.xlu0 %v4535, 112
      %v5941 = vpop.permute.xlu0 %5940
      %5942 = vrot.lane.b32.xlu0 %v4536, 112
      %v5943 = vpop.permute.xlu0 %5942
      %5944 = vrot.lane.b32.xlu0 %v4537, 112
      %v5945 = vpop.permute.xlu0 %5944
      %5946 = vrot.lane.b32.xlu0 %v4538, 112
      %v5947 = vpop.permute.xlu0 %5946
      %5948 = vrot.lane.b32.xlu0 %v4539, 112
      %v5949 = vpop.permute.xlu0 %5948
      %5950 = vrot.lane.b32.xlu0 %v4540, 112
      %v5951 = vpop.permute.xlu0 %5950
      %5952 = vrot.lane.b32.xlu0 %v4541, 112
      %v5953 = vpop.permute.xlu0 %5952
      %5954 = vrot.lane.b32.xlu0 %v4542, 112
      %v5955 = vpop.permute.xlu0 %5954
      %5964 = vmatprep.subr.bf16.mxu0 0
      %5965 = vmatpush1.bf16.msra.mxu0 %v5955
      %5966 = vmatprep.subr.bf16.mxu0 0
      %5967 = vmatpush1.bf16.msra.mxu0 %v5953
      %5968 = vmatprep.subr.bf16.mxu0 0
      %5969 = vmatpush1.bf16.msra.mxu0 %v5951
      %5970 = vmatprep.subr.bf16.mxu0 0
      %5971 = vmatpush1.bf16.msra.mxu0 %v5949
      %5972 = vmatprep.subr.bf16.mxu0 0
      %5973 = vmatpush1.bf16.msra.mxu0 %v5947
      %5974 = vmatprep.subr.bf16.mxu0 0
      %5975 = vmatpush1.bf16.msra.mxu0 %v5945
      %5976 = vmatprep.subr.bf16.mxu0 0
      %5977 = vmatpush1.bf16.msra.mxu0 %v5943
      %5978 = vmatprep.subr.bf16.mxu0 0
      %5979 = vmatpush1.bf16.msra.mxu0 %v5941
      %5980 = vmatprep.subr.bf16.mxu0 0
      %5981 = vmatpush2.bf16.msra.mxu0 0
      %5982 = vmatprep.subr.bf16.mxu0 0
      %5983 = vmatpush2.bf16.msra.mxu0 0
      %5984 = vmatprep.subr.bf16.mxu0 0
      %5985 = vmatpush2.bf16.msra.mxu0 0
      %5986 = vmatprep.subr.bf16.mxu0 0
      %5987 = vmatpush2.bf16.msra.mxu0 0
      %5988 = vmatprep.subr.bf16.mxu0 0
      %5989 = vmatpush2.bf16.msra.mxu0 0
      %5990 = vmatprep.subr.bf16.mxu0 0
      %5991 = vmatpush2.bf16.msra.mxu0 0
      %5992 = vmatprep.subr.bf16.mxu0 0
      %5993 = vmatpush2.bf16.msra.mxu0 0
      %5994 = vmatprep.subr.bf16.mxu0 0
      %5995 = vmatpush2.bf16.msra.mxu0 0
      %5996 = vmatprep.mubr.bf16.mxu0 0
      %5997 = vmatmul.mubr.bf16.gmra.mxu0 %v5932
      %v5998 = vpop.f32.mrf.mxu0
      %v5999 = vadd.f32 0.0, %v5998
      %v6000 = vpop.f32.mrf.mxu0
      %v6001 = vpop.f32.mrf.mxu0
      %v6002 = vadd.f32 0.0, %v6001
      %v6003 = vpop.f32.mrf.mxu0
      %6004 = vmatprep.mubr.bf16.mxu0 0
      %6005 = vmatmul.mubr.bf16.gmra.mxu0 %v5933
      %v6006 = vpop.f32.mrf.mxu0
      %v6007 = vadd.f32 0.0, %v6006
      %v6008 = vpop.f32.mrf.mxu0
      %v6009 = vpop.f32.mrf.mxu0
      %v6010 = vadd.f32 0.0, %v6009
      %v6011 = vpop.f32.mrf.mxu0
      %6012 = vmatprep.mubr.bf16.mxu0 0
      %6013 = vmatmul.mubr.bf16.gmra.mxu0 %v5934
      %v6014 = vpop.f32.mrf.mxu0
      %v6015 = vadd.f32 0.0, %v6014
      %v6016 = vpop.f32.mrf.mxu0
      %v6017 = vpop.f32.mrf.mxu0
      %v6018 = vadd.f32 0.0, %v6017
      %v6019 = vpop.f32.mrf.mxu0
      %6020 = vmatprep.mubr.bf16.mxu0 0
      %6021 = vmatmul.mubr.bf16.gmra.mxu0 %v5935
      %v6022 = vpop.f32.mrf.mxu0
      %v6023 = vadd.f32 0.0, %v6022
      %v6024 = vpop.f32.mrf.mxu0
      %v6025 = vpop.f32.mrf.mxu0
      %v6026 = vadd.f32 0.0, %v6025
      %v6027 = vpop.f32.mrf.mxu0
      %6028 = vmatprep.mubr.bf16.mxu0 0
      %6029 = vmatmul.mubr.bf16.gmra.mxu0 %v5936
      %v6030 = vpop.f32.mrf.mxu0
      %v6031 = vadd.f32 0.0, %v6030
      %v6032 = vpop.f32.mrf.mxu0
      %v6033 = vpop.f32.mrf.mxu0
      %v6034 = vadd.f32 0.0, %v6033
      %v6035 = vpop.f32.mrf.mxu0
      %6036 = vmatprep.mubr.bf16.mxu0 0
      %6037 = vmatmul.mubr.bf16.gmra.mxu0 %v5937
      %v6038 = vpop.f32.mrf.mxu0
      %v6039 = vadd.f32 0.0, %v6038
      %v6040 = vpop.f32.mrf.mxu0
      %v6041 = vpop.f32.mrf.mxu0
      %v6042 = vadd.f32 0.0, %v6041
      %v6043 = vpop.f32.mrf.mxu0
      %6044 = vmatprep.mubr.bf16.mxu0 0
      %6045 = vmatmul.mubr.bf16.gmra.mxu0 %v5938
      %v6046 = vpop.f32.mrf.mxu0
      %v6047 = vadd.f32 0.0, %v6046
      %v6048 = vpop.f32.mrf.mxu0
      %v6049 = vpop.f32.mrf.mxu0
      %v6050 = vadd.f32 0.0, %v6049
      %v6051 = vpop.f32.mrf.mxu0
      %6052 = vmatprep.mubr.bf16.mxu0 0
      %6053 = vmatmul.mubr.bf16.gmra.mxu0 %v5939
      %v6054 = vpop.f32.mrf.mxu0
      %v6055 = vadd.f32 0.0, %v6054
      %v6056 = vpop.f32.mrf.mxu0
      %v6057 = vpop.f32.mrf.mxu0
      %v6058 = vadd.f32 0.0, %v6057
      %v6059 = vpop.f32.mrf.mxu0
      %6060 = vdwg.mxu0
      %6077 = vrot.lane.b32.xlu0 %v5999, 16
      %v6078 = vpop.permute.xlu0 %6077
      %6079 = vrot.lane.b32.xlu0 %v6002, 16
      %v6080 = vpop.permute.xlu0 %6079
      %6081 = vrot.lane.b32.xlu0 %v6007, 16
      %v6082 = vpop.permute.xlu0 %6081
      %6083 = vrot.lane.b32.xlu0 %v6010, 16
      %v6084 = vpop.permute.xlu0 %6083
      %6085 = vrot.lane.b32.xlu0 %v6015, 16
      %v6086 = vpop.permute.xlu0 %6085
      %6087 = vrot.lane.b32.xlu0 %v6018, 16
      %v6088 = vpop.permute.xlu0 %6087
      %6089 = vrot.lane.b32.xlu0 %v6023, 16
      %v6090 = vpop.permute.xlu0 %6089
      %6091 = vrot.lane.b32.xlu0 %v6026, 16
      %v6092 = vpop.permute.xlu0 %6091
      %6093 = vrot.lane.b32.xlu0 %v6031, 16
      %v6094 = vpop.permute.xlu0 %6093
      %6095 = vrot.lane.b32.xlu0 %v6034, 16
      %v6096 = vpop.permute.xlu0 %6095
      %6097 = vrot.lane.b32.xlu0 %v6039, 16
      %v6098 = vpop.permute.xlu0 %6097
      %6099 = vrot.lane.b32.xlu0 %v6042, 16
      %v6100 = vpop.permute.xlu0 %6099
      %6101 = vrot.lane.b32.xlu0 %v6047, 16
      %v6102 = vpop.permute.xlu0 %6101
      %6103 = vrot.lane.b32.xlu0 %v6050, 16
      %v6104 = vpop.permute.xlu0 %6103
      %6105 = vrot.lane.b32.xlu0 %v6055, 16
      %v6106 = vpop.permute.xlu0 %6105
      %6107 = vrot.lane.b32.xlu0 %v6058, 16
      %v6108 = vpop.permute.xlu0 %6107
      %6125 = vst.msk [vmem:[#allocation2] sm:$0xff] %vm2565, %v6078
      %6126 = vst.msk [vmem:[#allocation2 + $0x8] sm:$0xff] %vm2565, %v6080
      %6127 = vst.msk [vmem:[#allocation2 + $0x10] sm:$0xff] %vm2565, %v6082
      %6128 = vst.msk [vmem:[#allocation2 + $0x18] sm:$0xff] %vm2565, %v6084
      %6129 = vst.msk [vmem:[#allocation2 + $0x20] sm:$0xff] %vm2565, %v6086
      %6130 = vst.msk [vmem:[#allocation2 + $0x28] sm:$0xff] %vm2565, %v6088
      %6131 = vst.msk [vmem:[#allocation2 + $0x30] sm:$0xff] %vm2565, %v6090
      %6132 = vst.msk [vmem:[#allocation2 + $0x38] sm:$0xff] %vm2565, %v6092
      %6133 = vst.msk [vmem:[#allocation2 + $0x40] sm:$0xff] %vm2565, %v6094
      %6134 = vst.msk [vmem:[#allocation2 + $0x48] sm:$0xff] %vm2565, %v6096
      %6135 = vst.msk [vmem:[#allocation2 + $0x50] sm:$0xff] %vm2565, %v6098
      %6136 = vst.msk [vmem:[#allocation2 + $0x58] sm:$0xff] %vm2565, %v6100
      %6137 = vst.msk [vmem:[#allocation2 + $0x60] sm:$0xff] %vm2565, %v6102
      %6138 = vst.msk [vmem:[#allocation2 + $0x68] sm:$0xff] %vm2565, %v6104
      %6139 = vst.msk [vmem:[#allocation2 + $0x70] sm:$0xff] %vm2565, %v6106
      %6140 = vst.msk [vmem:[#allocation2 + $0x78] sm:$0xff] %vm2565, %v6108
      %6141 = vrot.lane.b32.xlu0 %v4527, 104
      %v6142 = vpop.permute.xlu0 %6141
      %6143 = vrot.lane.b32.xlu0 %v4528, 104
      %v6144 = vpop.permute.xlu0 %6143
      %6145 = vrot.lane.b32.xlu0 %v4529, 104
      %v6146 = vpop.permute.xlu0 %6145
      %6147 = vrot.lane.b32.xlu0 %v4530, 104
      %v6148 = vpop.permute.xlu0 %6147
      %6149 = vrot.lane.b32.xlu0 %v4531, 104
      %v6150 = vpop.permute.xlu0 %6149
      %6151 = vrot.lane.b32.xlu0 %v4532, 104
      %v6152 = vpop.permute.xlu0 %6151
      %6153 = vrot.lane.b32.xlu0 %v4533, 104
      %v6154 = vpop.permute.xlu0 %6153
      %6155 = vrot.lane.b32.xlu0 %v4534, 104
      %v6156 = vpop.permute.xlu0 %6155
      %6157 = vrot.lane.b32.xlu0 %v4527, 72
      %v6158 = vpop.permute.xlu0 %6157
      %6159 = vrot.lane.b32.xlu0 %v4528, 72
      %v6160 = vpop.permute.xlu0 %6159
      %6161 = vrot.lane.b32.xlu0 %v4529, 72
      %v6162 = vpop.permute.xlu0 %6161
      %6163 = vrot.lane.b32.xlu0 %v4530, 72
      %v6164 = vpop.permute.xlu0 %6163
      %6165 = vrot.lane.b32.xlu0 %v4531, 72
      %v6166 = vpop.permute.xlu0 %6165
      %6167 = vrot.lane.b32.xlu0 %v4532, 72
      %v6168 = vpop.permute.xlu0 %6167
      %6169 = vrot.lane.b32.xlu0 %v4533, 72
      %v6170 = vpop.permute.xlu0 %6169
      %6171 = vrot.lane.b32.xlu0 %v4534, 72
      %v6172 = vpop.permute.xlu0 %6171
      %v6174 = vsel %vm1005, %v6142, 0
      %v6177 = vsel %vm1005, %v6144, 0
      %v6180 = vsel %vm1005, %v6146, 0
      %v6183 = vsel %vm1005, %v6148, 0
      %v6186 = vsel %vm1005, %v6150, 0
      %v6189 = vsel %vm1005, %v6152, 0
      %v6192 = vsel %vm1005, %v6154, 0
      %v6195 = vsel %vm1005, %v6156, 0
      %v6198 = vsel %vm1005, %v6158, 0
      %v6201 = vsel %vm1005, %v6160, 0
      %v6204 = vsel %vm1005, %v6162, 0
      %v6207 = vsel %vm1005, %v6164, 0
      %v6210 = vsel %vm1005, %v6166, 0
      %v6213 = vsel %vm1005, %v6168, 0
      %v6216 = vsel %vm1005, %v6170, 0
      %v6219 = vsel %vm1005, %v6172, 0
      %6221 = vmatprep.subr.bf16.mxu0 0
      %6222 = vmatpush1.bf16.xpose.msra.mxu0 %v6219
      %6223 = vmatprep.subr.bf16.mxu0 0
      %6224 = vmatpush1.bf16.xpose.msra.mxu0 %v6216
      %6225 = vmatprep.subr.bf16.mxu0 0
      %6226 = vmatpush1.bf16.xpose.msra.mxu0 %v6213
      %6227 = vmatprep.subr.bf16.mxu0 0
      %6228 = vmatpush1.bf16.xpose.msra.mxu0 %v6210
      %6229 = vmatprep.subr.bf16.mxu0 0
      %6230 = vmatpush1.bf16.xpose.msra.mxu0 %v6207
      %6231 = vmatprep.subr.bf16.mxu0 0
      %6232 = vmatpush1.bf16.xpose.msra.mxu0 %v6204
      %6233 = vmatprep.subr.bf16.mxu0 0
      %6234 = vmatpush1.bf16.xpose.msra.mxu0 %v6201
      %6235 = vmatprep.subr.bf16.mxu0 0
      %6236 = vmatpush1.bf16.xpose.msra.mxu0 %v6198
      %6237 = vmatprep.subr.bf16.mxu0 0
      %6238 = vmatpush2.bf16.xpose.msra.mxu0 0
      %6239 = vmatprep.subr.bf16.mxu0 0
      %6240 = vmatpush2.bf16.xpose.msra.mxu0 0
      %6241 = vmatprep.subr.bf16.mxu0 0
      %6242 = vmatpush2.bf16.xpose.msra.mxu0 0
      %6243 = vmatprep.subr.bf16.mxu0 0
      %6244 = vmatpush2.bf16.xpose.msra.mxu0 0
      %6245 = vmatprep.subr.bf16.mxu0 0
      %6246 = vmatpush2.bf16.xpose.msra.mxu0 0
      %6247 = vmatprep.subr.bf16.mxu0 0
      %6248 = vmatpush2.bf16.xpose.msra.mxu0 0
      %6249 = vmatprep.subr.bf16.mxu0 0
      %6250 = vmatpush2.bf16.xpose.msra.mxu0 0
      %6251 = vmatprep.subr.bf16.mxu0 0
      %6252 = vmatpush2.bf16.xpose.msra.mxu0 0
      %6253 = vmatprep.mubr.bf16.mxu0 0
      %6254 = vmatmul.mubr.bf16.gmra.mxu0 %v6174
      %v6255 = vpop.f32.mrf.mxu0
      %v6256 = vadd.f32 0.0, %v6255
      %v6257 = vpop.f32.mrf.mxu0
      %v6258 = vpop.f32.mrf.mxu0
      %v6259 = vadd.f32 0.0, %v6258
      %v6260 = vpop.f32.mrf.mxu0
      %6261 = vmatprep.mubr.bf16.mxu0 0
      %6262 = vmatmul.mubr.bf16.gmra.mxu0 %v6177
      %v6263 = vpop.f32.mrf.mxu0
      %v6264 = vadd.f32 0.0, %v6263
      %v6265 = vpop.f32.mrf.mxu0
      %v6266 = vpop.f32.mrf.mxu0
      %v6267 = vadd.f32 0.0, %v6266
      %v6268 = vpop.f32.mrf.mxu0
      %6269 = vmatprep.mubr.bf16.mxu0 0
      %6270 = vmatmul.mubr.bf16.gmra.mxu0 %v6180
      %v6271 = vpop.f32.mrf.mxu0
      %v6272 = vadd.f32 0.0, %v6271
      %v6273 = vpop.f32.mrf.mxu0
      %v6274 = vpop.f32.mrf.mxu0
      %v6275 = vadd.f32 0.0, %v6274
      %v6276 = vpop.f32.mrf.mxu0
      %6277 = vmatprep.mubr.bf16.mxu0 0
      %6278 = vmatmul.mubr.bf16.gmra.mxu0 %v6183
      %v6279 = vpop.f32.mrf.mxu0
      %v6280 = vadd.f32 0.0, %v6279
      %v6281 = vpop.f32.mrf.mxu0
      %v6282 = vpop.f32.mrf.mxu0
      %v6283 = vadd.f32 0.0, %v6282
      %v6284 = vpop.f32.mrf.mxu0
      %6285 = vmatprep.mubr.bf16.mxu0 0
      %6286 = vmatmul.mubr.bf16.gmra.mxu0 %v6186
      %v6287 = vpop.f32.mrf.mxu0
      %v6288 = vadd.f32 0.0, %v6287
      %v6289 = vpop.f32.mrf.mxu0
      %v6290 = vpop.f32.mrf.mxu0
      %v6291 = vadd.f32 0.0, %v6290
      %v6292 = vpop.f32.mrf.mxu0
      %6293 = vmatprep.mubr.bf16.mxu0 0
      %6294 = vmatmul.mubr.bf16.gmra.mxu0 %v6189
      %v6295 = vpop.f32.mrf.mxu0
      %v6296 = vadd.f32 0.0, %v6295
      %v6297 = vpop.f32.mrf.mxu0
      %v6298 = vpop.f32.mrf.mxu0
      %v6299 = vadd.f32 0.0, %v6298
      %v6300 = vpop.f32.mrf.mxu0
      %6301 = vmatprep.mubr.bf16.mxu0 0
      %6302 = vmatmul.mubr.bf16.gmra.mxu0 %v6192
      %v6303 = vpop.f32.mrf.mxu0
      %v6304 = vadd.f32 0.0, %v6303
      %v6305 = vpop.f32.mrf.mxu0
      %v6306 = vpop.f32.mrf.mxu0
      %v6307 = vadd.f32 0.0, %v6306
      %v6308 = vpop.f32.mrf.mxu0
      %6309 = vmatprep.mubr.bf16.mxu0 0
      %6310 = vmatmul.mubr.bf16.gmra.mxu0 %v6195
      %v6311 = vpop.f32.mrf.mxu0
      %v6312 = vadd.f32 0.0, %v6311
      %v6313 = vpop.f32.mrf.mxu0
      %v6314 = vpop.f32.mrf.mxu0
      %v6315 = vadd.f32 0.0, %v6314
      %v6316 = vpop.f32.mrf.mxu0
      %6317 = vdwg.mxu0
      %v6318 = vmul.f32 %v6256, 0.35355338
      %v6319 = vmul.f32 %v6259, 0.35355338
      %v6320 = vmul.f32 %v6264, 0.35355338
      %v6321 = vmul.f32 %v6267, 0.35355338
      %v6322 = vmul.f32 %v6272, 0.35355338
      %v6323 = vmul.f32 %v6275, 0.35355338
      %v6324 = vmul.f32 %v6280, 0.35355338
      %v6325 = vmul.f32 %v6283, 0.35355338
      %v6326 = vmul.f32 %v6288, 0.35355338
      %v6327 = vmul.f32 %v6291, 0.35355338
      %v6328 = vmul.f32 %v6296, 0.35355338
      %v6329 = vmul.f32 %v6299, 0.35355338
      %v6330 = vmul.f32 %v6304, 0.35355338
      %v6331 = vmul.f32 %v6307, 0.35355338
      %v6332 = vmul.f32 %v6312, 0.35355338
      %v6333 = vmul.f32 %v6315, 0.35355338
      %v6334 = vadd.f32 %v6318, %v578
      %v6335 = vadd.f32 %v6319, %v578
      %v6336 = vadd.f32 %v6320, %v578
      %v6337 = vadd.f32 %v6321, %v578
      %v6338 = vadd.f32 %v6322, %v578
      %v6339 = vadd.f32 %v6323, %v578
      %v6340 = vadd.f32 %v6324, %v578
      %v6341 = vadd.f32 %v6325, %v578
      %v6342 = vadd.f32 %v6326, %v578
      %v6343 = vadd.f32 %v6327, %v578
      %v6344 = vadd.f32 %v6328, %v578
      %v6345 = vadd.f32 %v6329, %v578
      %v6346 = vadd.f32 %v6330, %v578
      %v6347 = vadd.f32 %v6331, %v578
      %v6348 = vadd.f32 %v6332, %v578
      %v6349 = vadd.f32 %v6333, %v578
      %6350 = vmax.xlane.f32.xlu0 %v6334
      %v6351 = vpop.xlane.xlu0 %6350
      %6352 = vmax.xlane.f32.xlu0 %v6335
      %v6353 = vpop.xlane.xlu0 %6352
      %6354 = vmax.xlane.f32.xlu0 %v6336
      %v6355 = vpop.xlane.xlu0 %6354
      %6356 = vmax.xlane.f32.xlu0 %v6337
      %v6357 = vpop.xlane.xlu0 %6356
      %6358 = vmax.xlane.f32.xlu0 %v6338
      %v6359 = vpop.xlane.xlu0 %6358
      %6360 = vmax.xlane.f32.xlu0 %v6339
      %v6361 = vpop.xlane.xlu0 %6360
      %6362 = vmax.xlane.f32.xlu0 %v6340
      %v6363 = vpop.xlane.xlu0 %6362
      %6364 = vmax.xlane.f32.xlu0 %v6341
      %v6365 = vpop.xlane.xlu0 %6364
      %6366 = vmax.xlane.f32.xlu0 %v6342
      %v6367 = vpop.xlane.xlu0 %6366
      %6368 = vmax.xlane.f32.xlu0 %v6343
      %v6369 = vpop.xlane.xlu0 %6368
      %6370 = vmax.xlane.f32.xlu0 %v6344
      %v6371 = vpop.xlane.xlu0 %6370
      %6372 = vmax.xlane.f32.xlu0 %v6345
      %v6373 = vpop.xlane.xlu0 %6372
      %6374 = vmax.xlane.f32.xlu0 %v6346
      %v6375 = vpop.xlane.xlu0 %6374
      %6376 = vmax.xlane.f32.xlu0 %v6347
      %v6377 = vpop.xlane.xlu0 %6376
      %6378 = vmax.xlane.f32.xlu0 %v6348
      %v6379 = vpop.xlane.xlu0 %6378
      %6380 = vmax.xlane.f32.xlu0 %v6349
      %v6381 = vpop.xlane.xlu0 %6380
      %v6382 = vsub.f32 %v6334, %v6351
      %v6383 = vsub.f32 %v6335, %v6353
      %v6384 = vsub.f32 %v6336, %v6355
      %v6385 = vsub.f32 %v6337, %v6357
      %v6386 = vsub.f32 %v6338, %v6359
      %v6387 = vsub.f32 %v6339, %v6361
      %v6388 = vsub.f32 %v6340, %v6363
      %v6389 = vsub.f32 %v6341, %v6365
      %v6390 = vsub.f32 %v6342, %v6367
      %v6391 = vsub.f32 %v6343, %v6369
      %v6392 = vsub.f32 %v6344, %v6371
      %v6393 = vsub.f32 %v6345, %v6373
      %v6394 = vsub.f32 %v6346, %v6375
      %v6395 = vsub.f32 %v6347, %v6377
      %v6396 = vsub.f32 %v6348, %v6379
      %v6397 = vsub.f32 %v6349, %v6381
      %v6398 = vmul.f32 %v6382, 1.442695
      %v6399 = vpow.pop %v6398
      %v6400 = vmul.f32 %v6383, 1.442695
      %v6401 = vpow.pop %v6400
      %v6402 = vmul.f32 %v6384, 1.442695
      %v6403 = vpow.pop %v6402
      %v6404 = vmul.f32 %v6385, 1.442695
      %v6405 = vpow.pop %v6404
      %v6406 = vmul.f32 %v6386, 1.442695
      %v6407 = vpow.pop %v6406
      %v6408 = vmul.f32 %v6387, 1.442695
      %v6409 = vpow.pop %v6408
      %v6410 = vmul.f32 %v6388, 1.442695
      %v6411 = vpow.pop %v6410
      %v6412 = vmul.f32 %v6389, 1.442695
      %v6413 = vpow.pop %v6412
      %v6414 = vmul.f32 %v6390, 1.442695
      %v6415 = vpow.pop %v6414
      %v6416 = vmul.f32 %v6391, 1.442695
      %v6417 = vpow.pop %v6416
      %v6418 = vmul.f32 %v6392, 1.442695
      %v6419 = vpow.pop %v6418
      %v6420 = vmul.f32 %v6393, 1.442695
      %v6421 = vpow.pop %v6420
      %v6422 = vmul.f32 %v6394, 1.442695
      %v6423 = vpow.pop %v6422
      %v6424 = vmul.f32 %v6395, 1.442695
      %v6425 = vpow.pop %v6424
      %v6426 = vmul.f32 %v6396, 1.442695
      %v6427 = vpow.pop %v6426
      %v6428 = vmul.f32 %v6397, 1.442695
      %v6429 = vpow.pop %v6428
      %6430 = vadd.xlane.f32.xlu0 %v6399
      %v6431 = vpop.xlane.xlu0 %6430
      %6432 = vadd.xlane.f32.xlu0 %v6401
      %v6433 = vpop.xlane.xlu0 %6432
      %6434 = vadd.xlane.f32.xlu0 %v6403
      %v6435 = vpop.xlane.xlu0 %6434
      %6436 = vadd.xlane.f32.xlu0 %v6405
      %v6437 = vpop.xlane.xlu0 %6436
      %6438 = vadd.xlane.f32.xlu0 %v6407
      %v6439 = vpop.xlane.xlu0 %6438
      %6440 = vadd.xlane.f32.xlu0 %v6409
      %v6441 = vpop.xlane.xlu0 %6440
      %6442 = vadd.xlane.f32.xlu0 %v6411
      %v6443 = vpop.xlane.xlu0 %6442
      %6444 = vadd.xlane.f32.xlu0 %v6413
      %v6445 = vpop.xlane.xlu0 %6444
      %6446 = vadd.xlane.f32.xlu0 %v6415
      %v6447 = vpop.xlane.xlu0 %6446
      %6448 = vadd.xlane.f32.xlu0 %v6417
      %v6449 = vpop.xlane.xlu0 %6448
      %6450 = vadd.xlane.f32.xlu0 %v6419
      %v6451 = vpop.xlane.xlu0 %6450
      %6452 = vadd.xlane.f32.xlu0 %v6421
      %v6453 = vpop.xlane.xlu0 %6452
      %6454 = vadd.xlane.f32.xlu0 %v6423
      %v6455 = vpop.xlane.xlu0 %6454
      %6456 = vadd.xlane.f32.xlu0 %v6425
      %v6457 = vpop.xlane.xlu0 %6456
      %6458 = vadd.xlane.f32.xlu0 %v6427
      %v6459 = vpop.xlane.xlu0 %6458
      %6460 = vadd.xlane.f32.xlu0 %v6429
      %v6461 = vpop.xlane.xlu0 %6460
      %v6462 = vrcp.pop %v6431
      %v6463 = vrcp.pop %v6433
      %v6464 = vrcp.pop %v6435
      %v6465 = vrcp.pop %v6437
      %v6466 = vrcp.pop %v6439
      %v6467 = vrcp.pop %v6441
      %v6468 = vrcp.pop %v6443
      %v6469 = vrcp.pop %v6445
      %v6470 = vrcp.pop %v6447
      %v6471 = vrcp.pop %v6449
      %v6472 = vrcp.pop %v6451
      %v6473 = vrcp.pop %v6453
      %v6474 = vrcp.pop %v6455
      %v6475 = vrcp.pop %v6457
      %v6476 = vrcp.pop %v6459
      %v6477 = vrcp.pop %v6461
      %v6478 = vmul.f32 %v6399, %v6462
      %v6479 = vmul.f32 %v6401, %v6463
      %v6480 = vmul.f32 %v6403, %v6464
      %v6481 = vmul.f32 %v6405, %v6465
      %v6482 = vmul.f32 %v6407, %v6466
      %v6483 = vmul.f32 %v6409, %v6467
      %v6484 = vmul.f32 %v6411, %v6468
      %v6485 = vmul.f32 %v6413, %v6469
      %v6486 = vmul.f32 %v6415, %v6470
      %v6487 = vmul.f32 %v6417, %v6471
      %v6488 = vmul.f32 %v6419, %v6472
      %v6489 = vmul.f32 %v6421, %v6473
      %v6490 = vmul.f32 %v6423, %v6474
      %v6491 = vmul.f32 %v6425, %v6475
      %v6492 = vmul.f32 %v6427, %v6476
      %v6493 = vmul.f32 %v6429, %v6477
      %v6494 = vpack.c.bf16 %v6479, %v6478
      %v6495 = vpack.c.bf16 %v6481, %v6480
      %v6496 = vpack.c.bf16 %v6483, %v6482
      %v6497 = vpack.c.bf16 %v6485, %v6484
      %v6498 = vpack.c.bf16 %v6487, %v6486
      %v6499 = vpack.c.bf16 %v6489, %v6488
      %v6500 = vpack.c.bf16 %v6491, %v6490
      %v6501 = vpack.c.bf16 %v6493, %v6492
      %6502 = vrot.lane.b32.xlu0 %v4535, 104
      %v6503 = vpop.permute.xlu0 %6502
      %6504 = vrot.lane.b32.xlu0 %v4536, 104
      %v6505 = vpop.permute.xlu0 %6504
      %6506 = vrot.lane.b32.xlu0 %v4537, 104
      %v6507 = vpop.permute.xlu0 %6506
      %6508 = vrot.lane.b32.xlu0 %v4538, 104
      %v6509 = vpop.permute.xlu0 %6508
      %6510 = vrot.lane.b32.xlu0 %v4539, 104
      %v6511 = vpop.permute.xlu0 %6510
      %6512 = vrot.lane.b32.xlu0 %v4540, 104
      %v6513 = vpop.permute.xlu0 %6512
      %6514 = vrot.lane.b32.xlu0 %v4541, 104
      %v6515 = vpop.permute.xlu0 %6514
      %6516 = vrot.lane.b32.xlu0 %v4542, 104
      %v6517 = vpop.permute.xlu0 %6516
      %6526 = vmatprep.subr.bf16.mxu0 0
      %6527 = vmatpush1.bf16.msra.mxu0 %v6517
      %6528 = vmatprep.subr.bf16.mxu0 0
      %6529 = vmatpush1.bf16.msra.mxu0 %v6515
      %6530 = vmatprep.subr.bf16.mxu0 0
      %6531 = vmatpush1.bf16.msra.mxu0 %v6513
      %6532 = vmatprep.subr.bf16.mxu0 0
      %6533 = vmatpush1.bf16.msra.mxu0 %v6511
      %6534 = vmatprep.subr.bf16.mxu0 0
      %6535 = vmatpush1.bf16.msra.mxu0 %v6509
      %6536 = vmatprep.subr.bf16.mxu0 0
      %6537 = vmatpush1.bf16.msra.mxu0 %v6507
      %6538 = vmatprep.subr.bf16.mxu0 0
      %6539 = vmatpush1.bf16.msra.mxu0 %v6505
      %6540 = vmatprep.subr.bf16.mxu0 0
      %6541 = vmatpush1.bf16.msra.mxu0 %v6503
      %6542 = vmatprep.subr.bf16.mxu0 0
      %6543 = vmatpush2.bf16.msra.mxu0 0
      %6544 = vmatprep.subr.bf16.mxu0 0
      %6545 = vmatpush2.bf16.msra.mxu0 0
      %6546 = vmatprep.subr.bf16.mxu0 0
      %6547 = vmatpush2.bf16.msra.mxu0 0
      %6548 = vmatprep.subr.bf16.mxu0 0
      %6549 = vmatpush2.bf16.msra.mxu0 0
      %6550 = vmatprep.subr.bf16.mxu0 0
      %6551 = vmatpush2.bf16.msra.mxu0 0
      %6552 = vmatprep.subr.bf16.mxu0 0
      %6553 = vmatpush2.bf16.msra.mxu0 0
      %6554 = vmatprep.subr.bf16.mxu0 0
      %6555 = vmatpush2.bf16.msra.mxu0 0
      %6556 = vmatprep.subr.bf16.mxu0 0
      %6557 = vmatpush2.bf16.msra.mxu0 0
      %6558 = vmatprep.mubr.bf16.mxu0 0
      %6559 = vmatmul.mubr.bf16.gmra.mxu0 %v6494
      %v6560 = vpop.f32.mrf.mxu0
      %v6561 = vadd.f32 0.0, %v6560
      %v6562 = vpop.f32.mrf.mxu0
      %v6563 = vpop.f32.mrf.mxu0
      %v6564 = vadd.f32 0.0, %v6563
      %v6565 = vpop.f32.mrf.mxu0
      %6566 = vmatprep.mubr.bf16.mxu0 0
      %6567 = vmatmul.mubr.bf16.gmra.mxu0 %v6495
      %v6568 = vpop.f32.mrf.mxu0
      %v6569 = vadd.f32 0.0, %v6568
      %v6570 = vpop.f32.mrf.mxu0
      %v6571 = vpop.f32.mrf.mxu0
      %v6572 = vadd.f32 0.0, %v6571
      %v6573 = vpop.f32.mrf.mxu0
      %6574 = vmatprep.mubr.bf16.mxu0 0
      %6575 = vmatmul.mubr.bf16.gmra.mxu0 %v6496
      %v6576 = vpop.f32.mrf.mxu0
      %v6577 = vadd.f32 0.0, %v6576
      %v6578 = vpop.f32.mrf.mxu0
      %v6579 = vpop.f32.mrf.mxu0
      %v6580 = vadd.f32 0.0, %v6579
      %v6581 = vpop.f32.mrf.mxu0
      %6582 = vmatprep.mubr.bf16.mxu0 0
      %6583 = vmatmul.mubr.bf16.gmra.mxu0 %v6497
      %v6584 = vpop.f32.mrf.mxu0
      %v6585 = vadd.f32 0.0, %v6584
      %v6586 = vpop.f32.mrf.mxu0
      %v6587 = vpop.f32.mrf.mxu0
      %v6588 = vadd.f32 0.0, %v6587
      %v6589 = vpop.f32.mrf.mxu0
      %6590 = vmatprep.mubr.bf16.mxu0 0
      %6591 = vmatmul.mubr.bf16.gmra.mxu0 %v6498
      %v6592 = vpop.f32.mrf.mxu0
      %v6593 = vadd.f32 0.0, %v6592
      %v6594 = vpop.f32.mrf.mxu0
      %v6595 = vpop.f32.mrf.mxu0
      %v6596 = vadd.f32 0.0, %v6595
      %v6597 = vpop.f32.mrf.mxu0
      %6598 = vmatprep.mubr.bf16.mxu0 0
      %6599 = vmatmul.mubr.bf16.gmra.mxu0 %v6499
      %v6600 = vpop.f32.mrf.mxu0
      %v6601 = vadd.f32 0.0, %v6600
      %v6602 = vpop.f32.mrf.mxu0
      %v6603 = vpop.f32.mrf.mxu0
      %v6604 = vadd.f32 0.0, %v6603
      %v6605 = vpop.f32.mrf.mxu0
      %6606 = vmatprep.mubr.bf16.mxu0 0
      %6607 = vmatmul.mubr.bf16.gmra.mxu0 %v6500
      %v6608 = vpop.f32.mrf.mxu0
      %v6609 = vadd.f32 0.0, %v6608
      %v6610 = vpop.f32.mrf.mxu0
      %v6611 = vpop.f32.mrf.mxu0
      %v6612 = vadd.f32 0.0, %v6611
      %v6613 = vpop.f32.mrf.mxu0
      %6614 = vmatprep.mubr.bf16.mxu0 0
      %6615 = vmatmul.mubr.bf16.gmra.mxu0 %v6501
      %v6616 = vpop.f32.mrf.mxu0
      %v6617 = vadd.f32 0.0, %v6616
      %v6618 = vpop.f32.mrf.mxu0
      %v6619 = vpop.f32.mrf.mxu0
      %v6620 = vadd.f32 0.0, %v6619
      %v6621 = vpop.f32.mrf.mxu0
      %6622 = vdwg.mxu0
      %6639 = vrot.lane.b32.xlu0 %v6561, 24
      %v6640 = vpop.permute.xlu0 %6639
      %6641 = vrot.lane.b32.xlu0 %v6564, 24
      %v6642 = vpop.permute.xlu0 %6641
      %6643 = vrot.lane.b32.xlu0 %v6569, 24
      %v6644 = vpop.permute.xlu0 %6643
      %6645 = vrot.lane.b32.xlu0 %v6572, 24
      %v6646 = vpop.permute.xlu0 %6645
      %6647 = vrot.lane.b32.xlu0 %v6577, 24
      %v6648 = vpop.permute.xlu0 %6647
      %6649 = vrot.lane.b32.xlu0 %v6580, 24
      %v6650 = vpop.permute.xlu0 %6649
      %6651 = vrot.lane.b32.xlu0 %v6585, 24
      %v6652 = vpop.permute.xlu0 %6651
      %6653 = vrot.lane.b32.xlu0 %v6588, 24
      %v6654 = vpop.permute.xlu0 %6653
      %6655 = vrot.lane.b32.xlu0 %v6593, 24
      %v6656 = vpop.permute.xlu0 %6655
      %6657 = vrot.lane.b32.xlu0 %v6596, 24
      %v6658 = vpop.permute.xlu0 %6657
      %6659 = vrot.lane.b32.xlu0 %v6601, 24
      %v6660 = vpop.permute.xlu0 %6659
      %6661 = vrot.lane.b32.xlu0 %v6604, 24
      %v6662 = vpop.permute.xlu0 %6661
      %6663 = vrot.lane.b32.xlu0 %v6609, 24
      %v6664 = vpop.permute.xlu0 %6663
      %6665 = vrot.lane.b32.xlu0 %v6612, 24
      %v6666 = vpop.permute.xlu0 %6665
      %6667 = vrot.lane.b32.xlu0 %v6617, 24
      %v6668 = vpop.permute.xlu0 %6667
      %6669 = vrot.lane.b32.xlu0 %v6620, 24
      %v6670 = vpop.permute.xlu0 %6669
      %6687 = vst.msk [vmem:[#allocation2] sm:$0xff] %vm3128, %v6640
      %6688 = vst.msk [vmem:[#allocation2 + $0x8] sm:$0xff] %vm3128, %v6642
      %6689 = vst.msk [vmem:[#allocation2 + $0x10] sm:$0xff] %vm3128, %v6644
      %6690 = vst.msk [vmem:[#allocation2 + $0x18] sm:$0xff] %vm3128, %v6646
      %6691 = vst.msk [vmem:[#allocation2 + $0x20] sm:$0xff] %vm3128, %v6648
      %6692 = vst.msk [vmem:[#allocation2 + $0x28] sm:$0xff] %vm3128, %v6650
      %6693 = vst.msk [vmem:[#allocation2 + $0x30] sm:$0xff] %vm3128, %v6652
      %6694 = vst.msk [vmem:[#allocation2 + $0x38] sm:$0xff] %vm3128, %v6654
      %6695 = vst.msk [vmem:[#allocation2 + $0x40] sm:$0xff] %vm3128, %v6656
      %6696 = vst.msk [vmem:[#allocation2 + $0x48] sm:$0xff] %vm3128, %v6658
      %6697 = vst.msk [vmem:[#allocation2 + $0x50] sm:$0xff] %vm3128, %v6660
      %6698 = vst.msk [vmem:[#allocation2 + $0x58] sm:$0xff] %vm3128, %v6662
      %6699 = vst.msk [vmem:[#allocation2 + $0x60] sm:$0xff] %vm3128, %v6664
      %6700 = vst.msk [vmem:[#allocation2 + $0x68] sm:$0xff] %vm3128, %v6666
      %6701 = vst.msk [vmem:[#allocation2 + $0x70] sm:$0xff] %vm3128, %v6668
      %6702 = vst.msk [vmem:[#allocation2 + $0x78] sm:$0xff] %vm3128, %v6670
      %v6703 = vld [vmem:[#allocation2] sm:$0xff]
      %v6704 = vld [vmem:[#allocation2 + $0x8] sm:$0xff]
      %v6705 = vld [vmem:[#allocation2 + $0x10] sm:$0xff]
      %v6706 = vld [vmem:[#allocation2 + $0x18] sm:$0xff]
      %v6707 = vld [vmem:[#allocation2 + $0x20] sm:$0xff]
      %v6708 = vld [vmem:[#allocation2 + $0x28] sm:$0xff]
      %v6709 = vld [vmem:[#allocation2 + $0x30] sm:$0xff]
      %v6710 = vld [vmem:[#allocation2 + $0x38] sm:$0xff]
      %v6711 = vld [vmem:[#allocation2 + $0x40] sm:$0xff]
      %v6712 = vld [vmem:[#allocation2 + $0x48] sm:$0xff]
      %v6713 = vld [vmem:[#allocation2 + $0x50] sm:$0xff]
      %v6714 = vld [vmem:[#allocation2 + $0x58] sm:$0xff]
      %v6715 = vld [vmem:[#allocation2 + $0x60] sm:$0xff]
      %v6716 = vld [vmem:[#allocation2 + $0x68] sm:$0xff]
      %v6717 = vld [vmem:[#allocation2 + $0x70] sm:$0xff]
      %v6718 = vld [vmem:[#allocation2 + $0x78] sm:$0xff]
      %v6719 = vpack.c.bf16 %v6704, %v6703
      %v6720 = vpack.c.bf16 %v6706, %v6705
      %v6721 = vpack.c.bf16 %v6708, %v6707
      %v6722 = vpack.c.bf16 %v6710, %v6709
      %v6723 = vpack.c.bf16 %v6712, %v6711
      %v6724 = vpack.c.bf16 %v6714, %v6713
      %v6725 = vpack.c.bf16 %v6716, %v6715
      %v6726 = vpack.c.bf16 %v6718, %v6717
      %v6727 = vld [vmem:[%s6] sm:$0xf]
      %v6728 = vld [vmem:[%s6 + $0x4] sm:$0xf]
      %v6729 = vld [vmem:[%s6 + $0x8] sm:$0xf]
      %v6730 = vld [vmem:[%s6 + $0xc] sm:$0xf]
      %v6731 = vld [vmem:[%s7] sm:$0x1]
      %v6733 = vlaneseq
      %v6734 = vshrl.u32 %v6733, 7
      %v6735 = vsub.s32 0, %v6734
      %v6736 = vrot.slane %v6731, %v6735
      %v6742 = vunpack.c.l.b16 %v6727
      %v6743 = vunpack.c.l.b16 %v6728
      %v6744 = vunpack.c.l.b16 %v6729
      %v6745 = vunpack.c.l.b16 %v6730
      %v6746 = vpack.c.b16 %v6743, %v6742
      %v6747 = vpack.c.b16 %v6745, %v6744
      %v6751 = vsel %vm691, %v6719, 0
      %v6754 = vsel %vm691, %v6720, 0
      %v6757 = vsel %vm691, %v6721, 0
      %v6760 = vsel %vm691, %v6722, 0
      %v6763 = vsel %vm691, %v6723, 0
      %v6766 = vsel %vm691, %v6724, 0
      %v6769 = vsel %vm691, %v6725, 0
      %v6772 = vsel %vm691, %v6726, 0
      %6774 = vmatprep.subr.bf16.mxu0 0
      %6775 = vmatpush1.bf16.msra.mxu0 0
      %6776 = vmatprep.subr.bf16.mxu0 0
      %6777 = vmatpush1.bf16.msra.mxu0 0
      %6778 = vmatprep.subr.bf16.mxu0 0
      %6779 = vmatpush1.bf16.msra.mxu0 0
      %6780 = vmatprep.subr.bf16.mxu0 0
      %6781 = vmatpush1.bf16.msra.mxu0 0
      %6782 = vmatprep.subr.bf16.mxu0 0
      %6783 = vmatpush1.bf16.msra.mxu0 0
      %6784 = vmatprep.subr.bf16.mxu0 0
      %6785 = vmatpush1.bf16.msra.mxu0 0
      %6786 = vmatprep.subr.bf16.mxu0 0
      %6787 = vmatpush1.bf16.msra.mxu0 %v6747
      %6788 = vmatprep.subr.bf16.mxu0 0
      %6789 = vmatpush1.bf16.msra.mxu0 %v6746
      %6790 = vmatprep.subr.bf16.mxu0 0
      %6791 = vmatpush2.bf16.msra.mxu0 0
      %6792 = vmatprep.subr.bf16.mxu0 0
      %6793 = vmatpush2.bf16.msra.mxu0 0
      %6794 = vmatprep.subr.bf16.mxu0 0
      %6795 = vmatpush2.bf16.msra.mxu0 0
      %6796 = vmatprep.subr.bf16.mxu0 0
      %6797 = vmatpush2.bf16.msra.mxu0 0
      %6798 = vmatprep.subr.bf16.mxu0 0
      %6799 = vmatpush2.bf16.msra.mxu0 0
      %6800 = vmatprep.subr.bf16.mxu0 0
      %6801 = vmatpush2.bf16.msra.mxu0 0
      %6802 = vmatprep.subr.bf16.mxu0 0
      %6803 = vmatpush2.bf16.msra.mxu0 0
      %6804 = vmatprep.subr.bf16.mxu0 0
      %6805 = vmatpush2.bf16.msra.mxu0 0
      %6806 = vmatprep.mubr.bf16.mxu0 0
      %6807 = vmatmul.mubr.bf16.gmra.mxu0 %v6751
      %v6808 = vpop.f32.mrf.mxu0
      %v6809 = vadd.f32 %v6736, %v6808
      %v6810 = vpop.f32.mrf.mxu0
      %v6811 = vpop.f32.mrf.mxu0
      %v6812 = vadd.f32 %v6736, %v6811
      %v6813 = vpop.f32.mrf.mxu0
      %6814 = vmatprep.mubr.bf16.mxu0 0
      %6815 = vmatmul.mubr.bf16.gmra.mxu0 %v6754
      %v6816 = vpop.f32.mrf.mxu0
      %v6817 = vadd.f32 %v6736, %v6816
      %v6818 = vpop.f32.mrf.mxu0
      %v6819 = vpop.f32.mrf.mxu0
      %v6820 = vadd.f32 %v6736, %v6819
      %v6821 = vpop.f32.mrf.mxu0
      %6822 = vmatprep.mubr.bf16.mxu0 0
      %6823 = vmatmul.mubr.bf16.gmra.mxu0 %v6757
      %v6824 = vpop.f32.mrf.mxu0
      %v6825 = vadd.f32 %v6736, %v6824
      %v6826 = vpop.f32.mrf.mxu0
      %v6827 = vpop.f32.mrf.mxu0
      %v6828 = vadd.f32 %v6736, %v6827
      %v6829 = vpop.f32.mrf.mxu0
      %6830 = vmatprep.mubr.bf16.mxu0 0
      %6831 = vmatmul.mubr.bf16.gmra.mxu0 %v6760
      %v6832 = vpop.f32.mrf.mxu0
      %v6833 = vadd.f32 %v6736, %v6832
      %v6834 = vpop.f32.mrf.mxu0
      %v6835 = vpop.f32.mrf.mxu0
      %v6836 = vadd.f32 %v6736, %v6835
      %v6837 = vpop.f32.mrf.mxu0
      %6838 = vmatprep.mubr.bf16.mxu0 0
      %6839 = vmatmul.mubr.bf16.gmra.mxu0 %v6763
      %v6840 = vpop.f32.mrf.mxu0
      %v6841 = vadd.f32 %v6736, %v6840
      %v6842 = vpop.f32.mrf.mxu0
      %v6843 = vpop.f32.mrf.mxu0
      %v6844 = vadd.f32 %v6736, %v6843
      %v6845 = vpop.f32.mrf.mxu0
      %6846 = vmatprep.mubr.bf16.mxu0 0
      %6847 = vmatmul.mubr.bf16.gmra.mxu0 %v6766
      %v6848 = vpop.f32.mrf.mxu0
      %v6849 = vadd.f32 %v6736, %v6848
      %v6850 = vpop.f32.mrf.mxu0
      %v6851 = vpop.f32.mrf.mxu0
      %v6852 = vadd.f32 %v6736, %v6851
      %v6853 = vpop.f32.mrf.mxu0
      %6854 = vmatprep.mubr.bf16.mxu0 0
      %6855 = vmatmul.mubr.bf16.gmra.mxu0 %v6769
      %v6856 = vpop.f32.mrf.mxu0
      %v6857 = vadd.f32 %v6736, %v6856
      %v6858 = vpop.f32.mrf.mxu0
      %v6859 = vpop.f32.mrf.mxu0
      %v6860 = vadd.f32 %v6736, %v6859
      %v6861 = vpop.f32.mrf.mxu0
      %6862 = vmatprep.mubr.bf16.mxu0 0
      %6863 = vmatmul.mubr.bf16.gmra.mxu0 %v6772
      %v6864 = vpop.f32.mrf.mxu0
      %v6865 = vadd.f32 %v6736, %v6864
      %v6866 = vpop.f32.mrf.mxu0
      %v6867 = vpop.f32.mrf.mxu0
      %v6868 = vadd.f32 %v6736, %v6867
      %v6869 = vpop.f32.mrf.mxu0
      %6870 = vdwg.mxu0
      %v6871 = vadd.f32 %v4191, %v6809
      %v6872 = vadd.f32 %v4192, %v6812
      %v6873 = vadd.f32 %v4193, %v6817
      %v6874 = vadd.f32 %v4194, %v6820
      %v6875 = vadd.f32 %v4195, %v6825
      %v6876 = vadd.f32 %v4196, %v6828
      %v6877 = vadd.f32 %v4197, %v6833
      %v6878 = vadd.f32 %v4198, %v6836
      %v6879 = vadd.f32 %v4199, %v6841
      %v6880 = vadd.f32 %v4200, %v6844
      %v6881 = vadd.f32 %v4201, %v6849
      %v6882 = vadd.f32 %v4202, %v6852
      %v6883 = vadd.f32 %v4203, %v6857
      %v6884 = vadd.f32 %v4204, %v6860
      %v6885 = vadd.f32 %v4205, %v6865
      %v6886 = vadd.f32 %v4206, %v6868
      %v6887 = vsel %vm691, %v6871, 0.0
      %6888 = vadd.xlane.f32.xlu0 %v6887
      %v6889 = vpop.xlane.xlu0 %6888
      %v6890 = vsel %vm691, %v6872, 0.0
      %6891 = vadd.xlane.f32.xlu0 %v6890
      %v6892 = vpop.xlane.xlu0 %6891
      %v6893 = vsel %vm691, %v6873, 0.0
      %6894 = vadd.xlane.f32.xlu0 %v6893
      %v6895 = vpop.xlane.xlu0 %6894
      %v6896 = vsel %vm691, %v6874, 0.0
      %6897 = vadd.xlane.f32.xlu0 %v6896
      %v6898 = vpop.xlane.xlu0 %6897
      %v6899 = vsel %vm691, %v6875, 0.0
      %6900 = vadd.xlane.f32.xlu0 %v6899
      %v6901 = vpop.xlane.xlu0 %6900
      %v6902 = vsel %vm691, %v6876, 0.0
      %6903 = vadd.xlane.f32.xlu0 %v6902
      %v6904 = vpop.xlane.xlu0 %6903
      %v6905 = vsel %vm691, %v6877, 0.0
      %6906 = vadd.xlane.f32.xlu0 %v6905
      %v6907 = vpop.xlane.xlu0 %6906
      %v6908 = vsel %vm691, %v6878, 0.0
      %6909 = vadd.xlane.f32.xlu0 %v6908
      %v6910 = vpop.xlane.xlu0 %6909
      %v6911 = vsel %vm691, %v6879, 0.0
      %6912 = vadd.xlane.f32.xlu0 %v6911
      %v6913 = vpop.xlane.xlu0 %6912
      %v6914 = vsel %vm691, %v6880, 0.0
      %6915 = vadd.xlane.f32.xlu0 %v6914
      %v6916 = vpop.xlane.xlu0 %6915
      %v6917 = vsel %vm691, %v6881, 0.0
      %6918 = vadd.xlane.f32.xlu0 %v6917
      %v6919 = vpop.xlane.xlu0 %6918
      %v6920 = vsel %vm691, %v6882, 0.0
      %6921 = vadd.xlane.f32.xlu0 %v6920
      %v6922 = vpop.xlane.xlu0 %6921
      %v6923 = vsel %vm691, %v6883, 0.0
      %6924 = vadd.xlane.f32.xlu0 %v6923
      %v6925 = vpop.xlane.xlu0 %6924
      %v6926 = vsel %vm691, %v6884, 0.0
      %6927 = vadd.xlane.f32.xlu0 %v6926
      %v6928 = vpop.xlane.xlu0 %6927
      %v6929 = vsel %vm691, %v6885, 0.0
      %6930 = vadd.xlane.f32.xlu0 %v6929
      %v6931 = vpop.xlane.xlu0 %6930
      %v6932 = vsel %vm691, %v6886, 0.0
      %6933 = vadd.xlane.f32.xlu0 %v6932
      %v6934 = vpop.xlane.xlu0 %6933
      %v6935 = vmul.f32 %v6889, %v3377
      %v6936 = vmul.f32 %v6892, %v3377
      %v6937 = vmul.f32 %v6895, %v3377
      %v6938 = vmul.f32 %v6898, %v3377
      %v6939 = vmul.f32 %v6901, %v3377
      %v6940 = vmul.f32 %v6904, %v3377
      %v6941 = vmul.f32 %v6907, %v3377
      %v6942 = vmul.f32 %v6910, %v3377
      %v6943 = vmul.f32 %v6913, %v3377
      %v6944 = vmul.f32 %v6916, %v3377
      %v6945 = vmul.f32 %v6919, %v3377
      %v6946 = vmul.f32 %v6922, %v3377
      %v6947 = vmul.f32 %v6925, %v3377
      %v6948 = vmul.f32 %v6928, %v3377
      %v6949 = vmul.f32 %v6931, %v3377
      %v6950 = vmul.f32 %v6934, %v3377
      %v6951 = vsub.f32 %v6871, %v6935
      %v6952 = vsub.f32 %v6872, %v6936
      %v6953 = vsub.f32 %v6873, %v6937
      %v6954 = vsub.f32 %v6874, %v6938
      %v6955 = vsub.f32 %v6875, %v6939
      %v6956 = vsub.f32 %v6876, %v6940
      %v6957 = vsub.f32 %v6877, %v6941
      %v6958 = vsub.f32 %v6878, %v6942
      %v6959 = vsub.f32 %v6879, %v6943
      %v6960 = vsub.f32 %v6880, %v6944
      %v6961 = vsub.f32 %v6881, %v6945
      %v6962 = vsub.f32 %v6882, %v6946
      %v6963 = vsub.f32 %v6883, %v6947
      %v6964 = vsub.f32 %v6884, %v6948
      %v6965 = vsub.f32 %v6885, %v6949
      %v6966 = vsub.f32 %v6886, %v6950
      %v6967 = vmul.f32 %v6951, %v6951
      %v6968 = vmul.f32 %v6952, %v6952
      %v6969 = vmul.f32 %v6953, %v6953
      %v6970 = vmul.f32 %v6954, %v6954
      %v6971 = vmul.f32 %v6955, %v6955
      %v6972 = vmul.f32 %v6956, %v6956
      %v6973 = vmul.f32 %v6957, %v6957
      %v6974 = vmul.f32 %v6958, %v6958
      %v6975 = vmul.f32 %v6959, %v6959
      %v6976 = vmul.f32 %v6960, %v6960
      %v6977 = vmul.f32 %v6961, %v6961
      %v6978 = vmul.f32 %v6962, %v6962
      %v6979 = vmul.f32 %v6963, %v6963
      %v6980 = vmul.f32 %v6964, %v6964
      %v6981 = vmul.f32 %v6965, %v6965
      %v6982 = vmul.f32 %v6966, %v6966
      %v6983 = vsel %vm691, %v6967, 0.0
      %6984 = vadd.xlane.f32.xlu0 %v6983
      %v6985 = vpop.xlane.xlu0 %6984
      %v6986 = vsel %vm691, %v6968, 0.0
      %6987 = vadd.xlane.f32.xlu0 %v6986
      %v6988 = vpop.xlane.xlu0 %6987
      %v6989 = vsel %vm691, %v6969, 0.0
      %6990 = vadd.xlane.f32.xlu0 %v6989
      %v6991 = vpop.xlane.xlu0 %6990
      %v6992 = vsel %vm691, %v6970, 0.0
      %6993 = vadd.xlane.f32.xlu0 %v6992
      %v6994 = vpop.xlane.xlu0 %6993
      %v6995 = vsel %vm691, %v6971, 0.0
      %6996 = vadd.xlane.f32.xlu0 %v6995
      %v6997 = vpop.xlane.xlu0 %6996
      %v6998 = vsel %vm691, %v6972, 0.0
      %6999 = vadd.xlane.f32.xlu0 %v6998
      %v7000 = vpop.xlane.xlu0 %6999
      %v7001 = vsel %vm691, %v6973, 0.0
      %7002 = vadd.xlane.f32.xlu0 %v7001
      %v7003 = vpop.xlane.xlu0 %7002
      %v7004 = vsel %vm691, %v6974, 0.0
      %7005 = vadd.xlane.f32.xlu0 %v7004
      %v7006 = vpop.xlane.xlu0 %7005
      %v7007 = vsel %vm691, %v6975, 0.0
      %7008 = vadd.xlane.f32.xlu0 %v7007
      %v7009 = vpop.xlane.xlu0 %7008
      %v7010 = vsel %vm691, %v6976, 0.0
      %7011 = vadd.xlane.f32.xlu0 %v7010
      %v7012 = vpop.xlane.xlu0 %7011
      %v7013 = vsel %vm691, %v6977, 0.0
      %7014 = vadd.xlane.f32.xlu0 %v7013
      %v7015 = vpop.xlane.xlu0 %7014
      %v7016 = vsel %vm691, %v6978, 0.0
      %7017 = vadd.xlane.f32.xlu0 %v7016
      %v7018 = vpop.xlane.xlu0 %7017
      %v7019 = vsel %vm691, %v6979, 0.0
      %7020 = vadd.xlane.f32.xlu0 %v7019
      %v7021 = vpop.xlane.xlu0 %7020
      %v7022 = vsel %vm691, %v6980, 0.0
      %7023 = vadd.xlane.f32.xlu0 %v7022
      %v7024 = vpop.xlane.xlu0 %7023
      %v7025 = vsel %vm691, %v6981, 0.0
      %7026 = vadd.xlane.f32.xlu0 %v7025
      %v7027 = vpop.xlane.xlu0 %7026
      %v7028 = vsel %vm691, %v6982, 0.0
      %7029 = vadd.xlane.f32.xlu0 %v7028
      %v7030 = vpop.xlane.xlu0 %7029
      %v7031 = vmul.f32 %v6985, %v3377
      %v7032 = vmul.f32 %v6988, %v3377
      %v7033 = vmul.f32 %v6991, %v3377
      %v7034 = vmul.f32 %v6994, %v3377
      %v7035 = vmul.f32 %v6997, %v3377
      %v7036 = vmul.f32 %v7000, %v3377
      %v7037 = vmul.f32 %v7003, %v3377
      %v7038 = vmul.f32 %v7006, %v3377
      %v7039 = vmul.f32 %v7009, %v3377
      %v7040 = vmul.f32 %v7012, %v3377
      %v7041 = vmul.f32 %v7015, %v3377
      %v7042 = vmul.f32 %v7018, %v3377
      %v7043 = vmul.f32 %v7021, %v3377
      %v7044 = vmul.f32 %v7024, %v3377
      %v7045 = vmul.f32 %v7027, %v3377
      %v7046 = vmul.f32 %v7030, %v3377
      %v7047 = vadd.f32 %v7031, 1e-05
      %v7048 = vadd.f32 %v7032, 1e-05
      %v7049 = vadd.f32 %v7033, 1e-05
      %v7050 = vadd.f32 %v7034, 1e-05
      %v7051 = vadd.f32 %v7035, 1e-05
      %v7052 = vadd.f32 %v7036, 1e-05
      %v7053 = vadd.f32 %v7037, 1e-05
      %v7054 = vadd.f32 %v7038, 1e-05
      %v7055 = vadd.f32 %v7039, 1e-05
      %v7056 = vadd.f32 %v7040, 1e-05
      %v7057 = vadd.f32 %v7041, 1e-05
      %v7058 = vadd.f32 %v7042, 1e-05
      %v7059 = vadd.f32 %v7043, 1e-05
      %v7060 = vadd.f32 %v7044, 1e-05
      %v7061 = vadd.f32 %v7045, 1e-05
      %v7062 = vadd.f32 %v7046, 1e-05
      %v7063 = vrsqrt.pop %v7047
      %v7064 = vrsqrt.pop %v7048
      %v7065 = vrsqrt.pop %v7049
      %v7066 = vrsqrt.pop %v7050
      %v7067 = vrsqrt.pop %v7051
      %v7068 = vrsqrt.pop %v7052
      %v7069 = vrsqrt.pop %v7053
      %v7070 = vrsqrt.pop %v7054
      %v7071 = vrsqrt.pop %v7055
      %v7072 = vrsqrt.pop %v7056
      %v7073 = vrsqrt.pop %v7057
      %v7074 = vrsqrt.pop %v7058
      %v7075 = vrsqrt.pop %v7059
      %v7076 = vrsqrt.pop %v7060
      %v7077 = vrsqrt.pop %v7061
      %v7078 = vrsqrt.pop %v7062
      %v7079 = vmul.f32 %v6951, %v7063
      %v7080 = vmul.f32 %v6952, %v7064
      %v7081 = vmul.f32 %v6953, %v7065
      %v7082 = vmul.f32 %v6954, %v7066
      %v7083 = vmul.f32 %v6955, %v7067
      %v7084 = vmul.f32 %v6956, %v7068
      %v7085 = vmul.f32 %v6957, %v7069
      %v7086 = vmul.f32 %v6958, %v7070
      %v7087 = vmul.f32 %v6959, %v7071
      %v7088 = vmul.f32 %v6960, %v7072
      %v7089 = vmul.f32 %v6961, %v7073
      %v7090 = vmul.f32 %v6962, %v7074
      %v7091 = vmul.f32 %v6963, %v7075
      %v7092 = vmul.f32 %v6964, %v7076
      %v7093 = vmul.f32 %v6965, %v7077
      %v7094 = vmul.f32 %v6966, %v7078
      %v7095 = vld [vmem:[%s12] sm:$0x1]
      %v7097 = vlaneseq
      %v7098 = vshrl.u32 %v7097, 7
      %v7099 = vsub.s32 0, %v7098
      %v7100 = vrot.slane %v7095, %v7099
      %v7102 = vmul.f32 %v7079, %v7100
      %v7103 = vmul.f32 %v7080, %v7100
      %v7104 = vmul.f32 %v7081, %v7100
      %v7105 = vmul.f32 %v7082, %v7100
      %v7106 = vmul.f32 %v7083, %v7100
      %v7107 = vmul.f32 %v7084, %v7100
      %v7108 = vmul.f32 %v7085, %v7100
      %v7109 = vmul.f32 %v7086, %v7100
      %v7110 = vmul.f32 %v7087, %v7100
      %v7111 = vmul.f32 %v7088, %v7100
      %v7112 = vmul.f32 %v7089, %v7100
      %v7113 = vmul.f32 %v7090, %v7100
      %v7114 = vmul.f32 %v7091, %v7100
      %v7115 = vmul.f32 %v7092, %v7100
      %v7116 = vmul.f32 %v7093, %v7100
      %v7117 = vmul.f32 %v7094, %v7100
      %v7118 = vld [vmem:[%s13] sm:$0x1]
      %v7120 = vlaneseq
      %v7121 = vshrl.u32 %v7120, 7
      %v7122 = vsub.s32 0, %v7121
      %v7123 = vrot.slane %v7118, %v7122
      %v7125 = vadd.f32 %v7102, %v7123
      %v7126 = vadd.f32 %v7103, %v7123
      %v7127 = vadd.f32 %v7104, %v7123
      %v7128 = vadd.f32 %v7105, %v7123
      %v7129 = vadd.f32 %v7106, %v7123
      %v7130 = vadd.f32 %v7107, %v7123
      %v7131 = vadd.f32 %v7108, %v7123
      %v7132 = vadd.f32 %v7109, %v7123
      %v7133 = vadd.f32 %v7110, %v7123
      %v7134 = vadd.f32 %v7111, %v7123
      %v7135 = vadd.f32 %v7112, %v7123
      %v7136 = vadd.f32 %v7113, %v7123
      %v7137 = vadd.f32 %v7114, %v7123
      %v7138 = vadd.f32 %v7115, %v7123
      %v7139 = vadd.f32 %v7116, %v7123
      %v7140 = vadd.f32 %v7117, %v7123
      %v7141 = vpack.c.bf16 %v7126, %v7125
      %v7142 = vpack.c.bf16 %v7128, %v7127
      %v7143 = vpack.c.bf16 %v7130, %v7129
      %v7144 = vpack.c.bf16 %v7132, %v7131
      %v7145 = vpack.c.bf16 %v7134, %v7133
      %v7146 = vpack.c.bf16 %v7136, %v7135
      %v7147 = vpack.c.bf16 %v7138, %v7137
      %v7148 = vpack.c.bf16 %v7140, %v7139
      %v7149 = vld [vmem:[%s8] sm:$0xf]
      %v7150 = vld [vmem:[%s8 + $0x4] sm:$0xf]
      %v7151 = vld [vmem:[%s8 + $0x8] sm:$0xf]
      %v7152 = vld [vmem:[%s8 + $0xc] sm:$0xf]
      %v7153 = vld [vmem:[%s9] sm:$0x1]
      %v7155 = vlaneseq
      %v7156 = vshrl.u32 %v7155, 7
      %v7157 = vsub.s32 0, %v7156
      %v7158 = vrot.slane %v7153, %v7157
      %v7164 = vunpack.c.l.b16 %v7149
      %v7165 = vunpack.c.l.b16 %v7150
      %v7166 = vunpack.c.l.b16 %v7151
      %v7167 = vunpack.c.l.b16 %v7152
      %v7168 = vpack.c.b16 %v7165, %v7164
      %v7169 = vpack.c.b16 %v7167, %v7166
      %v7173 = vsel %vm691, %v7141, 0
      %v7176 = vsel %vm691, %v7142, 0
      %v7179 = vsel %vm691, %v7143, 0
      %v7182 = vsel %vm691, %v7144, 0
      %v7185 = vsel %vm691, %v7145, 0
      %v7188 = vsel %vm691, %v7146, 0
      %v7191 = vsel %vm691, %v7147, 0
      %v7194 = vsel %vm691, %v7148, 0
      %7196 = vmatprep.subr.bf16.mxu0 0
      %7197 = vmatpush1.bf16.msra.mxu0 0
      %7198 = vmatprep.subr.bf16.mxu0 0
      %7199 = vmatpush1.bf16.msra.mxu0 0
      %7200 = vmatprep.subr.bf16.mxu0 0
      %7201 = vmatpush1.bf16.msra.mxu0 0
      %7202 = vmatprep.subr.bf16.mxu0 0
      %7203 = vmatpush1.bf16.msra.mxu0 0
      %7204 = vmatprep.subr.bf16.mxu0 0
      %7205 = vmatpush1.bf16.msra.mxu0 0
      %7206 = vmatprep.subr.bf16.mxu0 0
      %7207 = vmatpush1.bf16.msra.mxu0 0
      %7208 = vmatprep.subr.bf16.mxu0 0
      %7209 = vmatpush1.bf16.msra.mxu0 %v7169
      %7210 = vmatprep.subr.bf16.mxu0 0
      %7211 = vmatpush1.bf16.msra.mxu0 %v7168
      %7212 = vmatprep.subr.bf16.mxu0 0
      %7213 = vmatpush2.bf16.msra.mxu0 0
      %7214 = vmatprep.subr.bf16.mxu0 0
      %7215 = vmatpush2.bf16.msra.mxu0 0
      %7216 = vmatprep.subr.bf16.mxu0 0
      %7217 = vmatpush2.bf16.msra.mxu0 0
      %7218 = vmatprep.subr.bf16.mxu0 0
      %7219 = vmatpush2.bf16.msra.mxu0 0
      %7220 = vmatprep.subr.bf16.mxu0 0
      %7221 = vmatpush2.bf16.msra.mxu0 0
      %7222 = vmatprep.subr.bf16.mxu0 0
      %7223 = vmatpush2.bf16.msra.mxu0 0
      %7224 = vmatprep.subr.bf16.mxu0 0
      %7225 = vmatpush2.bf16.msra.mxu0 0
      %7226 = vmatprep.subr.bf16.mxu0 0
      %7227 = vmatpush2.bf16.msra.mxu0 0
      %7228 = vmatprep.mubr.bf16.mxu0 0
      %7229 = vmatmul.mubr.bf16.gmra.mxu0 %v7173
      %v7230 = vpop.f32.mrf.mxu0
      %v7231 = vadd.f32 %v7158, %v7230
      %v7232 = vpop.f32.mrf.mxu0
      %v7233 = vpop.f32.mrf.mxu0
      %v7234 = vadd.f32 %v7158, %v7233
      %v7235 = vpop.f32.mrf.mxu0
      %7236 = vmatprep.mubr.bf16.mxu0 0
      %7237 = vmatmul.mubr.bf16.gmra.mxu0 %v7176
      %v7238 = vpop.f32.mrf.mxu0
      %v7239 = vadd.f32 %v7158, %v7238
      %v7240 = vpop.f32.mrf.mxu0
      %v7241 = vpop.f32.mrf.mxu0
      %v7242 = vadd.f32 %v7158, %v7241
      %v7243 = vpop.f32.mrf.mxu0
      %7244 = vmatprep.mubr.bf16.mxu0 0
      %7245 = vmatmul.mubr.bf16.gmra.mxu0 %v7179
      %v7246 = vpop.f32.mrf.mxu0
      %v7247 = vadd.f32 %v7158, %v7246
      %v7248 = vpop.f32.mrf.mxu0
      %v7249 = vpop.f32.mrf.mxu0
      %v7250 = vadd.f32 %v7158, %v7249
      %v7251 = vpop.f32.mrf.mxu0
      %7252 = vmatprep.mubr.bf16.mxu0 0
      %7253 = vmatmul.mubr.bf16.gmra.mxu0 %v7182
      %v7254 = vpop.f32.mrf.mxu0
      %v7255 = vadd.f32 %v7158, %v7254
      %v7256 = vpop.f32.mrf.mxu0
      %v7257 = vpop.f32.mrf.mxu0
      %v7258 = vadd.f32 %v7158, %v7257
      %v7259 = vpop.f32.mrf.mxu0
      %7260 = vmatprep.mubr.bf16.mxu0 0
      %7261 = vmatmul.mubr.bf16.gmra.mxu0 %v7185
      %v7262 = vpop.f32.mrf.mxu0
      %v7263 = vadd.f32 %v7158, %v7262
      %v7264 = vpop.f32.mrf.mxu0
      %v7265 = vpop.f32.mrf.mxu0
      %v7266 = vadd.f32 %v7158, %v7265
      %v7267 = vpop.f32.mrf.mxu0
      %7268 = vmatprep.mubr.bf16.mxu0 0
      %7269 = vmatmul.mubr.bf16.gmra.mxu0 %v7188
      %v7270 = vpop.f32.mrf.mxu0
      %v7271 = vadd.f32 %v7158, %v7270
      %v7272 = vpop.f32.mrf.mxu0
      %v7273 = vpop.f32.mrf.mxu0
      %v7274 = vadd.f32 %v7158, %v7273
      %v7275 = vpop.f32.mrf.mxu0
      %7276 = vmatprep.mubr.bf16.mxu0 0
      %7277 = vmatmul.mubr.bf16.gmra.mxu0 %v7191
      %v7278 = vpop.f32.mrf.mxu0
      %v7279 = vadd.f32 %v7158, %v7278
      %v7280 = vpop.f32.mrf.mxu0
      %v7281 = vpop.f32.mrf.mxu0
      %v7282 = vadd.f32 %v7158, %v7281
      %v7283 = vpop.f32.mrf.mxu0
      %7284 = vmatprep.mubr.bf16.mxu0 0
      %7285 = vmatmul.mubr.bf16.gmra.mxu0 %v7194
      %v7286 = vpop.f32.mrf.mxu0
      %v7287 = vadd.f32 %v7158, %v7286
      %v7288 = vpop.f32.mrf.mxu0
      %v7289 = vpop.f32.mrf.mxu0
      %v7290 = vadd.f32 %v7158, %v7289
      %v7291 = vpop.f32.mrf.mxu0
      %7292 = vdwg.mxu0
      %v7293 = vmax.f32 %v7231, 0.0
      %v7294 = vmax.f32 %v7234, 0.0
      %v7295 = vmax.f32 %v7239, 0.0
      %v7296 = vmax.f32 %v7242, 0.0
      %v7297 = vmax.f32 %v7247, 0.0
      %v7298 = vmax.f32 %v7250, 0.0
      %v7299 = vmax.f32 %v7255, 0.0
      %v7300 = vmax.f32 %v7258, 0.0
      %v7301 = vmax.f32 %v7263, 0.0
      %v7302 = vmax.f32 %v7266, 0.0
      %v7303 = vmax.f32 %v7271, 0.0
      %v7304 = vmax.f32 %v7274, 0.0
      %v7305 = vmax.f32 %v7279, 0.0
      %v7306 = vmax.f32 %v7282, 0.0
      %v7307 = vmax.f32 %v7287, 0.0
      %v7308 = vmax.f32 %v7290, 0.0
      %v7309 = vpack.c.bf16 %v7294, %v7293
      %v7310 = vpack.c.bf16 %v7296, %v7295
      %v7311 = vpack.c.bf16 %v7298, %v7297
      %v7312 = vpack.c.bf16 %v7300, %v7299
      %v7313 = vpack.c.bf16 %v7302, %v7301
      %v7314 = vpack.c.bf16 %v7304, %v7303
      %v7315 = vpack.c.bf16 %v7306, %v7305
      %v7316 = vpack.c.bf16 %v7308, %v7307
      %v7317 = vld [vmem:[%s10] sm:$0xf]
      %v7318 = vld [vmem:[%s10 + $0x4] sm:$0xf]
      %v7319 = vld [vmem:[%s10 + $0x8] sm:$0xf]
      %v7320 = vld [vmem:[%s10 + $0xc] sm:$0xf]
      %v7321 = vld [vmem:[%s10 + $0x10] sm:$0xf]
      %v7322 = vld [vmem:[%s10 + $0x14] sm:$0xf]
      %v7323 = vld [vmem:[%s10 + $0x18] sm:$0xf]
      %v7324 = vld [vmem:[%s10 + $0x1c] sm:$0xf]
      %v7325 = vld [vmem:[%s11] sm:$0x1]
      %v7327 = vlaneseq
      %v7328 = vshrl.u32 %v7327, 7
      %v7329 = vsub.s32 0, %v7328
      %v7330 = vrot.slane %v7325, %v7329
      %v7340 = vunpack.c.l.b16 %v7317
      %v7341 = vunpack.c.l.b16 %v7318
      %v7342 = vunpack.c.l.b16 %v7319
      %v7343 = vunpack.c.l.b16 %v7320
      %v7344 = vunpack.c.l.b16 %v7321
      %v7345 = vunpack.c.l.b16 %v7322
      %v7346 = vunpack.c.l.b16 %v7323
      %v7347 = vunpack.c.l.b16 %v7324
      %v7348 = vpack.c.b16 %v7341, %v7340
      %v7349 = vpack.c.b16 %v7343, %v7342
      %v7350 = vpack.c.b16 %v7345, %v7344
      %v7351 = vpack.c.b16 %v7347, %v7346
      %v7357 = vsel %vm3799, %v7309, 0
      %v7360 = vsel %vm3799, %v7310, 0
      %v7363 = vsel %vm3799, %v7311, 0
      %v7366 = vsel %vm3799, %v7312, 0
      %v7369 = vsel %vm3799, %v7313, 0
      %v7372 = vsel %vm3799, %v7314, 0
      %v7375 = vsel %vm3799, %v7315, 0
      %v7378 = vsel %vm3799, %v7316, 0
      %7380 = vmatprep.subr.bf16.mxu0 0
      %7381 = vmatpush1.bf16.msra.mxu0 0
      %7382 = vmatprep.subr.bf16.mxu0 0
      %7383 = vmatpush1.bf16.msra.mxu0 0
      %7384 = vmatprep.subr.bf16.mxu0 0
      %7385 = vmatpush1.bf16.msra.mxu0 0
      %7386 = vmatprep.subr.bf16.mxu0 0
      %7387 = vmatpush1.bf16.msra.mxu0 0
      %7388 = vmatprep.subr.bf16.mxu0 0
      %7389 = vmatpush1.bf16.msra.mxu0 %v7351
      %7390 = vmatprep.subr.bf16.mxu0 0
      %7391 = vmatpush1.bf16.msra.mxu0 %v7350
      %7392 = vmatprep.subr.bf16.mxu0 0
      %7393 = vmatpush1.bf16.msra.mxu0 %v7349
      %7394 = vmatprep.subr.bf16.mxu0 0
      %7395 = vmatpush1.bf16.msra.mxu0 %v7348
      %7396 = vmatprep.subr.bf16.mxu0 0
      %7397 = vmatpush2.bf16.msra.mxu0 0
      %7398 = vmatprep.subr.bf16.mxu0 0
      %7399 = vmatpush2.bf16.msra.mxu0 0
      %7400 = vmatprep.subr.bf16.mxu0 0
      %7401 = vmatpush2.bf16.msra.mxu0 0
      %7402 = vmatprep.subr.bf16.mxu0 0
      %7403 = vmatpush2.bf16.msra.mxu0 0
      %7404 = vmatprep.subr.bf16.mxu0 0
      %7405 = vmatpush2.bf16.msra.mxu0 0
      %7406 = vmatprep.subr.bf16.mxu0 0
      %7407 = vmatpush2.bf16.msra.mxu0 0
      %7408 = vmatprep.subr.bf16.mxu0 0
      %7409 = vmatpush2.bf16.msra.mxu0 0
      %7410 = vmatprep.subr.bf16.mxu0 0
      %7411 = vmatpush2.bf16.msra.mxu0 0
      %7412 = vmatprep.mubr.bf16.mxu0 0
      %7413 = vmatmul.mubr.bf16.gmra.mxu0 %v7357
      %v7414 = vpop.f32.mrf.mxu0
      %v7415 = vadd.f32 %v7330, %v7414
      %v7416 = vpop.f32.mrf.mxu0
      %v7417 = vpop.f32.mrf.mxu0
      %v7418 = vadd.f32 %v7330, %v7417
      %v7419 = vpop.f32.mrf.mxu0
      %7420 = vmatprep.mubr.bf16.mxu0 0
      %7421 = vmatmul.mubr.bf16.gmra.mxu0 %v7360
      %v7422 = vpop.f32.mrf.mxu0
      %v7423 = vadd.f32 %v7330, %v7422
      %v7424 = vpop.f32.mrf.mxu0
      %v7425 = vpop.f32.mrf.mxu0
      %v7426 = vadd.f32 %v7330, %v7425
      %v7427 = vpop.f32.mrf.mxu0
      %7428 = vmatprep.mubr.bf16.mxu0 0
      %7429 = vmatmul.mubr.bf16.gmra.mxu0 %v7363
      %v7430 = vpop.f32.mrf.mxu0
      %v7431 = vadd.f32 %v7330, %v7430
      %v7432 = vpop.f32.mrf.mxu0
      %v7433 = vpop.f32.mrf.mxu0
      %v7434 = vadd.f32 %v7330, %v7433
      %v7435 = vpop.f32.mrf.mxu0
      %7436 = vmatprep.mubr.bf16.mxu0 0
      %7437 = vmatmul.mubr.bf16.gmra.mxu0 %v7366
      %v7438 = vpop.f32.mrf.mxu0
      %v7439 = vadd.f32 %v7330, %v7438
      %v7440 = vpop.f32.mrf.mxu0
      %v7441 = vpop.f32.mrf.mxu0
      %v7442 = vadd.f32 %v7330, %v7441
      %v7443 = vpop.f32.mrf.mxu0
      %7444 = vmatprep.mubr.bf16.mxu0 0
      %7445 = vmatmul.mubr.bf16.gmra.mxu0 %v7369
      %v7446 = vpop.f32.mrf.mxu0
      %v7447 = vadd.f32 %v7330, %v7446
      %v7448 = vpop.f32.mrf.mxu0
      %v7449 = vpop.f32.mrf.mxu0
      %v7450 = vadd.f32 %v7330, %v7449
      %v7451 = vpop.f32.mrf.mxu0
      %7452 = vmatprep.mubr.bf16.mxu0 0
      %7453 = vmatmul.mubr.bf16.gmra.mxu0 %v7372
      %v7454 = vpop.f32.mrf.mxu0
      %v7455 = vadd.f32 %v7330, %v7454
      %v7456 = vpop.f32.mrf.mxu0
      %v7457 = vpop.f32.mrf.mxu0
      %v7458 = vadd.f32 %v7330, %v7457
      %v7459 = vpop.f32.mrf.mxu0
      %7460 = vmatprep.mubr.bf16.mxu0 0
      %7461 = vmatmul.mubr.bf16.gmra.mxu0 %v7375
      %v7462 = vpop.f32.mrf.mxu0
      %v7463 = vadd.f32 %v7330, %v7462
      %v7464 = vpop.f32.mrf.mxu0
      %v7465 = vpop.f32.mrf.mxu0
      %v7466 = vadd.f32 %v7330, %v7465
      %v7467 = vpop.f32.mrf.mxu0
      %7468 = vmatprep.mubr.bf16.mxu0 0
      %7469 = vmatmul.mubr.bf16.gmra.mxu0 %v7378
      %v7470 = vpop.f32.mrf.mxu0
      %v7471 = vadd.f32 %v7330, %v7470
      %v7472 = vpop.f32.mrf.mxu0
      %v7473 = vpop.f32.mrf.mxu0
      %v7474 = vadd.f32 %v7330, %v7473
      %v7475 = vpop.f32.mrf.mxu0
      %7476 = vdwg.mxu0
      %v7477 = vadd.f32 %v7125, %v7415
      %v7478 = vadd.f32 %v7126, %v7418
      %v7479 = vadd.f32 %v7127, %v7423
      %v7480 = vadd.f32 %v7128, %v7426
      %v7481 = vadd.f32 %v7129, %v7431
      %v7482 = vadd.f32 %v7130, %v7434
      %v7483 = vadd.f32 %v7131, %v7439
      %v7484 = vadd.f32 %v7132, %v7442
      %v7485 = vadd.f32 %v7133, %v7447
      %v7486 = vadd.f32 %v7134, %v7450
      %v7487 = vadd.f32 %v7135, %v7455
      %v7488 = vadd.f32 %v7136, %v7458
      %v7489 = vadd.f32 %v7137, %v7463
      %v7490 = vadd.f32 %v7138, %v7466
      %v7491 = vadd.f32 %v7139, %v7471
      %v7492 = vadd.f32 %v7140, %v7474
      %v7493 = vsel %vm691, %v7477, 0.0
      %7494 = vadd.xlane.f32.xlu0 %v7493
      %v7495 = vpop.xlane.xlu0 %7494
      %v7496 = vsel %vm691, %v7478, 0.0
      %7497 = vadd.xlane.f32.xlu0 %v7496
      %v7498 = vpop.xlane.xlu0 %7497
      %v7499 = vsel %vm691, %v7479, 0.0
      %7500 = vadd.xlane.f32.xlu0 %v7499
      %v7501 = vpop.xlane.xlu0 %7500
      %v7502 = vsel %vm691, %v7480, 0.0
      %7503 = vadd.xlane.f32.xlu0 %v7502
      %v7504 = vpop.xlane.xlu0 %7503
      %v7505 = vsel %vm691, %v7481, 0.0
      %7506 = vadd.xlane.f32.xlu0 %v7505
      %v7507 = vpop.xlane.xlu0 %7506
      %v7508 = vsel %vm691, %v7482, 0.0
      %7509 = vadd.xlane.f32.xlu0 %v7508
      %v7510 = vpop.xlane.xlu0 %7509
      %v7511 = vsel %vm691, %v7483, 0.0
      %7512 = vadd.xlane.f32.xlu0 %v7511
      %v7513 = vpop.xlane.xlu0 %7512
      %v7514 = vsel %vm691, %v7484, 0.0
      %7515 = vadd.xlane.f32.xlu0 %v7514
      %v7516 = vpop.xlane.xlu0 %7515
      %v7517 = vsel %vm691, %v7485, 0.0
      %7518 = vadd.xlane.f32.xlu0 %v7517
      %v7519 = vpop.xlane.xlu0 %7518
      %v7520 = vsel %vm691, %v7486, 0.0
      %7521 = vadd.xlane.f32.xlu0 %v7520
      %v7522 = vpop.xlane.xlu0 %7521
      %v7523 = vsel %vm691, %v7487, 0.0
      %7524 = vadd.xlane.f32.xlu0 %v7523
      %v7525 = vpop.xlane.xlu0 %7524
      %v7526 = vsel %vm691, %v7488, 0.0
      %7527 = vadd.xlane.f32.xlu0 %v7526
      %v7528 = vpop.xlane.xlu0 %7527
      %v7529 = vsel %vm691, %v7489, 0.0
      %7530 = vadd.xlane.f32.xlu0 %v7529
      %v7531 = vpop.xlane.xlu0 %7530
      %v7532 = vsel %vm691, %v7490, 0.0
      %7533 = vadd.xlane.f32.xlu0 %v7532
      %v7534 = vpop.xlane.xlu0 %7533
      %v7535 = vsel %vm691, %v7491, 0.0
      %7536 = vadd.xlane.f32.xlu0 %v7535
      %v7537 = vpop.xlane.xlu0 %7536
      %v7538 = vsel %vm691, %v7492, 0.0
      %7539 = vadd.xlane.f32.xlu0 %v7538
      %v7540 = vpop.xlane.xlu0 %7539
      %v7541 = vmul.f32 %v7495, %v3377
      %v7542 = vmul.f32 %v7498, %v3377
      %v7543 = vmul.f32 %v7501, %v3377
      %v7544 = vmul.f32 %v7504, %v3377
      %v7545 = vmul.f32 %v7507, %v3377
      %v7546 = vmul.f32 %v7510, %v3377
      %v7547 = vmul.f32 %v7513, %v3377
      %v7548 = vmul.f32 %v7516, %v3377
      %v7549 = vmul.f32 %v7519, %v3377
      %v7550 = vmul.f32 %v7522, %v3377
      %v7551 = vmul.f32 %v7525, %v3377
      %v7552 = vmul.f32 %v7528, %v3377
      %v7553 = vmul.f32 %v7531, %v3377
      %v7554 = vmul.f32 %v7534, %v3377
      %v7555 = vmul.f32 %v7537, %v3377
      %v7556 = vmul.f32 %v7540, %v3377
      %v7557 = vsub.f32 %v7477, %v7541
      %v7558 = vsub.f32 %v7478, %v7542
      %v7559 = vsub.f32 %v7479, %v7543
      %v7560 = vsub.f32 %v7480, %v7544
      %v7561 = vsub.f32 %v7481, %v7545
      %v7562 = vsub.f32 %v7482, %v7546
      %v7563 = vsub.f32 %v7483, %v7547
      %v7564 = vsub.f32 %v7484, %v7548
      %v7565 = vsub.f32 %v7485, %v7549
      %v7566 = vsub.f32 %v7486, %v7550
      %v7567 = vsub.f32 %v7487, %v7551
      %v7568 = vsub.f32 %v7488, %v7552
      %v7569 = vsub.f32 %v7489, %v7553
      %v7570 = vsub.f32 %v7490, %v7554
      %v7571 = vsub.f32 %v7491, %v7555
      %v7572 = vsub.f32 %v7492, %v7556
      %v7573 = vmul.f32 %v7557, %v7557
      %v7574 = vmul.f32 %v7558, %v7558
      %v7575 = vmul.f32 %v7559, %v7559
      %v7576 = vmul.f32 %v7560, %v7560
      %v7577 = vmul.f32 %v7561, %v7561
      %v7578 = vmul.f32 %v7562, %v7562
      %v7579 = vmul.f32 %v7563, %v7563
      %v7580 = vmul.f32 %v7564, %v7564
      %v7581 = vmul.f32 %v7565, %v7565
      %v7582 = vmul.f32 %v7566, %v7566
      %v7583 = vmul.f32 %v7567, %v7567
      %v7584 = vmul.f32 %v7568, %v7568
      %v7585 = vmul.f32 %v7569, %v7569
      %v7586 = vmul.f32 %v7570, %v7570
      %v7587 = vmul.f32 %v7571, %v7571
      %v7588 = vmul.f32 %v7572, %v7572
      %v7589 = vsel %vm691, %v7573, 0.0
      %7590 = vadd.xlane.f32.xlu0 %v7589
      %v7591 = vpop.xlane.xlu0 %7590
      %v7592 = vsel %vm691, %v7574, 0.0
      %7593 = vadd.xlane.f32.xlu0 %v7592
      %v7594 = vpop.xlane.xlu0 %7593
      %v7595 = vsel %vm691, %v7575, 0.0
      %7596 = vadd.xlane.f32.xlu0 %v7595
      %v7597 = vpop.xlane.xlu0 %7596
      %v7598 = vsel %vm691, %v7576, 0.0
      %7599 = vadd.xlane.f32.xlu0 %v7598
      %v7600 = vpop.xlane.xlu0 %7599
      %v7601 = vsel %vm691, %v7577, 0.0
      %7602 = vadd.xlane.f32.xlu0 %v7601
      %v7603 = vpop.xlane.xlu0 %7602
      %v7604 = vsel %vm691, %v7578, 0.0
      %7605 = vadd.xlane.f32.xlu0 %v7604
      %v7606 = vpop.xlane.xlu0 %7605
      %v7607 = vsel %vm691, %v7579, 0.0
      %7608 = vadd.xlane.f32.xlu0 %v7607
      %v7609 = vpop.xlane.xlu0 %7608
      %v7610 = vsel %vm691, %v7580, 0.0
      %7611 = vadd.xlane.f32.xlu0 %v7610
      %v7612 = vpop.xlane.xlu0 %7611
      %v7613 = vsel %vm691, %v7581, 0.0
      %7614 = vadd.xlane.f32.xlu0 %v7613
      %v7615 = vpop.xlane.xlu0 %7614
      %v7616 = vsel %vm691, %v7582, 0.0
      %7617 = vadd.xlane.f32.xlu0 %v7616
      %v7618 = vpop.xlane.xlu0 %7617
      %v7619 = vsel %vm691, %v7583, 0.0
      %7620 = vadd.xlane.f32.xlu0 %v7619
      %v7621 = vpop.xlane.xlu0 %7620
      %v7622 = vsel %vm691, %v7584, 0.0
      %7623 = vadd.xlane.f32.xlu0 %v7622
      %v7624 = vpop.xlane.xlu0 %7623
      %v7625 = vsel %vm691, %v7585, 0.0
      %7626 = vadd.xlane.f32.xlu0 %v7625
      %v7627 = vpop.xlane.xlu0 %7626
      %v7628 = vsel %vm691, %v7586, 0.0
      %7629 = vadd.xlane.f32.xlu0 %v7628
      %v7630 = vpop.xlane.xlu0 %7629
      %v7631 = vsel %vm691, %v7587, 0.0
      %7632 = vadd.xlane.f32.xlu0 %v7631
      %v7633 = vpop.xlane.xlu0 %7632
      %v7634 = vsel %vm691, %v7588, 0.0
      %7635 = vadd.xlane.f32.xlu0 %v7634
      %v7636 = vpop.xlane.xlu0 %7635
      %v7637 = vmul.f32 %v7591, %v3377
      %v7638 = vmul.f32 %v7594, %v3377
      %v7639 = vmul.f32 %v7597, %v3377
      %v7640 = vmul.f32 %v7600, %v3377
      %v7641 = vmul.f32 %v7603, %v3377
      %v7642 = vmul.f32 %v7606, %v3377
      %v7643 = vmul.f32 %v7609, %v3377
      %v7644 = vmul.f32 %v7612, %v3377
      %v7645 = vmul.f32 %v7615, %v3377
      %v7646 = vmul.f32 %v7618, %v3377
      %v7647 = vmul.f32 %v7621, %v3377
      %v7648 = vmul.f32 %v7624, %v3377
      %v7649 = vmul.f32 %v7627, %v3377
      %v7650 = vmul.f32 %v7630, %v3377
      %v7651 = vmul.f32 %v7633, %v3377
      %v7652 = vmul.f32 %v7636, %v3377
      %v7653 = vadd.f32 %v7637, 1e-05
      %v7654 = vadd.f32 %v7638, 1e-05
      %v7655 = vadd.f32 %v7639, 1e-05
      %v7656 = vadd.f32 %v7640, 1e-05
      %v7657 = vadd.f32 %v7641, 1e-05
      %v7658 = vadd.f32 %v7642, 1e-05
      %v7659 = vadd.f32 %v7643, 1e-05
      %v7660 = vadd.f32 %v7644, 1e-05
      %v7661 = vadd.f32 %v7645, 1e-05
      %v7662 = vadd.f32 %v7646, 1e-05
      %v7663 = vadd.f32 %v7647, 1e-05
      %v7664 = vadd.f32 %v7648, 1e-05
      %v7665 = vadd.f32 %v7649, 1e-05
      %v7666 = vadd.f32 %v7650, 1e-05
      %v7667 = vadd.f32 %v7651, 1e-05
      %v7668 = vadd.f32 %v7652, 1e-05
      %v7669 = vrsqrt.pop %v7653
      %v7670 = vrsqrt.pop %v7654
      %v7671 = vrsqrt.pop %v7655
      %v7672 = vrsqrt.pop %v7656
      %v7673 = vrsqrt.pop %v7657
      %v7674 = vrsqrt.pop %v7658
      %v7675 = vrsqrt.pop %v7659
      %v7676 = vrsqrt.pop %v7660
      %v7677 = vrsqrt.pop %v7661
      %v7678 = vrsqrt.pop %v7662
      %v7679 = vrsqrt.pop %v7663
      %v7680 = vrsqrt.pop %v7664
      %v7681 = vrsqrt.pop %v7665
      %v7682 = vrsqrt.pop %v7666
      %v7683 = vrsqrt.pop %v7667
      %v7684 = vrsqrt.pop %v7668
      %v7685 = vmul.f32 %v7557, %v7669
      %v7686 = vmul.f32 %v7558, %v7670
      %v7687 = vmul.f32 %v7559, %v7671
      %v7688 = vmul.f32 %v7560, %v7672
      %v7689 = vmul.f32 %v7561, %v7673
      %v7690 = vmul.f32 %v7562, %v7674
      %v7691 = vmul.f32 %v7563, %v7675
      %v7692 = vmul.f32 %v7564, %v7676
      %v7693 = vmul.f32 %v7565, %v7677
      %v7694 = vmul.f32 %v7566, %v7678
      %v7695 = vmul.f32 %v7567, %v7679
      %v7696 = vmul.f32 %v7568, %v7680
      %v7697 = vmul.f32 %v7569, %v7681
      %v7698 = vmul.f32 %v7570, %v7682
      %v7699 = vmul.f32 %v7571, %v7683
      %v7700 = vmul.f32 %v7572, %v7684
      %v7701 = vld [vmem:[%s14] sm:$0x1]
      %v7703 = vlaneseq
      %v7704 = vshrl.u32 %v7703, 7
      %v7705 = vsub.s32 0, %v7704
      %v7706 = vrot.slane %v7701, %v7705
      %v7708 = vmul.f32 %v7685, %v7706
      %v7709 = vmul.f32 %v7686, %v7706
      %v7710 = vmul.f32 %v7687, %v7706
      %v7711 = vmul.f32 %v7688, %v7706
      %v7712 = vmul.f32 %v7689, %v7706
      %v7713 = vmul.f32 %v7690, %v7706
      %v7714 = vmul.f32 %v7691, %v7706
      %v7715 = vmul.f32 %v7692, %v7706
      %v7716 = vmul.f32 %v7693, %v7706
      %v7717 = vmul.f32 %v7694, %v7706
      %v7718 = vmul.f32 %v7695, %v7706
      %v7719 = vmul.f32 %v7696, %v7706
      %v7720 = vmul.f32 %v7697, %v7706
      %v7721 = vmul.f32 %v7698, %v7706
      %v7722 = vmul.f32 %v7699, %v7706
      %v7723 = vmul.f32 %v7700, %v7706
      %v7724 = vld [vmem:[%s15] sm:$0x1]
      %v7726 = vlaneseq
      %v7727 = vshrl.u32 %v7726, 7
      %v7728 = vsub.s32 0, %v7727
      %v7729 = vrot.slane %v7724, %v7728
      %v7731 = vadd.f32 %v7708, %v7729
      %v7732 = vadd.f32 %v7709, %v7729
      %v7733 = vadd.f32 %v7710, %v7729
      %v7734 = vadd.f32 %v7711, %v7729
      %v7735 = vadd.f32 %v7712, %v7729
      %v7736 = vadd.f32 %v7713, %v7729
      %v7737 = vadd.f32 %v7714, %v7729
      %v7738 = vadd.f32 %v7715, %v7729
      %v7739 = vadd.f32 %v7716, %v7729
      %v7740 = vadd.f32 %v7717, %v7729
      %v7741 = vadd.f32 %v7718, %v7729
      %v7742 = vadd.f32 %v7719, %v7729
      %v7743 = vadd.f32 %v7720, %v7729
      %v7744 = vadd.f32 %v7721, %v7729
      %v7745 = vadd.f32 %v7722, %v7729
      %v7746 = vadd.f32 %v7723, %v7729
      %v7747 = vmul.f32 %v7731, %v628
      %v7748 = vmul.f32 %v7732, %v629
      %v7749 = vmul.f32 %v7733, %v630
      %v7750 = vmul.f32 %v7734, %v631
      %v7751 = vmul.f32 %v7735, %v632
      %v7752 = vmul.f32 %v7736, %v633
      %v7753 = vmul.f32 %v7737, %v634
      %v7754 = vmul.f32 %v7738, %v635
      %v7755 = vmul.f32 %v7739, %v636
      %v7756 = vmul.f32 %v7740, %v637
      %v7757 = vmul.f32 %v7741, %v638
      %v7758 = vmul.f32 %v7742, %v639
      %v7759 = vmul.f32 %v7743, %v640
      %v7760 = vmul.f32 %v7744, %v641
      %v7761 = vmul.f32 %v7745, %v642
      %v7762 = vmul.f32 %v7746, %v643
      %7763 = vst.msk [vmem:[%s541] sm:$0xff] %vm691, %v7747
      %7764 = vst.msk [vmem:[%s541 + $0x8] sm:$0xff] %vm691, %v7748
      %7765 = vst.msk [vmem:[%s541 + $0x10] sm:$0xff] %vm691, %v7749
      %7766 = vst.msk [vmem:[%s541 + $0x18] sm:$0xff] %vm691, %v7750
      %7767 = vst.msk [vmem:[%s541 + $0x20] sm:$0xff] %vm691, %v7751
      %7768 = vst.msk [vmem:[%s541 + $0x28] sm:$0xff] %vm691, %v7752
      %7769 = vst.msk [vmem:[%s541 + $0x30] sm:$0xff] %vm691, %v7753
      %7770 = vst.msk [vmem:[%s541 + $0x38] sm:$0xff] %vm691, %v7754
      %7771 = vst.msk [vmem:[%s541 + $0x40] sm:$0xff] %vm691, %v7755
      %7772 = vst.msk [vmem:[%s541 + $0x48] sm:$0xff] %vm691, %v7756
      %7773 = vst.msk [vmem:[%s541 + $0x50] sm:$0xff] %vm691, %v7757
      %7774 = vst.msk [vmem:[%s541 + $0x58] sm:$0xff] %vm691, %v7758
      %7775 = vst.msk [vmem:[%s541 + $0x60] sm:$0xff] %vm691, %v7759
      %7776 = vst.msk [vmem:[%s541 + $0x68] sm:$0xff] %vm691, %v7760
      %7777 = vst.msk [vmem:[%s541 + $0x70] sm:$0xff] %vm691, %v7761
      %7778 = vst.msk [vmem:[%s541 + $0x78] sm:$0xff] %vm691, %v7762
      %p7779 = scmp.lt.s32.totalorder %s27, 1
      %s7780 = scalar_select %p7779, %s27, 1
      %s7781 = smul.addr %s7780, 16
      %s7782 = smul.addr %s7781, 8
      %s7783 = scalar_lea.vmem %s16, %s7782
      // Predicated region
      $region85: #{tpu_custom_call.1} parent=83 // pred_check
        %p7784 = pneg %p391
      $region86: #{tpu_custom_call.1} parent=83 // pred_check_branch
        %7786 = sbr.rel (%p7784) target = $region88
      $region87: #{tpu_custom_call.1} parent=83 // pred_region
        _
      $region88: #{tpu_custom_call.1} parent=83 // pred_fallthru
        _
    $region84: #{tpu_custom_call.1} parent=5 // pred_fallthru
      _
    %p7787 = scmp.le.s32.totalorder 2, %s22
    // Predicated region
    $region89: #{tpu_custom_call.1} parent=5 // pred_check
      %p7788 = pneg %p7787
    $region90: #{tpu_custom_call.1} parent=5 // pred_check_branch
      %7790 = sbr.rel (%p7788) target = $region92
    $region91: #{tpu_custom_call.1} parent=5 // pred_region
      %s7791 = ssub.s32 %s22, 2
      // Predicated region
      $region93: #{tpu_custom_call.1} parent=91 // pred_check
        %p7792 = pneg %p397
      $region94: #{tpu_custom_call.1} parent=91 // pred_check_branch
        %7794 = sbr.rel (%p7792) target = $region96
      $region95: #{tpu_custom_call.1} parent=91 // pred_region
        %p7795 = scmp.lt.s32.totalorder %s28, 1
        %s7796 = scalar_select %p7795, %s28, 1
        %s7797 = smul.addr %s7796, 16
        %s7798 = smul.addr %s7797, 8
        %s7799 = scalar_lea.vmem %s16, %s7798
      $region96: #{tpu_custom_call.1} parent=91 // pred_fallthru
        _
    $region92: #{tpu_custom_call.1} parent=5 // pred_fallthru
      _
  $region6: #{tpu_custom_call.1} parent=0 // loop_footer
    %s26 = sadd.s32 1, %s22
  $region7: #{tpu_custom_call.1} parent=0 // loop_footer_branch
    %21 = sbr.rel target = $region3
  $region8: #{tpu_custom_call.1} parent=0 // loop_exit
    _

</llo_original>
